<compile_context>
chip_gen: v6e
topology: v6e:2x2x1
jax: 0.10.0
libtpu: 0.0.40
codegen_flags: <defaults>
</compile_context>

<pallas_src>
import functools

import numpy as np

import jax
import jax.numpy as jnp
from jax.experimental import pallas as pl
from jax.experimental.pallas import tpu as pltpu

EPS = 1e-5
LANE = 128


def _round_up(x, m):
    return (x + m - 1) // m * m


def _interior_mask_np(H, W, Pr):
    """(Pr, 1) f32 mask: 1.0 at flat-padded positions that are real (interior) pixels.

    Computed at trace time with numpy (H, W, Pr are static) to avoid any in-kernel
    iota / float-divide / floor work and the associated numerical hazards.
    """
    W2 = W + 2
    idx = np.arange(Pr)
    row, col = idx // W2, idx % W2
    m = (idx < (H + 2) * W2) & (row >= 1) & (row <= H) & (col >= 1) & (col <= W)
    return m.astype(np.float32).reshape(Pr, 1)


def _conv3x3_taps(src_ref, w_ref, *, W, Pr, margin):
    """3x3 conv as 9 statically-shifted 2-D MXU matmuls (bf16 operands, f32 accumulation).

    src_ref : VMEM (2*margin + Pr, Cp) bf16 flat-padded activation; rows [margin, margin+Pr)
              hold the image; everything outside interior pixels is zero. A (dh, dw) spatial
              shift equals a row shift of dh*(W+2)+dw in the flat layout.
    w_ref   : (3, 3, Cp, Cp) bf16.
    Returns (Pr, Cp) f32; halo rows contain garbage and must be masked by the caller.
    """
    W2 = W + 2
    acc = None
    for kh in range(3):
        for kw in range(3):
            off = (kh - 1) * W2 + (kw - 1)
            lhs = src_ref[pl.ds(margin + off, Pr), :]     # static shifted window -> MXU
            z = jax.lax.dot_general(lhs, w_ref[kh, kw],
                                    (((1,), (0,)), ((), ())),
                                    preferred_element_type=jnp.float32)
            acc = z if acc is None else acc + z
    return acc


def _conv1_stats_kernel(x_ref, mask_ref, w_ref, y_ref, stats_ref, *, W, Pr, Cp, margin):
    """Pass 1: conv1 + per-image BN1 sum / sum-of-squares (stats from the f32 accumulator)."""
    acc = _conv3x3_taps(x_ref, w_ref, W=W, Pr=Pr, margin=margin) * mask_ref[...]
    y_ref[...] = acc.astype(jnp.bfloat16)
    stats_ref[...] = jnp.concatenate(
        [jnp.sum(acc, axis=0, keepdims=True),
         jnp.sum(acc * acc, axis=0, keepdims=True)], axis=0)


def _bn_relu_conv2_stats_kernel(y_ref, mask_ref, scale_ref, shift_ref, w_ref,
                                z_ref, stats_ref, pad_ref, *, W, Pr, Cp, margin):
    """Pass 2: bn1 (fused scale/shift) + relu + conv2 + per-image BN2 sum / sum-of-squares."""
    # Scratch persists across grid steps -> zero the halo rows only once.
    @pl.when(pl.program_id(0) == 0)
    def _():
        pad_ref[pl.ds(0, margin), :] = jnp.zeros((margin, Cp), jnp.bfloat16)
        pad_ref[pl.ds(margin + Pr, margin), :] = jnp.zeros((margin, Cp), jnp.bfloat16)

    h = y_ref[...].astype(jnp.float32) * scale_ref[...] + shift_ref[...]
    h = jnp.maximum(h, 0.0) * mask_ref[...]           # re-zero halo so conv2 sees zero padding
    pad_ref[pl.ds(margin, Pr), :] = h.astype(jnp.bfloat16)

    acc = _conv3x3_taps(pad_ref, w_ref, W=W, Pr=Pr, margin=margin) * mask_ref[...]
    z_ref[...] = acc.astype(jnp.bfloat16)
    stats_ref[...] = jnp.concatenate(
        [jnp.sum(acc, axis=0, keepdims=True),
         jnp.sum(acc * acc, axis=0, keepdims=True)], axis=0)


def _bn_scale_shift(stats, gamma, beta, count):
    """Reduce per-image sum/sumsq to fused BN scale/shift (training-mode, biased variance)."""
    tot = jnp.sum(stats[:, 0, :], axis=0)
    totsq = jnp.sum(stats[:, 1, :], axis=0)
    mean = tot / count
    var = jnp.maximum(totsq / count - mean * mean, 0.0)
    scale = gamma * jax.lax.rsqrt(var + EPS)
    shift = beta - mean * scale
    return (scale.reshape(1, -1).astype(jnp.float32),
            shift.reshape(1, -1).astype(jnp.float32))


@jax.jit
def basic_block_forward(x_nchw, params):
    """x_nchw: (N, C, H, W) float32; weights in HWIO; BN gamma/beta as (C,)."""
    w1, g1, b1, w2, g2, b2 = params
    N, C, H, W = x_nchw.shape
    assert w1.shape[2] == C and w1.shape[3] == C       # stride=1, no downsample => Cin == Cout

    Cp = _round_up(max(C, LANE), LANE)                 # lane-dense channel dim
    W2 = W + 2
    P = (H + 2) * W2                                   # flat padded spatial size
    Pr = _round_up(P, 8)                               # sublane-aligned row count
    margin = _round_up(W + 3, 8)                       # covers max |row shift| = W + 3
    Mr = 2 * margin + Pr

    # --- layout prep (plain XLA, once): NCHW -> NHWC, channel-pad to Cp, spatial zero-pad by 1,
    #     flatten (H+2, W+2) into one row axis, cast to bf16 and bake the conv halo margins
    #     into the HBM layout so pass 1 needs no in-kernel staging copy. ---
    x_nhwc = jnp.transpose(x_nchw, (0, 2, 3, 1))
    xp = jnp.pad(x_nhwc, ((0, 0), (1, 1), (1, 1), (0, Cp - C))).astype(jnp.bfloat16)
    x_flat = jnp.pad(xp.reshape(N, P, Cp), ((0, 0), (margin, margin + (Pr - P)), (0, 0)))

    mask = jnp.asarray(_interior_mask_np(H, W, Pr))    # trace-time constant, (Pr, 1) f32

    pad_c = ((0, 0), (0, 0), (0, Cp - C), (0, Cp - C))
    w1p = jnp.pad(w1, pad_c).astype(jnp.bfloat16)
    w2p = jnp.pad(w2, pad_c).astype(jnp.bfloat16)
    g1p = jnp.pad(g1, (0, Cp - C), constant_values=1.0)
    b1p = jnp.pad(b1, (0, Cp - C))
    g2p = jnp.pad(g2, (0, Cp - C), constant_values=1.0)
    b2p = jnp.pad(b2, (0, Cp - C))

    cparams = pltpu.CompilerParams(dimension_semantics=("parallel",))

    xin_spec = pl.BlockSpec((None, Mr, Cp), lambda i: (i, 0, 0))
    act_spec = pl.BlockSpec((None, Pr, Cp), lambda i: (i, 0, 0))
    mask_spec = pl.BlockSpec((Pr, 1), lambda i: (0, 0))
    vec_spec = pl.BlockSpec((1, Cp), lambda i: (0, 0))
    w_spec = pl.BlockSpec((3, 3, Cp, Cp), lambda i: (0, 0, 0, 0))
    stats_spec = pl.BlockSpec((None, 2, Cp), lambda i: (i, 0, 0))

    # --- pass 1: conv1 + BN1 statistics ---
    kern1 = functools.partial(_conv1_stats_kernel, W=W, Pr=Pr, Cp=Cp, margin=margin)
    y1, st1 = pl.pallas_call(
        kern1,
        grid=(N,),
        in_specs=[xin_spec, mask_spec, w_spec],
        out_specs=(act_spec, stats_spec),
        out_shape=(jax.ShapeDtypeStruct((N, Pr, Cp), jnp.bfloat16),
                   jax.ShapeDtypeStruct((N, 2, Cp), jnp.float32)),
        compiler_params=cparams,
    )(x_flat, mask, w1p)
    scale1, shift1 = _bn_scale_shift(st1, g1p, b1p, N * H * W)

    # --- pass 2: bn1 + relu + conv2 + BN2 statistics ---
    kern2 = functools.partial(_bn_relu_conv2_stats_kernel, W=W, Pr=Pr, Cp=Cp, margin=margin)
    y2, st2 = pl.pallas_call(
        kern2,
        grid=(N,),
        in_specs=[act_spec, mask_spec, vec_spec, vec_spec, w_spec],
        out_specs=(act_spec, stats_spec),
        out_shape=(jax.ShapeDtypeStruct((N, Pr, Cp), jnp.bfloat16),
                   jax.ShapeDtypeStruct((N, 2, Cp), jnp.float32)),
        scratch_shapes=[pltpu.VMEM((Mr, Cp), jnp.bfloat16)],
        compiler_params=cparams,
    )(y1, mask, scale1, shift1, w2p)
    scale2, shift2 = _bn_scale_shift(st2, g2p, b2p, N * H * W)

    # --- pass 3 (plain XLA, per perf review): bn2 + residual + relu fused with the un-pad /
    #     channel-slice / NHWC->NCHW epilogue -> no extra HBM round-trip over the padded tensor.
    y2i = y2[:, :P, :].reshape(N, H + 2, W2, Cp)[:, 1:H + 1, 1:W + 1, :C].astype(jnp.float32)
    out = jnp.maximum(y2i * scale2[0, :C] + shift2[0, :C] + x_nhwc, 0.0)
    return jnp.transpose(out, (0, 3, 1, 2))


def ref_forward(x_nchw, params):
    """Pure-JAX reference mirroring the kernel's precision policy: bf16 conv operands with f32
    accumulation, BN stats from the f32 conv output, BN applied to the bf16-rounded activations
    (the inter-pass storage dtype). Training-mode BatchNorm (biased variance, eps=1e-5)."""
    w1, g1, b1, w2, g2, b2 = params
    x = jnp.transpose(x_nchw, (0, 2, 3, 1))

    def conv(h, w):
        return jax.lax.conv_general_dilated(
            h.astype(jnp.bfloat16), w.astype(jnp.bfloat16), (1, 1), "SAME",
            dimension_numbers=("NHWC", "HWIO", "NHWC"),
            preferred_element_type=jnp.float32)

    def bn(h_f32, g, b):
        mean = jnp.mean(h_f32, axis=(0, 1, 2))
        var = jnp.maximum(jnp.mean(h_f32 * h_f32, axis=(0, 1, 2)) - mean * mean, 0.0)
        scale = g * jax.lax.rsqrt(var + EPS)
        shift = b - mean * scale
        h = h_f32.astype(jnp.bfloat16).astype(jnp.float32)    # inter-pass bf16 rounding
        return h * scale + shift

    h = jax.nn.relu(bn(conv(x, w1), g1, b1))
    out = bn(conv(h, w2), g2, b2)
    return jnp.transpose(jax.nn.relu(out + x), (0, 3, 1, 2))


if __name__ == "__main__":
    # BasicBlock(inplanes=8, planes=8, stride=1, downsample=None)
    N, C, H, W = 2, 8, 16, 16
    key = jax.random.PRNGKey(0)
    ks = jax.random.split(key, 7)

    x = jax.random.normal(ks[0], (N, C, H, W), jnp.float32)
    w1 = 0.1 * jax.random.normal(ks[1], (3, 3, C, C), jnp.float32)   # HWIO
    w2 = 0.1 * jax.random.normal(ks[2], (3, 3, C, C), jnp.float32)
    g1 = 1.0 + 0.1 * jax.random.normal(ks[3], (C,), jnp.float32)
    b1 = 0.1 * jax.random.normal(ks[4], (C,), jnp.float32)
    g2 = 1.0 + 0.1 * jax.random.normal(ks[5], (C,), jnp.float32)
    b2 = 0.1 * jax.random.normal(ks[6], (C,), jnp.float32)
    params = (w1, g1, b1, w2, g2, b2)

    out = jax.block_until_ready(basic_block_forward(x, params))
    ref = jax.block_until_ready(ref_forward(x, params))

    assert out.shape == (N, C, H, W), out.shape
    err = float(jnp.max(jnp.abs(out - ref)))
    # Tolerance accounts for bf16 MXU operands + bf16 inter-pass activations (f32 accumulation
    # and f32 BN statistics in both kernel and reference).
    assert err < 2e-2, err
    print("KERNEL_OK")
</pallas_src>

<mosaic_0001>
module attributes {stable_mosaic.version = 11 : i64} {
  func.func @_conv1_stats_kernel(%arg0: i32, %arg1: memref<1x376x128xbf16, #tpu.memory_space<vmem>>, %arg2: memref<328x1xf32, #tpu.memory_space<vmem>>, %arg3: memref<3x3x128x128xbf16, #tpu.memory_space<vmem>>, %arg4: memref<1x328x128xbf16, #tpu.memory_space<vmem>>, %arg5: memref<1x2x128xf32, #tpu.memory_space<vmem>>) attributes {dimension_semantics = [#tpu.dimension_semantics<parallel>], iteration_bounds = array<i64: 2>, scalar_prefetch = 0 : i64, scratch_operands = 0 : i64, tpu.core_type = #tpu.core_type<tc>, window_params = [{transform_indices = @transform_0, window_bounds = array<i64: 1, 376, 128>}, {pipeline_mode = #tpu.pipeline_mode<synchronous>, transform_indices = @transform_1, window_bounds = array<i64: 328, 1>}, {pipeline_mode = #tpu.pipeline_mode<synchronous>, transform_indices = @transform_2, window_bounds = array<i64: 3, 3, 128, 128>}, {transform_indices = @transform_3, window_bounds = array<i64: 1, 328, 128>}, {transform_indices = @transform_4, window_bounds = array<i64: 1, 2, 128>}]} {
    %c0 = arith.constant 0 : index
    %c5 = arith.constant 5 : index
    %c0_0 = arith.constant 0 : index
    %0 = vector.load %arg1[%c0, %c5, %c0_0] : memref<1x376x128xbf16, #tpu.memory_space<vmem>>, vector<1x328x128xbf16>
    %1 = vector.shape_cast %0 : vector<1x328x128xbf16> to vector<328x128xbf16>
    %c0_1 = arith.constant 0 : index
    %c0_2 = arith.constant 0 : index
    %c0_3 = arith.constant 0 : index
    %c0_4 = arith.constant 0 : index
    %2 = vector.load %arg3[%c0_1, %c0_2, %c0_3, %c0_4] : memref<3x3x128x128xbf16, #tpu.memory_space<vmem>>, vector<1x1x128x128xbf16>
    %3 = vector.shape_cast %2 : vector<1x1x128x128xbf16> to vector<128x128xbf16>
    %cst = arith.constant dense<0.000000e+00> : vector<328x128xf32>
    %4 = tpu.matmul %1, %3, %cst {dimension_numbers = #tpu.dot_dimension_numbers<[1], [0], [0], [1], [0, 0, 1, 1], [], []>} : vector<328x128xbf16>, vector<128x128xbf16>, vector<328x128xf32> -> vector<328x128xf32>
    %c0_5 = arith.constant 0 : index
    %c6 = arith.constant 6 : index
    %c0_6 = arith.constant 0 : index
    %5 = vector.load %arg1[%c0_5, %c6, %c0_6] : memref<1x376x128xbf16, #tpu.memory_space<vmem>>, vector<1x328x128xbf16>
    %6 = vector.shape_cast %5 : vector<1x328x128xbf16> to vector<328x128xbf16>
    %c0_7 = arith.constant 0 : index
    %c1 = arith.constant 1 : index
    %c0_8 = arith.constant 0 : index
    %c0_9 = arith.constant 0 : index
    %7 = vector.load %arg3[%c0_7, %c1, %c0_8, %c0_9] : memref<3x3x128x128xbf16, #tpu.memory_space<vmem>>, vector<1x1x128x128xbf16>
    %8 = vector.shape_cast %7 : vector<1x1x128x128xbf16> to vector<128x128xbf16>
    %cst_10 = arith.constant dense<0.000000e+00> : vector<328x128xf32>
    %9 = tpu.matmul %6, %8, %cst_10 {dimension_numbers = #tpu.dot_dimension_numbers<[1], [0], [0], [1], [0, 0, 1, 1], [], []>} : vector<328x128xbf16>, vector<128x128xbf16>, vector<328x128xf32> -> vector<328x128xf32>
    %10 = arith.addf %4, %9 : vector<328x128xf32>
    %c0_11 = arith.constant 0 : index
    %c7 = arith.constant 7 : index
    %c0_12 = arith.constant 0 : index
    %11 = vector.load %arg1[%c0_11, %c7, %c0_12] : memref<1x376x128xbf16, #tpu.memory_space<vmem>>, vector<1x328x128xbf16>
    %12 = vector.shape_cast %11 : vector<1x328x128xbf16> to vector<328x128xbf16>
    %c0_13 = arith.constant 0 : index
    %c2 = arith.constant 2 : index
    %c0_14 = arith.constant 0 : index
    %c0_15 = arith.constant 0 : index
    %13 = vector.load %arg3[%c0_13, %c2, %c0_14, %c0_15] : memref<3x3x128x128xbf16, #tpu.memory_space<vmem>>, vector<1x1x128x128xbf16>
    %14 = vector.shape_cast %13 : vector<1x1x128x128xbf16> to vector<128x128xbf16>
    %cst_16 = arith.constant dense<0.000000e+00> : vector<328x128xf32>
    %15 = tpu.matmul %12, %14, %cst_16 {dimension_numbers = #tpu.dot_dimension_numbers<[1], [0], [0], [1], [0, 0, 1, 1], [], []>} : vector<328x128xbf16>, vector<128x128xbf16>, vector<328x128xf32> -> vector<328x128xf32>
    %16 = arith.addf %10, %15 : vector<328x128xf32>
    %c0_17 = arith.constant 0 : index
    %c23 = arith.constant 23 : index
    %c0_18 = arith.constant 0 : index
    %17 = vector.load %arg1[%c0_17, %c23, %c0_18] : memref<1x376x128xbf16, #tpu.memory_space<vmem>>, vector<1x328x128xbf16>
    %18 = vector.shape_cast %17 : vector<1x328x128xbf16> to vector<328x128xbf16>
    %c1_19 = arith.constant 1 : index
    %c0_20 = arith.constant 0 : index
    %c0_21 = arith.constant 0 : index
    %c0_22 = arith.constant 0 : index
    %19 = vector.load %arg3[%c1_19, %c0_20, %c0_21, %c0_22] : memref<3x3x128x128xbf16, #tpu.memory_space<vmem>>, vector<1x1x128x128xbf16>
    %20 = vector.shape_cast %19 : vector<1x1x128x128xbf16> to vector<128x128xbf16>
    %cst_23 = arith.constant dense<0.000000e+00> : vector<328x128xf32>
    %21 = tpu.matmul %18, %20, %cst_23 {dimension_numbers = #tpu.dot_dimension_numbers<[1], [0], [0], [1], [0, 0, 1, 1], [], []>} : vector<328x128xbf16>, vector<128x128xbf16>, vector<328x128xf32> -> vector<328x128xf32>
    %22 = arith.addf %16, %21 : vector<328x128xf32>
    %c0_24 = arith.constant 0 : index
    %c24 = arith.constant 24 : index
    %c0_25 = arith.constant 0 : index
    %23 = vector.load %arg1[%c0_24, %c24, %c0_25] : memref<1x376x128xbf16, #tpu.memory_space<vmem>>, vector<1x328x128xbf16>
    %24 = vector.shape_cast %23 : vector<1x328x128xbf16> to vector<328x128xbf16>
    %c1_26 = arith.constant 1 : index
    %c1_27 = arith.constant 1 : index
    %c0_28 = arith.constant 0 : index
    %c0_29 = arith.constant 0 : index
    %25 = vector.load %arg3[%c1_26, %c1_27, %c0_28, %c0_29] : memref<3x3x128x128xbf16, #tpu.memory_space<vmem>>, vector<1x1x128x128xbf16>
    %26 = vector.shape_cast %25 : vector<1x1x128x128xbf16> to vector<128x128xbf16>
    %cst_30 = arith.constant dense<0.000000e+00> : vector<328x128xf32>
    %27 = tpu.matmul %24, %26, %cst_30 {dimension_numbers = #tpu.dot_dimension_numbers<[1], [0], [0], [1], [0, 0, 1, 1], [], []>} : vector<328x128xbf16>, vector<128x128xbf16>, vector<328x128xf32> -> vector<328x128xf32>
    %28 = arith.addf %22, %27 : vector<328x128xf32>
    %c0_31 = arith.constant 0 : index
    %c25 = arith.constant 25 : index
    %c0_32 = arith.constant 0 : index
    %29 = vector.load %arg1[%c0_31, %c25, %c0_32] : memref<1x376x128xbf16, #tpu.memory_space<vmem>>, vector<1x328x128xbf16>
    %30 = vector.shape_cast %29 : vector<1x328x128xbf16> to vector<328x128xbf16>
    %c1_33 = arith.constant 1 : index
    %c2_34 = arith.constant 2 : index
    %c0_35 = arith.constant 0 : index
    %c0_36 = arith.constant 0 : index
    %31 = vector.load %arg3[%c1_33, %c2_34, %c0_35, %c0_36] : memref<3x3x128x128xbf16, #tpu.memory_space<vmem>>, vector<1x1x128x128xbf16>
    %32 = vector.shape_cast %31 : vector<1x1x128x128xbf16> to vector<128x128xbf16>
    %cst_37 = arith.constant dense<0.000000e+00> : vector<328x128xf32>
    %33 = tpu.matmul %30, %32, %cst_37 {dimension_numbers = #tpu.dot_dimension_numbers<[1], [0], [0], [1], [0, 0, 1, 1], [], []>} : vector<328x128xbf16>, vector<128x128xbf16>, vector<328x128xf32> -> vector<328x128xf32>
    %34 = arith.addf %28, %33 : vector<328x128xf32>
    %c0_38 = arith.constant 0 : index
    %c41 = arith.constant 41 : index
    %c0_39 = arith.constant 0 : index
    %35 = vector.load %arg1[%c0_38, %c41, %c0_39] : memref<1x376x128xbf16, #tpu.memory_space<vmem>>, vector<1x328x128xbf16>
    %36 = vector.shape_cast %35 : vector<1x328x128xbf16> to vector<328x128xbf16>
    %c2_40 = arith.constant 2 : index
    %c0_41 = arith.constant 0 : index
    %c0_42 = arith.constant 0 : index
    %c0_43 = arith.constant 0 : index
    %37 = vector.load %arg3[%c2_40, %c0_41, %c0_42, %c0_43] : memref<3x3x128x128xbf16, #tpu.memory_space<vmem>>, vector<1x1x128x128xbf16>
    %38 = vector.shape_cast %37 : vector<1x1x128x128xbf16> to vector<128x128xbf16>
    %cst_44 = arith.constant dense<0.000000e+00> : vector<328x128xf32>
    %39 = tpu.matmul %36, %38, %cst_44 {dimension_numbers = #tpu.dot_dimension_numbers<[1], [0], [0], [1], [0, 0, 1, 1], [], []>} : vector<328x128xbf16>, vector<128x128xbf16>, vector<328x128xf32> -> vector<328x128xf32>
    %40 = arith.addf %34, %39 : vector<328x128xf32>
    %c0_45 = arith.constant 0 : index
    %c42 = arith.constant 42 : index
    %c0_46 = arith.constant 0 : index
    %41 = vector.load %arg1[%c0_45, %c42, %c0_46] : memref<1x376x128xbf16, #tpu.memory_space<vmem>>, vector<1x328x128xbf16>
    %42 = vector.shape_cast %41 : vector<1x328x128xbf16> to vector<328x128xbf16>
    %c2_47 = arith.constant 2 : index
    %c1_48 = arith.constant 1 : index
    %c0_49 = arith.constant 0 : index
    %c0_50 = arith.constant 0 : index
    %43 = vector.load %arg3[%c2_47, %c1_48, %c0_49, %c0_50] : memref<3x3x128x128xbf16, #tpu.memory_space<vmem>>, vector<1x1x128x128xbf16>
    %44 = vector.shape_cast %43 : vector<1x1x128x128xbf16> to vector<128x128xbf16>
    %cst_51 = arith.constant dense<0.000000e+00> : vector<328x128xf32>
    %45 = tpu.matmul %42, %44, %cst_51 {dimension_numbers = #tpu.dot_dimension_numbers<[1], [0], [0], [1], [0, 0, 1, 1], [], []>} : vector<328x128xbf16>, vector<128x128xbf16>, vector<328x128xf32> -> vector<328x128xf32>
    %46 = arith.addf %40, %45 : vector<328x128xf32>
    %c0_52 = arith.constant 0 : index
    %c43 = arith.constant 43 : index
    %c0_53 = arith.constant 0 : index
    %47 = vector.load %arg1[%c0_52, %c43, %c0_53] : memref<1x376x128xbf16, #tpu.memory_space<vmem>>, vector<1x328x128xbf16>
    %48 = vector.shape_cast %47 : vector<1x328x128xbf16> to vector<328x128xbf16>
    %c2_54 = arith.constant 2 : index
    %c2_55 = arith.constant 2 : index
    %c0_56 = arith.constant 0 : index
    %c0_57 = arith.constant 0 : index
    %49 = vector.load %arg3[%c2_54, %c2_55, %c0_56, %c0_57] : memref<3x3x128x128xbf16, #tpu.memory_space<vmem>>, vector<1x1x128x128xbf16>
    %50 = vector.shape_cast %49 : vector<1x1x128x128xbf16> to vector<128x128xbf16>
    %cst_58 = arith.constant dense<0.000000e+00> : vector<328x128xf32>
    %51 = tpu.matmul %48, %50, %cst_58 {dimension_numbers = #tpu.dot_dimension_numbers<[1], [0], [0], [1], [0, 0, 1, 1], [], []>} : vector<328x128xbf16>, vector<128x128xbf16>, vector<328x128xf32> -> vector<328x128xf32>
    %52 = arith.addf %46, %51 : vector<328x128xf32>
    %c0_59 = arith.constant 0 : index
    %c0_60 = arith.constant 0 : index
    %53 = vector.load %arg2[%c0_59, %c0_60] : memref<328x1xf32, #tpu.memory_space<vmem>>, vector<328x1xf32>
    %54 = vector.broadcast %53 : vector<328x1xf32> to vector<328x128xf32>
    %55 = arith.mulf %52, %54 : vector<328x128xf32>
    %56 = arith.truncf %55 : vector<328x128xf32> to vector<328x128xbf16>
    %c0_61 = arith.constant 0 : index
    %c0_62 = arith.constant 0 : index
    %c0_63 = arith.constant 0 : index
    %57 = vector.load %arg4[%c0_61, %c0_62, %c0_63] : memref<1x328x128xbf16, #tpu.memory_space<vmem>>, vector<1x328x128xbf16>
    %58 = vector.shape_cast %57 : vector<1x328x128xbf16> to vector<328x128xbf16>
    %59 = vector.shape_cast %56 : vector<328x128xbf16> to vector<1x328x128xbf16>
    tpu.vector_store %arg4[%c0_61, %c0_62, %c0_63], %59 {strides = array<i32>} : memref<1x328x128xbf16, #tpu.memory_space<vmem>>, vector<1x328x128xbf16>,
    %cst_64 = arith.constant dense<0.000000e+00> : vector<128xf32>
    %60 = vector.multi_reduction <add>, %55, %cst_64 [0] : vector<328x128xf32> to vector<128xf32>
    %61 = vector.shape_cast %60 : vector<128xf32> to vector<1x128xf32>
    %62 = arith.mulf %55, %55 : vector<328x128xf32>
    %cst_65 = arith.constant dense<0.000000e+00> : vector<128xf32>
    %63 = vector.multi_reduction <add>, %62, %cst_65 [0] : vector<328x128xf32> to vector<128xf32>
    %64 = vector.shape_cast %63 : vector<128xf32> to vector<1x128xf32>
    %65 = tpu.concatenate %61, %64 in 0 : vector<1x128xf32>, vector<1x128xf32> -> vector<2x128xf32>
    %c0_66 = arith.constant 0 : index
    %c0_67 = arith.constant 0 : index
    %c0_68 = arith.constant 0 : index
    %66 = vector.load %arg5[%c0_66, %c0_67, %c0_68] : memref<1x2x128xf32, #tpu.memory_space<vmem>>, vector<1x2x128xf32>
    %67 = vector.shape_cast %66 : vector<1x2x128xf32> to vector<2x128xf32>
    %68 = vector.shape_cast %65 : vector<2x128xf32> to vector<1x2x128xf32>
    tpu.vector_store %arg5[%c0_66, %c0_67, %c0_68], %68 {strides = array<i32>} : memref<1x2x128xf32, #tpu.memory_space<vmem>>, vector<1x2x128xf32>,
    return
  }
  func.func @transform_0(%arg0: i32) -> (i32, i32, i32) {
    %c0_i32 = arith.constant 0 : i32
    %c0_i32_0 = arith.constant 0 : i32
    %c0_i32_1 = arith.constant 0 : i32
    return %arg0, %c0_i32, %c0_i32_0 : i32, i32, i32
  }
  func.func @transform_1(%arg0: i32) -> (i32, i32) {
    %c0_i32 = arith.constant 0 : i32
    %c0_i32_0 = arith.constant 0 : i32
    %c0_i32_1 = arith.constant 0 : i32
    return %c0_i32, %c0_i32_0 : i32, i32
  }
  func.func @transform_2(%arg0: i32) -> (i32, i32, i32, i32) {
    %c0_i32 = arith.constant 0 : i32
    %c0_i32_0 = arith.constant 0 : i32
    %c0_i32_1 = arith.constant 0 : i32
    %c0_i32_2 = arith.constant 0 : i32
    %c0_i32_3 = arith.constant 0 : i32
    return %c0_i32, %c0_i32_0, %c0_i32_1, %c0_i32_2 : i32, i32, i32, i32
  }
  func.func @transform_3(%arg0: i32) -> (i32, i32, i32) {
    %c0_i32 = arith.constant 0 : i32
    %c0_i32_0 = arith.constant 0 : i32
    %c0_i32_1 = arith.constant 0 : i32
    return %arg0, %c0_i32, %c0_i32_0 : i32, i32, i32
  }
  func.func @transform_4(%arg0: i32) -> (i32, i32, i32) {
    %c0_i32 = arith.constant 0 : i32
    %c0_i32_0 = arith.constant 0 : i32
    %c0_i32_1 = arith.constant 0 : i32
    return %arg0, %c0_i32, %c0_i32_0 : i32, i32, i32
  }
}

module attributes {stable_mosaic.version = 11 : i64} {
  func.func @_bn_relu_conv2_stats_kernel(%arg0: i32, %arg1: memref<1x328x128xbf16, #tpu.memory_space<vmem>>, %arg2: memref<328x1xf32, #tpu.memory_space<vmem>>, %arg3: memref<1x128xf32, #tpu.memory_space<vmem>>, %arg4: memref<1x128xf32, #tpu.memory_space<vmem>>, %arg5: memref<3x3x128x128xbf16, #tpu.memory_space<vmem>>, %arg6: memref<1x328x128xbf16, #tpu.memory_space<vmem>>, %arg7: memref<1x2x128xf32, #tpu.memory_space<vmem>>, %arg8: memref<376x128xbf16, #tpu.memory_space<vmem>>) attributes {dimension_semantics = [#tpu.dimension_semantics<parallel>], iteration_bounds = array<i64: 2>, scalar_prefetch = 0 : i64, scratch_operands = 1 : i64, tpu.core_type = #tpu.core_type<tc>, window_params = [{transform_indices = @transform_0, window_bounds = array<i64: 1, 328, 128>}, {pipeline_mode = #tpu.pipeline_mode<synchronous>, transform_indices = @transform_1, window_bounds = array<i64: 328, 1>}, {pipeline_mode = #tpu.pipeline_mode<synchronous>, transform_indices = @transform_2, window_bounds = array<i64: 1, 128>}, {pipeline_mode = #tpu.pipeline_mode<synchronous>, transform_indices = @transform_3, window_bounds = array<i64: 1, 128>}, {pipeline_mode = #tpu.pipeline_mode<synchronous>, transform_indices = @transform_4, window_bounds = array<i64: 3, 3, 128, 128>}, {transform_indices = @transform_5, window_bounds = array<i64: 1, 328, 128>}, {transform_indices = @transform_6, window_bounds = array<i64: 1, 2, 128>}]} {
    %c0_i32 = arith.constant 0 : i32
    %0 = arith.cmpi eq, %arg0, %c0_i32 : i32
    %1 = arith.extui %0 : i1 to i32
    %c0_i32_0 = arith.constant 0 : i32
    %2 = arith.cmpi ne, %1, %c0_i32_0 : i32
    scf.if %2 {
      %cst_73 = arith.constant 0.000000e+00 : bf16
      %79 = vector.broadcast %cst_73 : bf16 to vector<24x128xbf16>
      %c0_74 = arith.constant 0 : index
      %c0_75 = arith.constant 0 : index
      %80 = vector.load %arg8[%c0_74, %c0_75] : memref<376x128xbf16, #tpu.memory_space<vmem>>, vector<24x128xbf16>
      tpu.vector_store %arg8[%c0_74, %c0_75], %79 {strides = array<i32>} : memref<376x128xbf16, #tpu.memory_space<vmem>>, vector<24x128xbf16>,
      %cst_76 = arith.constant 0.000000e+00 : bf16
      %81 = vector.broadcast %cst_76 : bf16 to vector<24x128xbf16>
      %c352 = arith.constant 352 : index
      %c0_77 = arith.constant 0 : index
      %82 = vector.load %arg8[%c352, %c0_77] : memref<376x128xbf16, #tpu.memory_space<vmem>>, vector<24x128xbf16>
      tpu.vector_store %arg8[%c352, %c0_77], %81 {strides = array<i32>} : memref<376x128xbf16, #tpu.memory_space<vmem>>, vector<24x128xbf16>,
    } else {
    }
    %c0 = arith.constant 0 : index
    %c0_1 = arith.constant 0 : index
    %c0_2 = arith.constant 0 : index
    %3 = vector.load %arg1[%c0, %c0_1, %c0_2] : memref<1x328x128xbf16, #tpu.memory_space<vmem>>, vector<1x328x128xbf16>
    %4 = vector.shape_cast %3 : vector<1x328x128xbf16> to vector<328x128xbf16>
    %5 = arith.extf %4 : vector<328x128xbf16> to vector<328x128xf32>
    %c0_3 = arith.constant 0 : index
    %c0_4 = arith.constant 0 : index
    %6 = vector.load %arg3[%c0_3, %c0_4] : memref<1x128xf32, #tpu.memory_space<vmem>>, vector<1x128xf32>
    %7 = vector.broadcast %6 : vector<1x128xf32> to vector<328x128xf32>
    %8 = arith.mulf %5, %7 : vector<328x128xf32>
    %c0_5 = arith.constant 0 : index
    %c0_6 = arith.constant 0 : index
    %9 = vector.load %arg4[%c0_5, %c0_6] : memref<1x128xf32, #tpu.memory_space<vmem>>, vector<1x128xf32>
    %10 = vector.broadcast %9 : vector<1x128xf32> to vector<328x128xf32>
    %11 = arith.addf %8, %10 : vector<328x128xf32>
    %cst = arith.constant 0.000000e+00 : f32
    %12 = vector.broadcast %cst : f32 to vector<328x128xf32>
    %13 = arith.maximumf %11, %12 : vector<328x128xf32>
    %c0_7 = arith.constant 0 : index
    %c0_8 = arith.constant 0 : index
    %14 = vector.load %arg2[%c0_7, %c0_8] : memref<328x1xf32, #tpu.memory_space<vmem>>, vector<328x1xf32>
    %15 = vector.broadcast %14 : vector<328x1xf32> to vector<328x128xf32>
    %16 = arith.mulf %13, %15 : vector<328x128xf32>
    %17 = arith.truncf %16 : vector<328x128xf32> to vector<328x128xbf16>
    %c24 = arith.constant 24 : index
    %c0_9 = arith.constant 0 : index
    %18 = vector.load %arg8[%c24, %c0_9] : memref<376x128xbf16, #tpu.memory_space<vmem>>, vector<328x128xbf16>
    tpu.vector_store %arg8[%c24, %c0_9], %17 {strides = array<i32>} : memref<376x128xbf16, #tpu.memory_space<vmem>>, vector<328x128xbf16>,
    %c5 = arith.constant 5 : index
    %c0_10 = arith.constant 0 : index
    %19 = vector.load %arg8[%c5, %c0_10] : memref<376x128xbf16, #tpu.memory_space<vmem>>, vector<328x128xbf16>
    %c0_11 = arith.constant 0 : index
    %c0_12 = arith.constant 0 : index
    %c0_13 = arith.constant 0 : index
    %c0_14 = arith.constant 0 : index
    %20 = vector.load %arg5[%c0_11, %c0_12, %c0_13, %c0_14] : memref<3x3x128x128xbf16, #tpu.memory_space<vmem>>, vector<1x1x128x128xbf16>
    %21 = vector.shape_cast %20 : vector<1x1x128x128xbf16> to vector<128x128xbf16>
    %cst_15 = arith.constant dense<0.000000e+00> : vector<328x128xf32>
    %22 = tpu.matmul %19, %21, %cst_15 {dimension_numbers = #tpu.dot_dimension_numbers<[1], [0], [0], [1], [0, 0, 1, 1], [], []>} : vector<328x128xbf16>, vector<128x128xbf16>, vector<328x128xf32> -> vector<328x128xf32>
    %c6 = arith.constant 6 : index
    %c0_16 = arith.constant 0 : index
    %23 = vector.load %arg8[%c6, %c0_16] : memref<376x128xbf16, #tpu.memory_space<vmem>>, vector<328x128xbf16>
    %c0_17 = arith.constant 0 : index
    %c1 = arith.constant 1 : index
    %c0_18 = arith.constant 0 : index
    %c0_19 = arith.constant 0 : index
    %24 = vector.load %arg5[%c0_17, %c1, %c0_18, %c0_19] : memref<3x3x128x128xbf16, #tpu.memory_space<vmem>>, vector<1x1x128x128xbf16>
    %25 = vector.shape_cast %24 : vector<1x1x128x128xbf16> to vector<128x128xbf16>
    %cst_20 = arith.constant dense<0.000000e+00> : vector<328x128xf32>
    %26 = tpu.matmul %23, %25, %cst_20 {dimension_numbers = #tpu.dot_dimension_numbers<[1], [0], [0], [1], [0, 0, 1, 1], [], []>} : vector<328x128xbf16>, vector<128x128xbf16>, vector<328x128xf32> -> vector<328x128xf32>
    %27 = arith.addf %22, %26 : vector<328x128xf32>
    %c7 = arith.constant 7 : index
    %c0_21 = arith.constant 0 : index
    %28 = vector.load %arg8[%c7, %c0_21] : memref<376x128xbf16, #tpu.memory_space<vmem>>, vector<328x128xbf16>
    %c0_22 = arith.constant 0 : index
    %c2 = arith.constant 2 : index
    %c0_23 = arith.constant 0 : index
    %c0_24 = arith.constant 0 : index
    %29 = vector.load %arg5[%c0_22, %c2, %c0_23, %c0_24] : memref<3x3x128x128xbf16, #tpu.memory_space<vmem>>, vector<1x1x128x128xbf16>
    %30 = vector.shape_cast %29 : vector<1x1x128x128xbf16> to vector<128x128xbf16>
    %cst_25 = arith.constant dense<0.000000e+00> : vector<328x128xf32>
    %31 = tpu.matmul %28, %30, %cst_25 {dimension_numbers = #tpu.dot_dimension_numbers<[1], [0], [0], [1], [0, 0, 1, 1], [], []>} : vector<328x128xbf16>, vector<128x128xbf16>, vector<328x128xf32> -> vector<328x128xf32>
    %32 = arith.addf %27, %31 : vector<328x128xf32>
    %c23 = arith.constant 23 : index
    %c0_26 = arith.constant 0 : index
    %33 = vector.load %arg8[%c23, %c0_26] : memref<376x128xbf16, #tpu.memory_space<vmem>>, vector<328x128xbf16>
    %c1_27 = arith.constant 1 : index
    %c0_28 = arith.constant 0 : index
    %c0_29 = arith.constant 0 : index
    %c0_30 = arith.constant 0 : index
    %34 = vector.load %arg5[%c1_27, %c0_28, %c0_29, %c0_30] : memref<3x3x128x128xbf16, #tpu.memory_space<vmem>>, vector<1x1x128x128xbf16>
    %35 = vector.shape_cast %34 : vector<1x1x128x128xbf16> to vector<128x128xbf16>
    %cst_31 = arith.constant dense<0.000000e+00> : vector<328x128xf32>
    %36 = tpu.matmul %33, %35, %cst_31 {dimension_numbers = #tpu.dot_dimension_numbers<[1], [0], [0], [1], [0, 0, 1, 1], [], []>} : vector<328x128xbf16>, vector<128x128xbf16>, vector<328x128xf32> -> vector<328x128xf32>
    %37 = arith.addf %32, %36 : vector<328x128xf32>
    %c24_32 = arith.constant 24 : index
    %c0_33 = arith.constant 0 : index
    %38 = vector.load %arg8[%c24_32, %c0_33] : memref<376x128xbf16, #tpu.memory_space<vmem>>, vector<328x128xbf16>
    %c1_34 = arith.constant 1 : index
    %c1_35 = arith.constant 1 : index
    %c0_36 = arith.constant 0 : index
    %c0_37 = arith.constant 0 : index
    %39 = vector.load %arg5[%c1_34, %c1_35, %c0_36, %c0_37] : memref<3x3x128x128xbf16, #tpu.memory_space<vmem>>, vector<1x1x128x128xbf16>
    %40 = vector.shape_cast %39 : vector<1x1x128x128xbf16> to vector<128x128xbf16>
    %cst_38 = arith.constant dense<0.000000e+00> : vector<328x128xf32>
    %41 = tpu.matmul %38, %40, %cst_38 {dimension_numbers = #tpu.dot_dimension_numbers<[1], [0], [0], [1], [0, 0, 1, 1], [], []>} : vector<328x128xbf16>, vector<128x128xbf16>, vector<328x128xf32> -> vector<328x128xf32>
    %42 = arith.addf %37, %41 : vector<328x128xf32>
    %c25 = arith.constant 25 : index
    %c0_39 = arith.constant 0 : index
    %43 = vector.load %arg8[%c25, %c0_39] : memref<376x128xbf16, #tpu.memory_space<vmem>>, vector<328x128xbf16>
    %c1_40 = arith.constant 1 : index
    %c2_41 = arith.constant 2 : index
    %c0_42 = arith.constant 0 : index
    %c0_43 = arith.constant 0 : index
    %44 = vector.load %arg5[%c1_40, %c2_41, %c0_42, %c0_43] : memref<3x3x128x128xbf16, #tpu.memory_space<vmem>>, vector<1x1x128x128xbf16>
    %45 = vector.shape_cast %44 : vector<1x1x128x128xbf16> to vector<128x128xbf16>
    %cst_44 = arith.constant dense<0.000000e+00> : vector<328x128xf32>
    %46 = tpu.matmul %43, %45, %cst_44 {dimension_numbers = #tpu.dot_dimension_numbers<[1], [0], [0], [1], [0, 0, 1, 1], [], []>} : vector<328x128xbf16>, vector<128x128xbf16>, vector<328x128xf32> -> vector<328x128xf32>
    %47 = arith.addf %42, %46 : vector<328x128xf32>
    %c41 = arith.constant 41 : index
    %c0_45 = arith.constant 0 : index
    %48 = vector.load %arg8[%c41, %c0_45] : memref<376x128xbf16, #tpu.memory_space<vmem>>, vector<328x128xbf16>
    %c2_46 = arith.constant 2 : index
    %c0_47 = arith.constant 0 : index
    %c0_48 = arith.constant 0 : index
    %c0_49 = arith.constant 0 : index
    %49 = vector.load %arg5[%c2_46, %c0_47, %c0_48, %c0_49] : memref<3x3x128x128xbf16, #tpu.memory_space<vmem>>, vector<1x1x128x128xbf16>
    %50 = vector.shape_cast %49 : vector<1x1x128x128xbf16> to vector<128x128xbf16>
    %cst_50 = arith.constant dense<0.000000e+00> : vector<328x128xf32>
    %51 = tpu.matmul %48, %50, %cst_50 {dimension_numbers = #tpu.dot_dimension_numbers<[1], [0], [0], [1], [0, 0, 1, 1], [], []>} : vector<328x128xbf16>, vector<128x128xbf16>, vector<328x128xf32> -> vector<328x128xf32>
    %52 = arith.addf %47, %51 : vector<328x128xf32>
    %c42 = arith.constant 42 : index
    %c0_51 = arith.constant 0 : index
    %53 = vector.load %arg8[%c42, %c0_51] : memref<376x128xbf16, #tpu.memory_space<vmem>>, vector<328x128xbf16>
    %c2_52 = arith.constant 2 : index
    %c1_53 = arith.constant 1 : index
    %c0_54 = arith.constant 0 : index
    %c0_55 = arith.constant 0 : index
    %54 = vector.load %arg5[%c2_52, %c1_53, %c0_54, %c0_55] : memref<3x3x128x128xbf16, #tpu.memory_space<vmem>>, vector<1x1x128x128xbf16>
    %55 = vector.shape_cast %54 : vector<1x1x128x128xbf16> to vector<128x128xbf16>
    %cst_56 = arith.constant dense<0.000000e+00> : vector<328x128xf32>
    %56 = tpu.matmul %53, %55, %cst_56 {dimension_numbers = #tpu.dot_dimension_numbers<[1], [0], [0], [1], [0, 0, 1, 1], [], []>} : vector<328x128xbf16>, vector<128x128xbf16>, vector<328x128xf32> -> vector<328x128xf32>
    %57 = arith.addf %52, %56 : vector<328x128xf32>
    %c43 = arith.constant 43 : index
    %c0_57 = arith.constant 0 : index
    %58 = vector.load %arg8[%c43, %c0_57] : memref<376x128xbf16, #tpu.memory_space<vmem>>, vector<328x128xbf16>
    %c2_58 = arith.constant 2 : index
    %c2_59 = arith.constant 2 : index
    %c0_60 = arith.constant 0 : index
    %c0_61 = arith.constant 0 : index
    %59 = vector.load %arg5[%c2_58, %c2_59, %c0_60, %c0_61] : memref<3x3x128x128xbf16, #tpu.memory_space<vmem>>, vector<1x1x128x128xbf16>
    %60 = vector.shape_cast %59 : vector<1x1x128x128xbf16> to vector<128x128xbf16>
    %cst_62 = arith.constant dense<0.000000e+00> : vector<328x128xf32>
    %61 = tpu.matmul %58, %60, %cst_62 {dimension_numbers = #tpu.dot_dimension_numbers<[1], [0], [0], [1], [0, 0, 1, 1], [], []>} : vector<328x128xbf16>, vector<128x128xbf16>, vector<328x128xf32> -> vector<328x128xf32>
    %62 = arith.addf %57, %61 : vector<328x128xf32>
    %c0_63 = arith.constant 0 : index
    %c0_64 = arith.constant 0 : index
    %63 = vector.load %arg2[%c0_63, %c0_64] : memref<328x1xf32, #tpu.memory_space<vmem>>, vector<328x1xf32>
    %64 = vector.broadcast %63 : vector<328x1xf32> to vector<328x128xf32>
    %65 = arith.mulf %62, %64 : vector<328x128xf32>
    %66 = arith.truncf %65 : vector<328x128xf32> to vector<328x128xbf16>
    %c0_65 = arith.constant 0 : index
    %c0_66 = arith.constant 0 : index
    %c0_67 = arith.constant 0 : index
    %67 = vector.load %arg6[%c0_65, %c0_66, %c0_67] : memref<1x328x128xbf16, #tpu.memory_space<vmem>>, vector<1x328x128xbf16>
    %68 = vector.shape_cast %67 : vector<1x328x128xbf16> to vector<328x128xbf16>
    %69 = vector.shape_cast %66 : vector<328x128xbf16> to vector<1x328x128xbf16>
    tpu.vector_store %arg6[%c0_65, %c0_66, %c0_67], %69 {strides = array<i32>} : memref<1x328x128xbf16, #tpu.memory_space<vmem>>, vector<1x328x128xbf16>,
    %cst_68 = arith.constant dense<0.000000e+00> : vector<128xf32>
    %70 = vector.multi_reduction <add>, %65, %cst_68 [0] : vector<328x128xf32> to vector<128xf32>
    %71 = vector.shape_cast %70 : vector<128xf32> to vector<1x128xf32>
    %72 = arith.mulf %65, %65 : vector<328x128xf32>
    %cst_69 = arith.constant dense<0.000000e+00> : vector<128xf32>
    %73 = vector.multi_reduction <add>, %72, %cst_69 [0] : vector<328x128xf32> to vector<128xf32>
    %74 = vector.shape_cast %73 : vector<128xf32> to vector<1x128xf32>
    %75 = tpu.concatenate %71, %74 in 0 : vector<1x128xf32>, vector<1x128xf32> -> vector<2x128xf32>
    %c0_70 = arith.constant 0 : index
    %c0_71 = arith.constant 0 : index
    %c0_72 = arith.constant 0 : index
    %76 = vector.load %arg7[%c0_70, %c0_71, %c0_72] : memref<1x2x128xf32, #tpu.memory_space<vmem>>, vector<1x2x128xf32>
    %77 = vector.shape_cast %76 : vector<1x2x128xf32> to vector<2x128xf32>
    %78 = vector.shape_cast %75 : vector<2x128xf32> to vector<1x2x128xf32>
    tpu.vector_store %arg7[%c0_70, %c0_71, %c0_72], %78 {strides = array<i32>} : memref<1x2x128xf32, #tpu.memory_space<vmem>>, vector<1x2x128xf32>,
    return
  }
  func.func @transform_0(%arg0: i32) -> (i32, i32, i32) {
    %c0_i32 = arith.constant 0 : i32
    %c0_i32_0 = arith.constant 0 : i32
    %c0_i32_1 = arith.constant 0 : i32
    return %arg0, %c0_i32, %c0_i32_0 : i32, i32, i32
  }
  func.func @transform_1(%arg0: i32) -> (i32, i32) {
    %c0_i32 = arith.constant 0 : i32
    %c0_i32_0 = arith.constant 0 : i32
    %c0_i32_1 = arith.constant 0 : i32
    return %c0_i32, %c0_i32_0 : i32, i32
  }
  func.func @transform_2(%arg0: i32) -> (i32, i32) {
    %c0_i32 = arith.constant 0 : i32
    %c0_i32_0 = arith.constant 0 : i32
    %c0_i32_1 = arith.constant 0 : i32
    return %c0_i32, %c0_i32_0 : i32, i32
  }
  func.func @transform_3(%arg0: i32) -> (i32, i32) {
    %c0_i32 = arith.constant 0 : i32
    %c0_i32_0 = arith.constant 0 : i32
    %c0_i32_1 = arith.constant 0 : i32
    return %c0_i32, %c0_i32_0 : i32, i32
  }
  func.func @transform_4(%arg0: i32) -> (i32, i32, i32, i32) {
    %c0_i32 = arith.constant 0 : i32
    %c0_i32_0 = arith.constant 0 : i32
    %c0_i32_1 = arith.constant 0 : i32
    %c0_i32_2 = arith.constant 0 : i32
    %c0_i32_3 = arith.constant 0 : i32
    return %c0_i32, %c0_i32_0, %c0_i32_1, %c0_i32_2 : i32, i32, i32, i32
  }
  func.func @transform_5(%arg0: i32) -> (i32, i32, i32) {
    %c0_i32 = arith.constant 0 : i32
    %c0_i32_0 = arith.constant 0 : i32
    %c0_i32_1 = arith.constant 0 : i32
    return %arg0, %c0_i32, %c0_i32_0 : i32, i32, i32
  }
  func.func @transform_6(%arg0: i32) -> (i32, i32, i32) {
    %c0_i32 = arith.constant 0 : i32
    %c0_i32_0 = arith.constant 0 : i32
    %c0_i32_1 = arith.constant 0 : i32
    return %arg0, %c0_i32, %c0_i32_0 : i32, i32, i32
  }
}

</mosaic_0001>

<llo_original>
// kernel: basic_block_forward.2
$region0: #{basic_block_forward.2}
  #allocation0 [shape = 'u32[]', space=smem, size = 0x4, offset = 0x4, fixed_abs, tag = 'smem constant byte address 0x4 - core index']
  #allocation1 [shape = 'u32[144,128]{1,0:T(1,128)}', space=vmem, size = 0x12000, scoped, tag = 'internal scratch']
  %s0 = inlined_call_operand.vmem [shape: bf16[2,376,128], index: 0, kind: input, shape index: {}]
  %s1 = inlined_call_operand.vmem [shape: f32[328,1], index: 1, kind: input, shape index: {}]
  %s2 = inlined_call_operand.vmem [shape: bf16[3,3,128,128], index: 2, kind: input, shape index: {}]
  %s3 = inlined_call_operand.vmem [shape: bf16[2,328,128], index: 3, kind: output, shape index: {0}]
  %s4 = inlined_call_operand.vmem [shape: f32[2,2,128], index: 4, kind: output, shape index: {1}]
  %5 = xla_tuple %s3, %s4
  %s6 = sld [smem:[#allocation0]]
  $region53: #{basic_block_forward.2} parent=0
    _
  %s8 = ssub.s32 1, %s6
  %s9 = scalar_select 0, %s8, %s6
  loop: start=0, step=1, limit=4
  $region2: #{basic_block_forward.2} parent=0 // loop_pre_header
    _
  $region3: #{basic_block_forward.2} parent=0 // loop_header
    %s11 = sphi 0, %s15
    %p12 = scmp.ge.s32.totalorder %s11, 4
    %s21 = sphi 0, %s23
    %s24 = sphi 0, %s21
    %s25 = sphi 0, %s24
    %s41 = sphi 0, %s25
    %s45 = sphi 0, %s45
    %s47 = sphi 0, %s45
    %s48 = sphi 0, %s47
    %s62 = sphi 0, %s48
    %s66 = sphi 0, %s66
    %s68 = sphi 0, %s66
    %s69 = sphi 0, %s68
    %s83 = sphi 0, %s69
    %s89 = sphi 0, %s91
    %s92 = sphi 0, %s89
    %s93 = sphi 0, %s92
    %s109 = sphi 0, %s93
    %s115 = sphi 0, %s117
    %s118 = sphi 0, %s115
    %s119 = sphi 0, %s118
    %s135 = sphi 0, %s119
  $region4: #{basic_block_forward.2} parent=0 // loop_header_branch
    %14 = sbr.rel (%p12) target = $region8
  $region5: #{basic_block_forward.2} parent=0 // loop_body
    %s16 = ssub.s32 %s11, 1
    %s17 = ssub.s32 %s11, 2
    %s18 = sadd.s32 %s11, 1
    %s19 = ssub.s32 %s11, %s18
    %p20 = scmp.eq.s32.totalorder %s19, 0
    %s22 = sadd.s32 %s21, 1
    %s23 = scalar_select %p20, %s21, %s22
    %p26 = pneg %p20
    %p27 = scmp.eq.s32.totalorder %s11, 1
    %p28 = por %p26, %p27
    %p29 = scmp.ne.s32.totalorder %s21, %s24
    %p30 = scmp.eq.s32.totalorder %s11, 0
    %p31 = por %p29, %p30
    %p32 = scmp.ne.s32.totalorder %s21, %s24
    %p33 = scmp.eq.s32.totalorder %s16, 1
    %p34 = por %p32, %p33
    %p35 = scmp.ne.s32.totalorder %s24, %s25
    %p36 = scmp.eq.s32.totalorder %s16, 0
    %p37 = por %p35, %p36
    %p38 = scmp.ne.s32.totalorder %s24, %s25
    %p39 = scmp.eq.s32.totalorder %s17, 1
    %p40 = por %p38, %p39
    %p42 = scmp.ne.s32.totalorder %s25, %s41
    %p43 = scmp.eq.s32.totalorder %s17, 0
    %p44 = por %p42, %p43
    %s46 = sadd.s32 %s45, 1
    %p49 = scmp.eq.s32.totalorder %s11, 1
    %p50 = scmp.ne.s32.totalorder %s45, %s47
    %p51 = scmp.eq.s32.totalorder %s11, 0
    %p52 = por %p50, %p51
    %p53 = scmp.ne.s32.totalorder %s45, %s47
    %p54 = scmp.eq.s32.totalorder %s16, 1
    %p55 = por %p53, %p54
    %p56 = scmp.ne.s32.totalorder %s47, %s48
    %p57 = scmp.eq.s32.totalorder %s16, 0
    %p58 = por %p56, %p57
    %p59 = scmp.ne.s32.totalorder %s47, %s48
    %p60 = scmp.eq.s32.totalorder %s17, 1
    %p61 = por %p59, %p60
    %p63 = scmp.ne.s32.totalorder %s48, %s62
    %p64 = scmp.eq.s32.totalorder %s17, 0
    %p65 = por %p63, %p64
    %s67 = sadd.s32 %s66, 1
    %p70 = scmp.eq.s32.totalorder %s11, 1
    %p71 = scmp.ne.s32.totalorder %s66, %s68
    %p72 = scmp.eq.s32.totalorder %s11, 0
    %p73 = por %p71, %p72
    %p74 = scmp.ne.s32.totalorder %s66, %s68
    %p75 = scmp.eq.s32.totalorder %s16, 1
    %p76 = por %p74, %p75
    %p77 = scmp.ne.s32.totalorder %s68, %s69
    %p78 = scmp.eq.s32.totalorder %s16, 0
    %p79 = por %p77, %p78
    %p80 = scmp.ne.s32.totalorder %s68, %s69
    %p81 = scmp.eq.s32.totalorder %s17, 1
    %p82 = por %p80, %p81
    %p84 = scmp.ne.s32.totalorder %s69, %s83
    %p85 = scmp.eq.s32.totalorder %s17, 0
    %p86 = por %p84, %p85
    %s87 = ssub.s32 %s11, %s18
    %p88 = scmp.eq.s32.totalorder %s87, 0
    %s90 = sadd.s32 %s89, 1
    %s91 = scalar_select %p88, %s89, %s90
    %p94 = pneg %p88
    %p95 = scmp.eq.s32.totalorder %s11, 1
    %p96 = por %p94, %p95
    %p97 = scmp.ne.s32.totalorder %s89, %s92
    %p98 = scmp.eq.s32.totalorder %s11, 0
    %p99 = por %p97, %p98
    %p100 = scmp.ne.s32.totalorder %s89, %s92
    %p101 = scmp.eq.s32.totalorder %s16, 1
    %p102 = por %p100, %p101
    %p103 = scmp.ne.s32.totalorder %s92, %s93
    %p104 = scmp.eq.s32.totalorder %s16, 0
    %p105 = por %p103, %p104
    %p106 = scmp.ne.s32.totalorder %s92, %s93
    %p107 = scmp.eq.s32.totalorder %s17, 1
    %p108 = por %p106, %p107
    %p110 = scmp.ne.s32.totalorder %s93, %s109
    %p111 = scmp.eq.s32.totalorder %s17, 0
    %p112 = por %p110, %p111
    %s113 = ssub.s32 %s11, %s18
    %p114 = scmp.eq.s32.totalorder %s113, 0
    %s116 = sadd.s32 %s115, 1
    %s117 = scalar_select %p114, %s115, %s116
    %p120 = pneg %p114
    %p121 = scmp.eq.s32.totalorder %s11, 1
    %p122 = por %p120, %p121
    %p123 = scmp.ne.s32.totalorder %s115, %s118
    %p124 = scmp.eq.s32.totalorder %s11, 0
    %p125 = por %p123, %p124
    %p126 = scmp.ne.s32.totalorder %s115, %s118
    %p127 = scmp.eq.s32.totalorder %s16, 1
    %p128 = por %p126, %p127
    %p129 = scmp.ne.s32.totalorder %s118, %s119
    %p130 = scmp.eq.s32.totalorder %s16, 0
    %p131 = por %p129, %p130
    %p132 = scmp.ne.s32.totalorder %s118, %s119
    %p133 = scmp.eq.s32.totalorder %s17, 1
    %p134 = por %p132, %p133
    %p136 = scmp.ne.s32.totalorder %s119, %s135
    %p137 = scmp.eq.s32.totalorder %s17, 0
    %p138 = por %p136, %p137
    %p139 = scmp.le.s32.totalorder 1, %s11
    %p140 = scmp.lt.s32.totalorder %s11, 3
    %p141 = pnand %p139, %p140
    %p142 = pneg %p141
    // Predicated region
    $region9: #{basic_block_forward.2} parent=5 // pred_check
      _
    $region10: #{basic_block_forward.2} parent=5 // pred_check_branch
      %144 = sbr.rel (%p141) target = $region12
    $region11: #{basic_block_forward.2} parent=5 // pred_region
      %s145 = ssub.s32 %s11, 1
      // Predicated region
      $region13: #{basic_block_forward.2} parent=11 // pred_check
        %p146 = pneg %p58
      $region14: #{basic_block_forward.2} parent=11 // pred_check_branch
        %148 = sbr.rel (%p146) target = $region16
      $region15: #{basic_block_forward.2} parent=11 // pred_region
        _
      $region16: #{basic_block_forward.2} parent=11 // pred_fallthru
        _
      // Predicated region
      $region17: #{basic_block_forward.2} parent=11 // pred_check
        %p149 = pneg %p79
      $region18: #{basic_block_forward.2} parent=11 // pred_check_branch
        %151 = sbr.rel (%p149) target = $region20
      $region19: #{basic_block_forward.2} parent=11 // pred_region
        _
      $region20: #{basic_block_forward.2} parent=11 // pred_fallthru
        _
    $region12: #{basic_block_forward.2} parent=5 // pred_fallthru
      _
    %p152 = scmp.lt.s32.totalorder %s11, 2
    // Predicated region
    $region21: #{basic_block_forward.2} parent=5 // pred_check
      %p153 = pneg %p152
    $region22: #{basic_block_forward.2} parent=5 // pred_check_branch
      %155 = sbr.rel (%p153) target = $region24
    $region23: #{basic_block_forward.2} parent=5 // pred_region
      // Predicated region
      $region25: #{basic_block_forward.2} parent=23 // pred_check
        %p156 = pneg %p31
      $region26: #{basic_block_forward.2} parent=23 // pred_check_branch
        %158 = sbr.rel (%p156) target = $region28
      $region27: #{basic_block_forward.2} parent=23 // pred_region
        %p159 = scmp.lt.s32.totalorder %s11, 1
        %s160 = scalar_select %p159, %s11, 1
        %s161 = smul.addr %s160, 47
        %s162 = smul.addr %s161, 4
        %s163 = scalar_lea.vmem %s0, %s162
      $region28: #{basic_block_forward.2} parent=23 // pred_fallthru
        _
    $region24: #{basic_block_forward.2} parent=5 // pred_fallthru
      _
    %p164 = scmp.le.s32.totalorder 1, %s11
    %p165 = scmp.lt.s32.totalorder %s11, 3
    %p166 = pnand %p164, %p165
    %p167 = pneg %p166
    // Predicated region
    $region29: #{basic_block_forward.2} parent=5 // pred_check
      _
    $region30: #{basic_block_forward.2} parent=5 // pred_check_branch
      %169 = sbr.rel (%p166) target = $region32
    $region31: #{basic_block_forward.2} parent=5 // pred_region
      %s170 = ssub.s32 %s11, 1
      %p171 = scmp.lt.s32.totalorder %s16, 1
      %s172 = scalar_select %p171, %s16, 1
      %s173 = smul.addr %s172, 47
      %s174 = smul.addr %s173, 4
      %s175 = scalar_lea.vmem %s0, %s174
      %p176 = pneg %p37
      %p177 = pneg %p34
      %p178 = pneg %p58
      %p179 = pneg %p55
      %p180 = pneg %p79
      %p181 = pneg %p76
      %p182 = pneg %p105
      %p183 = pneg %p102
      %p184 = scmp.lt.s32.totalorder %s16, 1
      %s185 = scalar_select %p184, %s16, 1
      %s186 = smul.addr %s185, 41
      %s187 = smul.addr %s186, 4
      %s188 = scalar_lea.vmem %s3, %s187
      %p189 = pneg %p131
      %p190 = pneg %p128
      %p191 = scmp.lt.s32.totalorder %s16, 1
      %s192 = scalar_select %p191, %s16, 1
      %s193 = smul.addr %s192, 2
      %s194 = scalar_lea.vmem %s4, %s193
      %p195 = scmp.lt.s32.totalorder %s16, 1
      %s196 = scalar_select %p195, %s16, 1
      %s197 = smul.addr %s196, 47
      %s198 = smul.addr %s197, 4
      %s199 = scalar_lea.vmem %s0, %s198
      %p200 = scmp.lt.s32.totalorder %s16, 1
      %s201 = scalar_select %p200, %s16, 1
      %s202 = smul.addr %s201, 41
      %s203 = smul.addr %s202, 4
      %s204 = scalar_lea.vmem %s3, %s203
      %p205 = scmp.lt.s32.totalorder %s16, 1
      %s206 = scalar_select %p205, %s16, 1
      %s207 = smul.addr %s206, 2
      %s208 = scalar_lea.vmem %s4, %s207
      %v210 = vld [vmem:[%s199] sm:$0xc]
      %v211 = vld [vmem:[%s199 + $0x4] sm:$0xf]
      %v212 = vld [vmem:[%s199 + $0x8] sm:$0xf]
      %v213 = vld [vmem:[%s199 + $0xc] sm:$0xf]
      %v214 = vld [vmem:[%s199 + $0x10] sm:$0xf]
      %v215 = vld [vmem:[%s199 + $0x14] sm:$0xf]
      %v216 = vld [vmem:[%s199 + $0x18] sm:$0xf]
      %v217 = vld [vmem:[%s199 + $0x1c] sm:$0xf]
      %v218 = vld [vmem:[%s199 + $0x20] sm:$0xf]
      %v219 = vld [vmem:[%s199 + $0x24] sm:$0xf]
      %v220 = vld [vmem:[%s199 + $0x28] sm:$0xf]
      %v221 = vld [vmem:[%s199 + $0x2c] sm:$0xf]
      %v222 = vld [vmem:[%s199 + $0x30] sm:$0xf]
      %v223 = vld [vmem:[%s199 + $0x34] sm:$0xf]
      %v224 = vld [vmem:[%s199 + $0x38] sm:$0xf]
      %v225 = vld [vmem:[%s199 + $0x3c] sm:$0xf]
      %v226 = vld [vmem:[%s199 + $0x40] sm:$0xf]
      %v227 = vld [vmem:[%s199 + $0x44] sm:$0xf]
      %v228 = vld [vmem:[%s199 + $0x48] sm:$0xf]
      %v229 = vld [vmem:[%s199 + $0x4c] sm:$0xf]
      %v230 = vld [vmem:[%s199 + $0x50] sm:$0xf]
      %v231 = vld [vmem:[%s199 + $0x54] sm:$0xf]
      %v232 = vld [vmem:[%s199 + $0x58] sm:$0xf]
      %v233 = vld [vmem:[%s199 + $0x5c] sm:$0xf]
      %v234 = vld [vmem:[%s199 + $0x60] sm:$0xf]
      %v235 = vld [vmem:[%s199 + $0x64] sm:$0xf]
      %v236 = vld [vmem:[%s199 + $0x68] sm:$0xf]
      %v237 = vld [vmem:[%s199 + $0x6c] sm:$0xf]
      %v238 = vld [vmem:[%s199 + $0x70] sm:$0xf]
      %v239 = vld [vmem:[%s199 + $0x74] sm:$0xf]
      %v240 = vld [vmem:[%s199 + $0x78] sm:$0xf]
      %v241 = vld [vmem:[%s199 + $0x7c] sm:$0xf]
      %v242 = vld [vmem:[%s199 + $0x80] sm:$0xf]
      %v243 = vld [vmem:[%s199 + $0x84] sm:$0xf]
      %v244 = vld [vmem:[%s199 + $0x88] sm:$0xf]
      %v245 = vld [vmem:[%s199 + $0x8c] sm:$0xf]
      %v246 = vld [vmem:[%s199 + $0x90] sm:$0xf]
      %v247 = vld [vmem:[%s199 + $0x94] sm:$0xf]
      %v248 = vld [vmem:[%s199 + $0x98] sm:$0xf]
      %v249 = vld [vmem:[%s199 + $0x9c] sm:$0xf]
      %v250 = vld [vmem:[%s199 + $0xa0] sm:$0xf]
      %v251 = vld [vmem:[%s199 + $0xa4] sm:$0x7]
      %v252 = vld [vmem:[%s2] sm:$0xf]
      %v253 = vld [vmem:[%s2 + $0x4] sm:$0xf]
      %v254 = vld [vmem:[%s2 + $0x8] sm:$0xf]
      %v255 = vld [vmem:[%s2 + $0xc] sm:$0xf]
      %v256 = vld [vmem:[%s2 + $0x10] sm:$0xf]
      %v257 = vld [vmem:[%s2 + $0x14] sm:$0xf]
      %v258 = vld [vmem:[%s2 + $0x18] sm:$0xf]
      %v259 = vld [vmem:[%s2 + $0x1c] sm:$0xf]
      %v260 = vld [vmem:[%s2 + $0x20] sm:$0xf]
      %v261 = vld [vmem:[%s2 + $0x24] sm:$0xf]
      %v262 = vld [vmem:[%s2 + $0x28] sm:$0xf]
      %v263 = vld [vmem:[%s2 + $0x2c] sm:$0xf]
      %v264 = vld [vmem:[%s2 + $0x30] sm:$0xf]
      %v265 = vld [vmem:[%s2 + $0x34] sm:$0xf]
      %v266 = vld [vmem:[%s2 + $0x38] sm:$0xf]
      %v267 = vld [vmem:[%s2 + $0x3c] sm:$0xf]
      %v268 = vld [vmem:[%s199] sm:$0x8]
      %s269 = scalar_lea.vmem %s2, 64
      %v270 = vld [vmem:[%s269] sm:$0xf]
      %v271 = vld [vmem:[%s269 + $0x4] sm:$0xf]
      %v272 = vld [vmem:[%s269 + $0x8] sm:$0xf]
      %v273 = vld [vmem:[%s269 + $0xc] sm:$0xf]
      %v274 = vld [vmem:[%s269 + $0x10] sm:$0xf]
      %v275 = vld [vmem:[%s269 + $0x14] sm:$0xf]
      %v276 = vld [vmem:[%s269 + $0x18] sm:$0xf]
      %v277 = vld [vmem:[%s269 + $0x1c] sm:$0xf]
      %v278 = vld [vmem:[%s269 + $0x20] sm:$0xf]
      %v279 = vld [vmem:[%s269 + $0x24] sm:$0xf]
      %v280 = vld [vmem:[%s269 + $0x28] sm:$0xf]
      %v281 = vld [vmem:[%s269 + $0x2c] sm:$0xf]
      %v282 = vld [vmem:[%s269 + $0x30] sm:$0xf]
      %v283 = vld [vmem:[%s269 + $0x34] sm:$0xf]
      %v284 = vld [vmem:[%s269 + $0x38] sm:$0xf]
      %v285 = vld [vmem:[%s269 + $0x3c] sm:$0xf]
      %v328 = vunpack.c.l.b16 %v268
      %v329 = vunpack.c.l.b16 %v211
      %v330 = vunpack.c.l.b16 %v212
      %v331 = vunpack.c.l.b16 %v213
      %v332 = vunpack.c.l.b16 %v214
      %v333 = vunpack.c.l.b16 %v215
      %v334 = vunpack.c.l.b16 %v216
      %v335 = vunpack.c.l.b16 %v217
      %v336 = vunpack.c.l.b16 %v218
      %v337 = vunpack.c.l.b16 %v219
      %v338 = vunpack.c.l.b16 %v220
      %v339 = vunpack.c.l.b16 %v221
      %v340 = vunpack.c.l.b16 %v222
      %v341 = vunpack.c.l.b16 %v223
      %v342 = vunpack.c.l.b16 %v224
      %v343 = vunpack.c.l.b16 %v225
      %v344 = vunpack.c.l.b16 %v226
      %v345 = vunpack.c.l.b16 %v227
      %v346 = vunpack.c.l.b16 %v228
      %v347 = vunpack.c.l.b16 %v229
      %v348 = vunpack.c.l.b16 %v230
      %v349 = vunpack.c.l.b16 %v231
      %v350 = vunpack.c.l.b16 %v232
      %v351 = vunpack.c.l.b16 %v233
      %v352 = vunpack.c.l.b16 %v234
      %v353 = vunpack.c.l.b16 %v235
      %v354 = vunpack.c.l.b16 %v236
      %v355 = vunpack.c.l.b16 %v237
      %v356 = vunpack.c.l.b16 %v238
      %v357 = vunpack.c.l.b16 %v239
      %v358 = vunpack.c.l.b16 %v240
      %v359 = vunpack.c.l.b16 %v241
      %v360 = vunpack.c.l.b16 %v242
      %v361 = vunpack.c.l.b16 %v243
      %v362 = vunpack.c.l.b16 %v244
      %v363 = vunpack.c.l.b16 %v245
      %v364 = vunpack.c.l.b16 %v246
      %v365 = vunpack.c.l.b16 %v247
      %v366 = vunpack.c.l.b16 %v248
      %v367 = vunpack.c.l.b16 %v249
      %v368 = vunpack.c.l.b16 %v250
      %v369 = vunpack.c.l.b16 %v251
      %v370 = vpack.c.b16 %v329, %v328
      %v371 = vpack.c.b16 %v331, %v330
      %v372 = vpack.c.b16 %v333, %v332
      %v373 = vpack.c.b16 %v335, %v334
      %v374 = vpack.c.b16 %v337, %v336
      %v375 = vpack.c.b16 %v339, %v338
      %v376 = vpack.c.b16 %v341, %v340
      %v377 = vpack.c.b16 %v343, %v342
      %v378 = vpack.c.b16 %v345, %v344
      %v379 = vpack.c.b16 %v347, %v346
      %v380 = vpack.c.b16 %v349, %v348
      %v381 = vpack.c.b16 %v351, %v350
      %v382 = vpack.c.b16 %v353, %v352
      %v383 = vpack.c.b16 %v355, %v354
      %v384 = vpack.c.b16 %v357, %v356
      %v385 = vpack.c.b16 %v359, %v358
      %v386 = vpack.c.b16 %v361, %v360
      %v387 = vpack.c.b16 %v363, %v362
      %v388 = vpack.c.b16 %v365, %v364
      %v389 = vpack.c.b16 %v367, %v366
      %v390 = vpack.c.b16 %v369, %v368
      %vm391 = vcmask 1044480
      %v392 = vrot.slane %v370, 3
      %v393 = vrot.slane %v371, 3
      %v394 = vsel %vm391, %v392, %v393
      %v395 = vrot.slane %v372, 3
      %v396 = vsel %vm391, %v393, %v395
      %v397 = vrot.slane %v373, 3
      %v398 = vsel %vm391, %v395, %v397
      %v399 = vrot.slane %v374, 3
      %v400 = vsel %vm391, %v397, %v399
      %v401 = vrot.slane %v375, 3
      %v402 = vsel %vm391, %v399, %v401
      %v403 = vrot.slane %v376, 3
      %v404 = vsel %vm391, %v401, %v403
      %v405 = vrot.slane %v377, 3
      %v406 = vsel %vm391, %v403, %v405
      %v407 = vrot.slane %v378, 3
      %v408 = vsel %vm391, %v405, %v407
      %v409 = vrot.slane %v379, 3
      %v410 = vsel %vm391, %v407, %v409
      %v411 = vrot.slane %v380, 3
      %v412 = vsel %vm391, %v409, %v411
      %v413 = vrot.slane %v381, 3
      %v414 = vsel %vm391, %v411, %v413
      %v415 = vrot.slane %v382, 3
      %v416 = vsel %vm391, %v413, %v415
      %v417 = vrot.slane %v383, 3
      %v418 = vsel %vm391, %v415, %v417
      %v419 = vrot.slane %v384, 3
      %v420 = vsel %vm391, %v417, %v419
      %v421 = vrot.slane %v385, 3
      %v422 = vsel %vm391, %v419, %v421
      %v423 = vrot.slane %v386, 3
      %v424 = vsel %vm391, %v421, %v423
      %v425 = vrot.slane %v387, 3
      %v426 = vsel %vm391, %v423, %v425
      %v427 = vrot.slane %v388, 3
      %v428 = vsel %vm391, %v425, %v427
      %v429 = vrot.slane %v389, 3
      %v430 = vsel %vm391, %v427, %v429
      %v431 = vrot.slane %v390, 3
      %v432 = vsel %vm391, %v429, %v431
      %v470 = vunpack.c.l.b16 %v270
      %v471 = vunpack.c.l.b16 %v271
      %v472 = vunpack.c.l.b16 %v272
      %v473 = vunpack.c.l.b16 %v273
      %v474 = vunpack.c.l.b16 %v274
      %v475 = vunpack.c.l.b16 %v275
      %v476 = vunpack.c.l.b16 %v276
      %v477 = vunpack.c.l.b16 %v277
      %v478 = vunpack.c.l.b16 %v278
      %v479 = vunpack.c.l.b16 %v279
      %v480 = vunpack.c.l.b16 %v280
      %v481 = vunpack.c.l.b16 %v281
      %v482 = vunpack.c.l.b16 %v282
      %v483 = vunpack.c.l.b16 %v283
      %v484 = vunpack.c.l.b16 %v284
      %v485 = vunpack.c.l.b16 %v285
      %v486 = vpack.c.b16 %v471, %v470
      %v487 = vpack.c.b16 %v473, %v472
      %v488 = vpack.c.b16 %v475, %v474
      %v489 = vpack.c.b16 %v477, %v476
      %v490 = vpack.c.b16 %v479, %v478
      %v491 = vpack.c.b16 %v481, %v480
      %v492 = vpack.c.b16 %v483, %v482
      %v493 = vpack.c.b16 %v485, %v484
      %502 = vmatprep.subr.bf16.mxu0 0
      %503 = vmatpush1.bf16.msra.mxu0 %v493
      %504 = vmatprep.subr.bf16.mxu0 0
      %505 = vmatpush1.bf16.msra.mxu0 %v492
      %506 = vmatprep.subr.bf16.mxu0 0
      %507 = vmatpush1.bf16.msra.mxu0 %v491
      %508 = vmatprep.subr.bf16.mxu0 0
      %509 = vmatpush1.bf16.msra.mxu0 %v490
      %510 = vmatprep.subr.bf16.mxu0 0
      %511 = vmatpush1.bf16.msra.mxu0 %v489
      %512 = vmatprep.subr.bf16.mxu0 0
      %513 = vmatpush1.bf16.msra.mxu0 %v488
      %514 = vmatprep.subr.bf16.mxu0 0
      %515 = vmatpush1.bf16.msra.mxu0 %v487
      %516 = vmatprep.subr.bf16.mxu0 0
      %517 = vmatpush1.bf16.msra.mxu0 %v486
      %518 = vmatprep.subr.bf16.mxu0 0
      %519 = vmatpush2.bf16.msra.mxu0 0
      %520 = vmatprep.subr.bf16.mxu0 0
      %521 = vmatpush2.bf16.msra.mxu0 0
      %522 = vmatprep.subr.bf16.mxu0 0
      %523 = vmatpush2.bf16.msra.mxu0 0
      %524 = vmatprep.subr.bf16.mxu0 0
      %525 = vmatpush2.bf16.msra.mxu0 0
      %526 = vmatprep.subr.bf16.mxu0 0
      %527 = vmatpush2.bf16.msra.mxu0 0
      %528 = vmatprep.subr.bf16.mxu0 0
      %529 = vmatpush2.bf16.msra.mxu0 0
      %530 = vmatprep.subr.bf16.mxu0 0
      %531 = vmatpush2.bf16.msra.mxu0 0
      %532 = vmatprep.subr.bf16.mxu0 0
      %533 = vmatpush2.bf16.msra.mxu0 0
      %534 = vmatprep.mubr.bf16.mxu0 0
      %535 = vmatmul.mubr.bf16.gmra.mxu0 %v394
      %v536 = vpop.f32.mrf.mxu0
      %v537 = vadd.f32 0.0, %v536
      %v538 = vpop.f32.mrf.mxu0
      %v539 = vpop.f32.mrf.mxu0
      %v540 = vadd.f32 0.0, %v539
      %v541 = vpop.f32.mrf.mxu0
      %542 = vmatprep.mubr.bf16.mxu0 0
      %543 = vmatmul.mubr.bf16.gmra.mxu0 %v396
      %v544 = vpop.f32.mrf.mxu0
      %v545 = vadd.f32 0.0, %v544
      %v546 = vpop.f32.mrf.mxu0
      %v547 = vpop.f32.mrf.mxu0
      %v548 = vadd.f32 0.0, %v547
      %v549 = vpop.f32.mrf.mxu0
      %550 = vmatprep.mubr.bf16.mxu0 0
      %551 = vmatmul.mubr.bf16.gmra.mxu0 %v398
      %v552 = vpop.f32.mrf.mxu0
      %v553 = vadd.f32 0.0, %v552
      %v554 = vpop.f32.mrf.mxu0
      %v555 = vpop.f32.mrf.mxu0
      %v556 = vadd.f32 0.0, %v555
      %v557 = vpop.f32.mrf.mxu0
      %558 = vmatprep.mubr.bf16.mxu0 0
      %559 = vmatmul.mubr.bf16.gmra.mxu0 %v400
      %v560 = vpop.f32.mrf.mxu0
      %v561 = vadd.f32 0.0, %v560
      %v562 = vpop.f32.mrf.mxu0
      %v563 = vpop.f32.mrf.mxu0
      %v564 = vadd.f32 0.0, %v563
      %v565 = vpop.f32.mrf.mxu0
      %566 = vmatprep.mubr.bf16.mxu0 0
      %567 = vmatmul.mubr.bf16.gmra.mxu0 %v402
      %v568 = vpop.f32.mrf.mxu0
      %v569 = vadd.f32 0.0, %v568
      %v570 = vpop.f32.mrf.mxu0
      %v571 = vpop.f32.mrf.mxu0
      %v572 = vadd.f32 0.0, %v571
      %v573 = vpop.f32.mrf.mxu0
      %574 = vmatprep.mubr.bf16.mxu0 0
      %575 = vmatmul.mubr.bf16.gmra.mxu0 %v404
      %v576 = vpop.f32.mrf.mxu0
      %v577 = vadd.f32 0.0, %v576
      %v578 = vpop.f32.mrf.mxu0
      %v579 = vpop.f32.mrf.mxu0
      %v580 = vadd.f32 0.0, %v579
      %v581 = vpop.f32.mrf.mxu0
      %582 = vmatprep.mubr.bf16.mxu0 0
      %583 = vmatmul.mubr.bf16.gmra.mxu0 %v406
      %v584 = vpop.f32.mrf.mxu0
      %v585 = vadd.f32 0.0, %v584
      %v586 = vpop.f32.mrf.mxu0
      %v587 = vpop.f32.mrf.mxu0
      %v588 = vadd.f32 0.0, %v587
      %v589 = vpop.f32.mrf.mxu0
      %590 = vmatprep.mubr.bf16.mxu0 0
      %591 = vmatmul.mubr.bf16.gmra.mxu0 %v408
      %v592 = vpop.f32.mrf.mxu0
      %v593 = vadd.f32 0.0, %v592
      %v594 = vpop.f32.mrf.mxu0
      %v595 = vpop.f32.mrf.mxu0
      %v596 = vadd.f32 0.0, %v595
      %v597 = vpop.f32.mrf.mxu0
      %598 = vmatprep.mubr.bf16.mxu0 0
      %599 = vmatmul.mubr.bf16.gmra.mxu0 %v410
      %v600 = vpop.f32.mrf.mxu0
      %v601 = vadd.f32 0.0, %v600
      %v602 = vpop.f32.mrf.mxu0
      %v603 = vpop.f32.mrf.mxu0
      %v604 = vadd.f32 0.0, %v603
      %v605 = vpop.f32.mrf.mxu0
      %606 = vmatprep.mubr.bf16.mxu0 0
      %607 = vmatmul.mubr.bf16.gmra.mxu0 %v412
      %v608 = vpop.f32.mrf.mxu0
      %v609 = vadd.f32 0.0, %v608
      %v610 = vpop.f32.mrf.mxu0
      %v611 = vpop.f32.mrf.mxu0
      %v612 = vadd.f32 0.0, %v611
      %v613 = vpop.f32.mrf.mxu0
      %614 = vmatprep.mubr.bf16.mxu0 0
      %615 = vmatmul.mubr.bf16.gmra.mxu0 %v414
      %v616 = vpop.f32.mrf.mxu0
      %v617 = vadd.f32 0.0, %v616
      %v618 = vpop.f32.mrf.mxu0
      %v619 = vpop.f32.mrf.mxu0
      %v620 = vadd.f32 0.0, %v619
      %v621 = vpop.f32.mrf.mxu0
      %622 = vmatprep.mubr.bf16.mxu0 0
      %623 = vmatmul.mubr.bf16.gmra.mxu0 %v416
      %v624 = vpop.f32.mrf.mxu0
      %v625 = vadd.f32 0.0, %v624
      %v626 = vpop.f32.mrf.mxu0
      %v627 = vpop.f32.mrf.mxu0
      %v628 = vadd.f32 0.0, %v627
      %v629 = vpop.f32.mrf.mxu0
      %630 = vmatprep.mubr.bf16.mxu0 0
      %631 = vmatmul.mubr.bf16.gmra.mxu0 %v418
      %v632 = vpop.f32.mrf.mxu0
      %v633 = vadd.f32 0.0, %v632
      %v634 = vpop.f32.mrf.mxu0
      %v635 = vpop.f32.mrf.mxu0
      %v636 = vadd.f32 0.0, %v635
      %v637 = vpop.f32.mrf.mxu0
      %638 = vmatprep.mubr.bf16.mxu0 0
      %639 = vmatmul.mubr.bf16.gmra.mxu0 %v420
      %v640 = vpop.f32.mrf.mxu0
      %v641 = vadd.f32 0.0, %v640
      %v642 = vpop.f32.mrf.mxu0
      %v643 = vpop.f32.mrf.mxu0
      %v644 = vadd.f32 0.0, %v643
      %v645 = vpop.f32.mrf.mxu0
      %646 = vmatprep.mubr.bf16.mxu0 0
      %647 = vmatmul.mubr.bf16.gmra.mxu0 %v422
      %v648 = vpop.f32.mrf.mxu0
      %v649 = vadd.f32 0.0, %v648
      %v650 = vpop.f32.mrf.mxu0
      %v651 = vpop.f32.mrf.mxu0
      %v652 = vadd.f32 0.0, %v651
      %v653 = vpop.f32.mrf.mxu0
      %654 = vmatprep.mubr.bf16.mxu0 0
      %655 = vmatmul.mubr.bf16.gmra.mxu0 %v424
      %v656 = vpop.f32.mrf.mxu0
      %v657 = vadd.f32 0.0, %v656
      %v658 = vpop.f32.mrf.mxu0
      %v659 = vpop.f32.mrf.mxu0
      %v660 = vadd.f32 0.0, %v659
      %v661 = vpop.f32.mrf.mxu0
      %662 = vmatprep.mubr.bf16.mxu0 0
      %663 = vmatmul.mubr.bf16.gmra.mxu0 %v426
      %v664 = vpop.f32.mrf.mxu0
      %v665 = vadd.f32 0.0, %v664
      %v666 = vpop.f32.mrf.mxu0
      %v667 = vpop.f32.mrf.mxu0
      %v668 = vadd.f32 0.0, %v667
      %v669 = vpop.f32.mrf.mxu0
      %670 = vmatprep.mubr.bf16.mxu0 0
      %671 = vmatmul.mubr.bf16.gmra.mxu0 %v428
      %v672 = vpop.f32.mrf.mxu0
      %v673 = vadd.f32 0.0, %v672
      %v674 = vpop.f32.mrf.mxu0
      %v675 = vpop.f32.mrf.mxu0
      %v676 = vadd.f32 0.0, %v675
      %v677 = vpop.f32.mrf.mxu0
      %678 = vmatprep.mubr.bf16.mxu0 0
      %679 = vmatmul.mubr.bf16.gmra.mxu0 %v430
      %v680 = vpop.f32.mrf.mxu0
      %v681 = vadd.f32 0.0, %v680
      %v682 = vpop.f32.mrf.mxu0
      %v683 = vpop.f32.mrf.mxu0
      %v684 = vadd.f32 0.0, %v683
      %v685 = vpop.f32.mrf.mxu0
      %686 = vmatprep.mubr.bf16.mxu0 0
      %687 = vmatmul.mubr.bf16.gmra.mxu0 %v432
      %v688 = vpop.f32.mrf.mxu0
      %v689 = vadd.f32 0.0, %v688
      %v690 = vpop.f32.mrf.mxu0
      %v691 = vpop.f32.mrf.mxu0
      %v692 = vadd.f32 0.0, %v691
      %v693 = vpop.f32.mrf.mxu0
      %694 = vmatprep.mubr.bf16.mxu0 0
      %695 = vmatmul.mubr.bf16.gmra.mxu0 %v431
      %v696 = vpop.f32.mrf.mxu0
      %v697 = vadd.f32 0.0, %v696
      %v698 = vpop.f32.mrf.mxu0
      %v699 = vpop.f32.mrf.mxu0
      %v700 = vpop.f32.mrf.mxu0
      %701 = vdwg.mxu0
      %v703 = vunpack.c.l.b16 %v210
      %v704 = vpack.c.b16 %v329, %v703
      %vm705 = vsmask.f32 5376
      %v707 = vshrl.u32 %v704, 16
      %v709 = vrot.slane %v707, 2
      %v710 = vshll.u32 %v704, 16
      %v712 = vrot.slane %v710, 3
      %v713 = vor.u32 %v709, %v712
      %v715 = vshrl.u32 %v371, 16
      %v717 = vrot.slane %v715, 2
      %v718 = vshll.u32 %v371, 16
      %v720 = vrot.slane %v718, 3
      %v721 = vor.u32 %v717, %v720
      %v722 = vsel %vm705, %v713, %v721
      %v724 = vshrl.u32 %v372, 16
      %v726 = vrot.slane %v724, 2
      %v727 = vshll.u32 %v372, 16
      %v729 = vrot.slane %v727, 3
      %v730 = vor.u32 %v726, %v729
      %v731 = vsel %vm705, %v721, %v730
      %v733 = vshrl.u32 %v373, 16
      %v735 = vrot.slane %v733, 2
      %v736 = vshll.u32 %v373, 16
      %v738 = vrot.slane %v736, 3
      %v739 = vor.u32 %v735, %v738
      %v740 = vsel %vm705, %v730, %v739
      %v742 = vshrl.u32 %v374, 16
      %v744 = vrot.slane %v742, 2
      %v745 = vshll.u32 %v374, 16
      %v747 = vrot.slane %v745, 3
      %v748 = vor.u32 %v744, %v747
      %v749 = vsel %vm705, %v739, %v748
      %v751 = vshrl.u32 %v375, 16
      %v753 = vrot.slane %v751, 2
      %v754 = vshll.u32 %v375, 16
      %v756 = vrot.slane %v754, 3
      %v757 = vor.u32 %v753, %v756
      %v758 = vsel %vm705, %v748, %v757
      %v760 = vshrl.u32 %v376, 16
      %v762 = vrot.slane %v760, 2
      %v763 = vshll.u32 %v376, 16
      %v765 = vrot.slane %v763, 3
      %v766 = vor.u32 %v762, %v765
      %v767 = vsel %vm705, %v757, %v766
      %v769 = vshrl.u32 %v377, 16
      %v771 = vrot.slane %v769, 2
      %v772 = vshll.u32 %v377, 16
      %v774 = vrot.slane %v772, 3
      %v775 = vor.u32 %v771, %v774
      %v776 = vsel %vm705, %v766, %v775
      %v778 = vshrl.u32 %v378, 16
      %v780 = vrot.slane %v778, 2
      %v781 = vshll.u32 %v378, 16
      %v783 = vrot.slane %v781, 3
      %v784 = vor.u32 %v780, %v783
      %v785 = vsel %vm705, %v775, %v784
      %v787 = vshrl.u32 %v379, 16
      %v789 = vrot.slane %v787, 2
      %v790 = vshll.u32 %v379, 16
      %v792 = vrot.slane %v790, 3
      %v793 = vor.u32 %v789, %v792
      %v794 = vsel %vm705, %v784, %v793
      %v796 = vshrl.u32 %v380, 16
      %v798 = vrot.slane %v796, 2
      %v799 = vshll.u32 %v380, 16
      %v801 = vrot.slane %v799, 3
      %v802 = vor.u32 %v798, %v801
      %v803 = vsel %vm705, %v793, %v802
      %v805 = vshrl.u32 %v381, 16
      %v807 = vrot.slane %v805, 2
      %v808 = vshll.u32 %v381, 16
      %v810 = vrot.slane %v808, 3
      %v811 = vor.u32 %v807, %v810
      %v812 = vsel %vm705, %v802, %v811
      %v814 = vshrl.u32 %v382, 16
      %v816 = vrot.slane %v814, 2
      %v817 = vshll.u32 %v382, 16
      %v819 = vrot.slane %v817, 3
      %v820 = vor.u32 %v816, %v819
      %v821 = vsel %vm705, %v811, %v820
      %v823 = vshrl.u32 %v383, 16
      %v825 = vrot.slane %v823, 2
      %v826 = vshll.u32 %v383, 16
      %v828 = vrot.slane %v826, 3
      %v829 = vor.u32 %v825, %v828
      %v830 = vsel %vm705, %v820, %v829
      %v832 = vshrl.u32 %v384, 16
      %v834 = vrot.slane %v832, 2
      %v835 = vshll.u32 %v384, 16
      %v837 = vrot.slane %v835, 3
      %v838 = vor.u32 %v834, %v837
      %v839 = vsel %vm705, %v829, %v838
      %v841 = vshrl.u32 %v385, 16
      %v843 = vrot.slane %v841, 2
      %v844 = vshll.u32 %v385, 16
      %v846 = vrot.slane %v844, 3
      %v847 = vor.u32 %v843, %v846
      %v848 = vsel %vm705, %v838, %v847
      %v850 = vshrl.u32 %v386, 16
      %v852 = vrot.slane %v850, 2
      %v853 = vshll.u32 %v386, 16
      %v855 = vrot.slane %v853, 3
      %v856 = vor.u32 %v852, %v855
      %v857 = vsel %vm705, %v847, %v856
      %v859 = vshrl.u32 %v387, 16
      %v861 = vrot.slane %v859, 2
      %v862 = vshll.u32 %v387, 16
      %v864 = vrot.slane %v862, 3
      %v865 = vor.u32 %v861, %v864
      %v866 = vsel %vm705, %v856, %v865
      %v868 = vshrl.u32 %v388, 16
      %v870 = vrot.slane %v868, 2
      %v871 = vshll.u32 %v388, 16
      %v873 = vrot.slane %v871, 3
      %v874 = vor.u32 %v870, %v873
      %v875 = vsel %vm705, %v865, %v874
      %v877 = vshrl.u32 %v389, 16
      %v879 = vrot.slane %v877, 2
      %v880 = vshll.u32 %v389, 16
      %v882 = vrot.slane %v880, 3
      %v883 = vor.u32 %v879, %v882
      %v884 = vsel %vm705, %v874, %v883
      %v886 = vshrl.u32 %v390, 16
      %v888 = vrot.slane %v886, 2
      %v889 = vshll.u32 %v390, 16
      %v891 = vrot.slane %v889, 3
      %v892 = vor.u32 %v888, %v891
      %v893 = vsel %vm705, %v883, %v892
      %v931 = vunpack.c.l.b16 %v252
      %v932 = vunpack.c.l.b16 %v253
      %v933 = vunpack.c.l.b16 %v254
      %v934 = vunpack.c.l.b16 %v255
      %v935 = vunpack.c.l.b16 %v256
      %v936 = vunpack.c.l.b16 %v257
      %v937 = vunpack.c.l.b16 %v258
      %v938 = vunpack.c.l.b16 %v259
      %v939 = vunpack.c.l.b16 %v260
      %v940 = vunpack.c.l.b16 %v261
      %v941 = vunpack.c.l.b16 %v262
      %v942 = vunpack.c.l.b16 %v263
      %v943 = vunpack.c.l.b16 %v264
      %v944 = vunpack.c.l.b16 %v265
      %v945 = vunpack.c.l.b16 %v266
      %v946 = vunpack.c.l.b16 %v267
      %v947 = vpack.c.b16 %v932, %v931
      %v948 = vpack.c.b16 %v934, %v933
      %v949 = vpack.c.b16 %v936, %v935
      %v950 = vpack.c.b16 %v938, %v937
      %v951 = vpack.c.b16 %v940, %v939
      %v952 = vpack.c.b16 %v942, %v941
      %v953 = vpack.c.b16 %v944, %v943
      %v954 = vpack.c.b16 %v946, %v945
      %963 = vmatprep.subr.bf16.mxu0 0
      %964 = vmatpush1.bf16.msra.mxu0 %v954
      %965 = vmatprep.subr.bf16.mxu0 0
      %966 = vmatpush1.bf16.msra.mxu0 %v953
      %967 = vmatprep.subr.bf16.mxu0 0
      %968 = vmatpush1.bf16.msra.mxu0 %v952
      %969 = vmatprep.subr.bf16.mxu0 0
      %970 = vmatpush1.bf16.msra.mxu0 %v951
      %971 = vmatprep.subr.bf16.mxu0 0
      %972 = vmatpush1.bf16.msra.mxu0 %v950
      %973 = vmatprep.subr.bf16.mxu0 0
      %974 = vmatpush1.bf16.msra.mxu0 %v949
      %975 = vmatprep.subr.bf16.mxu0 0
      %976 = vmatpush1.bf16.msra.mxu0 %v948
      %977 = vmatprep.subr.bf16.mxu0 0
      %978 = vmatpush1.bf16.msra.mxu0 %v947
      %979 = vmatprep.subr.bf16.mxu0 0
      %980 = vmatpush2.bf16.msra.mxu0 0
      %981 = vmatprep.subr.bf16.mxu0 0
      %982 = vmatpush2.bf16.msra.mxu0 0
      %983 = vmatprep.subr.bf16.mxu0 0
      %984 = vmatpush2.bf16.msra.mxu0 0
      %985 = vmatprep.subr.bf16.mxu0 0
      %986 = vmatpush2.bf16.msra.mxu0 0
      %987 = vmatprep.subr.bf16.mxu0 0
      %988 = vmatpush2.bf16.msra.mxu0 0
      %989 = vmatprep.subr.bf16.mxu0 0
      %990 = vmatpush2.bf16.msra.mxu0 0
      %991 = vmatprep.subr.bf16.mxu0 0
      %992 = vmatpush2.bf16.msra.mxu0 0
      %993 = vmatprep.subr.bf16.mxu0 0
      %994 = vmatpush2.bf16.msra.mxu0 0
      %995 = vmatprep.mubr.bf16.mxu0 0
      %996 = vmatmul.mubr.bf16.gmra.mxu0 %v722
      %v997 = vpop.f32.mrf.mxu0
      %v998 = vadd.f32 %v537, %v997
      %v999 = vpop.f32.mrf.mxu0
      %v1000 = vpop.f32.mrf.mxu0
      %v1001 = vadd.f32 %v540, %v1000
      %v1002 = vpop.f32.mrf.mxu0
      %1003 = vmatprep.mubr.bf16.mxu0 0
      %1004 = vmatmul.mubr.bf16.gmra.mxu0 %v731
      %v1005 = vpop.f32.mrf.mxu0
      %v1006 = vadd.f32 %v545, %v1005
      %v1007 = vpop.f32.mrf.mxu0
      %v1008 = vpop.f32.mrf.mxu0
      %v1009 = vadd.f32 %v548, %v1008
      %v1010 = vpop.f32.mrf.mxu0
      %1011 = vmatprep.mubr.bf16.mxu0 0
      %1012 = vmatmul.mubr.bf16.gmra.mxu0 %v740
      %v1013 = vpop.f32.mrf.mxu0
      %v1014 = vadd.f32 %v553, %v1013
      %v1015 = vpop.f32.mrf.mxu0
      %v1016 = vpop.f32.mrf.mxu0
      %v1017 = vadd.f32 %v556, %v1016
      %v1018 = vpop.f32.mrf.mxu0
      %1019 = vmatprep.mubr.bf16.mxu0 0
      %1020 = vmatmul.mubr.bf16.gmra.mxu0 %v749
      %v1021 = vpop.f32.mrf.mxu0
      %v1022 = vadd.f32 %v561, %v1021
      %v1023 = vpop.f32.mrf.mxu0
      %v1024 = vpop.f32.mrf.mxu0
      %v1025 = vadd.f32 %v564, %v1024
      %v1026 = vpop.f32.mrf.mxu0
      %1027 = vmatprep.mubr.bf16.mxu0 0
      %1028 = vmatmul.mubr.bf16.gmra.mxu0 %v758
      %v1029 = vpop.f32.mrf.mxu0
      %v1030 = vadd.f32 %v569, %v1029
      %v1031 = vpop.f32.mrf.mxu0
      %v1032 = vpop.f32.mrf.mxu0
      %v1033 = vadd.f32 %v572, %v1032
      %v1034 = vpop.f32.mrf.mxu0
      %1035 = vmatprep.mubr.bf16.mxu0 0
      %1036 = vmatmul.mubr.bf16.gmra.mxu0 %v767
      %v1037 = vpop.f32.mrf.mxu0
      %v1038 = vadd.f32 %v577, %v1037
      %v1039 = vpop.f32.mrf.mxu0
      %v1040 = vpop.f32.mrf.mxu0
      %v1041 = vadd.f32 %v580, %v1040
      %v1042 = vpop.f32.mrf.mxu0
      %1043 = vmatprep.mubr.bf16.mxu0 0
      %1044 = vmatmul.mubr.bf16.gmra.mxu0 %v776
      %v1045 = vpop.f32.mrf.mxu0
      %v1046 = vadd.f32 %v585, %v1045
      %v1047 = vpop.f32.mrf.mxu0
      %v1048 = vpop.f32.mrf.mxu0
      %v1049 = vadd.f32 %v588, %v1048
      %v1050 = vpop.f32.mrf.mxu0
      %1051 = vmatprep.mubr.bf16.mxu0 0
      %1052 = vmatmul.mubr.bf16.gmra.mxu0 %v785
      %v1053 = vpop.f32.mrf.mxu0
      %v1054 = vadd.f32 %v593, %v1053
      %v1055 = vpop.f32.mrf.mxu0
      %v1056 = vpop.f32.mrf.mxu0
      %v1057 = vadd.f32 %v596, %v1056
      %v1058 = vpop.f32.mrf.mxu0
      %1059 = vmatprep.mubr.bf16.mxu0 0
      %1060 = vmatmul.mubr.bf16.gmra.mxu0 %v794
      %v1061 = vpop.f32.mrf.mxu0
      %v1062 = vadd.f32 %v601, %v1061
      %v1063 = vpop.f32.mrf.mxu0
      %v1064 = vpop.f32.mrf.mxu0
      %v1065 = vadd.f32 %v604, %v1064
      %v1066 = vpop.f32.mrf.mxu0
      %1067 = vmatprep.mubr.bf16.mxu0 0
      %1068 = vmatmul.mubr.bf16.gmra.mxu0 %v803
      %v1069 = vpop.f32.mrf.mxu0
      %v1070 = vadd.f32 %v609, %v1069
      %v1071 = vpop.f32.mrf.mxu0
      %v1072 = vpop.f32.mrf.mxu0
      %v1073 = vadd.f32 %v612, %v1072
      %v1074 = vpop.f32.mrf.mxu0
      %1075 = vmatprep.mubr.bf16.mxu0 0
      %1076 = vmatmul.mubr.bf16.gmra.mxu0 %v812
      %v1077 = vpop.f32.mrf.mxu0
      %v1078 = vadd.f32 %v617, %v1077
      %v1079 = vpop.f32.mrf.mxu0
      %v1080 = vpop.f32.mrf.mxu0
      %v1081 = vadd.f32 %v620, %v1080
      %v1082 = vpop.f32.mrf.mxu0
      %1083 = vmatprep.mubr.bf16.mxu0 0
      %1084 = vmatmul.mubr.bf16.gmra.mxu0 %v821
      %v1085 = vpop.f32.mrf.mxu0
      %v1086 = vadd.f32 %v625, %v1085
      %v1087 = vpop.f32.mrf.mxu0
      %v1088 = vpop.f32.mrf.mxu0
      %v1089 = vadd.f32 %v628, %v1088
      %v1090 = vpop.f32.mrf.mxu0
      %1091 = vmatprep.mubr.bf16.mxu0 0
      %1092 = vmatmul.mubr.bf16.gmra.mxu0 %v830
      %v1093 = vpop.f32.mrf.mxu0
      %v1094 = vadd.f32 %v633, %v1093
      %v1095 = vpop.f32.mrf.mxu0
      %v1096 = vpop.f32.mrf.mxu0
      %v1097 = vadd.f32 %v636, %v1096
      %v1098 = vpop.f32.mrf.mxu0
      %1099 = vmatprep.mubr.bf16.mxu0 0
      %1100 = vmatmul.mubr.bf16.gmra.mxu0 %v839
      %v1101 = vpop.f32.mrf.mxu0
      %v1102 = vadd.f32 %v641, %v1101
      %v1103 = vpop.f32.mrf.mxu0
      %v1104 = vpop.f32.mrf.mxu0
      %v1105 = vadd.f32 %v644, %v1104
      %v1106 = vpop.f32.mrf.mxu0
      %1107 = vmatprep.mubr.bf16.mxu0 0
      %1108 = vmatmul.mubr.bf16.gmra.mxu0 %v848
      %v1109 = vpop.f32.mrf.mxu0
      %v1110 = vadd.f32 %v649, %v1109
      %v1111 = vpop.f32.mrf.mxu0
      %v1112 = vpop.f32.mrf.mxu0
      %v1113 = vadd.f32 %v652, %v1112
      %v1114 = vpop.f32.mrf.mxu0
      %1115 = vmatprep.mubr.bf16.mxu0 0
      %1116 = vmatmul.mubr.bf16.gmra.mxu0 %v857
      %v1117 = vpop.f32.mrf.mxu0
      %v1118 = vadd.f32 %v657, %v1117
      %v1119 = vpop.f32.mrf.mxu0
      %v1120 = vpop.f32.mrf.mxu0
      %v1121 = vadd.f32 %v660, %v1120
      %v1122 = vpop.f32.mrf.mxu0
      %1123 = vmatprep.mubr.bf16.mxu0 0
      %1124 = vmatmul.mubr.bf16.gmra.mxu0 %v866
      %v1125 = vpop.f32.mrf.mxu0
      %v1126 = vadd.f32 %v665, %v1125
      %v1127 = vpop.f32.mrf.mxu0
      %v1128 = vpop.f32.mrf.mxu0
      %v1129 = vadd.f32 %v668, %v1128
      %v1130 = vpop.f32.mrf.mxu0
      %1131 = vmatprep.mubr.bf16.mxu0 0
      %1132 = vmatmul.mubr.bf16.gmra.mxu0 %v875
      %v1133 = vpop.f32.mrf.mxu0
      %v1134 = vadd.f32 %v673, %v1133
      %v1135 = vpop.f32.mrf.mxu0
      %v1136 = vpop.f32.mrf.mxu0
      %v1137 = vadd.f32 %v676, %v1136
      %v1138 = vpop.f32.mrf.mxu0
      %1139 = vmatprep.mubr.bf16.mxu0 0
      %1140 = vmatmul.mubr.bf16.gmra.mxu0 %v884
      %v1141 = vpop.f32.mrf.mxu0
      %v1142 = vadd.f32 %v681, %v1141
      %v1143 = vpop.f32.mrf.mxu0
      %v1144 = vpop.f32.mrf.mxu0
      %v1145 = vadd.f32 %v684, %v1144
      %v1146 = vpop.f32.mrf.mxu0
      %1147 = vmatprep.mubr.bf16.mxu0 0
      %1148 = vmatmul.mubr.bf16.gmra.mxu0 %v893
      %v1149 = vpop.f32.mrf.mxu0
      %v1150 = vadd.f32 %v689, %v1149
      %v1151 = vpop.f32.mrf.mxu0
      %v1152 = vpop.f32.mrf.mxu0
      %v1153 = vadd.f32 %v692, %v1152
      %v1154 = vpop.f32.mrf.mxu0
      %1155 = vmatprep.mubr.bf16.mxu0 0
      %1156 = vmatmul.mubr.bf16.gmra.mxu0 %v892
      %v1157 = vpop.f32.mrf.mxu0
      %v1158 = vadd.f32 %v697, %v1157
      %v1159 = vpop.f32.mrf.mxu0
      %v1160 = vpop.f32.mrf.mxu0
      %v1161 = vpop.f32.mrf.mxu0
      %1162 = vdwg.mxu0
      %v1163 = vld [vmem:[%s199 + $0xa4] sm:$0xf]
      %s1164 = scalar_lea.vmem %s2, 128
      %v1165 = vld [vmem:[%s1164] sm:$0xf]
      %v1166 = vld [vmem:[%s1164 + $0x4] sm:$0xf]
      %v1167 = vld [vmem:[%s1164 + $0x8] sm:$0xf]
      %v1168 = vld [vmem:[%s1164 + $0xc] sm:$0xf]
      %v1169 = vld [vmem:[%s1164 + $0x10] sm:$0xf]
      %v1170 = vld [vmem:[%s1164 + $0x14] sm:$0xf]
      %v1171 = vld [vmem:[%s1164 + $0x18] sm:$0xf]
      %v1172 = vld [vmem:[%s1164 + $0x1c] sm:$0xf]
      %v1173 = vld [vmem:[%s1164 + $0x20] sm:$0xf]
      %v1174 = vld [vmem:[%s1164 + $0x24] sm:$0xf]
      %v1175 = vld [vmem:[%s1164 + $0x28] sm:$0xf]
      %v1176 = vld [vmem:[%s1164 + $0x2c] sm:$0xf]
      %v1177 = vld [vmem:[%s1164 + $0x30] sm:$0xf]
      %v1178 = vld [vmem:[%s1164 + $0x34] sm:$0xf]
      %v1179 = vld [vmem:[%s1164 + $0x38] sm:$0xf]
      %v1180 = vld [vmem:[%s1164 + $0x3c] sm:$0xf]
      %v1182 = vunpack.c.l.b16 %v1163
      %v1183 = vpack.c.b16 %v1182, %v368
      %vm1184 = vsmask.f32 4352
      %v1186 = vshrl.u32 %v370, 16
      %v1188 = vrot.slane %v1186, 3
      %v1189 = vshll.u32 %v370, 16
      %v1191 = vrot.slane %v1189, 4
      %v1192 = vor.u32 %v1188, %v1191
      %v1193 = vrot.slane %v715, 3
      %v1194 = vrot.slane %v718, 4
      %v1195 = vor.u32 %v1193, %v1194
      %v1196 = vsel %vm1184, %v1192, %v1195
      %v1197 = vrot.slane %v724, 3
      %v1198 = vrot.slane %v727, 4
      %v1199 = vor.u32 %v1197, %v1198
      %v1200 = vsel %vm1184, %v1195, %v1199
      %v1201 = vrot.slane %v733, 3
      %v1202 = vrot.slane %v736, 4
      %v1203 = vor.u32 %v1201, %v1202
      %v1204 = vsel %vm1184, %v1199, %v1203
      %v1205 = vrot.slane %v742, 3
      %v1206 = vrot.slane %v745, 4
      %v1207 = vor.u32 %v1205, %v1206
      %v1208 = vsel %vm1184, %v1203, %v1207
      %v1209 = vrot.slane %v751, 3
      %v1210 = vrot.slane %v754, 4
      %v1211 = vor.u32 %v1209, %v1210
      %v1212 = vsel %vm1184, %v1207, %v1211
      %v1213 = vrot.slane %v760, 3
      %v1214 = vrot.slane %v763, 4
      %v1215 = vor.u32 %v1213, %v1214
      %v1216 = vsel %vm1184, %v1211, %v1215
      %v1217 = vrot.slane %v769, 3
      %v1218 = vrot.slane %v772, 4
      %v1219 = vor.u32 %v1217, %v1218
      %v1220 = vsel %vm1184, %v1215, %v1219
      %v1221 = vrot.slane %v778, 3
      %v1222 = vrot.slane %v781, 4
      %v1223 = vor.u32 %v1221, %v1222
      %v1224 = vsel %vm1184, %v1219, %v1223
      %v1225 = vrot.slane %v787, 3
      %v1226 = vrot.slane %v790, 4
      %v1227 = vor.u32 %v1225, %v1226
      %v1228 = vsel %vm1184, %v1223, %v1227
      %v1229 = vrot.slane %v796, 3
      %v1230 = vrot.slane %v799, 4
      %v1231 = vor.u32 %v1229, %v1230
      %v1232 = vsel %vm1184, %v1227, %v1231
      %v1233 = vrot.slane %v805, 3
      %v1234 = vrot.slane %v808, 4
      %v1235 = vor.u32 %v1233, %v1234
      %v1236 = vsel %vm1184, %v1231, %v1235
      %v1237 = vrot.slane %v814, 3
      %v1238 = vrot.slane %v817, 4
      %v1239 = vor.u32 %v1237, %v1238
      %v1240 = vsel %vm1184, %v1235, %v1239
      %v1241 = vrot.slane %v823, 3
      %v1242 = vrot.slane %v826, 4
      %v1243 = vor.u32 %v1241, %v1242
      %v1244 = vsel %vm1184, %v1239, %v1243
      %v1245 = vrot.slane %v832, 3
      %v1246 = vrot.slane %v835, 4
      %v1247 = vor.u32 %v1245, %v1246
      %v1248 = vsel %vm1184, %v1243, %v1247
      %v1249 = vrot.slane %v841, 3
      %v1250 = vrot.slane %v844, 4
      %v1251 = vor.u32 %v1249, %v1250
      %v1252 = vsel %vm1184, %v1247, %v1251
      %v1253 = vrot.slane %v850, 3
      %v1254 = vrot.slane %v853, 4
      %v1255 = vor.u32 %v1253, %v1254
      %v1256 = vsel %vm1184, %v1251, %v1255
      %v1257 = vrot.slane %v859, 3
      %v1258 = vrot.slane %v862, 4
      %v1259 = vor.u32 %v1257, %v1258
      %v1260 = vsel %vm1184, %v1255, %v1259
      %v1261 = vrot.slane %v868, 3
      %v1262 = vrot.slane %v871, 4
      %v1263 = vor.u32 %v1261, %v1262
      %v1264 = vsel %vm1184, %v1259, %v1263
      %v1265 = vrot.slane %v877, 3
      %v1266 = vrot.slane %v880, 4
      %v1267 = vor.u32 %v1265, %v1266
      %v1268 = vsel %vm1184, %v1263, %v1267
      %v1270 = vshrl.u32 %v1183, 16
      %v1272 = vrot.slane %v1270, 3
      %v1273 = vshll.u32 %v1183, 16
      %v1275 = vrot.slane %v1273, 4
      %v1276 = vor.u32 %v1272, %v1275
      %v1277 = vsel %vm1184, %v1267, %v1276
      %v1315 = vunpack.c.l.b16 %v1165
      %v1316 = vunpack.c.l.b16 %v1166
      %v1317 = vunpack.c.l.b16 %v1167
      %v1318 = vunpack.c.l.b16 %v1168
      %v1319 = vunpack.c.l.b16 %v1169
      %v1320 = vunpack.c.l.b16 %v1170
      %v1321 = vunpack.c.l.b16 %v1171
      %v1322 = vunpack.c.l.b16 %v1172
      %v1323 = vunpack.c.l.b16 %v1173
      %v1324 = vunpack.c.l.b16 %v1174
      %v1325 = vunpack.c.l.b16 %v1175
      %v1326 = vunpack.c.l.b16 %v1176
      %v1327 = vunpack.c.l.b16 %v1177
      %v1328 = vunpack.c.l.b16 %v1178
      %v1329 = vunpack.c.l.b16 %v1179
      %v1330 = vunpack.c.l.b16 %v1180
      %v1331 = vpack.c.b16 %v1316, %v1315
      %v1332 = vpack.c.b16 %v1318, %v1317
      %v1333 = vpack.c.b16 %v1320, %v1319
      %v1334 = vpack.c.b16 %v1322, %v1321
      %v1335 = vpack.c.b16 %v1324, %v1323
      %v1336 = vpack.c.b16 %v1326, %v1325
      %v1337 = vpack.c.b16 %v1328, %v1327
      %v1338 = vpack.c.b16 %v1330, %v1329
      %1347 = vmatprep.subr.bf16.mxu0 0
      %1348 = vmatpush1.bf16.msra.mxu0 %v1338
      %1349 = vmatprep.subr.bf16.mxu0 0
      %1350 = vmatpush1.bf16.msra.mxu0 %v1337
      %1351 = vmatprep.subr.bf16.mxu0 0
      %1352 = vmatpush1.bf16.msra.mxu0 %v1336
      %1353 = vmatprep.subr.bf16.mxu0 0
      %1354 = vmatpush1.bf16.msra.mxu0 %v1335
      %1355 = vmatprep.subr.bf16.mxu0 0
      %1356 = vmatpush1.bf16.msra.mxu0 %v1334
      %1357 = vmatprep.subr.bf16.mxu0 0
      %1358 = vmatpush1.bf16.msra.mxu0 %v1333
      %1359 = vmatprep.subr.bf16.mxu0 0
      %1360 = vmatpush1.bf16.msra.mxu0 %v1332
      %1361 = vmatprep.subr.bf16.mxu0 0
      %1362 = vmatpush1.bf16.msra.mxu0 %v1331
      %1363 = vmatprep.subr.bf16.mxu0 0
      %1364 = vmatpush2.bf16.msra.mxu0 0
      %1365 = vmatprep.subr.bf16.mxu0 0
      %1366 = vmatpush2.bf16.msra.mxu0 0
      %1367 = vmatprep.subr.bf16.mxu0 0
      %1368 = vmatpush2.bf16.msra.mxu0 0
      %1369 = vmatprep.subr.bf16.mxu0 0
      %1370 = vmatpush2.bf16.msra.mxu0 0
      %1371 = vmatprep.subr.bf16.mxu0 0
      %1372 = vmatpush2.bf16.msra.mxu0 0
      %1373 = vmatprep.subr.bf16.mxu0 0
      %1374 = vmatpush2.bf16.msra.mxu0 0
      %1375 = vmatprep.subr.bf16.mxu0 0
      %1376 = vmatpush2.bf16.msra.mxu0 0
      %1377 = vmatprep.subr.bf16.mxu0 0
      %1378 = vmatpush2.bf16.msra.mxu0 0
      %1379 = vmatprep.mubr.bf16.mxu0 0
      %1380 = vmatmul.mubr.bf16.gmra.mxu0 %v1196
      %v1381 = vpop.f32.mrf.mxu0
      %v1382 = vadd.f32 0.0, %v1381
      %v1383 = vpop.f32.mrf.mxu0
      %v1384 = vpop.f32.mrf.mxu0
      %v1385 = vadd.f32 0.0, %v1384
      %v1386 = vpop.f32.mrf.mxu0
      %1387 = vmatprep.mubr.bf16.mxu0 0
      %1388 = vmatmul.mubr.bf16.gmra.mxu0 %v1200
      %v1389 = vpop.f32.mrf.mxu0
      %v1390 = vadd.f32 0.0, %v1389
      %v1391 = vpop.f32.mrf.mxu0
      %v1392 = vpop.f32.mrf.mxu0
      %v1393 = vadd.f32 0.0, %v1392
      %v1394 = vpop.f32.mrf.mxu0
      %1395 = vmatprep.mubr.bf16.mxu0 0
      %1396 = vmatmul.mubr.bf16.gmra.mxu0 %v1204
      %v1397 = vpop.f32.mrf.mxu0
      %v1398 = vadd.f32 0.0, %v1397
      %v1399 = vpop.f32.mrf.mxu0
      %v1400 = vpop.f32.mrf.mxu0
      %v1401 = vadd.f32 0.0, %v1400
      %v1402 = vpop.f32.mrf.mxu0
      %1403 = vmatprep.mubr.bf16.mxu0 0
      %1404 = vmatmul.mubr.bf16.gmra.mxu0 %v1208
      %v1405 = vpop.f32.mrf.mxu0
      %v1406 = vadd.f32 0.0, %v1405
      %v1407 = vpop.f32.mrf.mxu0
      %v1408 = vpop.f32.mrf.mxu0
      %v1409 = vadd.f32 0.0, %v1408
      %v1410 = vpop.f32.mrf.mxu0
      %1411 = vmatprep.mubr.bf16.mxu0 0
      %1412 = vmatmul.mubr.bf16.gmra.mxu0 %v1212
      %v1413 = vpop.f32.mrf.mxu0
      %v1414 = vadd.f32 0.0, %v1413
      %v1415 = vpop.f32.mrf.mxu0
      %v1416 = vpop.f32.mrf.mxu0
      %v1417 = vadd.f32 0.0, %v1416
      %v1418 = vpop.f32.mrf.mxu0
      %1419 = vmatprep.mubr.bf16.mxu0 0
      %1420 = vmatmul.mubr.bf16.gmra.mxu0 %v1216
      %v1421 = vpop.f32.mrf.mxu0
      %v1422 = vadd.f32 0.0, %v1421
      %v1423 = vpop.f32.mrf.mxu0
      %v1424 = vpop.f32.mrf.mxu0
      %v1425 = vadd.f32 0.0, %v1424
      %v1426 = vpop.f32.mrf.mxu0
      %1427 = vmatprep.mubr.bf16.mxu0 0
      %1428 = vmatmul.mubr.bf16.gmra.mxu0 %v1220
      %v1429 = vpop.f32.mrf.mxu0
      %v1430 = vadd.f32 0.0, %v1429
      %v1431 = vpop.f32.mrf.mxu0
      %v1432 = vpop.f32.mrf.mxu0
      %v1433 = vadd.f32 0.0, %v1432
      %v1434 = vpop.f32.mrf.mxu0
      %1435 = vmatprep.mubr.bf16.mxu0 0
      %1436 = vmatmul.mubr.bf16.gmra.mxu0 %v1224
      %v1437 = vpop.f32.mrf.mxu0
      %v1438 = vadd.f32 0.0, %v1437
      %v1439 = vpop.f32.mrf.mxu0
      %v1440 = vpop.f32.mrf.mxu0
      %v1441 = vadd.f32 0.0, %v1440
      %v1442 = vpop.f32.mrf.mxu0
      %1443 = vmatprep.mubr.bf16.mxu0 0
      %1444 = vmatmul.mubr.bf16.gmra.mxu0 %v1228
      %v1445 = vpop.f32.mrf.mxu0
      %v1446 = vadd.f32 0.0, %v1445
      %v1447 = vpop.f32.mrf.mxu0
      %v1448 = vpop.f32.mrf.mxu0
      %v1449 = vadd.f32 0.0, %v1448
      %v1450 = vpop.f32.mrf.mxu0
      %1451 = vmatprep.mubr.bf16.mxu0 0
      %1452 = vmatmul.mubr.bf16.gmra.mxu0 %v1232
      %v1453 = vpop.f32.mrf.mxu0
      %v1454 = vadd.f32 0.0, %v1453
      %v1455 = vpop.f32.mrf.mxu0
      %v1456 = vpop.f32.mrf.mxu0
      %v1457 = vadd.f32 0.0, %v1456
      %v1458 = vpop.f32.mrf.mxu0
      %1459 = vmatprep.mubr.bf16.mxu0 0
      %1460 = vmatmul.mubr.bf16.gmra.mxu0 %v1236
      %v1461 = vpop.f32.mrf.mxu0
      %v1462 = vadd.f32 0.0, %v1461
      %v1463 = vpop.f32.mrf.mxu0
      %v1464 = vpop.f32.mrf.mxu0
      %v1465 = vadd.f32 0.0, %v1464
      %v1466 = vpop.f32.mrf.mxu0
      %1467 = vmatprep.mubr.bf16.mxu0 0
      %1468 = vmatmul.mubr.bf16.gmra.mxu0 %v1240
      %v1469 = vpop.f32.mrf.mxu0
      %v1470 = vadd.f32 0.0, %v1469
      %v1471 = vpop.f32.mrf.mxu0
      %v1472 = vpop.f32.mrf.mxu0
      %v1473 = vadd.f32 0.0, %v1472
      %v1474 = vpop.f32.mrf.mxu0
      %1475 = vmatprep.mubr.bf16.mxu0 0
      %1476 = vmatmul.mubr.bf16.gmra.mxu0 %v1244
      %v1477 = vpop.f32.mrf.mxu0
      %v1478 = vadd.f32 0.0, %v1477
      %v1479 = vpop.f32.mrf.mxu0
      %v1480 = vpop.f32.mrf.mxu0
      %v1481 = vadd.f32 0.0, %v1480
      %v1482 = vpop.f32.mrf.mxu0
      %1483 = vmatprep.mubr.bf16.mxu0 0
      %1484 = vmatmul.mubr.bf16.gmra.mxu0 %v1248
      %v1485 = vpop.f32.mrf.mxu0
      %v1486 = vadd.f32 0.0, %v1485
      %v1487 = vpop.f32.mrf.mxu0
      %v1488 = vpop.f32.mrf.mxu0
      %v1489 = vadd.f32 0.0, %v1488
      %v1490 = vpop.f32.mrf.mxu0
      %1491 = vmatprep.mubr.bf16.mxu0 0
      %1492 = vmatmul.mubr.bf16.gmra.mxu0 %v1252
      %v1493 = vpop.f32.mrf.mxu0
      %v1494 = vadd.f32 0.0, %v1493
      %v1495 = vpop.f32.mrf.mxu0
      %v1496 = vpop.f32.mrf.mxu0
      %v1497 = vadd.f32 0.0, %v1496
      %v1498 = vpop.f32.mrf.mxu0
      %1499 = vmatprep.mubr.bf16.mxu0 0
      %1500 = vmatmul.mubr.bf16.gmra.mxu0 %v1256
      %v1501 = vpop.f32.mrf.mxu0
      %v1502 = vadd.f32 0.0, %v1501
      %v1503 = vpop.f32.mrf.mxu0
      %v1504 = vpop.f32.mrf.mxu0
      %v1505 = vadd.f32 0.0, %v1504
      %v1506 = vpop.f32.mrf.mxu0
      %1507 = vmatprep.mubr.bf16.mxu0 0
      %1508 = vmatmul.mubr.bf16.gmra.mxu0 %v1260
      %v1509 = vpop.f32.mrf.mxu0
      %v1510 = vadd.f32 0.0, %v1509
      %v1511 = vpop.f32.mrf.mxu0
      %v1512 = vpop.f32.mrf.mxu0
      %v1513 = vadd.f32 0.0, %v1512
      %v1514 = vpop.f32.mrf.mxu0
      %1515 = vmatprep.mubr.bf16.mxu0 0
      %1516 = vmatmul.mubr.bf16.gmra.mxu0 %v1264
      %v1517 = vpop.f32.mrf.mxu0
      %v1518 = vadd.f32 0.0, %v1517
      %v1519 = vpop.f32.mrf.mxu0
      %v1520 = vpop.f32.mrf.mxu0
      %v1521 = vadd.f32 0.0, %v1520
      %v1522 = vpop.f32.mrf.mxu0
      %1523 = vmatprep.mubr.bf16.mxu0 0
      %1524 = vmatmul.mubr.bf16.gmra.mxu0 %v1268
      %v1525 = vpop.f32.mrf.mxu0
      %v1526 = vadd.f32 0.0, %v1525
      %v1527 = vpop.f32.mrf.mxu0
      %v1528 = vpop.f32.mrf.mxu0
      %v1529 = vadd.f32 0.0, %v1528
      %v1530 = vpop.f32.mrf.mxu0
      %1531 = vmatprep.mubr.bf16.mxu0 0
      %1532 = vmatmul.mubr.bf16.gmra.mxu0 %v1277
      %v1533 = vpop.f32.mrf.mxu0
      %v1534 = vadd.f32 0.0, %v1533
      %v1535 = vpop.f32.mrf.mxu0
      %v1536 = vpop.f32.mrf.mxu0
      %v1537 = vadd.f32 0.0, %v1536
      %v1538 = vpop.f32.mrf.mxu0
      %1539 = vmatprep.mubr.bf16.mxu0 0
      %1540 = vmatmul.mubr.bf16.gmra.mxu0 %v1276
      %v1541 = vpop.f32.mrf.mxu0
      %v1542 = vadd.f32 0.0, %v1541
      %v1543 = vpop.f32.mrf.mxu0
      %v1544 = vpop.f32.mrf.mxu0
      %v1545 = vpop.f32.mrf.mxu0
      %1546 = vdwg.mxu0
      %v1547 = vadd.f32 %v998, %v1382
      %v1548 = vadd.f32 %v1001, %v1385
      %v1549 = vadd.f32 %v1006, %v1390
      %v1550 = vadd.f32 %v1009, %v1393
      %v1551 = vadd.f32 %v1014, %v1398
      %v1552 = vadd.f32 %v1017, %v1401
      %v1553 = vadd.f32 %v1022, %v1406
      %v1554 = vadd.f32 %v1025, %v1409
      %v1555 = vadd.f32 %v1030, %v1414
      %v1556 = vadd.f32 %v1033, %v1417
      %v1557 = vadd.f32 %v1038, %v1422
      %v1558 = vadd.f32 %v1041, %v1425
      %v1559 = vadd.f32 %v1046, %v1430
      %v1560 = vadd.f32 %v1049, %v1433
      %v1561 = vadd.f32 %v1054, %v1438
      %v1562 = vadd.f32 %v1057, %v1441
      %v1563 = vadd.f32 %v1062, %v1446
      %v1564 = vadd.f32 %v1065, %v1449
      %v1565 = vadd.f32 %v1070, %v1454
      %v1566 = vadd.f32 %v1073, %v1457
      %v1567 = vadd.f32 %v1078, %v1462
      %v1568 = vadd.f32 %v1081, %v1465
      %v1569 = vadd.f32 %v1086, %v1470
      %v1570 = vadd.f32 %v1089, %v1473
      %v1571 = vadd.f32 %v1094, %v1478
      %v1572 = vadd.f32 %v1097, %v1481
      %v1573 = vadd.f32 %v1102, %v1486
      %v1574 = vadd.f32 %v1105, %v1489
      %v1575 = vadd.f32 %v1110, %v1494
      %v1576 = vadd.f32 %v1113, %v1497
      %v1577 = vadd.f32 %v1118, %v1502
      %v1578 = vadd.f32 %v1121, %v1505
      %v1579 = vadd.f32 %v1126, %v1510
      %v1580 = vadd.f32 %v1129, %v1513
      %v1581 = vadd.f32 %v1134, %v1518
      %v1582 = vadd.f32 %v1137, %v1521
      %v1583 = vadd.f32 %v1142, %v1526
      %v1584 = vadd.f32 %v1145, %v1529
      %v1585 = vadd.f32 %v1150, %v1534
      %v1586 = vadd.f32 %v1153, %v1537
      %v1587 = vadd.f32 %v1158, %v1542
      %v1588 = vld [vmem:[%s199 + $0x8] sm:$0x8]
      %v1589 = vld [vmem:[%s199 + $0xc] sm:$0xf]
      %v1590 = vld [vmem:[%s199 + $0x10] sm:$0xf]
      %v1591 = vld [vmem:[%s199 + $0x14] sm:$0xf]
      %v1592 = vld [vmem:[%s199 + $0x18] sm:$0xf]
      %v1593 = vld [vmem:[%s199 + $0x1c] sm:$0xf]
      %v1594 = vld [vmem:[%s199 + $0x20] sm:$0xf]
      %v1595 = vld [vmem:[%s199 + $0x24] sm:$0xf]
      %v1596 = vld [vmem:[%s199 + $0x28] sm:$0xf]
      %v1597 = vld [vmem:[%s199 + $0x2c] sm:$0xf]
      %v1598 = vld [vmem:[%s199 + $0x30] sm:$0xf]
      %v1599 = vld [vmem:[%s199 + $0x34] sm:$0xf]
      %v1600 = vld [vmem:[%s199 + $0x38] sm:$0xf]
      %v1601 = vld [vmem:[%s199 + $0x3c] sm:$0xf]
      %v1602 = vld [vmem:[%s199 + $0x40] sm:$0xf]
      %v1603 = vld [vmem:[%s199 + $0x44] sm:$0xf]
      %v1604 = vld [vmem:[%s199 + $0x48] sm:$0xf]
      %v1605 = vld [vmem:[%s199 + $0x4c] sm:$0xf]
      %v1606 = vld [vmem:[%s199 + $0x50] sm:$0xf]
      %v1607 = vld [vmem:[%s199 + $0x54] sm:$0xf]
      %v1608 = vld [vmem:[%s199 + $0x58] sm:$0xf]
      %v1609 = vld [vmem:[%s199 + $0x5c] sm:$0xf]
      %v1610 = vld [vmem:[%s199 + $0x60] sm:$0xf]
      %v1611 = vld [vmem:[%s199 + $0x64] sm:$0xf]
      %v1612 = vld [vmem:[%s199 + $0x68] sm:$0xf]
      %v1613 = vld [vmem:[%s199 + $0x6c] sm:$0xf]
      %v1614 = vld [vmem:[%s199 + $0x70] sm:$0xf]
      %v1615 = vld [vmem:[%s199 + $0x74] sm:$0xf]
      %v1616 = vld [vmem:[%s199 + $0x78] sm:$0xf]
      %v1617 = vld [vmem:[%s199 + $0x7c] sm:$0xf]
      %v1618 = vld [vmem:[%s199 + $0x80] sm:$0xf]
      %v1619 = vld [vmem:[%s199 + $0x84] sm:$0xf]
      %v1620 = vld [vmem:[%s199 + $0x88] sm:$0xf]
      %v1621 = vld [vmem:[%s199 + $0x8c] sm:$0xf]
      %v1622 = vld [vmem:[%s199 + $0x90] sm:$0xf]
      %v1623 = vld [vmem:[%s199 + $0x94] sm:$0xf]
      %v1624 = vld [vmem:[%s199 + $0x98] sm:$0xf]
      %v1625 = vld [vmem:[%s199 + $0x9c] sm:$0xf]
      %v1626 = vld [vmem:[%s199 + $0xa0] sm:$0xf]
      %v1627 = vld [vmem:[%s199 + $0xa4] sm:$0xf]
      %v1628 = vld [vmem:[%s199 + $0xa8] sm:$0xf]
      %v1629 = vld [vmem:[%s199 + $0xac] sm:$0xf]
      %s1630 = scalar_lea.vmem %s2, 192
      %v1631 = vld [vmem:[%s1630] sm:$0xf]
      %v1632 = vld [vmem:[%s1630 + $0x4] sm:$0xf]
      %v1633 = vld [vmem:[%s1630 + $0x8] sm:$0xf]
      %v1634 = vld [vmem:[%s1630 + $0xc] sm:$0xf]
      %v1635 = vld [vmem:[%s1630 + $0x10] sm:$0xf]
      %v1636 = vld [vmem:[%s1630 + $0x14] sm:$0xf]
      %v1637 = vld [vmem:[%s1630 + $0x18] sm:$0xf]
      %v1638 = vld [vmem:[%s1630 + $0x1c] sm:$0xf]
      %v1639 = vld [vmem:[%s1630 + $0x20] sm:$0xf]
      %v1640 = vld [vmem:[%s1630 + $0x24] sm:$0xf]
      %v1641 = vld [vmem:[%s1630 + $0x28] sm:$0xf]
      %v1642 = vld [vmem:[%s1630 + $0x2c] sm:$0xf]
      %v1643 = vld [vmem:[%s1630 + $0x30] sm:$0xf]
      %v1644 = vld [vmem:[%s1630 + $0x34] sm:$0xf]
      %v1645 = vld [vmem:[%s1630 + $0x38] sm:$0xf]
      %v1646 = vld [vmem:[%s1630 + $0x3c] sm:$0xf]
      %v1689 = vunpack.c.l.b16 %v1588
      %v1690 = vunpack.c.l.b16 %v1589
      %v1691 = vunpack.c.l.b16 %v1590
      %v1692 = vunpack.c.l.b16 %v1591
      %v1693 = vunpack.c.l.b16 %v1592
      %v1694 = vunpack.c.l.b16 %v1593
      %v1695 = vunpack.c.l.b16 %v1594
      %v1696 = vunpack.c.l.b16 %v1595
      %v1697 = vunpack.c.l.b16 %v1596
      %v1698 = vunpack.c.l.b16 %v1597
      %v1699 = vunpack.c.l.b16 %v1598
      %v1700 = vunpack.c.l.b16 %v1599
      %v1701 = vunpack.c.l.b16 %v1600
      %v1702 = vunpack.c.l.b16 %v1601
      %v1703 = vunpack.c.l.b16 %v1602
      %v1704 = vunpack.c.l.b16 %v1603
      %v1705 = vunpack.c.l.b16 %v1604
      %v1706 = vunpack.c.l.b16 %v1605
      %v1707 = vunpack.c.l.b16 %v1606
      %v1708 = vunpack.c.l.b16 %v1607
      %v1709 = vunpack.c.l.b16 %v1608
      %v1710 = vunpack.c.l.b16 %v1609
      %v1711 = vunpack.c.l.b16 %v1610
      %v1712 = vunpack.c.l.b16 %v1611
      %v1713 = vunpack.c.l.b16 %v1612
      %v1714 = vunpack.c.l.b16 %v1613
      %v1715 = vunpack.c.l.b16 %v1614
      %v1716 = vunpack.c.l.b16 %v1615
      %v1717 = vunpack.c.l.b16 %v1616
      %v1718 = vunpack.c.l.b16 %v1617
      %v1719 = vunpack.c.l.b16 %v1618
      %v1720 = vunpack.c.l.b16 %v1619
      %v1721 = vunpack.c.l.b16 %v1620
      %v1722 = vunpack.c.l.b16 %v1621
      %v1723 = vunpack.c.l.b16 %v1622
      %v1724 = vunpack.c.l.b16 %v1623
      %v1725 = vunpack.c.l.b16 %v1624
      %v1726 = vunpack.c.l.b16 %v1625
      %v1727 = vunpack.c.l.b16 %v1626
      %v1728 = vunpack.c.l.b16 %v1627
      %v1729 = vunpack.c.l.b16 %v1628
      %v1730 = vunpack.c.l.b16 %v1629
      %v1731 = vpack.c.b16 %v1690, %v1689
      %v1732 = vpack.c.b16 %v1692, %v1691
      %v1733 = vpack.c.b16 %v1694, %v1693
      %v1734 = vpack.c.b16 %v1696, %v1695
      %v1735 = vpack.c.b16 %v1698, %v1697
      %v1736 = vpack.c.b16 %v1700, %v1699
      %v1737 = vpack.c.b16 %v1702, %v1701
      %v1738 = vpack.c.b16 %v1704, %v1703
      %v1739 = vpack.c.b16 %v1706, %v1705
      %v1740 = vpack.c.b16 %v1708, %v1707
      %v1741 = vpack.c.b16 %v1710, %v1709
      %v1742 = vpack.c.b16 %v1712, %v1711
      %v1743 = vpack.c.b16 %v1714, %v1713
      %v1744 = vpack.c.b16 %v1716, %v1715
      %v1745 = vpack.c.b16 %v1718, %v1717
      %v1746 = vpack.c.b16 %v1720, %v1719
      %v1747 = vpack.c.b16 %v1722, %v1721
      %v1748 = vpack.c.b16 %v1724, %v1723
      %v1749 = vpack.c.b16 %v1726, %v1725
      %v1750 = vpack.c.b16 %v1728, %v1727
      %v1751 = vpack.c.b16 %v1730, %v1729
      %v1753 = vshrl.u32 %v1731, 16
      %v1755 = vrot.slane %v1753, 3
      %v1756 = vshll.u32 %v1731, 16
      %v1758 = vrot.slane %v1756, 4
      %v1759 = vor.u32 %v1755, %v1758
      %v1761 = vshrl.u32 %v1732, 16
      %v1763 = vrot.slane %v1761, 3
      %v1764 = vshll.u32 %v1732, 16
      %v1766 = vrot.slane %v1764, 4
      %v1767 = vor.u32 %v1763, %v1766
      %v1768 = vsel %vm1184, %v1759, %v1767
      %v1770 = vshrl.u32 %v1733, 16
      %v1772 = vrot.slane %v1770, 3
      %v1773 = vshll.u32 %v1733, 16
      %v1775 = vrot.slane %v1773, 4
      %v1776 = vor.u32 %v1772, %v1775
      %v1777 = vsel %vm1184, %v1767, %v1776
      %v1779 = vshrl.u32 %v1734, 16
      %v1781 = vrot.slane %v1779, 3
      %v1782 = vshll.u32 %v1734, 16
      %v1784 = vrot.slane %v1782, 4
      %v1785 = vor.u32 %v1781, %v1784
      %v1786 = vsel %vm1184, %v1776, %v1785
      %v1788 = vshrl.u32 %v1735, 16
      %v1790 = vrot.slane %v1788, 3
      %v1791 = vshll.u32 %v1735, 16
      %v1793 = vrot.slane %v1791, 4
      %v1794 = vor.u32 %v1790, %v1793
      %v1795 = vsel %vm1184, %v1785, %v1794
      %v1797 = vshrl.u32 %v1736, 16
      %v1799 = vrot.slane %v1797, 3
      %v1800 = vshll.u32 %v1736, 16
      %v1802 = vrot.slane %v1800, 4
      %v1803 = vor.u32 %v1799, %v1802
      %v1804 = vsel %vm1184, %v1794, %v1803
      %v1806 = vshrl.u32 %v1737, 16
      %v1808 = vrot.slane %v1806, 3
      %v1809 = vshll.u32 %v1737, 16
      %v1811 = vrot.slane %v1809, 4
      %v1812 = vor.u32 %v1808, %v1811
      %v1813 = vsel %vm1184, %v1803, %v1812
      %v1815 = vshrl.u32 %v1738, 16
      %v1817 = vrot.slane %v1815, 3
      %v1818 = vshll.u32 %v1738, 16
      %v1820 = vrot.slane %v1818, 4
      %v1821 = vor.u32 %v1817, %v1820
      %v1822 = vsel %vm1184, %v1812, %v1821
      %v1824 = vshrl.u32 %v1739, 16
      %v1826 = vrot.slane %v1824, 3
      %v1827 = vshll.u32 %v1739, 16
      %v1829 = vrot.slane %v1827, 4
      %v1830 = vor.u32 %v1826, %v1829
      %v1831 = vsel %vm1184, %v1821, %v1830
      %v1833 = vshrl.u32 %v1740, 16
      %v1835 = vrot.slane %v1833, 3
      %v1836 = vshll.u32 %v1740, 16
      %v1838 = vrot.slane %v1836, 4
      %v1839 = vor.u32 %v1835, %v1838
      %v1840 = vsel %vm1184, %v1830, %v1839
      %v1842 = vshrl.u32 %v1741, 16
      %v1844 = vrot.slane %v1842, 3
      %v1845 = vshll.u32 %v1741, 16
      %v1847 = vrot.slane %v1845, 4
      %v1848 = vor.u32 %v1844, %v1847
      %v1849 = vsel %vm1184, %v1839, %v1848
      %v1851 = vshrl.u32 %v1742, 16
      %v1853 = vrot.slane %v1851, 3
      %v1854 = vshll.u32 %v1742, 16
      %v1856 = vrot.slane %v1854, 4
      %v1857 = vor.u32 %v1853, %v1856
      %v1858 = vsel %vm1184, %v1848, %v1857
      %v1860 = vshrl.u32 %v1743, 16
      %v1862 = vrot.slane %v1860, 3
      %v1863 = vshll.u32 %v1743, 16
      %v1865 = vrot.slane %v1863, 4
      %v1866 = vor.u32 %v1862, %v1865
      %v1867 = vsel %vm1184, %v1857, %v1866
      %v1869 = vshrl.u32 %v1744, 16
      %v1871 = vrot.slane %v1869, 3
      %v1872 = vshll.u32 %v1744, 16
      %v1874 = vrot.slane %v1872, 4
      %v1875 = vor.u32 %v1871, %v1874
      %v1876 = vsel %vm1184, %v1866, %v1875
      %v1878 = vshrl.u32 %v1745, 16
      %v1880 = vrot.slane %v1878, 3
      %v1881 = vshll.u32 %v1745, 16
      %v1883 = vrot.slane %v1881, 4
      %v1884 = vor.u32 %v1880, %v1883
      %v1885 = vsel %vm1184, %v1875, %v1884
      %v1887 = vshrl.u32 %v1746, 16
      %v1889 = vrot.slane %v1887, 3
      %v1890 = vshll.u32 %v1746, 16
      %v1892 = vrot.slane %v1890, 4
      %v1893 = vor.u32 %v1889, %v1892
      %v1894 = vsel %vm1184, %v1884, %v1893
      %v1896 = vshrl.u32 %v1747, 16
      %v1898 = vrot.slane %v1896, 3
      %v1899 = vshll.u32 %v1747, 16
      %v1901 = vrot.slane %v1899, 4
      %v1902 = vor.u32 %v1898, %v1901
      %v1903 = vsel %vm1184, %v1893, %v1902
      %v1905 = vshrl.u32 %v1748, 16
      %v1907 = vrot.slane %v1905, 3
      %v1908 = vshll.u32 %v1748, 16
      %v1910 = vrot.slane %v1908, 4
      %v1911 = vor.u32 %v1907, %v1910
      %v1912 = vsel %vm1184, %v1902, %v1911
      %v1914 = vshrl.u32 %v1749, 16
      %v1916 = vrot.slane %v1914, 3
      %v1917 = vshll.u32 %v1749, 16
      %v1919 = vrot.slane %v1917, 4
      %v1920 = vor.u32 %v1916, %v1919
      %v1921 = vsel %vm1184, %v1911, %v1920
      %v1923 = vshrl.u32 %v1750, 16
      %v1925 = vrot.slane %v1923, 3
      %v1926 = vshll.u32 %v1750, 16
      %v1928 = vrot.slane %v1926, 4
      %v1929 = vor.u32 %v1925, %v1928
      %v1930 = vsel %vm1184, %v1920, %v1929
      %v1932 = vshrl.u32 %v1751, 16
      %v1934 = vrot.slane %v1932, 3
      %v1935 = vshll.u32 %v1751, 16
      %v1937 = vrot.slane %v1935, 4
      %v1938 = vor.u32 %v1934, %v1937
      %v1939 = vsel %vm1184, %v1929, %v1938
      %v1977 = vunpack.c.l.b16 %v1631
      %v1978 = vunpack.c.l.b16 %v1632
      %v1979 = vunpack.c.l.b16 %v1633
      %v1980 = vunpack.c.l.b16 %v1634
      %v1981 = vunpack.c.l.b16 %v1635
      %v1982 = vunpack.c.l.b16 %v1636
      %v1983 = vunpack.c.l.b16 %v1637
      %v1984 = vunpack.c.l.b16 %v1638
      %v1985 = vunpack.c.l.b16 %v1639
      %v1986 = vunpack.c.l.b16 %v1640
      %v1987 = vunpack.c.l.b16 %v1641
      %v1988 = vunpack.c.l.b16 %v1642
      %v1989 = vunpack.c.l.b16 %v1643
      %v1990 = vunpack.c.l.b16 %v1644
      %v1991 = vunpack.c.l.b16 %v1645
      %v1992 = vunpack.c.l.b16 %v1646
      %v1993 = vpack.c.b16 %v1978, %v1977
      %v1994 = vpack.c.b16 %v1980, %v1979
      %v1995 = vpack.c.b16 %v1982, %v1981
      %v1996 = vpack.c.b16 %v1984, %v1983
      %v1997 = vpack.c.b16 %v1986, %v1985
      %v1998 = vpack.c.b16 %v1988, %v1987
      %v1999 = vpack.c.b16 %v1990, %v1989
      %v2000 = vpack.c.b16 %v1992, %v1991
      %2009 = vmatprep.subr.bf16.mxu0 0
      %2010 = vmatpush1.bf16.msra.mxu0 %v2000
      %2011 = vmatprep.subr.bf16.mxu0 0
      %2012 = vmatpush1.bf16.msra.mxu0 %v1999
      %2013 = vmatprep.subr.bf16.mxu0 0
      %2014 = vmatpush1.bf16.msra.mxu0 %v1998
      %2015 = vmatprep.subr.bf16.mxu0 0
      %2016 = vmatpush1.bf16.msra.mxu0 %v1997
      %2017 = vmatprep.subr.bf16.mxu0 0
      %2018 = vmatpush1.bf16.msra.mxu0 %v1996
      %2019 = vmatprep.subr.bf16.mxu0 0
      %2020 = vmatpush1.bf16.msra.mxu0 %v1995
      %2021 = vmatprep.subr.bf16.mxu0 0
      %2022 = vmatpush1.bf16.msra.mxu0 %v1994
      %2023 = vmatprep.subr.bf16.mxu0 0
      %2024 = vmatpush1.bf16.msra.mxu0 %v1993
      %2025 = vmatprep.subr.bf16.mxu0 0
      %2026 = vmatpush2.bf16.msra.mxu0 0
      %2027 = vmatprep.subr.bf16.mxu0 0
      %2028 = vmatpush2.bf16.msra.mxu0 0
      %2029 = vmatprep.subr.bf16.mxu0 0
      %2030 = vmatpush2.bf16.msra.mxu0 0
      %2031 = vmatprep.subr.bf16.mxu0 0
      %2032 = vmatpush2.bf16.msra.mxu0 0
      %2033 = vmatprep.subr.bf16.mxu0 0
      %2034 = vmatpush2.bf16.msra.mxu0 0
      %2035 = vmatprep.subr.bf16.mxu0 0
      %2036 = vmatpush2.bf16.msra.mxu0 0
      %2037 = vmatprep.subr.bf16.mxu0 0
      %2038 = vmatpush2.bf16.msra.mxu0 0
      %2039 = vmatprep.subr.bf16.mxu0 0
      %2040 = vmatpush2.bf16.msra.mxu0 0
      %2041 = vmatprep.mubr.bf16.mxu0 0
      %2042 = vmatmul.mubr.bf16.gmra.mxu0 %v1768
      %v2043 = vpop.f32.mrf.mxu0
      %v2044 = vadd.f32 0.0, %v2043
      %v2045 = vpop.f32.mrf.mxu0
      %v2046 = vpop.f32.mrf.mxu0
      %v2047 = vadd.f32 0.0, %v2046
      %v2048 = vpop.f32.mrf.mxu0
      %2049 = vmatprep.mubr.bf16.mxu0 0
      %2050 = vmatmul.mubr.bf16.gmra.mxu0 %v1777
      %v2051 = vpop.f32.mrf.mxu0
      %v2052 = vadd.f32 0.0, %v2051
      %v2053 = vpop.f32.mrf.mxu0
      %v2054 = vpop.f32.mrf.mxu0
      %v2055 = vadd.f32 0.0, %v2054
      %v2056 = vpop.f32.mrf.mxu0
      %2057 = vmatprep.mubr.bf16.mxu0 0
      %2058 = vmatmul.mubr.bf16.gmra.mxu0 %v1786
      %v2059 = vpop.f32.mrf.mxu0
      %v2060 = vadd.f32 0.0, %v2059
      %v2061 = vpop.f32.mrf.mxu0
      %v2062 = vpop.f32.mrf.mxu0
      %v2063 = vadd.f32 0.0, %v2062
      %v2064 = vpop.f32.mrf.mxu0
      %2065 = vmatprep.mubr.bf16.mxu0 0
      %2066 = vmatmul.mubr.bf16.gmra.mxu0 %v1795
      %v2067 = vpop.f32.mrf.mxu0
      %v2068 = vadd.f32 0.0, %v2067
      %v2069 = vpop.f32.mrf.mxu0
      %v2070 = vpop.f32.mrf.mxu0
      %v2071 = vadd.f32 0.0, %v2070
      %v2072 = vpop.f32.mrf.mxu0
      %2073 = vmatprep.mubr.bf16.mxu0 0
      %2074 = vmatmul.mubr.bf16.gmra.mxu0 %v1804
      %v2075 = vpop.f32.mrf.mxu0
      %v2076 = vadd.f32 0.0, %v2075
      %v2077 = vpop.f32.mrf.mxu0
      %v2078 = vpop.f32.mrf.mxu0
      %v2079 = vadd.f32 0.0, %v2078
      %v2080 = vpop.f32.mrf.mxu0
      %2081 = vmatprep.mubr.bf16.mxu0 0
      %2082 = vmatmul.mubr.bf16.gmra.mxu0 %v1813
      %v2083 = vpop.f32.mrf.mxu0
      %v2084 = vadd.f32 0.0, %v2083
      %v2085 = vpop.f32.mrf.mxu0
      %v2086 = vpop.f32.mrf.mxu0
      %v2087 = vadd.f32 0.0, %v2086
      %v2088 = vpop.f32.mrf.mxu0
      %2089 = vmatprep.mubr.bf16.mxu0 0
      %2090 = vmatmul.mubr.bf16.gmra.mxu0 %v1822
      %v2091 = vpop.f32.mrf.mxu0
      %v2092 = vadd.f32 0.0, %v2091
      %v2093 = vpop.f32.mrf.mxu0
      %v2094 = vpop.f32.mrf.mxu0
      %v2095 = vadd.f32 0.0, %v2094
      %v2096 = vpop.f32.mrf.mxu0
      %2097 = vmatprep.mubr.bf16.mxu0 0
      %2098 = vmatmul.mubr.bf16.gmra.mxu0 %v1831
      %v2099 = vpop.f32.mrf.mxu0
      %v2100 = vadd.f32 0.0, %v2099
      %v2101 = vpop.f32.mrf.mxu0
      %v2102 = vpop.f32.mrf.mxu0
      %v2103 = vadd.f32 0.0, %v2102
      %v2104 = vpop.f32.mrf.mxu0
      %2105 = vmatprep.mubr.bf16.mxu0 0
      %2106 = vmatmul.mubr.bf16.gmra.mxu0 %v1840
      %v2107 = vpop.f32.mrf.mxu0
      %v2108 = vadd.f32 0.0, %v2107
      %v2109 = vpop.f32.mrf.mxu0
      %v2110 = vpop.f32.mrf.mxu0
      %v2111 = vadd.f32 0.0, %v2110
      %v2112 = vpop.f32.mrf.mxu0
      %2113 = vmatprep.mubr.bf16.mxu0 0
      %2114 = vmatmul.mubr.bf16.gmra.mxu0 %v1849
      %v2115 = vpop.f32.mrf.mxu0
      %v2116 = vadd.f32 0.0, %v2115
      %v2117 = vpop.f32.mrf.mxu0
      %v2118 = vpop.f32.mrf.mxu0
      %v2119 = vadd.f32 0.0, %v2118
      %v2120 = vpop.f32.mrf.mxu0
      %2121 = vmatprep.mubr.bf16.mxu0 0
      %2122 = vmatmul.mubr.bf16.gmra.mxu0 %v1858
      %v2123 = vpop.f32.mrf.mxu0
      %v2124 = vadd.f32 0.0, %v2123
      %v2125 = vpop.f32.mrf.mxu0
      %v2126 = vpop.f32.mrf.mxu0
      %v2127 = vadd.f32 0.0, %v2126
      %v2128 = vpop.f32.mrf.mxu0
      %2129 = vmatprep.mubr.bf16.mxu0 0
      %2130 = vmatmul.mubr.bf16.gmra.mxu0 %v1867
      %v2131 = vpop.f32.mrf.mxu0
      %v2132 = vadd.f32 0.0, %v2131
      %v2133 = vpop.f32.mrf.mxu0
      %v2134 = vpop.f32.mrf.mxu0
      %v2135 = vadd.f32 0.0, %v2134
      %v2136 = vpop.f32.mrf.mxu0
      %2137 = vmatprep.mubr.bf16.mxu0 0
      %2138 = vmatmul.mubr.bf16.gmra.mxu0 %v1876
      %v2139 = vpop.f32.mrf.mxu0
      %v2140 = vadd.f32 0.0, %v2139
      %v2141 = vpop.f32.mrf.mxu0
      %v2142 = vpop.f32.mrf.mxu0
      %v2143 = vadd.f32 0.0, %v2142
      %v2144 = vpop.f32.mrf.mxu0
      %2145 = vmatprep.mubr.bf16.mxu0 0
      %2146 = vmatmul.mubr.bf16.gmra.mxu0 %v1885
      %v2147 = vpop.f32.mrf.mxu0
      %v2148 = vadd.f32 0.0, %v2147
      %v2149 = vpop.f32.mrf.mxu0
      %v2150 = vpop.f32.mrf.mxu0
      %v2151 = vadd.f32 0.0, %v2150
      %v2152 = vpop.f32.mrf.mxu0
      %2153 = vmatprep.mubr.bf16.mxu0 0
      %2154 = vmatmul.mubr.bf16.gmra.mxu0 %v1894
      %v2155 = vpop.f32.mrf.mxu0
      %v2156 = vadd.f32 0.0, %v2155
      %v2157 = vpop.f32.mrf.mxu0
      %v2158 = vpop.f32.mrf.mxu0
      %v2159 = vadd.f32 0.0, %v2158
      %v2160 = vpop.f32.mrf.mxu0
      %2161 = vmatprep.mubr.bf16.mxu0 0
      %2162 = vmatmul.mubr.bf16.gmra.mxu0 %v1903
      %v2163 = vpop.f32.mrf.mxu0
      %v2164 = vadd.f32 0.0, %v2163
      %v2165 = vpop.f32.mrf.mxu0
      %v2166 = vpop.f32.mrf.mxu0
      %v2167 = vadd.f32 0.0, %v2166
      %v2168 = vpop.f32.mrf.mxu0
      %2169 = vmatprep.mubr.bf16.mxu0 0
      %2170 = vmatmul.mubr.bf16.gmra.mxu0 %v1912
      %v2171 = vpop.f32.mrf.mxu0
      %v2172 = vadd.f32 0.0, %v2171
      %v2173 = vpop.f32.mrf.mxu0
      %v2174 = vpop.f32.mrf.mxu0
      %v2175 = vadd.f32 0.0, %v2174
      %v2176 = vpop.f32.mrf.mxu0
      %2177 = vmatprep.mubr.bf16.mxu0 0
      %2178 = vmatmul.mubr.bf16.gmra.mxu0 %v1921
      %v2179 = vpop.f32.mrf.mxu0
      %v2180 = vadd.f32 0.0, %v2179
      %v2181 = vpop.f32.mrf.mxu0
      %v2182 = vpop.f32.mrf.mxu0
      %v2183 = vadd.f32 0.0, %v2182
      %v2184 = vpop.f32.mrf.mxu0
      %2185 = vmatprep.mubr.bf16.mxu0 0
      %2186 = vmatmul.mubr.bf16.gmra.mxu0 %v1930
      %v2187 = vpop.f32.mrf.mxu0
      %v2188 = vadd.f32 0.0, %v2187
      %v2189 = vpop.f32.mrf.mxu0
      %v2190 = vpop.f32.mrf.mxu0
      %v2191 = vadd.f32 0.0, %v2190
      %v2192 = vpop.f32.mrf.mxu0
      %2193 = vmatprep.mubr.bf16.mxu0 0
      %2194 = vmatmul.mubr.bf16.gmra.mxu0 %v1939
      %v2195 = vpop.f32.mrf.mxu0
      %v2196 = vadd.f32 0.0, %v2195
      %v2197 = vpop.f32.mrf.mxu0
      %v2198 = vpop.f32.mrf.mxu0
      %v2199 = vadd.f32 0.0, %v2198
      %v2200 = vpop.f32.mrf.mxu0
      %2201 = vmatprep.mubr.bf16.mxu0 0
      %2202 = vmatmul.mubr.bf16.gmra.mxu0 %v1938
      %v2203 = vpop.f32.mrf.mxu0
      %v2204 = vadd.f32 0.0, %v2203
      %v2205 = vpop.f32.mrf.mxu0
      %v2206 = vpop.f32.mrf.mxu0
      %v2207 = vpop.f32.mrf.mxu0
      %2208 = vdwg.mxu0
      %v2209 = vadd.f32 %v1547, %v2044
      %v2210 = vadd.f32 %v1548, %v2047
      %v2211 = vadd.f32 %v1549, %v2052
      %v2212 = vadd.f32 %v1550, %v2055
      %v2213 = vadd.f32 %v1551, %v2060
      %v2214 = vadd.f32 %v1552, %v2063
      %v2215 = vadd.f32 %v1553, %v2068
      %v2216 = vadd.f32 %v1554, %v2071
      %v2217 = vadd.f32 %v1555, %v2076
      %v2218 = vadd.f32 %v1556, %v2079
      %v2219 = vadd.f32 %v1557, %v2084
      %v2220 = vadd.f32 %v1558, %v2087
      %v2221 = vadd.f32 %v1559, %v2092
      %v2222 = vadd.f32 %v1560, %v2095
      %v2223 = vadd.f32 %v1561, %v2100
      %v2224 = vadd.f32 %v1562, %v2103
      %v2225 = vadd.f32 %v1563, %v2108
      %v2226 = vadd.f32 %v1564, %v2111
      %v2227 = vadd.f32 %v1565, %v2116
      %v2228 = vadd.f32 %v1566, %v2119
      %v2229 = vadd.f32 %v1567, %v2124
      %v2230 = vadd.f32 %v1568, %v2127
      %v2231 = vadd.f32 %v1569, %v2132
      %v2232 = vadd.f32 %v1570, %v2135
      %v2233 = vadd.f32 %v1571, %v2140
      %v2234 = vadd.f32 %v1572, %v2143
      %v2235 = vadd.f32 %v1573, %v2148
      %v2236 = vadd.f32 %v1574, %v2151
      %v2237 = vadd.f32 %v1575, %v2156
      %v2238 = vadd.f32 %v1576, %v2159
      %v2239 = vadd.f32 %v1577, %v2164
      %v2240 = vadd.f32 %v1578, %v2167
      %v2241 = vadd.f32 %v1579, %v2172
      %v2242 = vadd.f32 %v1580, %v2175
      %v2243 = vadd.f32 %v1581, %v2180
      %v2244 = vadd.f32 %v1582, %v2183
      %v2245 = vadd.f32 %v1583, %v2188
      %v2246 = vadd.f32 %v1584, %v2191
      %v2247 = vadd.f32 %v1585, %v2196
      %v2248 = vadd.f32 %v1586, %v2199
      %v2249 = vadd.f32 %v1587, %v2204
      %s2250 = scalar_lea.vmem %s2, 256
      %v2251 = vld [vmem:[%s2250] sm:$0xf]
      %v2252 = vld [vmem:[%s2250 + $0x4] sm:$0xf]
      %v2253 = vld [vmem:[%s2250 + $0x8] sm:$0xf]
      %v2254 = vld [vmem:[%s2250 + $0xc] sm:$0xf]
      %v2255 = vld [vmem:[%s2250 + $0x10] sm:$0xf]
      %v2256 = vld [vmem:[%s2250 + $0x14] sm:$0xf]
      %v2257 = vld [vmem:[%s2250 + $0x18] sm:$0xf]
      %v2258 = vld [vmem:[%s2250 + $0x1c] sm:$0xf]
      %v2259 = vld [vmem:[%s2250 + $0x20] sm:$0xf]
      %v2260 = vld [vmem:[%s2250 + $0x24] sm:$0xf]
      %v2261 = vld [vmem:[%s2250 + $0x28] sm:$0xf]
      %v2262 = vld [vmem:[%s2250 + $0x2c] sm:$0xf]
      %v2263 = vld [vmem:[%s2250 + $0x30] sm:$0xf]
      %v2264 = vld [vmem:[%s2250 + $0x34] sm:$0xf]
      %v2265 = vld [vmem:[%s2250 + $0x38] sm:$0xf]
      %v2266 = vld [vmem:[%s2250 + $0x3c] sm:$0xf]
      %v2267 = vpack.c.b16 %v1691, %v1690
      %v2268 = vpack.c.b16 %v1693, %v1692
      %v2269 = vpack.c.b16 %v1695, %v1694
      %v2270 = vpack.c.b16 %v1697, %v1696
      %v2271 = vpack.c.b16 %v1699, %v1698
      %v2272 = vpack.c.b16 %v1701, %v1700
      %v2273 = vpack.c.b16 %v1703, %v1702
      %v2274 = vpack.c.b16 %v1705, %v1704
      %v2275 = vpack.c.b16 %v1707, %v1706
      %v2276 = vpack.c.b16 %v1709, %v1708
      %v2277 = vpack.c.b16 %v1711, %v1710
      %v2278 = vpack.c.b16 %v1713, %v1712
      %v2279 = vpack.c.b16 %v1715, %v1714
      %v2280 = vpack.c.b16 %v1717, %v1716
      %v2281 = vpack.c.b16 %v1719, %v1718
      %v2282 = vpack.c.b16 %v1721, %v1720
      %v2283 = vpack.c.b16 %v1723, %v1722
      %v2284 = vpack.c.b16 %v1725, %v1724
      %v2285 = vpack.c.b16 %v1727, %v1726
      %v2286 = vpack.c.b16 %v1729, %v1728
      %v2287 = vpack.c.b16 %v1730, %v1730
      %v2325 = vunpack.c.l.b16 %v2251
      %v2326 = vunpack.c.l.b16 %v2252
      %v2327 = vunpack.c.l.b16 %v2253
      %v2328 = vunpack.c.l.b16 %v2254
      %v2329 = vunpack.c.l.b16 %v2255
      %v2330 = vunpack.c.l.b16 %v2256
      %v2331 = vunpack.c.l.b16 %v2257
      %v2332 = vunpack.c.l.b16 %v2258
      %v2333 = vunpack.c.l.b16 %v2259
      %v2334 = vunpack.c.l.b16 %v2260
      %v2335 = vunpack.c.l.b16 %v2261
      %v2336 = vunpack.c.l.b16 %v2262
      %v2337 = vunpack.c.l.b16 %v2263
      %v2338 = vunpack.c.l.b16 %v2264
      %v2339 = vunpack.c.l.b16 %v2265
      %v2340 = vunpack.c.l.b16 %v2266
      %v2341 = vpack.c.b16 %v2326, %v2325
      %v2342 = vpack.c.b16 %v2328, %v2327
      %v2343 = vpack.c.b16 %v2330, %v2329
      %v2344 = vpack.c.b16 %v2332, %v2331
      %v2345 = vpack.c.b16 %v2334, %v2333
      %v2346 = vpack.c.b16 %v2336, %v2335
      %v2347 = vpack.c.b16 %v2338, %v2337
      %v2348 = vpack.c.b16 %v2340, %v2339
      %2357 = vmatprep.subr.bf16.mxu0 0
      %2358 = vmatpush1.bf16.msra.mxu0 %v2348
      %2359 = vmatprep.subr.bf16.mxu0 0
      %2360 = vmatpush1.bf16.msra.mxu0 %v2347
      %2361 = vmatprep.subr.bf16.mxu0 0
      %2362 = vmatpush1.bf16.msra.mxu0 %v2346
      %2363 = vmatprep.subr.bf16.mxu0 0
      %2364 = vmatpush1.bf16.msra.mxu0 %v2345
      %2365 = vmatprep.subr.bf16.mxu0 0
      %2366 = vmatpush1.bf16.msra.mxu0 %v2344
      %2367 = vmatprep.subr.bf16.mxu0 0
      %2368 = vmatpush1.bf16.msra.mxu0 %v2343
      %2369 = vmatprep.subr.bf16.mxu0 0
      %2370 = vmatpush1.bf16.msra.mxu0 %v2342
      %2371 = vmatprep.subr.bf16.mxu0 0
      %2372 = vmatpush1.bf16.msra.mxu0 %v2341
      %2373 = vmatprep.subr.bf16.mxu0 0
      %2374 = vmatpush2.bf16.msra.mxu0 0
      %2375 = vmatprep.subr.bf16.mxu0 0
      %2376 = vmatpush2.bf16.msra.mxu0 0
      %2377 = vmatprep.subr.bf16.mxu0 0
      %2378 = vmatpush2.bf16.msra.mxu0 0
      %2379 = vmatprep.subr.bf16.mxu0 0
      %2380 = vmatpush2.bf16.msra.mxu0 0
      %2381 = vmatprep.subr.bf16.mxu0 0
      %2382 = vmatpush2.bf16.msra.mxu0 0
      %2383 = vmatprep.subr.bf16.mxu0 0
      %2384 = vmatpush2.bf16.msra.mxu0 0
      %2385 = vmatprep.subr.bf16.mxu0 0
      %2386 = vmatpush2.bf16.msra.mxu0 0
      %2387 = vmatprep.subr.bf16.mxu0 0
      %2388 = vmatpush2.bf16.msra.mxu0 0
      %2389 = vmatprep.mubr.bf16.mxu0 0
      %2390 = vmatmul.mubr.bf16.gmra.mxu0 %v2267
      %v2391 = vpop.f32.mrf.mxu0
      %v2392 = vadd.f32 0.0, %v2391
      %v2393 = vpop.f32.mrf.mxu0
      %v2394 = vpop.f32.mrf.mxu0
      %v2395 = vadd.f32 0.0, %v2394
      %v2396 = vpop.f32.mrf.mxu0
      %2397 = vmatprep.mubr.bf16.mxu0 0
      %2398 = vmatmul.mubr.bf16.gmra.mxu0 %v2268
      %v2399 = vpop.f32.mrf.mxu0
      %v2400 = vadd.f32 0.0, %v2399
      %v2401 = vpop.f32.mrf.mxu0
      %v2402 = vpop.f32.mrf.mxu0
      %v2403 = vadd.f32 0.0, %v2402
      %v2404 = vpop.f32.mrf.mxu0
      %2405 = vmatprep.mubr.bf16.mxu0 0
      %2406 = vmatmul.mubr.bf16.gmra.mxu0 %v2269
      %v2407 = vpop.f32.mrf.mxu0
      %v2408 = vadd.f32 0.0, %v2407
      %v2409 = vpop.f32.mrf.mxu0
      %v2410 = vpop.f32.mrf.mxu0
      %v2411 = vadd.f32 0.0, %v2410
      %v2412 = vpop.f32.mrf.mxu0
      %2413 = vmatprep.mubr.bf16.mxu0 0
      %2414 = vmatmul.mubr.bf16.gmra.mxu0 %v2270
      %v2415 = vpop.f32.mrf.mxu0
      %v2416 = vadd.f32 0.0, %v2415
      %v2417 = vpop.f32.mrf.mxu0
      %v2418 = vpop.f32.mrf.mxu0
      %v2419 = vadd.f32 0.0, %v2418
      %v2420 = vpop.f32.mrf.mxu0
      %2421 = vmatprep.mubr.bf16.mxu0 0
      %2422 = vmatmul.mubr.bf16.gmra.mxu0 %v2271
      %v2423 = vpop.f32.mrf.mxu0
      %v2424 = vadd.f32 0.0, %v2423
      %v2425 = vpop.f32.mrf.mxu0
      %v2426 = vpop.f32.mrf.mxu0
      %v2427 = vadd.f32 0.0, %v2426
      %v2428 = vpop.f32.mrf.mxu0
      %2429 = vmatprep.mubr.bf16.mxu0 0
      %2430 = vmatmul.mubr.bf16.gmra.mxu0 %v2272
      %v2431 = vpop.f32.mrf.mxu0
      %v2432 = vadd.f32 0.0, %v2431
      %v2433 = vpop.f32.mrf.mxu0
      %v2434 = vpop.f32.mrf.mxu0
      %v2435 = vadd.f32 0.0, %v2434
      %v2436 = vpop.f32.mrf.mxu0
      %2437 = vmatprep.mubr.bf16.mxu0 0
      %2438 = vmatmul.mubr.bf16.gmra.mxu0 %v2273
      %v2439 = vpop.f32.mrf.mxu0
      %v2440 = vadd.f32 0.0, %v2439
      %v2441 = vpop.f32.mrf.mxu0
      %v2442 = vpop.f32.mrf.mxu0
      %v2443 = vadd.f32 0.0, %v2442
      %v2444 = vpop.f32.mrf.mxu0
      %2445 = vmatprep.mubr.bf16.mxu0 0
      %2446 = vmatmul.mubr.bf16.gmra.mxu0 %v2274
      %v2447 = vpop.f32.mrf.mxu0
      %v2448 = vadd.f32 0.0, %v2447
      %v2449 = vpop.f32.mrf.mxu0
      %v2450 = vpop.f32.mrf.mxu0
      %v2451 = vadd.f32 0.0, %v2450
      %v2452 = vpop.f32.mrf.mxu0
      %2453 = vmatprep.mubr.bf16.mxu0 0
      %2454 = vmatmul.mubr.bf16.gmra.mxu0 %v2275
      %v2455 = vpop.f32.mrf.mxu0
      %v2456 = vadd.f32 0.0, %v2455
      %v2457 = vpop.f32.mrf.mxu0
      %v2458 = vpop.f32.mrf.mxu0
      %v2459 = vadd.f32 0.0, %v2458
      %v2460 = vpop.f32.mrf.mxu0
      %2461 = vmatprep.mubr.bf16.mxu0 0
      %2462 = vmatmul.mubr.bf16.gmra.mxu0 %v2276
      %v2463 = vpop.f32.mrf.mxu0
      %v2464 = vadd.f32 0.0, %v2463
      %v2465 = vpop.f32.mrf.mxu0
      %v2466 = vpop.f32.mrf.mxu0
      %v2467 = vadd.f32 0.0, %v2466
      %v2468 = vpop.f32.mrf.mxu0
      %2469 = vmatprep.mubr.bf16.mxu0 0
      %2470 = vmatmul.mubr.bf16.gmra.mxu0 %v2277
      %v2471 = vpop.f32.mrf.mxu0
      %v2472 = vadd.f32 0.0, %v2471
      %v2473 = vpop.f32.mrf.mxu0
      %v2474 = vpop.f32.mrf.mxu0
      %v2475 = vadd.f32 0.0, %v2474
      %v2476 = vpop.f32.mrf.mxu0
      %2477 = vmatprep.mubr.bf16.mxu0 0
      %2478 = vmatmul.mubr.bf16.gmra.mxu0 %v2278
      %v2479 = vpop.f32.mrf.mxu0
      %v2480 = vadd.f32 0.0, %v2479
      %v2481 = vpop.f32.mrf.mxu0
      %v2482 = vpop.f32.mrf.mxu0
      %v2483 = vadd.f32 0.0, %v2482
      %v2484 = vpop.f32.mrf.mxu0
      %2485 = vmatprep.mubr.bf16.mxu0 0
      %2486 = vmatmul.mubr.bf16.gmra.mxu0 %v2279
      %v2487 = vpop.f32.mrf.mxu0
      %v2488 = vadd.f32 0.0, %v2487
      %v2489 = vpop.f32.mrf.mxu0
      %v2490 = vpop.f32.mrf.mxu0
      %v2491 = vadd.f32 0.0, %v2490
      %v2492 = vpop.f32.mrf.mxu0
      %2493 = vmatprep.mubr.bf16.mxu0 0
      %2494 = vmatmul.mubr.bf16.gmra.mxu0 %v2280
      %v2495 = vpop.f32.mrf.mxu0
      %v2496 = vadd.f32 0.0, %v2495
      %v2497 = vpop.f32.mrf.mxu0
      %v2498 = vpop.f32.mrf.mxu0
      %v2499 = vadd.f32 0.0, %v2498
      %v2500 = vpop.f32.mrf.mxu0
      %2501 = vmatprep.mubr.bf16.mxu0 0
      %2502 = vmatmul.mubr.bf16.gmra.mxu0 %v2281
      %v2503 = vpop.f32.mrf.mxu0
      %v2504 = vadd.f32 0.0, %v2503
      %v2505 = vpop.f32.mrf.mxu0
      %v2506 = vpop.f32.mrf.mxu0
      %v2507 = vadd.f32 0.0, %v2506
      %v2508 = vpop.f32.mrf.mxu0
      %2509 = vmatprep.mubr.bf16.mxu0 0
      %2510 = vmatmul.mubr.bf16.gmra.mxu0 %v2282
      %v2511 = vpop.f32.mrf.mxu0
      %v2512 = vadd.f32 0.0, %v2511
      %v2513 = vpop.f32.mrf.mxu0
      %v2514 = vpop.f32.mrf.mxu0
      %v2515 = vadd.f32 0.0, %v2514
      %v2516 = vpop.f32.mrf.mxu0
      %2517 = vmatprep.mubr.bf16.mxu0 0
      %2518 = vmatmul.mubr.bf16.gmra.mxu0 %v2283
      %v2519 = vpop.f32.mrf.mxu0
      %v2520 = vadd.f32 0.0, %v2519
      %v2521 = vpop.f32.mrf.mxu0
      %v2522 = vpop.f32.mrf.mxu0
      %v2523 = vadd.f32 0.0, %v2522
      %v2524 = vpop.f32.mrf.mxu0
      %2525 = vmatprep.mubr.bf16.mxu0 0
      %2526 = vmatmul.mubr.bf16.gmra.mxu0 %v2284
      %v2527 = vpop.f32.mrf.mxu0
      %v2528 = vadd.f32 0.0, %v2527
      %v2529 = vpop.f32.mrf.mxu0
      %v2530 = vpop.f32.mrf.mxu0
      %v2531 = vadd.f32 0.0, %v2530
      %v2532 = vpop.f32.mrf.mxu0
      %2533 = vmatprep.mubr.bf16.mxu0 0
      %2534 = vmatmul.mubr.bf16.gmra.mxu0 %v2285
      %v2535 = vpop.f32.mrf.mxu0
      %v2536 = vadd.f32 0.0, %v2535
      %v2537 = vpop.f32.mrf.mxu0
      %v2538 = vpop.f32.mrf.mxu0
      %v2539 = vadd.f32 0.0, %v2538
      %v2540 = vpop.f32.mrf.mxu0
      %2541 = vmatprep.mubr.bf16.mxu0 0
      %2542 = vmatmul.mubr.bf16.gmra.mxu0 %v2286
      %v2543 = vpop.f32.mrf.mxu0
      %v2544 = vadd.f32 0.0, %v2543
      %v2545 = vpop.f32.mrf.mxu0
      %v2546 = vpop.f32.mrf.mxu0
      %v2547 = vadd.f32 0.0, %v2546
      %v2548 = vpop.f32.mrf.mxu0
      %2549 = vmatprep.mubr.bf16.mxu0 0
      %2550 = vmatmul.mubr.bf16.gmra.mxu0 %v2287
      %v2551 = vpop.f32.mrf.mxu0
      %v2552 = vadd.f32 0.0, %v2551
      %v2553 = vpop.f32.mrf.mxu0
      %v2554 = vpop.f32.mrf.mxu0
      %v2555 = vpop.f32.mrf.mxu0
      %2556 = vdwg.mxu0
      %v2557 = vadd.f32 %v2209, %v2392
      %v2558 = vadd.f32 %v2210, %v2395
      %v2559 = vadd.f32 %v2211, %v2400
      %v2560 = vadd.f32 %v2212, %v2403
      %v2561 = vadd.f32 %v2213, %v2408
      %v2562 = vadd.f32 %v2214, %v2411
      %v2563 = vadd.f32 %v2215, %v2416
      %v2564 = vadd.f32 %v2216, %v2419
      %v2565 = vadd.f32 %v2217, %v2424
      %v2566 = vadd.f32 %v2218, %v2427
      %v2567 = vadd.f32 %v2219, %v2432
      %v2568 = vadd.f32 %v2220, %v2435
      %v2569 = vadd.f32 %v2221, %v2440
      %v2570 = vadd.f32 %v2222, %v2443
      %v2571 = vadd.f32 %v2223, %v2448
      %v2572 = vadd.f32 %v2224, %v2451
      %v2573 = vadd.f32 %v2225, %v2456
      %v2574 = vadd.f32 %v2226, %v2459
      %v2575 = vadd.f32 %v2227, %v2464
      %v2576 = vadd.f32 %v2228, %v2467
      %v2577 = vadd.f32 %v2229, %v2472
      %v2578 = vadd.f32 %v2230, %v2475
      %v2579 = vadd.f32 %v2231, %v2480
      %v2580 = vadd.f32 %v2232, %v2483
      %v2581 = vadd.f32 %v2233, %v2488
      %v2582 = vadd.f32 %v2234, %v2491
      %v2583 = vadd.f32 %v2235, %v2496
      %v2584 = vadd.f32 %v2236, %v2499
      %v2585 = vadd.f32 %v2237, %v2504
      %v2586 = vadd.f32 %v2238, %v2507
      %v2587 = vadd.f32 %v2239, %v2512
      %v2588 = vadd.f32 %v2240, %v2515
      %v2589 = vadd.f32 %v2241, %v2520
      %v2590 = vadd.f32 %v2242, %v2523
      %v2591 = vadd.f32 %v2243, %v2528
      %v2592 = vadd.f32 %v2244, %v2531
      %v2593 = vadd.f32 %v2245, %v2536
      %v2594 = vadd.f32 %v2246, %v2539
      %v2595 = vadd.f32 %v2247, %v2544
      %v2596 = vadd.f32 %v2248, %v2547
      %v2597 = vadd.f32 %v2249, %v2552
      %v2598 = vld [vmem:[%s199 + $0xc] sm:$0xf]
      %v2599 = vld [vmem:[%s199 + $0x10] sm:$0xf]
      %v2600 = vld [vmem:[%s199 + $0x14] sm:$0xf]
      %v2601 = vld [vmem:[%s199 + $0x18] sm:$0xf]
      %v2602 = vld [vmem:[%s199 + $0x1c] sm:$0xf]
      %v2603 = vld [vmem:[%s199 + $0x20] sm:$0xf]
      %v2604 = vld [vmem:[%s199 + $0x24] sm:$0xf]
      %v2605 = vld [vmem:[%s199 + $0x28] sm:$0xf]
      %v2606 = vld [vmem:[%s199 + $0x2c] sm:$0xf]
      %v2607 = vld [vmem:[%s199 + $0x30] sm:$0xf]
      %v2608 = vld [vmem:[%s199 + $0x34] sm:$0xf]
      %v2609 = vld [vmem:[%s199 + $0x38] sm:$0xf]
      %v2610 = vld [vmem:[%s199 + $0x3c] sm:$0xf]
      %v2611 = vld [vmem:[%s199 + $0x40] sm:$0xf]
      %v2612 = vld [vmem:[%s199 + $0x44] sm:$0xf]
      %v2613 = vld [vmem:[%s199 + $0x48] sm:$0xf]
      %v2614 = vld [vmem:[%s199 + $0x4c] sm:$0xf]
      %v2615 = vld [vmem:[%s199 + $0x50] sm:$0xf]
      %v2616 = vld [vmem:[%s199 + $0x54] sm:$0xf]
      %v2617 = vld [vmem:[%s199 + $0x58] sm:$0xf]
      %v2618 = vld [vmem:[%s199 + $0x5c] sm:$0xf]
      %v2619 = vld [vmem:[%s199 + $0x60] sm:$0xf]
      %v2620 = vld [vmem:[%s199 + $0x64] sm:$0xf]
      %v2621 = vld [vmem:[%s199 + $0x68] sm:$0xf]
      %v2622 = vld [vmem:[%s199 + $0x6c] sm:$0xf]
      %v2623 = vld [vmem:[%s199 + $0x70] sm:$0xf]
      %v2624 = vld [vmem:[%s199 + $0x74] sm:$0xf]
      %v2625 = vld [vmem:[%s199 + $0x78] sm:$0xf]
      %v2626 = vld [vmem:[%s199 + $0x7c] sm:$0xf]
      %v2627 = vld [vmem:[%s199 + $0x80] sm:$0xf]
      %v2628 = vld [vmem:[%s199 + $0x84] sm:$0xf]
      %v2629 = vld [vmem:[%s199 + $0x88] sm:$0xf]
      %v2630 = vld [vmem:[%s199 + $0x8c] sm:$0xf]
      %v2631 = vld [vmem:[%s199 + $0x90] sm:$0xf]
      %v2632 = vld [vmem:[%s199 + $0x94] sm:$0xf]
      %v2633 = vld [vmem:[%s199 + $0x98] sm:$0xf]
      %v2634 = vld [vmem:[%s199 + $0x9c] sm:$0xf]
      %v2635 = vld [vmem:[%s199 + $0xa0] sm:$0xf]
      %v2636 = vld [vmem:[%s199 + $0xa4] sm:$0xf]
      %v2637 = vld [vmem:[%s199 + $0xa8] sm:$0xf]
      %v2638 = vld [vmem:[%s199 + $0xac] sm:$0xf]
      %v2639 = vld [vmem:[%s199 + $0xb0] sm:$0x1]
      %s2640 = scalar_lea.vmem %s2, 320
      %v2641 = vld [vmem:[%s2640] sm:$0xf]
      %v2642 = vld [vmem:[%s2640 + $0x4] sm:$0xf]
      %v2643 = vld [vmem:[%s2640 + $0x8] sm:$0xf]
      %v2644 = vld [vmem:[%s2640 + $0xc] sm:$0xf]
      %v2645 = vld [vmem:[%s2640 + $0x10] sm:$0xf]
      %v2646 = vld [vmem:[%s2640 + $0x14] sm:$0xf]
      %v2647 = vld [vmem:[%s2640 + $0x18] sm:$0xf]
      %v2648 = vld [vmem:[%s2640 + $0x1c] sm:$0xf]
      %v2649 = vld [vmem:[%s2640 + $0x20] sm:$0xf]
      %v2650 = vld [vmem:[%s2640 + $0x24] sm:$0xf]
      %v2651 = vld [vmem:[%s2640 + $0x28] sm:$0xf]
      %v2652 = vld [vmem:[%s2640 + $0x2c] sm:$0xf]
      %v2653 = vld [vmem:[%s2640 + $0x30] sm:$0xf]
      %v2654 = vld [vmem:[%s2640 + $0x34] sm:$0xf]
      %v2655 = vld [vmem:[%s2640 + $0x38] sm:$0xf]
      %v2656 = vld [vmem:[%s2640 + $0x3c] sm:$0xf]
      %v2699 = vunpack.c.l.b16 %v2598
      %v2700 = vunpack.c.l.b16 %v2599
      %v2701 = vunpack.c.l.b16 %v2600
      %v2702 = vunpack.c.l.b16 %v2601
      %v2703 = vunpack.c.l.b16 %v2602
      %v2704 = vunpack.c.l.b16 %v2603
      %v2705 = vunpack.c.l.b16 %v2604
      %v2706 = vunpack.c.l.b16 %v2605
      %v2707 = vunpack.c.l.b16 %v2606
      %v2708 = vunpack.c.l.b16 %v2607
      %v2709 = vunpack.c.l.b16 %v2608
      %v2710 = vunpack.c.l.b16 %v2609
      %v2711 = vunpack.c.l.b16 %v2610
      %v2712 = vunpack.c.l.b16 %v2611
      %v2713 = vunpack.c.l.b16 %v2612
      %v2714 = vunpack.c.l.b16 %v2613
      %v2715 = vunpack.c.l.b16 %v2614
      %v2716 = vunpack.c.l.b16 %v2615
      %v2717 = vunpack.c.l.b16 %v2616
      %v2718 = vunpack.c.l.b16 %v2617
      %v2719 = vunpack.c.l.b16 %v2618
      %v2720 = vunpack.c.l.b16 %v2619
      %v2721 = vunpack.c.l.b16 %v2620
      %v2722 = vunpack.c.l.b16 %v2621
      %v2723 = vunpack.c.l.b16 %v2622
      %v2724 = vunpack.c.l.b16 %v2623
      %v2725 = vunpack.c.l.b16 %v2624
      %v2726 = vunpack.c.l.b16 %v2625
      %v2727 = vunpack.c.l.b16 %v2626
      %v2728 = vunpack.c.l.b16 %v2627
      %v2729 = vunpack.c.l.b16 %v2628
      %v2730 = vunpack.c.l.b16 %v2629
      %v2731 = vunpack.c.l.b16 %v2630
      %v2732 = vunpack.c.l.b16 %v2631
      %v2733 = vunpack.c.l.b16 %v2632
      %v2734 = vunpack.c.l.b16 %v2633
      %v2735 = vunpack.c.l.b16 %v2634
      %v2736 = vunpack.c.l.b16 %v2635
      %v2737 = vunpack.c.l.b16 %v2636
      %v2738 = vunpack.c.l.b16 %v2637
      %v2739 = vunpack.c.l.b16 %v2638
      %v2740 = vunpack.c.l.b16 %v2639
      %v2741 = vpack.c.b16 %v2700, %v2699
      %v2742 = vpack.c.b16 %v2702, %v2701
      %v2743 = vpack.c.b16 %v2704, %v2703
      %v2744 = vpack.c.b16 %v2706, %v2705
      %v2745 = vpack.c.b16 %v2708, %v2707
      %v2746 = vpack.c.b16 %v2710, %v2709
      %v2747 = vpack.c.b16 %v2712, %v2711
      %v2748 = vpack.c.b16 %v2714, %v2713
      %v2749 = vpack.c.b16 %v2716, %v2715
      %v2750 = vpack.c.b16 %v2718, %v2717
      %v2751 = vpack.c.b16 %v2720, %v2719
      %v2752 = vpack.c.b16 %v2722, %v2721
      %v2753 = vpack.c.b16 %v2724, %v2723
      %v2754 = vpack.c.b16 %v2726, %v2725
      %v2755 = vpack.c.b16 %v2728, %v2727
      %v2756 = vpack.c.b16 %v2730, %v2729
      %v2757 = vpack.c.b16 %v2732, %v2731
      %v2758 = vpack.c.b16 %v2734, %v2733
      %v2759 = vpack.c.b16 %v2736, %v2735
      %v2760 = vpack.c.b16 %v2738, %v2737
      %v2761 = vpack.c.b16 %v2740, %v2739
      %vm2762 = vsmask.f32 7424
      %v2764 = vshrl.u32 %v2741, 16
      %v2766 = vshll.u32 %v2741, 16
      %v2768 = vrot.slane %v2766, 1
      %v2769 = vor.u32 %v2764, %v2768
      %v2771 = vshll.u32 %v2742, 16
      %v2773 = vrot.slane %v2771, 1
      %v2774 = vsel %vm2762, %v2769, %v2773
      %v2775 = vshrl.u32 %v2742, 16
      %v2777 = vor.u32 %v2775, %v2773
      %v2779 = vshll.u32 %v2743, 16
      %v2781 = vrot.slane %v2779, 1
      %v2782 = vsel %vm2762, %v2777, %v2781
      %v2783 = vshrl.u32 %v2743, 16
      %v2785 = vor.u32 %v2783, %v2781
      %v2787 = vshll.u32 %v2744, 16
      %v2789 = vrot.slane %v2787, 1
      %v2790 = vsel %vm2762, %v2785, %v2789
      %v2791 = vshrl.u32 %v2744, 16
      %v2793 = vor.u32 %v2791, %v2789
      %v2795 = vshll.u32 %v2745, 16
      %v2797 = vrot.slane %v2795, 1
      %v2798 = vsel %vm2762, %v2793, %v2797
      %v2799 = vshrl.u32 %v2745, 16
      %v2801 = vor.u32 %v2799, %v2797
      %v2803 = vshll.u32 %v2746, 16
      %v2805 = vrot.slane %v2803, 1
      %v2806 = vsel %vm2762, %v2801, %v2805
      %v2807 = vshrl.u32 %v2746, 16
      %v2809 = vor.u32 %v2807, %v2805
      %v2811 = vshll.u32 %v2747, 16
      %v2813 = vrot.slane %v2811, 1
      %v2814 = vsel %vm2762, %v2809, %v2813
      %v2815 = vshrl.u32 %v2747, 16
      %v2817 = vor.u32 %v2815, %v2813
      %v2819 = vshll.u32 %v2748, 16
      %v2821 = vrot.slane %v2819, 1
      %v2822 = vsel %vm2762, %v2817, %v2821
      %v2823 = vshrl.u32 %v2748, 16
      %v2825 = vor.u32 %v2823, %v2821
      %v2827 = vshll.u32 %v2749, 16
      %v2829 = vrot.slane %v2827, 1
      %v2830 = vsel %vm2762, %v2825, %v2829
      %v2831 = vshrl.u32 %v2749, 16
      %v2833 = vor.u32 %v2831, %v2829
      %v2835 = vshll.u32 %v2750, 16
      %v2837 = vrot.slane %v2835, 1
      %v2838 = vsel %vm2762, %v2833, %v2837
      %v2839 = vshrl.u32 %v2750, 16
      %v2841 = vor.u32 %v2839, %v2837
      %v2843 = vshll.u32 %v2751, 16
      %v2845 = vrot.slane %v2843, 1
      %v2846 = vsel %vm2762, %v2841, %v2845
      %v2847 = vshrl.u32 %v2751, 16
      %v2849 = vor.u32 %v2847, %v2845
      %v2851 = vshll.u32 %v2752, 16
      %v2853 = vrot.slane %v2851, 1
      %v2854 = vsel %vm2762, %v2849, %v2853
      %v2855 = vshrl.u32 %v2752, 16
      %v2857 = vor.u32 %v2855, %v2853
      %v2859 = vshll.u32 %v2753, 16
      %v2861 = vrot.slane %v2859, 1
      %v2862 = vsel %vm2762, %v2857, %v2861
      %v2863 = vshrl.u32 %v2753, 16
      %v2865 = vor.u32 %v2863, %v2861
      %v2867 = vshll.u32 %v2754, 16
      %v2869 = vrot.slane %v2867, 1
      %v2870 = vsel %vm2762, %v2865, %v2869
      %v2871 = vshrl.u32 %v2754, 16
      %v2873 = vor.u32 %v2871, %v2869
      %v2875 = vshll.u32 %v2755, 16
      %v2877 = vrot.slane %v2875, 1
      %v2878 = vsel %vm2762, %v2873, %v2877
      %v2879 = vshrl.u32 %v2755, 16
      %v2881 = vor.u32 %v2879, %v2877
      %v2883 = vshll.u32 %v2756, 16
      %v2885 = vrot.slane %v2883, 1
      %v2886 = vsel %vm2762, %v2881, %v2885
      %v2887 = vshrl.u32 %v2756, 16
      %v2889 = vor.u32 %v2887, %v2885
      %v2891 = vshll.u32 %v2757, 16
      %v2893 = vrot.slane %v2891, 1
      %v2894 = vsel %vm2762, %v2889, %v2893
      %v2895 = vshrl.u32 %v2757, 16
      %v2897 = vor.u32 %v2895, %v2893
      %v2899 = vshll.u32 %v2758, 16
      %v2901 = vrot.slane %v2899, 1
      %v2902 = vsel %vm2762, %v2897, %v2901
      %v2903 = vshrl.u32 %v2758, 16
      %v2905 = vor.u32 %v2903, %v2901
      %v2907 = vshll.u32 %v2759, 16
      %v2909 = vrot.slane %v2907, 1
      %v2910 = vsel %vm2762, %v2905, %v2909
      %v2911 = vshrl.u32 %v2759, 16
      %v2913 = vor.u32 %v2911, %v2909
      %v2915 = vshll.u32 %v2760, 16
      %v2917 = vrot.slane %v2915, 1
      %v2918 = vsel %vm2762, %v2913, %v2917
      %v2919 = vshrl.u32 %v2760, 16
      %v2921 = vor.u32 %v2919, %v2917
      %v2923 = vshll.u32 %v2761, 16
      %v2925 = vrot.slane %v2923, 1
      %v2926 = vsel %vm2762, %v2921, %v2925
      %v2927 = vshrl.u32 %v2761, 16
      %v2929 = vor.u32 %v2927, %v2925
      %v2967 = vunpack.c.l.b16 %v2641
      %v2968 = vunpack.c.l.b16 %v2642
      %v2969 = vunpack.c.l.b16 %v2643
      %v2970 = vunpack.c.l.b16 %v2644
      %v2971 = vunpack.c.l.b16 %v2645
      %v2972 = vunpack.c.l.b16 %v2646
      %v2973 = vunpack.c.l.b16 %v2647
      %v2974 = vunpack.c.l.b16 %v2648
      %v2975 = vunpack.c.l.b16 %v2649
      %v2976 = vunpack.c.l.b16 %v2650
      %v2977 = vunpack.c.l.b16 %v2651
      %v2978 = vunpack.c.l.b16 %v2652
      %v2979 = vunpack.c.l.b16 %v2653
      %v2980 = vunpack.c.l.b16 %v2654
      %v2981 = vunpack.c.l.b16 %v2655
      %v2982 = vunpack.c.l.b16 %v2656
      %v2983 = vpack.c.b16 %v2968, %v2967
      %v2984 = vpack.c.b16 %v2970, %v2969
      %v2985 = vpack.c.b16 %v2972, %v2971
      %v2986 = vpack.c.b16 %v2974, %v2973
      %v2987 = vpack.c.b16 %v2976, %v2975
      %v2988 = vpack.c.b16 %v2978, %v2977
      %v2989 = vpack.c.b16 %v2980, %v2979
      %v2990 = vpack.c.b16 %v2982, %v2981
      %2999 = vmatprep.subr.bf16.mxu0 0
      %3000 = vmatpush1.bf16.msra.mxu0 %v2990
      %3001 = vmatprep.subr.bf16.mxu0 0
      %3002 = vmatpush1.bf16.msra.mxu0 %v2989
      %3003 = vmatprep.subr.bf16.mxu0 0
      %3004 = vmatpush1.bf16.msra.mxu0 %v2988
      %3005 = vmatprep.subr.bf16.mxu0 0
      %3006 = vmatpush1.bf16.msra.mxu0 %v2987
      %3007 = vmatprep.subr.bf16.mxu0 0
      %3008 = vmatpush1.bf16.msra.mxu0 %v2986
      %3009 = vmatprep.subr.bf16.mxu0 0
      %3010 = vmatpush1.bf16.msra.mxu0 %v2985
      %3011 = vmatprep.subr.bf16.mxu0 0
      %3012 = vmatpush1.bf16.msra.mxu0 %v2984
      %3013 = vmatprep.subr.bf16.mxu0 0
      %3014 = vmatpush1.bf16.msra.mxu0 %v2983
      %3015 = vmatprep.subr.bf16.mxu0 0
      %3016 = vmatpush2.bf16.msra.mxu0 0
      %3017 = vmatprep.subr.bf16.mxu0 0
      %3018 = vmatpush2.bf16.msra.mxu0 0
      %3019 = vmatprep.subr.bf16.mxu0 0
      %3020 = vmatpush2.bf16.msra.mxu0 0
      %3021 = vmatprep.subr.bf16.mxu0 0
      %3022 = vmatpush2.bf16.msra.mxu0 0
      %3023 = vmatprep.subr.bf16.mxu0 0
      %3024 = vmatpush2.bf16.msra.mxu0 0
      %3025 = vmatprep.subr.bf16.mxu0 0
      %3026 = vmatpush2.bf16.msra.mxu0 0
      %3027 = vmatprep.subr.bf16.mxu0 0
      %3028 = vmatpush2.bf16.msra.mxu0 0
      %3029 = vmatprep.subr.bf16.mxu0 0
      %3030 = vmatpush2.bf16.msra.mxu0 0
      %3031 = vmatprep.mubr.bf16.mxu0 0
      %3032 = vmatmul.mubr.bf16.gmra.mxu0 %v2774
      %v3033 = vpop.f32.mrf.mxu0
      %v3034 = vadd.f32 0.0, %v3033
      %v3035 = vpop.f32.mrf.mxu0
      %v3036 = vpop.f32.mrf.mxu0
      %v3037 = vadd.f32 0.0, %v3036
      %v3038 = vpop.f32.mrf.mxu0
      %3039 = vmatprep.mubr.bf16.mxu0 0
      %3040 = vmatmul.mubr.bf16.gmra.mxu0 %v2782
      %v3041 = vpop.f32.mrf.mxu0
      %v3042 = vadd.f32 0.0, %v3041
      %v3043 = vpop.f32.mrf.mxu0
      %v3044 = vpop.f32.mrf.mxu0
      %v3045 = vadd.f32 0.0, %v3044
      %v3046 = vpop.f32.mrf.mxu0
      %3047 = vmatprep.mubr.bf16.mxu0 0
      %3048 = vmatmul.mubr.bf16.gmra.mxu0 %v2790
      %v3049 = vpop.f32.mrf.mxu0
      %v3050 = vadd.f32 0.0, %v3049
      %v3051 = vpop.f32.mrf.mxu0
      %v3052 = vpop.f32.mrf.mxu0
      %v3053 = vadd.f32 0.0, %v3052
      %v3054 = vpop.f32.mrf.mxu0
      %3055 = vmatprep.mubr.bf16.mxu0 0
      %3056 = vmatmul.mubr.bf16.gmra.mxu0 %v2798
      %v3057 = vpop.f32.mrf.mxu0
      %v3058 = vadd.f32 0.0, %v3057
      %v3059 = vpop.f32.mrf.mxu0
      %v3060 = vpop.f32.mrf.mxu0
      %v3061 = vadd.f32 0.0, %v3060
      %v3062 = vpop.f32.mrf.mxu0
      %3063 = vmatprep.mubr.bf16.mxu0 0
      %3064 = vmatmul.mubr.bf16.gmra.mxu0 %v2806
      %v3065 = vpop.f32.mrf.mxu0
      %v3066 = vadd.f32 0.0, %v3065
      %v3067 = vpop.f32.mrf.mxu0
      %v3068 = vpop.f32.mrf.mxu0
      %v3069 = vadd.f32 0.0, %v3068
      %v3070 = vpop.f32.mrf.mxu0
      %3071 = vmatprep.mubr.bf16.mxu0 0
      %3072 = vmatmul.mubr.bf16.gmra.mxu0 %v2814
      %v3073 = vpop.f32.mrf.mxu0
      %v3074 = vadd.f32 0.0, %v3073
      %v3075 = vpop.f32.mrf.mxu0
      %v3076 = vpop.f32.mrf.mxu0
      %v3077 = vadd.f32 0.0, %v3076
      %v3078 = vpop.f32.mrf.mxu0
      %3079 = vmatprep.mubr.bf16.mxu0 0
      %3080 = vmatmul.mubr.bf16.gmra.mxu0 %v2822
      %v3081 = vpop.f32.mrf.mxu0
      %v3082 = vadd.f32 0.0, %v3081
      %v3083 = vpop.f32.mrf.mxu0
      %v3084 = vpop.f32.mrf.mxu0
      %v3085 = vadd.f32 0.0, %v3084
      %v3086 = vpop.f32.mrf.mxu0
      %3087 = vmatprep.mubr.bf16.mxu0 0
      %3088 = vmatmul.mubr.bf16.gmra.mxu0 %v2830
      %v3089 = vpop.f32.mrf.mxu0
      %v3090 = vadd.f32 0.0, %v3089
      %v3091 = vpop.f32.mrf.mxu0
      %v3092 = vpop.f32.mrf.mxu0
      %v3093 = vadd.f32 0.0, %v3092
      %v3094 = vpop.f32.mrf.mxu0
      %3095 = vmatprep.mubr.bf16.mxu0 0
      %3096 = vmatmul.mubr.bf16.gmra.mxu0 %v2838
      %v3097 = vpop.f32.mrf.mxu0
      %v3098 = vadd.f32 0.0, %v3097
      %v3099 = vpop.f32.mrf.mxu0
      %v3100 = vpop.f32.mrf.mxu0
      %v3101 = vadd.f32 0.0, %v3100
      %v3102 = vpop.f32.mrf.mxu0
      %3103 = vmatprep.mubr.bf16.mxu0 0
      %3104 = vmatmul.mubr.bf16.gmra.mxu0 %v2846
      %v3105 = vpop.f32.mrf.mxu0
      %v3106 = vadd.f32 0.0, %v3105
      %v3107 = vpop.f32.mrf.mxu0
      %v3108 = vpop.f32.mrf.mxu0
      %v3109 = vadd.f32 0.0, %v3108
      %v3110 = vpop.f32.mrf.mxu0
      %3111 = vmatprep.mubr.bf16.mxu0 0
      %3112 = vmatmul.mubr.bf16.gmra.mxu0 %v2854
      %v3113 = vpop.f32.mrf.mxu0
      %v3114 = vadd.f32 0.0, %v3113
      %v3115 = vpop.f32.mrf.mxu0
      %v3116 = vpop.f32.mrf.mxu0
      %v3117 = vadd.f32 0.0, %v3116
      %v3118 = vpop.f32.mrf.mxu0
      %3119 = vmatprep.mubr.bf16.mxu0 0
      %3120 = vmatmul.mubr.bf16.gmra.mxu0 %v2862
      %v3121 = vpop.f32.mrf.mxu0
      %v3122 = vadd.f32 0.0, %v3121
      %v3123 = vpop.f32.mrf.mxu0
      %v3124 = vpop.f32.mrf.mxu0
      %v3125 = vadd.f32 0.0, %v3124
      %v3126 = vpop.f32.mrf.mxu0
      %3127 = vmatprep.mubr.bf16.mxu0 0
      %3128 = vmatmul.mubr.bf16.gmra.mxu0 %v2870
      %v3129 = vpop.f32.mrf.mxu0
      %v3130 = vadd.f32 0.0, %v3129
      %v3131 = vpop.f32.mrf.mxu0
      %v3132 = vpop.f32.mrf.mxu0
      %v3133 = vadd.f32 0.0, %v3132
      %v3134 = vpop.f32.mrf.mxu0
      %3135 = vmatprep.mubr.bf16.mxu0 0
      %3136 = vmatmul.mubr.bf16.gmra.mxu0 %v2878
      %v3137 = vpop.f32.mrf.mxu0
      %v3138 = vadd.f32 0.0, %v3137
      %v3139 = vpop.f32.mrf.mxu0
      %v3140 = vpop.f32.mrf.mxu0
      %v3141 = vadd.f32 0.0, %v3140
      %v3142 = vpop.f32.mrf.mxu0
      %3143 = vmatprep.mubr.bf16.mxu0 0
      %3144 = vmatmul.mubr.bf16.gmra.mxu0 %v2886
      %v3145 = vpop.f32.mrf.mxu0
      %v3146 = vadd.f32 0.0, %v3145
      %v3147 = vpop.f32.mrf.mxu0
      %v3148 = vpop.f32.mrf.mxu0
      %v3149 = vadd.f32 0.0, %v3148
      %v3150 = vpop.f32.mrf.mxu0
      %3151 = vmatprep.mubr.bf16.mxu0 0
      %3152 = vmatmul.mubr.bf16.gmra.mxu0 %v2894
      %v3153 = vpop.f32.mrf.mxu0
      %v3154 = vadd.f32 0.0, %v3153
      %v3155 = vpop.f32.mrf.mxu0
      %v3156 = vpop.f32.mrf.mxu0
      %v3157 = vadd.f32 0.0, %v3156
      %v3158 = vpop.f32.mrf.mxu0
      %3159 = vmatprep.mubr.bf16.mxu0 0
      %3160 = vmatmul.mubr.bf16.gmra.mxu0 %v2902
      %v3161 = vpop.f32.mrf.mxu0
      %v3162 = vadd.f32 0.0, %v3161
      %v3163 = vpop.f32.mrf.mxu0
      %v3164 = vpop.f32.mrf.mxu0
      %v3165 = vadd.f32 0.0, %v3164
      %v3166 = vpop.f32.mrf.mxu0
      %3167 = vmatprep.mubr.bf16.mxu0 0
      %3168 = vmatmul.mubr.bf16.gmra.mxu0 %v2910
      %v3169 = vpop.f32.mrf.mxu0
      %v3170 = vadd.f32 0.0, %v3169
      %v3171 = vpop.f32.mrf.mxu0
      %v3172 = vpop.f32.mrf.mxu0
      %v3173 = vadd.f32 0.0, %v3172
      %v3174 = vpop.f32.mrf.mxu0
      %3175 = vmatprep.mubr.bf16.mxu0 0
      %3176 = vmatmul.mubr.bf16.gmra.mxu0 %v2918
      %v3177 = vpop.f32.mrf.mxu0
      %v3178 = vadd.f32 0.0, %v3177
      %v3179 = vpop.f32.mrf.mxu0
      %v3180 = vpop.f32.mrf.mxu0
      %v3181 = vadd.f32 0.0, %v3180
      %v3182 = vpop.f32.mrf.mxu0
      %3183 = vmatprep.mubr.bf16.mxu0 0
      %3184 = vmatmul.mubr.bf16.gmra.mxu0 %v2926
      %v3185 = vpop.f32.mrf.mxu0
      %v3186 = vadd.f32 0.0, %v3185
      %v3187 = vpop.f32.mrf.mxu0
      %v3188 = vpop.f32.mrf.mxu0
      %v3189 = vadd.f32 0.0, %v3188
      %v3190 = vpop.f32.mrf.mxu0
      %3191 = vmatprep.mubr.bf16.mxu0 0
      %3192 = vmatmul.mubr.bf16.gmra.mxu0 %v2929
      %v3193 = vpop.f32.mrf.mxu0
      %v3194 = vadd.f32 0.0, %v3193
      %v3195 = vpop.f32.mrf.mxu0
      %v3196 = vpop.f32.mrf.mxu0
      %v3197 = vpop.f32.mrf.mxu0
      %3198 = vdwg.mxu0
      %v3199 = vadd.f32 %v2557, %v3034
      %v3200 = vadd.f32 %v2558, %v3037
      %v3201 = vadd.f32 %v2559, %v3042
      %v3202 = vadd.f32 %v2560, %v3045
      %v3203 = vadd.f32 %v2561, %v3050
      %v3204 = vadd.f32 %v2562, %v3053
      %v3205 = vadd.f32 %v2563, %v3058
      %v3206 = vadd.f32 %v2564, %v3061
      %v3207 = vadd.f32 %v2565, %v3066
      %v3208 = vadd.f32 %v2566, %v3069
      %v3209 = vadd.f32 %v2567, %v3074
      %v3210 = vadd.f32 %v2568, %v3077
      %v3211 = vadd.f32 %v2569, %v3082
      %v3212 = vadd.f32 %v2570, %v3085
      %v3213 = vadd.f32 %v2571, %v3090
      %v3214 = vadd.f32 %v2572, %v3093
      %v3215 = vadd.f32 %v2573, %v3098
      %v3216 = vadd.f32 %v2574, %v3101
      %v3217 = vadd.f32 %v2575, %v3106
      %v3218 = vadd.f32 %v2576, %v3109
      %v3219 = vadd.f32 %v2577, %v3114
      %v3220 = vadd.f32 %v2578, %v3117
      %v3221 = vadd.f32 %v2579, %v3122
      %v3222 = vadd.f32 %v2580, %v3125
      %v3223 = vadd.f32 %v2581, %v3130
      %v3224 = vadd.f32 %v2582, %v3133
      %v3225 = vadd.f32 %v2583, %v3138
      %v3226 = vadd.f32 %v2584, %v3141
      %v3227 = vadd.f32 %v2585, %v3146
      %v3228 = vadd.f32 %v2586, %v3149
      %v3229 = vadd.f32 %v2587, %v3154
      %v3230 = vadd.f32 %v2588, %v3157
      %v3231 = vadd.f32 %v2589, %v3162
      %v3232 = vadd.f32 %v2590, %v3165
      %v3233 = vadd.f32 %v2591, %v3170
      %v3234 = vadd.f32 %v2592, %v3173
      %v3235 = vadd.f32 %v2593, %v3178
      %v3236 = vadd.f32 %v2594, %v3181
      %v3237 = vadd.f32 %v2595, %v3186
      %v3238 = vadd.f32 %v2596, %v3189
      %v3239 = vadd.f32 %v2597, %v3194
      %v3240 = vld [vmem:[%s199 + $0x14] sm:$0xf]
      %v3241 = vld [vmem:[%s199 + $0x18] sm:$0xf]
      %v3242 = vld [vmem:[%s199 + $0x1c] sm:$0xf]
      %v3243 = vld [vmem:[%s199 + $0x20] sm:$0xf]
      %v3244 = vld [vmem:[%s199 + $0x24] sm:$0xf]
      %v3245 = vld [vmem:[%s199 + $0x28] sm:$0xf]
      %v3246 = vld [vmem:[%s199 + $0x2c] sm:$0xf]
      %v3247 = vld [vmem:[%s199 + $0x30] sm:$0xf]
      %v3248 = vld [vmem:[%s199 + $0x34] sm:$0xf]
      %v3249 = vld [vmem:[%s199 + $0x38] sm:$0xf]
      %v3250 = vld [vmem:[%s199 + $0x3c] sm:$0xf]
      %v3251 = vld [vmem:[%s199 + $0x40] sm:$0xf]
      %v3252 = vld [vmem:[%s199 + $0x44] sm:$0xf]
      %v3253 = vld [vmem:[%s199 + $0x48] sm:$0xf]
      %v3254 = vld [vmem:[%s199 + $0x4c] sm:$0xf]
      %v3255 = vld [vmem:[%s199 + $0x50] sm:$0xf]
      %v3256 = vld [vmem:[%s199 + $0x54] sm:$0xf]
      %v3257 = vld [vmem:[%s199 + $0x58] sm:$0xf]
      %v3258 = vld [vmem:[%s199 + $0x5c] sm:$0xf]
      %v3259 = vld [vmem:[%s199 + $0x60] sm:$0xf]
      %v3260 = vld [vmem:[%s199 + $0x64] sm:$0xf]
      %v3261 = vld [vmem:[%s199 + $0x68] sm:$0xf]
      %v3262 = vld [vmem:[%s199 + $0x6c] sm:$0xf]
      %v3263 = vld [vmem:[%s199 + $0x70] sm:$0xf]
      %v3264 = vld [vmem:[%s199 + $0x74] sm:$0xf]
      %v3265 = vld [vmem:[%s199 + $0x78] sm:$0xf]
      %v3266 = vld [vmem:[%s199 + $0x7c] sm:$0xf]
      %v3267 = vld [vmem:[%s199 + $0x80] sm:$0xf]
      %v3268 = vld [vmem:[%s199 + $0x84] sm:$0xf]
      %v3269 = vld [vmem:[%s199 + $0x88] sm:$0xf]
      %v3270 = vld [vmem:[%s199 + $0x8c] sm:$0xf]
      %v3271 = vld [vmem:[%s199 + $0x90] sm:$0xf]
      %v3272 = vld [vmem:[%s199 + $0x94] sm:$0xf]
      %v3273 = vld [vmem:[%s199 + $0x98] sm:$0xf]
      %v3274 = vld [vmem:[%s199 + $0x9c] sm:$0xf]
      %v3275 = vld [vmem:[%s199 + $0xa0] sm:$0xf]
      %v3276 = vld [vmem:[%s199 + $0xa4] sm:$0xf]
      %v3277 = vld [vmem:[%s199 + $0xa8] sm:$0xf]
      %v3278 = vld [vmem:[%s199 + $0xac] sm:$0xf]
      %v3279 = vld [vmem:[%s199 + $0xb0] sm:$0xf]
      %v3280 = vld [vmem:[%s199 + $0xb4] sm:$0xf]
      %v3281 = vld [vmem:[%s199 + $0xb8] sm:$0x1]
      %s3282 = scalar_lea.vmem %s2, 384
      %v3283 = vld [vmem:[%s3282] sm:$0xf]
      %v3284 = vld [vmem:[%s3282 + $0x4] sm:$0xf]
      %v3285 = vld [vmem:[%s3282 + $0x8] sm:$0xf]
      %v3286 = vld [vmem:[%s3282 + $0xc] sm:$0xf]
      %v3287 = vld [vmem:[%s3282 + $0x10] sm:$0xf]
      %v3288 = vld [vmem:[%s3282 + $0x14] sm:$0xf]
      %v3289 = vld [vmem:[%s3282 + $0x18] sm:$0xf]
      %v3290 = vld [vmem:[%s3282 + $0x1c] sm:$0xf]
      %v3291 = vld [vmem:[%s3282 + $0x20] sm:$0xf]
      %v3292 = vld [vmem:[%s3282 + $0x24] sm:$0xf]
      %v3293 = vld [vmem:[%s3282 + $0x28] sm:$0xf]
      %v3294 = vld [vmem:[%s3282 + $0x2c] sm:$0xf]
      %v3295 = vld [vmem:[%s3282 + $0x30] sm:$0xf]
      %v3296 = vld [vmem:[%s3282 + $0x34] sm:$0xf]
      %v3297 = vld [vmem:[%s3282 + $0x38] sm:$0xf]
      %v3298 = vld [vmem:[%s3282 + $0x3c] sm:$0xf]
      %v3341 = vunpack.c.l.b16 %v3240
      %v3342 = vunpack.c.l.b16 %v3241
      %v3343 = vunpack.c.l.b16 %v3242
      %v3344 = vunpack.c.l.b16 %v3243
      %v3345 = vunpack.c.l.b16 %v3244
      %v3346 = vunpack.c.l.b16 %v3245
      %v3347 = vunpack.c.l.b16 %v3246
      %v3348 = vunpack.c.l.b16 %v3247
      %v3349 = vunpack.c.l.b16 %v3248
      %v3350 = vunpack.c.l.b16 %v3249
      %v3351 = vunpack.c.l.b16 %v3250
      %v3352 = vunpack.c.l.b16 %v3251
      %v3353 = vunpack.c.l.b16 %v3252
      %v3354 = vunpack.c.l.b16 %v3253
      %v3355 = vunpack.c.l.b16 %v3254
      %v3356 = vunpack.c.l.b16 %v3255
      %v3357 = vunpack.c.l.b16 %v3256
      %v3358 = vunpack.c.l.b16 %v3257
      %v3359 = vunpack.c.l.b16 %v3258
      %v3360 = vunpack.c.l.b16 %v3259
      %v3361 = vunpack.c.l.b16 %v3260
      %v3362 = vunpack.c.l.b16 %v3261
      %v3363 = vunpack.c.l.b16 %v3262
      %v3364 = vunpack.c.l.b16 %v3263
      %v3365 = vunpack.c.l.b16 %v3264
      %v3366 = vunpack.c.l.b16 %v3265
      %v3367 = vunpack.c.l.b16 %v3266
      %v3368 = vunpack.c.l.b16 %v3267
      %v3369 = vunpack.c.l.b16 %v3268
      %v3370 = vunpack.c.l.b16 %v3269
      %v3371 = vunpack.c.l.b16 %v3270
      %v3372 = vunpack.c.l.b16 %v3271
      %v3373 = vunpack.c.l.b16 %v3272
      %v3374 = vunpack.c.l.b16 %v3273
      %v3375 = vunpack.c.l.b16 %v3274
      %v3376 = vunpack.c.l.b16 %v3275
      %v3377 = vunpack.c.l.b16 %v3276
      %v3378 = vunpack.c.l.b16 %v3277
      %v3379 = vunpack.c.l.b16 %v3278
      %v3380 = vunpack.c.l.b16 %v3279
      %v3381 = vunpack.c.l.b16 %v3280
      %v3382 = vunpack.c.l.b16 %v3281
      %v3383 = vpack.c.b16 %v3342, %v3341
      %v3384 = vpack.c.b16 %v3344, %v3343
      %v3385 = vpack.c.b16 %v3346, %v3345
      %v3386 = vpack.c.b16 %v3348, %v3347
      %v3387 = vpack.c.b16 %v3350, %v3349
      %v3388 = vpack.c.b16 %v3352, %v3351
      %v3389 = vpack.c.b16 %v3354, %v3353
      %v3390 = vpack.c.b16 %v3356, %v3355
      %v3391 = vpack.c.b16 %v3358, %v3357
      %v3392 = vpack.c.b16 %v3360, %v3359
      %v3393 = vpack.c.b16 %v3362, %v3361
      %v3394 = vpack.c.b16 %v3364, %v3363
      %v3395 = vpack.c.b16 %v3366, %v3365
      %v3396 = vpack.c.b16 %v3368, %v3367
      %v3397 = vpack.c.b16 %v3370, %v3369
      %v3398 = vpack.c.b16 %v3372, %v3371
      %v3399 = vpack.c.b16 %v3374, %v3373
      %v3400 = vpack.c.b16 %v3376, %v3375
      %v3401 = vpack.c.b16 %v3378, %v3377
      %v3402 = vpack.c.b16 %v3380, %v3379
      %v3403 = vpack.c.b16 %v3382, %v3381
      %v3405 = vshrl.u32 %v3383, 16
      %v3407 = vshll.u32 %v3383, 16
      %v3409 = vrot.slane %v3407, 1
      %v3410 = vor.u32 %v3405, %v3409
      %v3412 = vshll.u32 %v3384, 16
      %v3414 = vrot.slane %v3412, 1
      %v3415 = vsel %vm2762, %v3410, %v3414
      %v3416 = vshrl.u32 %v3384, 16
      %v3418 = vor.u32 %v3416, %v3414
      %v3420 = vshll.u32 %v3385, 16
      %v3422 = vrot.slane %v3420, 1
      %v3423 = vsel %vm2762, %v3418, %v3422
      %v3424 = vshrl.u32 %v3385, 16
      %v3426 = vor.u32 %v3424, %v3422
      %v3428 = vshll.u32 %v3386, 16
      %v3430 = vrot.slane %v3428, 1
      %v3431 = vsel %vm2762, %v3426, %v3430
      %v3432 = vshrl.u32 %v3386, 16
      %v3434 = vor.u32 %v3432, %v3430
      %v3436 = vshll.u32 %v3387, 16
      %v3438 = vrot.slane %v3436, 1
      %v3439 = vsel %vm2762, %v3434, %v3438
      %v3440 = vshrl.u32 %v3387, 16
      %v3442 = vor.u32 %v3440, %v3438
      %v3444 = vshll.u32 %v3388, 16
      %v3446 = vrot.slane %v3444, 1
      %v3447 = vsel %vm2762, %v3442, %v3446
      %v3448 = vshrl.u32 %v3388, 16
      %v3450 = vor.u32 %v3448, %v3446
      %v3452 = vshll.u32 %v3389, 16
      %v3454 = vrot.slane %v3452, 1
      %v3455 = vsel %vm2762, %v3450, %v3454
      %v3456 = vshrl.u32 %v3389, 16
      %v3458 = vor.u32 %v3456, %v3454
      %v3460 = vshll.u32 %v3390, 16
      %v3462 = vrot.slane %v3460, 1
      %v3463 = vsel %vm2762, %v3458, %v3462
      %v3464 = vshrl.u32 %v3390, 16
      %v3466 = vor.u32 %v3464, %v3462
      %v3468 = vshll.u32 %v3391, 16
      %v3470 = vrot.slane %v3468, 1
      %v3471 = vsel %vm2762, %v3466, %v3470
      %v3472 = vshrl.u32 %v3391, 16
      %v3474 = vor.u32 %v3472, %v3470
      %v3476 = vshll.u32 %v3392, 16
      %v3478 = vrot.slane %v3476, 1
      %v3479 = vsel %vm2762, %v3474, %v3478
      %v3480 = vshrl.u32 %v3392, 16
      %v3482 = vor.u32 %v3480, %v3478
      %v3484 = vshll.u32 %v3393, 16
      %v3486 = vrot.slane %v3484, 1
      %v3487 = vsel %vm2762, %v3482, %v3486
      %v3488 = vshrl.u32 %v3393, 16
      %v3490 = vor.u32 %v3488, %v3486
      %v3492 = vshll.u32 %v3394, 16
      %v3494 = vrot.slane %v3492, 1
      %v3495 = vsel %vm2762, %v3490, %v3494
      %v3496 = vshrl.u32 %v3394, 16
      %v3498 = vor.u32 %v3496, %v3494
      %v3500 = vshll.u32 %v3395, 16
      %v3502 = vrot.slane %v3500, 1
      %v3503 = vsel %vm2762, %v3498, %v3502
      %v3504 = vshrl.u32 %v3395, 16
      %v3506 = vor.u32 %v3504, %v3502
      %v3508 = vshll.u32 %v3396, 16
      %v3510 = vrot.slane %v3508, 1
      %v3511 = vsel %vm2762, %v3506, %v3510
      %v3512 = vshrl.u32 %v3396, 16
      %v3514 = vor.u32 %v3512, %v3510
      %v3516 = vshll.u32 %v3397, 16
      %v3518 = vrot.slane %v3516, 1
      %v3519 = vsel %vm2762, %v3514, %v3518
      %v3520 = vshrl.u32 %v3397, 16
      %v3522 = vor.u32 %v3520, %v3518
      %v3524 = vshll.u32 %v3398, 16
      %v3526 = vrot.slane %v3524, 1
      %v3527 = vsel %vm2762, %v3522, %v3526
      %v3528 = vshrl.u32 %v3398, 16
      %v3530 = vor.u32 %v3528, %v3526
      %v3532 = vshll.u32 %v3399, 16
      %v3534 = vrot.slane %v3532, 1
      %v3535 = vsel %vm2762, %v3530, %v3534
      %v3536 = vshrl.u32 %v3399, 16
      %v3538 = vor.u32 %v3536, %v3534
      %v3540 = vshll.u32 %v3400, 16
      %v3542 = vrot.slane %v3540, 1
      %v3543 = vsel %vm2762, %v3538, %v3542
      %v3544 = vshrl.u32 %v3400, 16
      %v3546 = vor.u32 %v3544, %v3542
      %v3548 = vshll.u32 %v3401, 16
      %v3550 = vrot.slane %v3548, 1
      %v3551 = vsel %vm2762, %v3546, %v3550
      %v3552 = vshrl.u32 %v3401, 16
      %v3554 = vor.u32 %v3552, %v3550
      %v3556 = vshll.u32 %v3402, 16
      %v3558 = vrot.slane %v3556, 1
      %v3559 = vsel %vm2762, %v3554, %v3558
      %v3560 = vshrl.u32 %v3402, 16
      %v3562 = vor.u32 %v3560, %v3558
      %v3564 = vshll.u32 %v3403, 16
      %v3566 = vrot.slane %v3564, 1
      %v3567 = vsel %vm2762, %v3562, %v3566
      %v3568 = vshrl.u32 %v3403, 16
      %v3570 = vor.u32 %v3568, %v3566
      %v3608 = vunpack.c.l.b16 %v3283
      %v3609 = vunpack.c.l.b16 %v3284
      %v3610 = vunpack.c.l.b16 %v3285
      %v3611 = vunpack.c.l.b16 %v3286
      %v3612 = vunpack.c.l.b16 %v3287
      %v3613 = vunpack.c.l.b16 %v3288
      %v3614 = vunpack.c.l.b16 %v3289
      %v3615 = vunpack.c.l.b16 %v3290
      %v3616 = vunpack.c.l.b16 %v3291
      %v3617 = vunpack.c.l.b16 %v3292
      %v3618 = vunpack.c.l.b16 %v3293
      %v3619 = vunpack.c.l.b16 %v3294
      %v3620 = vunpack.c.l.b16 %v3295
      %v3621 = vunpack.c.l.b16 %v3296
      %v3622 = vunpack.c.l.b16 %v3297
      %v3623 = vunpack.c.l.b16 %v3298
      %v3624 = vpack.c.b16 %v3609, %v3608
      %v3625 = vpack.c.b16 %v3611, %v3610
      %v3626 = vpack.c.b16 %v3613, %v3612
      %v3627 = vpack.c.b16 %v3615, %v3614
      %v3628 = vpack.c.b16 %v3617, %v3616
      %v3629 = vpack.c.b16 %v3619, %v3618
      %v3630 = vpack.c.b16 %v3621, %v3620
      %v3631 = vpack.c.b16 %v3623, %v3622
      %3640 = vmatprep.subr.bf16.mxu0 0
      %3641 = vmatpush1.bf16.msra.mxu0 %v3631
      %3642 = vmatprep.subr.bf16.mxu0 0
      %3643 = vmatpush1.bf16.msra.mxu0 %v3630
      %3644 = vmatprep.subr.bf16.mxu0 0
      %3645 = vmatpush1.bf16.msra.mxu0 %v3629
      %3646 = vmatprep.subr.bf16.mxu0 0
      %3647 = vmatpush1.bf16.msra.mxu0 %v3628
      %3648 = vmatprep.subr.bf16.mxu0 0
      %3649 = vmatpush1.bf16.msra.mxu0 %v3627
      %3650 = vmatprep.subr.bf16.mxu0 0
      %3651 = vmatpush1.bf16.msra.mxu0 %v3626
      %3652 = vmatprep.subr.bf16.mxu0 0
      %3653 = vmatpush1.bf16.msra.mxu0 %v3625
      %3654 = vmatprep.subr.bf16.mxu0 0
      %3655 = vmatpush1.bf16.msra.mxu0 %v3624
      %3656 = vmatprep.subr.bf16.mxu0 0
      %3657 = vmatpush2.bf16.msra.mxu0 0
      %3658 = vmatprep.subr.bf16.mxu0 0
      %3659 = vmatpush2.bf16.msra.mxu0 0
      %3660 = vmatprep.subr.bf16.mxu0 0
      %3661 = vmatpush2.bf16.msra.mxu0 0
      %3662 = vmatprep.subr.bf16.mxu0 0
      %3663 = vmatpush2.bf16.msra.mxu0 0
      %3664 = vmatprep.subr.bf16.mxu0 0
      %3665 = vmatpush2.bf16.msra.mxu0 0
      %3666 = vmatprep.subr.bf16.mxu0 0
      %3667 = vmatpush2.bf16.msra.mxu0 0
      %3668 = vmatprep.subr.bf16.mxu0 0
      %3669 = vmatpush2.bf16.msra.mxu0 0
      %3670 = vmatprep.subr.bf16.mxu0 0
      %3671 = vmatpush2.bf16.msra.mxu0 0
      %3672 = vmatprep.mubr.bf16.mxu0 0
      %3673 = vmatmul.mubr.bf16.gmra.mxu0 %v3415
      %v3674 = vpop.f32.mrf.mxu0
      %v3675 = vadd.f32 0.0, %v3674
      %v3676 = vpop.f32.mrf.mxu0
      %v3677 = vpop.f32.mrf.mxu0
      %v3678 = vadd.f32 0.0, %v3677
      %v3679 = vpop.f32.mrf.mxu0
      %3680 = vmatprep.mubr.bf16.mxu0 0
      %3681 = vmatmul.mubr.bf16.gmra.mxu0 %v3423
      %v3682 = vpop.f32.mrf.mxu0
      %v3683 = vadd.f32 0.0, %v3682
      %v3684 = vpop.f32.mrf.mxu0
      %v3685 = vpop.f32.mrf.mxu0
      %v3686 = vadd.f32 0.0, %v3685
      %v3687 = vpop.f32.mrf.mxu0
      %3688 = vmatprep.mubr.bf16.mxu0 0
      %3689 = vmatmul.mubr.bf16.gmra.mxu0 %v3431
      %v3690 = vpop.f32.mrf.mxu0
      %v3691 = vadd.f32 0.0, %v3690
      %v3692 = vpop.f32.mrf.mxu0
      %v3693 = vpop.f32.mrf.mxu0
      %v3694 = vadd.f32 0.0, %v3693
      %v3695 = vpop.f32.mrf.mxu0
      %3696 = vmatprep.mubr.bf16.mxu0 0
      %3697 = vmatmul.mubr.bf16.gmra.mxu0 %v3439
      %v3698 = vpop.f32.mrf.mxu0
      %v3699 = vadd.f32 0.0, %v3698
      %v3700 = vpop.f32.mrf.mxu0
      %v3701 = vpop.f32.mrf.mxu0
      %v3702 = vadd.f32 0.0, %v3701
      %v3703 = vpop.f32.mrf.mxu0
      %3704 = vmatprep.mubr.bf16.mxu0 0
      %3705 = vmatmul.mubr.bf16.gmra.mxu0 %v3447
      %v3706 = vpop.f32.mrf.mxu0
      %v3707 = vadd.f32 0.0, %v3706
      %v3708 = vpop.f32.mrf.mxu0
      %v3709 = vpop.f32.mrf.mxu0
      %v3710 = vadd.f32 0.0, %v3709
      %v3711 = vpop.f32.mrf.mxu0
      %3712 = vmatprep.mubr.bf16.mxu0 0
      %3713 = vmatmul.mubr.bf16.gmra.mxu0 %v3455
      %v3714 = vpop.f32.mrf.mxu0
      %v3715 = vadd.f32 0.0, %v3714
      %v3716 = vpop.f32.mrf.mxu0
      %v3717 = vpop.f32.mrf.mxu0
      %v3718 = vadd.f32 0.0, %v3717
      %v3719 = vpop.f32.mrf.mxu0
      %3720 = vmatprep.mubr.bf16.mxu0 0
      %3721 = vmatmul.mubr.bf16.gmra.mxu0 %v3463
      %v3722 = vpop.f32.mrf.mxu0
      %v3723 = vadd.f32 0.0, %v3722
      %v3724 = vpop.f32.mrf.mxu0
      %v3725 = vpop.f32.mrf.mxu0
      %v3726 = vadd.f32 0.0, %v3725
      %v3727 = vpop.f32.mrf.mxu0
      %3728 = vmatprep.mubr.bf16.mxu0 0
      %3729 = vmatmul.mubr.bf16.gmra.mxu0 %v3471
      %v3730 = vpop.f32.mrf.mxu0
      %v3731 = vadd.f32 0.0, %v3730
      %v3732 = vpop.f32.mrf.mxu0
      %v3733 = vpop.f32.mrf.mxu0
      %v3734 = vadd.f32 0.0, %v3733
      %v3735 = vpop.f32.mrf.mxu0
      %3736 = vmatprep.mubr.bf16.mxu0 0
      %3737 = vmatmul.mubr.bf16.gmra.mxu0 %v3479
      %v3738 = vpop.f32.mrf.mxu0
      %v3739 = vadd.f32 0.0, %v3738
      %v3740 = vpop.f32.mrf.mxu0
      %v3741 = vpop.f32.mrf.mxu0
      %v3742 = vadd.f32 0.0, %v3741
      %v3743 = vpop.f32.mrf.mxu0
      %3744 = vmatprep.mubr.bf16.mxu0 0
      %3745 = vmatmul.mubr.bf16.gmra.mxu0 %v3487
      %v3746 = vpop.f32.mrf.mxu0
      %v3747 = vadd.f32 0.0, %v3746
      %v3748 = vpop.f32.mrf.mxu0
      %v3749 = vpop.f32.mrf.mxu0
      %v3750 = vadd.f32 0.0, %v3749
      %v3751 = vpop.f32.mrf.mxu0
      %3752 = vmatprep.mubr.bf16.mxu0 0
      %3753 = vmatmul.mubr.bf16.gmra.mxu0 %v3495
      %v3754 = vpop.f32.mrf.mxu0
      %v3755 = vadd.f32 0.0, %v3754
      %v3756 = vpop.f32.mrf.mxu0
      %v3757 = vpop.f32.mrf.mxu0
      %v3758 = vadd.f32 0.0, %v3757
      %v3759 = vpop.f32.mrf.mxu0
      %3760 = vmatprep.mubr.bf16.mxu0 0
      %3761 = vmatmul.mubr.bf16.gmra.mxu0 %v3503
      %v3762 = vpop.f32.mrf.mxu0
      %v3763 = vadd.f32 0.0, %v3762
      %v3764 = vpop.f32.mrf.mxu0
      %v3765 = vpop.f32.mrf.mxu0
      %v3766 = vadd.f32 0.0, %v3765
      %v3767 = vpop.f32.mrf.mxu0
      %3768 = vmatprep.mubr.bf16.mxu0 0
      %3769 = vmatmul.mubr.bf16.gmra.mxu0 %v3511
      %v3770 = vpop.f32.mrf.mxu0
      %v3771 = vadd.f32 0.0, %v3770
      %v3772 = vpop.f32.mrf.mxu0
      %v3773 = vpop.f32.mrf.mxu0
      %v3774 = vadd.f32 0.0, %v3773
      %v3775 = vpop.f32.mrf.mxu0
      %3776 = vmatprep.mubr.bf16.mxu0 0
      %3777 = vmatmul.mubr.bf16.gmra.mxu0 %v3519
      %v3778 = vpop.f32.mrf.mxu0
      %v3779 = vadd.f32 0.0, %v3778
      %v3780 = vpop.f32.mrf.mxu0
      %v3781 = vpop.f32.mrf.mxu0
      %v3782 = vadd.f32 0.0, %v3781
      %v3783 = vpop.f32.mrf.mxu0
      %3784 = vmatprep.mubr.bf16.mxu0 0
      %3785 = vmatmul.mubr.bf16.gmra.mxu0 %v3527
      %v3786 = vpop.f32.mrf.mxu0
      %v3787 = vadd.f32 0.0, %v3786
      %v3788 = vpop.f32.mrf.mxu0
      %v3789 = vpop.f32.mrf.mxu0
      %v3790 = vadd.f32 0.0, %v3789
      %v3791 = vpop.f32.mrf.mxu0
      %3792 = vmatprep.mubr.bf16.mxu0 0
      %3793 = vmatmul.mubr.bf16.gmra.mxu0 %v3535
      %v3794 = vpop.f32.mrf.mxu0
      %v3795 = vadd.f32 0.0, %v3794
      %v3796 = vpop.f32.mrf.mxu0
      %v3797 = vpop.f32.mrf.mxu0
      %v3798 = vadd.f32 0.0, %v3797
      %v3799 = vpop.f32.mrf.mxu0
      %3800 = vmatprep.mubr.bf16.mxu0 0
      %3801 = vmatmul.mubr.bf16.gmra.mxu0 %v3543
      %v3802 = vpop.f32.mrf.mxu0
      %v3803 = vadd.f32 0.0, %v3802
      %v3804 = vpop.f32.mrf.mxu0
      %v3805 = vpop.f32.mrf.mxu0
      %v3806 = vadd.f32 0.0, %v3805
      %v3807 = vpop.f32.mrf.mxu0
      %3808 = vmatprep.mubr.bf16.mxu0 0
      %3809 = vmatmul.mubr.bf16.gmra.mxu0 %v3551
      %v3810 = vpop.f32.mrf.mxu0
      %v3811 = vadd.f32 0.0, %v3810
      %v3812 = vpop.f32.mrf.mxu0
      %v3813 = vpop.f32.mrf.mxu0
      %v3814 = vadd.f32 0.0, %v3813
      %v3815 = vpop.f32.mrf.mxu0
      %3816 = vmatprep.mubr.bf16.mxu0 0
      %3817 = vmatmul.mubr.bf16.gmra.mxu0 %v3559
      %v3818 = vpop.f32.mrf.mxu0
      %v3819 = vadd.f32 0.0, %v3818
      %v3820 = vpop.f32.mrf.mxu0
      %v3821 = vpop.f32.mrf.mxu0
      %v3822 = vadd.f32 0.0, %v3821
      %v3823 = vpop.f32.mrf.mxu0
      %3824 = vmatprep.mubr.bf16.mxu0 0
      %3825 = vmatmul.mubr.bf16.gmra.mxu0 %v3567
      %v3826 = vpop.f32.mrf.mxu0
      %v3827 = vadd.f32 0.0, %v3826
      %v3828 = vpop.f32.mrf.mxu0
      %v3829 = vpop.f32.mrf.mxu0
      %v3830 = vadd.f32 0.0, %v3829
      %v3831 = vpop.f32.mrf.mxu0
      %3832 = vmatprep.mubr.bf16.mxu0 0
      %3833 = vmatmul.mubr.bf16.gmra.mxu0 %v3570
      %v3834 = vpop.f32.mrf.mxu0
      %v3835 = vadd.f32 0.0, %v3834
      %v3836 = vpop.f32.mrf.mxu0
      %v3837 = vpop.f32.mrf.mxu0
      %v3838 = vpop.f32.mrf.mxu0
      %3839 = vdwg.mxu0
      %v3840 = vadd.f32 %v3199, %v3675
      %v3841 = vadd.f32 %v3200, %v3678
      %v3842 = vadd.f32 %v3201, %v3683
      %v3843 = vadd.f32 %v3202, %v3686
      %v3844 = vadd.f32 %v3203, %v3691
      %v3845 = vadd.f32 %v3204, %v3694
      %v3846 = vadd.f32 %v3205, %v3699
      %v3847 = vadd.f32 %v3206, %v3702
      %v3848 = vadd.f32 %v3207, %v3707
      %v3849 = vadd.f32 %v3208, %v3710
      %v3850 = vadd.f32 %v3209, %v3715
      %v3851 = vadd.f32 %v3210, %v3718
      %v3852 = vadd.f32 %v3211, %v3723
      %v3853 = vadd.f32 %v3212, %v3726
      %v3854 = vadd.f32 %v3213, %v3731
      %v3855 = vadd.f32 %v3214, %v3734
      %v3856 = vadd.f32 %v3215, %v3739
      %v3857 = vadd.f32 %v3216, %v3742
      %v3858 = vadd.f32 %v3217, %v3747
      %v3859 = vadd.f32 %v3218, %v3750
      %v3860 = vadd.f32 %v3219, %v3755
      %v3861 = vadd.f32 %v3220, %v3758
      %v3862 = vadd.f32 %v3221, %v3763
      %v3863 = vadd.f32 %v3222, %v3766
      %v3864 = vadd.f32 %v3223, %v3771
      %v3865 = vadd.f32 %v3224, %v3774
      %v3866 = vadd.f32 %v3225, %v3779
      %v3867 = vadd.f32 %v3226, %v3782
      %v3868 = vadd.f32 %v3227, %v3787
      %v3869 = vadd.f32 %v3228, %v3790
      %v3870 = vadd.f32 %v3229, %v3795
      %v3871 = vadd.f32 %v3230, %v3798
      %v3872 = vadd.f32 %v3231, %v3803
      %v3873 = vadd.f32 %v3232, %v3806
      %v3874 = vadd.f32 %v3233, %v3811
      %v3875 = vadd.f32 %v3234, %v3814
      %v3876 = vadd.f32 %v3235, %v3819
      %v3877 = vadd.f32 %v3236, %v3822
      %v3878 = vadd.f32 %v3237, %v3827
      %v3879 = vadd.f32 %v3238, %v3830
      %v3880 = vadd.f32 %v3239, %v3835
      %v3881 = vld [vmem:[%s199 + $0x14] sm:$0xe]
      %s3882 = scalar_lea.vmem %s2, 448
      %v3883 = vld [vmem:[%s3882] sm:$0xf]
      %v3884 = vld [vmem:[%s3882 + $0x4] sm:$0xf]
      %v3885 = vld [vmem:[%s3882 + $0x8] sm:$0xf]
      %v3886 = vld [vmem:[%s3882 + $0xc] sm:$0xf]
      %v3887 = vld [vmem:[%s3882 + $0x10] sm:$0xf]
      %v3888 = vld [vmem:[%s3882 + $0x14] sm:$0xf]
      %v3889 = vld [vmem:[%s3882 + $0x18] sm:$0xf]
      %v3890 = vld [vmem:[%s3882 + $0x1c] sm:$0xf]
      %v3891 = vld [vmem:[%s3882 + $0x20] sm:$0xf]
      %v3892 = vld [vmem:[%s3882 + $0x24] sm:$0xf]
      %v3893 = vld [vmem:[%s3882 + $0x28] sm:$0xf]
      %v3894 = vld [vmem:[%s3882 + $0x2c] sm:$0xf]
      %v3895 = vld [vmem:[%s3882 + $0x30] sm:$0xf]
      %v3896 = vld [vmem:[%s3882 + $0x34] sm:$0xf]
      %v3897 = vld [vmem:[%s3882 + $0x38] sm:$0xf]
      %v3898 = vld [vmem:[%s3882 + $0x3c] sm:$0xf]
      %v3900 = vunpack.c.l.b16 %v3881
      %v3901 = vpack.c.b16 %v3342, %v3900
      %vm3902 = vcmask 1046528
      %v3903 = vrot.slane %v3901, 1
      %v3904 = vrot.slane %v3384, 1
      %v3905 = vsel %vm3902, %v3903, %v3904
      %v3906 = vrot.slane %v3385, 1
      %v3907 = vsel %vm3902, %v3904, %v3906
      %v3908 = vrot.slane %v3386, 1
      %v3909 = vsel %vm3902, %v3906, %v3908
      %v3910 = vrot.slane %v3387, 1
      %v3911 = vsel %vm3902, %v3908, %v3910
      %v3912 = vrot.slane %v3388, 1
      %v3913 = vsel %vm3902, %v3910, %v3912
      %v3914 = vrot.slane %v3389, 1
      %v3915 = vsel %vm3902, %v3912, %v3914
      %v3916 = vrot.slane %v3390, 1
      %v3917 = vsel %vm3902, %v3914, %v3916
      %v3918 = vrot.slane %v3391, 1
      %v3919 = vsel %vm3902, %v3916, %v3918
      %v3920 = vrot.slane %v3392, 1
      %v3921 = vsel %vm3902, %v3918, %v3920
      %v3922 = vrot.slane %v3393, 1
      %v3923 = vsel %vm3902, %v3920, %v3922
      %v3924 = vrot.slane %v3394, 1
      %v3925 = vsel %vm3902, %v3922, %v3924
      %v3926 = vrot.slane %v3395, 1
      %v3927 = vsel %vm3902, %v3924, %v3926
      %v3928 = vrot.slane %v3396, 1
      %v3929 = vsel %vm3902, %v3926, %v3928
      %v3930 = vrot.slane %v3397, 1
      %v3931 = vsel %vm3902, %v3928, %v3930
      %v3932 = vrot.slane %v3398, 1
      %v3933 = vsel %vm3902, %v3930, %v3932
      %v3934 = vrot.slane %v3399, 1
      %v3935 = vsel %vm3902, %v3932, %v3934
      %v3936 = vrot.slane %v3400, 1
      %v3937 = vsel %vm3902, %v3934, %v3936
      %v3938 = vrot.slane %v3401, 1
      %v3939 = vsel %vm3902, %v3936, %v3938
      %v3940 = vrot.slane %v3402, 1
      %v3941 = vsel %vm3902, %v3938, %v3940
      %v3942 = vrot.slane %v3403, 1
      %v3943 = vsel %vm3902, %v3940, %v3942
      %v3981 = vunpack.c.l.b16 %v3883
      %v3982 = vunpack.c.l.b16 %v3884
      %v3983 = vunpack.c.l.b16 %v3885
      %v3984 = vunpack.c.l.b16 %v3886
      %v3985 = vunpack.c.l.b16 %v3887
      %v3986 = vunpack.c.l.b16 %v3888
      %v3987 = vunpack.c.l.b16 %v3889
      %v3988 = vunpack.c.l.b16 %v3890
      %v3989 = vunpack.c.l.b16 %v3891
      %v3990 = vunpack.c.l.b16 %v3892
      %v3991 = vunpack.c.l.b16 %v3893
      %v3992 = vunpack.c.l.b16 %v3894
      %v3993 = vunpack.c.l.b16 %v3895
      %v3994 = vunpack.c.l.b16 %v3896
      %v3995 = vunpack.c.l.b16 %v3897
      %v3996 = vunpack.c.l.b16 %v3898
      %v3997 = vpack.c.b16 %v3982, %v3981
      %v3998 = vpack.c.b16 %v3984, %v3983
      %v3999 = vpack.c.b16 %v3986, %v3985
      %v4000 = vpack.c.b16 %v3988, %v3987
      %v4001 = vpack.c.b16 %v3990, %v3989
      %v4002 = vpack.c.b16 %v3992, %v3991
      %v4003 = vpack.c.b16 %v3994, %v3993
      %v4004 = vpack.c.b16 %v3996, %v3995
      %4013 = vmatprep.subr.bf16.mxu0 0
      %4014 = vmatpush1.bf16.msra.mxu0 %v4004
      %4015 = vmatprep.subr.bf16.mxu0 0
      %4016 = vmatpush1.bf16.msra.mxu0 %v4003
      %4017 = vmatprep.subr.bf16.mxu0 0
      %4018 = vmatpush1.bf16.msra.mxu0 %v4002
      %4019 = vmatprep.subr.bf16.mxu0 0
      %4020 = vmatpush1.bf16.msra.mxu0 %v4001
      %4021 = vmatprep.subr.bf16.mxu0 0
      %4022 = vmatpush1.bf16.msra.mxu0 %v4000
      %4023 = vmatprep.subr.bf16.mxu0 0
      %4024 = vmatpush1.bf16.msra.mxu0 %v3999
      %4025 = vmatprep.subr.bf16.mxu0 0
      %4026 = vmatpush1.bf16.msra.mxu0 %v3998
      %4027 = vmatprep.subr.bf16.mxu0 0
      %4028 = vmatpush1.bf16.msra.mxu0 %v3997
      %4029 = vmatprep.subr.bf16.mxu0 0
      %4030 = vmatpush2.bf16.msra.mxu0 0
      %4031 = vmatprep.subr.bf16.mxu0 0
      %4032 = vmatpush2.bf16.msra.mxu0 0
      %4033 = vmatprep.subr.bf16.mxu0 0
      %4034 = vmatpush2.bf16.msra.mxu0 0
      %4035 = vmatprep.subr.bf16.mxu0 0
      %4036 = vmatpush2.bf16.msra.mxu0 0
      %4037 = vmatprep.subr.bf16.mxu0 0
      %4038 = vmatpush2.bf16.msra.mxu0 0
      %4039 = vmatprep.subr.bf16.mxu0 0
      %4040 = vmatpush2.bf16.msra.mxu0 0
      %4041 = vmatprep.subr.bf16.mxu0 0
      %4042 = vmatpush2.bf16.msra.mxu0 0
      %4043 = vmatprep.subr.bf16.mxu0 0
      %4044 = vmatpush2.bf16.msra.mxu0 0
      %4045 = vmatprep.mubr.bf16.mxu0 0
      %4046 = vmatmul.mubr.bf16.gmra.mxu0 %v3905
      %v4047 = vpop.f32.mrf.mxu0
      %v4048 = vadd.f32 0.0, %v4047
      %v4049 = vpop.f32.mrf.mxu0
      %v4050 = vpop.f32.mrf.mxu0
      %v4051 = vadd.f32 0.0, %v4050
      %v4052 = vpop.f32.mrf.mxu0
      %4053 = vmatprep.mubr.bf16.mxu0 0
      %4054 = vmatmul.mubr.bf16.gmra.mxu0 %v3907
      %v4055 = vpop.f32.mrf.mxu0
      %v4056 = vadd.f32 0.0, %v4055
      %v4057 = vpop.f32.mrf.mxu0
      %v4058 = vpop.f32.mrf.mxu0
      %v4059 = vadd.f32 0.0, %v4058
      %v4060 = vpop.f32.mrf.mxu0
      %4061 = vmatprep.mubr.bf16.mxu0 0
      %4062 = vmatmul.mubr.bf16.gmra.mxu0 %v3909
      %v4063 = vpop.f32.mrf.mxu0
      %v4064 = vadd.f32 0.0, %v4063
      %v4065 = vpop.f32.mrf.mxu0
      %v4066 = vpop.f32.mrf.mxu0
      %v4067 = vadd.f32 0.0, %v4066
      %v4068 = vpop.f32.mrf.mxu0
      %4069 = vmatprep.mubr.bf16.mxu0 0
      %4070 = vmatmul.mubr.bf16.gmra.mxu0 %v3911
      %v4071 = vpop.f32.mrf.mxu0
      %v4072 = vadd.f32 0.0, %v4071
      %v4073 = vpop.f32.mrf.mxu0
      %v4074 = vpop.f32.mrf.mxu0
      %v4075 = vadd.f32 0.0, %v4074
      %v4076 = vpop.f32.mrf.mxu0
      %4077 = vmatprep.mubr.bf16.mxu0 0
      %4078 = vmatmul.mubr.bf16.gmra.mxu0 %v3913
      %v4079 = vpop.f32.mrf.mxu0
      %v4080 = vadd.f32 0.0, %v4079
      %v4081 = vpop.f32.mrf.mxu0
      %v4082 = vpop.f32.mrf.mxu0
      %v4083 = vadd.f32 0.0, %v4082
      %v4084 = vpop.f32.mrf.mxu0
      %4085 = vmatprep.mubr.bf16.mxu0 0
      %4086 = vmatmul.mubr.bf16.gmra.mxu0 %v3915
      %v4087 = vpop.f32.mrf.mxu0
      %v4088 = vadd.f32 0.0, %v4087
      %v4089 = vpop.f32.mrf.mxu0
      %v4090 = vpop.f32.mrf.mxu0
      %v4091 = vadd.f32 0.0, %v4090
      %v4092 = vpop.f32.mrf.mxu0
      %4093 = vmatprep.mubr.bf16.mxu0 0
      %4094 = vmatmul.mubr.bf16.gmra.mxu0 %v3917
      %v4095 = vpop.f32.mrf.mxu0
      %v4096 = vadd.f32 0.0, %v4095
      %v4097 = vpop.f32.mrf.mxu0
      %v4098 = vpop.f32.mrf.mxu0
      %v4099 = vadd.f32 0.0, %v4098
      %v4100 = vpop.f32.mrf.mxu0
      %4101 = vmatprep.mubr.bf16.mxu0 0
      %4102 = vmatmul.mubr.bf16.gmra.mxu0 %v3919
      %v4103 = vpop.f32.mrf.mxu0
      %v4104 = vadd.f32 0.0, %v4103
      %v4105 = vpop.f32.mrf.mxu0
      %v4106 = vpop.f32.mrf.mxu0
      %v4107 = vadd.f32 0.0, %v4106
      %v4108 = vpop.f32.mrf.mxu0
      %4109 = vmatprep.mubr.bf16.mxu0 0
      %4110 = vmatmul.mubr.bf16.gmra.mxu0 %v3921
      %v4111 = vpop.f32.mrf.mxu0
      %v4112 = vadd.f32 0.0, %v4111
      %v4113 = vpop.f32.mrf.mxu0
      %v4114 = vpop.f32.mrf.mxu0
      %v4115 = vadd.f32 0.0, %v4114
      %v4116 = vpop.f32.mrf.mxu0
      %4117 = vmatprep.mubr.bf16.mxu0 0
      %4118 = vmatmul.mubr.bf16.gmra.mxu0 %v3923
      %v4119 = vpop.f32.mrf.mxu0
      %v4120 = vadd.f32 0.0, %v4119
      %v4121 = vpop.f32.mrf.mxu0
      %v4122 = vpop.f32.mrf.mxu0
      %v4123 = vadd.f32 0.0, %v4122
      %v4124 = vpop.f32.mrf.mxu0
      %4125 = vmatprep.mubr.bf16.mxu0 0
      %4126 = vmatmul.mubr.bf16.gmra.mxu0 %v3925
      %v4127 = vpop.f32.mrf.mxu0
      %v4128 = vadd.f32 0.0, %v4127
      %v4129 = vpop.f32.mrf.mxu0
      %v4130 = vpop.f32.mrf.mxu0
      %v4131 = vadd.f32 0.0, %v4130
      %v4132 = vpop.f32.mrf.mxu0
      %4133 = vmatprep.mubr.bf16.mxu0 0
      %4134 = vmatmul.mubr.bf16.gmra.mxu0 %v3927
      %v4135 = vpop.f32.mrf.mxu0
      %v4136 = vadd.f32 0.0, %v4135
      %v4137 = vpop.f32.mrf.mxu0
      %v4138 = vpop.f32.mrf.mxu0
      %v4139 = vadd.f32 0.0, %v4138
      %v4140 = vpop.f32.mrf.mxu0
      %4141 = vmatprep.mubr.bf16.mxu0 0
      %4142 = vmatmul.mubr.bf16.gmra.mxu0 %v3929
      %v4143 = vpop.f32.mrf.mxu0
      %v4144 = vadd.f32 0.0, %v4143
      %v4145 = vpop.f32.mrf.mxu0
      %v4146 = vpop.f32.mrf.mxu0
      %v4147 = vadd.f32 0.0, %v4146
      %v4148 = vpop.f32.mrf.mxu0
      %4149 = vmatprep.mubr.bf16.mxu0 0
      %4150 = vmatmul.mubr.bf16.gmra.mxu0 %v3931
      %v4151 = vpop.f32.mrf.mxu0
      %v4152 = vadd.f32 0.0, %v4151
      %v4153 = vpop.f32.mrf.mxu0
      %v4154 = vpop.f32.mrf.mxu0
      %v4155 = vadd.f32 0.0, %v4154
      %v4156 = vpop.f32.mrf.mxu0
      %4157 = vmatprep.mubr.bf16.mxu0 0
      %4158 = vmatmul.mubr.bf16.gmra.mxu0 %v3933
      %v4159 = vpop.f32.mrf.mxu0
      %v4160 = vadd.f32 0.0, %v4159
      %v4161 = vpop.f32.mrf.mxu0
      %v4162 = vpop.f32.mrf.mxu0
      %v4163 = vadd.f32 0.0, %v4162
      %v4164 = vpop.f32.mrf.mxu0
      %4165 = vmatprep.mubr.bf16.mxu0 0
      %4166 = vmatmul.mubr.bf16.gmra.mxu0 %v3935
      %v4167 = vpop.f32.mrf.mxu0
      %v4168 = vadd.f32 0.0, %v4167
      %v4169 = vpop.f32.mrf.mxu0
      %v4170 = vpop.f32.mrf.mxu0
      %v4171 = vadd.f32 0.0, %v4170
      %v4172 = vpop.f32.mrf.mxu0
      %4173 = vmatprep.mubr.bf16.mxu0 0
      %4174 = vmatmul.mubr.bf16.gmra.mxu0 %v3937
      %v4175 = vpop.f32.mrf.mxu0
      %v4176 = vadd.f32 0.0, %v4175
      %v4177 = vpop.f32.mrf.mxu0
      %v4178 = vpop.f32.mrf.mxu0
      %v4179 = vadd.f32 0.0, %v4178
      %v4180 = vpop.f32.mrf.mxu0
      %4181 = vmatprep.mubr.bf16.mxu0 0
      %4182 = vmatmul.mubr.bf16.gmra.mxu0 %v3939
      %v4183 = vpop.f32.mrf.mxu0
      %v4184 = vadd.f32 0.0, %v4183
      %v4185 = vpop.f32.mrf.mxu0
      %v4186 = vpop.f32.mrf.mxu0
      %v4187 = vadd.f32 0.0, %v4186
      %v4188 = vpop.f32.mrf.mxu0
      %4189 = vmatprep.mubr.bf16.mxu0 0
      %4190 = vmatmul.mubr.bf16.gmra.mxu0 %v3941
      %v4191 = vpop.f32.mrf.mxu0
      %v4192 = vadd.f32 0.0, %v4191
      %v4193 = vpop.f32.mrf.mxu0
      %v4194 = vpop.f32.mrf.mxu0
      %v4195 = vadd.f32 0.0, %v4194
      %v4196 = vpop.f32.mrf.mxu0
      %4197 = vmatprep.mubr.bf16.mxu0 0
      %4198 = vmatmul.mubr.bf16.gmra.mxu0 %v3943
      %v4199 = vpop.f32.mrf.mxu0
      %v4200 = vadd.f32 0.0, %v4199
      %v4201 = vpop.f32.mrf.mxu0
      %v4202 = vpop.f32.mrf.mxu0
      %v4203 = vadd.f32 0.0, %v4202
      %v4204 = vpop.f32.mrf.mxu0
      %4205 = vmatprep.mubr.bf16.mxu0 0
      %4206 = vmatmul.mubr.bf16.gmra.mxu0 %v3942
      %v4207 = vpop.f32.mrf.mxu0
      %v4208 = vadd.f32 0.0, %v4207
      %v4209 = vpop.f32.mrf.mxu0
      %v4210 = vpop.f32.mrf.mxu0
      %v4211 = vpop.f32.mrf.mxu0
      %4212 = vdwg.mxu0
      %v4213 = vadd.f32 %v3840, %v4048
      %v4214 = vadd.f32 %v3841, %v4051
      %v4215 = vadd.f32 %v3842, %v4056
      %v4216 = vadd.f32 %v3843, %v4059
      %v4217 = vadd.f32 %v3844, %v4064
      %v4218 = vadd.f32 %v3845, %v4067
      %v4219 = vadd.f32 %v3846, %v4072
      %v4220 = vadd.f32 %v3847, %v4075
      %v4221 = vadd.f32 %v3848, %v4080
      %v4222 = vadd.f32 %v3849, %v4083
      %v4223 = vadd.f32 %v3850, %v4088
      %v4224 = vadd.f32 %v3851, %v4091
      %v4225 = vadd.f32 %v3852, %v4096
      %v4226 = vadd.f32 %v3853, %v4099
      %v4227 = vadd.f32 %v3854, %v4104
      %v4228 = vadd.f32 %v3855, %v4107
      %v4229 = vadd.f32 %v3856, %v4112
      %v4230 = vadd.f32 %v3857, %v4115
      %v4231 = vadd.f32 %v3858, %v4120
      %v4232 = vadd.f32 %v3859, %v4123
      %v4233 = vadd.f32 %v3860, %v4128
      %v4234 = vadd.f32 %v3861, %v4131
      %v4235 = vadd.f32 %v3862, %v4136
      %v4236 = vadd.f32 %v3863, %v4139
      %v4237 = vadd.f32 %v3864, %v4144
      %v4238 = vadd.f32 %v3865, %v4147
      %v4239 = vadd.f32 %v3866, %v4152
      %v4240 = vadd.f32 %v3867, %v4155
      %v4241 = vadd.f32 %v3868, %v4160
      %v4242 = vadd.f32 %v3869, %v4163
      %v4243 = vadd.f32 %v3870, %v4168
      %v4244 = vadd.f32 %v3871, %v4171
      %v4245 = vadd.f32 %v3872, %v4176
      %v4246 = vadd.f32 %v3873, %v4179
      %v4247 = vadd.f32 %v3874, %v4184
      %v4248 = vadd.f32 %v3875, %v4187
      %v4249 = vadd.f32 %v3876, %v4192
      %v4250 = vadd.f32 %v3877, %v4195
      %v4251 = vadd.f32 %v3878, %v4200
      %v4252 = vadd.f32 %v3879, %v4203
      %v4253 = vadd.f32 %v3880, %v4208
      %v4254 = vld [vmem:[%s199 + $0xb8] sm:$0x3]
      %s4255 = scalar_lea.vmem %s2, 512
      %v4256 = vld [vmem:[%s4255] sm:$0xf]
      %v4257 = vld [vmem:[%s4255 + $0x4] sm:$0xf]
      %v4258 = vld [vmem:[%s4255 + $0x8] sm:$0xf]
      %v4259 = vld [vmem:[%s4255 + $0xc] sm:$0xf]
      %v4260 = vld [vmem:[%s4255 + $0x10] sm:$0xf]
      %v4261 = vld [vmem:[%s4255 + $0x14] sm:$0xf]
      %v4262 = vld [vmem:[%s4255 + $0x18] sm:$0xf]
      %v4263 = vld [vmem:[%s4255 + $0x1c] sm:$0xf]
      %v4264 = vld [vmem:[%s4255 + $0x20] sm:$0xf]
      %v4265 = vld [vmem:[%s4255 + $0x24] sm:$0xf]
      %v4266 = vld [vmem:[%s4255 + $0x28] sm:$0xf]
      %v4267 = vld [vmem:[%s4255 + $0x2c] sm:$0xf]
      %v4268 = vld [vmem:[%s4255 + $0x30] sm:$0xf]
      %v4269 = vld [vmem:[%s4255 + $0x34] sm:$0xf]
      %v4270 = vld [vmem:[%s4255 + $0x38] sm:$0xf]
      %v4271 = vld [vmem:[%s4255 + $0x3c] sm:$0xf]
      %v4273 = vunpack.c.l.b16 %v4254
      %v4274 = vpack.c.b16 %v4273, %v3381
      %vm4275 = vsmask.f32 6400
      %v4277 = vshrl.u32 %v3901, 16
      %v4279 = vrot.slane %v4277, 1
      %v4280 = vshll.u32 %v3901, 16
      %v4282 = vrot.slane %v4280, 2
      %v4283 = vor.u32 %v4279, %v4282
      %v4284 = vrot.slane %v3416, 1
      %v4285 = vrot.slane %v3412, 2
      %v4286 = vor.u32 %v4284, %v4285
      %v4287 = vsel %vm4275, %v4283, %v4286
      %v4288 = vrot.slane %v3424, 1
      %v4289 = vrot.slane %v3420, 2
      %v4290 = vor.u32 %v4288, %v4289
      %v4291 = vsel %vm4275, %v4286, %v4290
      %v4292 = vrot.slane %v3432, 1
      %v4293 = vrot.slane %v3428, 2
      %v4294 = vor.u32 %v4292, %v4293
      %v4295 = vsel %vm4275, %v4290, %v4294
      %v4296 = vrot.slane %v3440, 1
      %v4297 = vrot.slane %v3436, 2
      %v4298 = vor.u32 %v4296, %v4297
      %v4299 = vsel %vm4275, %v4294, %v4298
      %v4300 = vrot.slane %v3448, 1
      %v4301 = vrot.slane %v3444, 2
      %v4302 = vor.u32 %v4300, %v4301
      %v4303 = vsel %vm4275, %v4298, %v4302
      %v4304 = vrot.slane %v3456, 1
      %v4305 = vrot.slane %v3452, 2
      %v4306 = vor.u32 %v4304, %v4305
      %v4307 = vsel %vm4275, %v4302, %v4306
      %v4308 = vrot.slane %v3464, 1
      %v4309 = vrot.slane %v3460, 2
      %v4310 = vor.u32 %v4308, %v4309
      %v4311 = vsel %vm4275, %v4306, %v4310
      %v4312 = vrot.slane %v3472, 1
      %v4313 = vrot.slane %v3468, 2
      %v4314 = vor.u32 %v4312, %v4313
      %v4315 = vsel %vm4275, %v4310, %v4314
      %v4316 = vrot.slane %v3480, 1
      %v4317 = vrot.slane %v3476, 2
      %v4318 = vor.u32 %v4316, %v4317
      %v4319 = vsel %vm4275, %v4314, %v4318
      %v4320 = vrot.slane %v3488, 1
      %v4321 = vrot.slane %v3484, 2
      %v4322 = vor.u32 %v4320, %v4321
      %v4323 = vsel %vm4275, %v4318, %v4322
      %v4324 = vrot.slane %v3496, 1
      %v4325 = vrot.slane %v3492, 2
      %v4326 = vor.u32 %v4324, %v4325
      %v4327 = vsel %vm4275, %v4322, %v4326
      %v4328 = vrot.slane %v3504, 1
      %v4329 = vrot.slane %v3500, 2
      %v4330 = vor.u32 %v4328, %v4329
      %v4331 = vsel %vm4275, %v4326, %v4330
      %v4332 = vrot.slane %v3512, 1
      %v4333 = vrot.slane %v3508, 2
      %v4334 = vor.u32 %v4332, %v4333
      %v4335 = vsel %vm4275, %v4330, %v4334
      %v4336 = vrot.slane %v3520, 1
      %v4337 = vrot.slane %v3516, 2
      %v4338 = vor.u32 %v4336, %v4337
      %v4339 = vsel %vm4275, %v4334, %v4338
      %v4340 = vrot.slane %v3528, 1
      %v4341 = vrot.slane %v3524, 2
      %v4342 = vor.u32 %v4340, %v4341
      %v4343 = vsel %vm4275, %v4338, %v4342
      %v4344 = vrot.slane %v3536, 1
      %v4345 = vrot.slane %v3532, 2
      %v4346 = vor.u32 %v4344, %v4345
      %v4347 = vsel %vm4275, %v4342, %v4346
      %v4348 = vrot.slane %v3544, 1
      %v4349 = vrot.slane %v3540, 2
      %v4350 = vor.u32 %v4348, %v4349
      %v4351 = vsel %vm4275, %v4346, %v4350
      %v4352 = vrot.slane %v3552, 1
      %v4353 = vrot.slane %v3548, 2
      %v4354 = vor.u32 %v4352, %v4353
      %v4355 = vsel %vm4275, %v4350, %v4354
      %v4356 = vrot.slane %v3560, 1
      %v4357 = vrot.slane %v3556, 2
      %v4358 = vor.u32 %v4356, %v4357
      %v4359 = vsel %vm4275, %v4354, %v4358
      %v4361 = vshrl.u32 %v4274, 16
      %v4363 = vrot.slane %v4361, 1
      %v4364 = vshll.u32 %v4274, 16
      %v4366 = vrot.slane %v4364, 2
      %v4367 = vor.u32 %v4363, %v4366
      %v4368 = vsel %vm4275, %v4358, %v4367
      %v4406 = vunpack.c.l.b16 %v4256
      %v4407 = vunpack.c.l.b16 %v4257
      %v4408 = vunpack.c.l.b16 %v4258
      %v4409 = vunpack.c.l.b16 %v4259
      %v4410 = vunpack.c.l.b16 %v4260
      %v4411 = vunpack.c.l.b16 %v4261
      %v4412 = vunpack.c.l.b16 %v4262
      %v4413 = vunpack.c.l.b16 %v4263
      %v4414 = vunpack.c.l.b16 %v4264
      %v4415 = vunpack.c.l.b16 %v4265
      %v4416 = vunpack.c.l.b16 %v4266
      %v4417 = vunpack.c.l.b16 %v4267
      %v4418 = vunpack.c.l.b16 %v4268
      %v4419 = vunpack.c.l.b16 %v4269
      %v4420 = vunpack.c.l.b16 %v4270
      %v4421 = vunpack.c.l.b16 %v4271
      %v4422 = vpack.c.b16 %v4407, %v4406
      %v4423 = vpack.c.b16 %v4409, %v4408
      %v4424 = vpack.c.b16 %v4411, %v4410
      %v4425 = vpack.c.b16 %v4413, %v4412
      %v4426 = vpack.c.b16 %v4415, %v4414
      %v4427 = vpack.c.b16 %v4417, %v4416
      %v4428 = vpack.c.b16 %v4419, %v4418
      %v4429 = vpack.c.b16 %v4421, %v4420
      %4438 = vmatprep.subr.bf16.mxu0 0
      %4439 = vmatpush1.bf16.msra.mxu0 %v4429
      %4440 = vmatprep.subr.bf16.mxu0 0
      %4441 = vmatpush1.bf16.msra.mxu0 %v4428
      %4442 = vmatprep.subr.bf16.mxu0 0
      %4443 = vmatpush1.bf16.msra.mxu0 %v4427
      %4444 = vmatprep.subr.bf16.mxu0 0
      %4445 = vmatpush1.bf16.msra.mxu0 %v4426
      %4446 = vmatprep.subr.bf16.mxu0 0
      %4447 = vmatpush1.bf16.msra.mxu0 %v4425
      %4448 = vmatprep.subr.bf16.mxu0 0
      %4449 = vmatpush1.bf16.msra.mxu0 %v4424
      %4450 = vmatprep.subr.bf16.mxu0 0
      %4451 = vmatpush1.bf16.msra.mxu0 %v4423
      %4452 = vmatprep.subr.bf16.mxu0 0
      %4453 = vmatpush1.bf16.msra.mxu0 %v4422
      %4454 = vmatprep.subr.bf16.mxu0 0
      %4455 = vmatpush2.bf16.msra.mxu0 0
      %4456 = vmatprep.subr.bf16.mxu0 0
      %4457 = vmatpush2.bf16.msra.mxu0 0
      %4458 = vmatprep.subr.bf16.mxu0 0
      %4459 = vmatpush2.bf16.msra.mxu0 0
      %4460 = vmatprep.subr.bf16.mxu0 0
      %4461 = vmatpush2.bf16.msra.mxu0 0
      %4462 = vmatprep.subr.bf16.mxu0 0
      %4463 = vmatpush2.bf16.msra.mxu0 0
      %4464 = vmatprep.subr.bf16.mxu0 0
      %4465 = vmatpush2.bf16.msra.mxu0 0
      %4466 = vmatprep.subr.bf16.mxu0 0
      %4467 = vmatpush2.bf16.msra.mxu0 0
      %4468 = vmatprep.subr.bf16.mxu0 0
      %4469 = vmatpush2.bf16.msra.mxu0 0
      %4470 = vmatprep.mubr.bf16.mxu0 0
      %4471 = vmatmul.mubr.bf16.gmra.mxu0 %v4287
      %v4472 = vpop.f32.mrf.mxu0
      %v4473 = vadd.f32 0.0, %v4472
      %v4474 = vpop.f32.mrf.mxu0
      %v4475 = vpop.f32.mrf.mxu0
      %v4476 = vadd.f32 0.0, %v4475
      %v4477 = vpop.f32.mrf.mxu0
      %4478 = vmatprep.mubr.bf16.mxu0 0
      %4479 = vmatmul.mubr.bf16.gmra.mxu0 %v4291
      %v4480 = vpop.f32.mrf.mxu0
      %v4481 = vadd.f32 0.0, %v4480
      %v4482 = vpop.f32.mrf.mxu0
      %v4483 = vpop.f32.mrf.mxu0
      %v4484 = vadd.f32 0.0, %v4483
      %v4485 = vpop.f32.mrf.mxu0
      %4486 = vmatprep.mubr.bf16.mxu0 0
      %4487 = vmatmul.mubr.bf16.gmra.mxu0 %v4295
      %v4488 = vpop.f32.mrf.mxu0
      %v4489 = vadd.f32 0.0, %v4488
      %v4490 = vpop.f32.mrf.mxu0
      %v4491 = vpop.f32.mrf.mxu0
      %v4492 = vadd.f32 0.0, %v4491
      %v4493 = vpop.f32.mrf.mxu0
      %4494 = vmatprep.mubr.bf16.mxu0 0
      %4495 = vmatmul.mubr.bf16.gmra.mxu0 %v4299
      %v4496 = vpop.f32.mrf.mxu0
      %v4497 = vadd.f32 0.0, %v4496
      %v4498 = vpop.f32.mrf.mxu0
      %v4499 = vpop.f32.mrf.mxu0
      %v4500 = vadd.f32 0.0, %v4499
      %v4501 = vpop.f32.mrf.mxu0
      %4502 = vmatprep.mubr.bf16.mxu0 0
      %4503 = vmatmul.mubr.bf16.gmra.mxu0 %v4303
      %v4504 = vpop.f32.mrf.mxu0
      %v4505 = vadd.f32 0.0, %v4504
      %v4506 = vpop.f32.mrf.mxu0
      %v4507 = vpop.f32.mrf.mxu0
      %v4508 = vadd.f32 0.0, %v4507
      %v4509 = vpop.f32.mrf.mxu0
      %4510 = vmatprep.mubr.bf16.mxu0 0
      %4511 = vmatmul.mubr.bf16.gmra.mxu0 %v4307
      %v4512 = vpop.f32.mrf.mxu0
      %v4513 = vadd.f32 0.0, %v4512
      %v4514 = vpop.f32.mrf.mxu0
      %v4515 = vpop.f32.mrf.mxu0
      %v4516 = vadd.f32 0.0, %v4515
      %v4517 = vpop.f32.mrf.mxu0
      %4518 = vmatprep.mubr.bf16.mxu0 0
      %4519 = vmatmul.mubr.bf16.gmra.mxu0 %v4311
      %v4520 = vpop.f32.mrf.mxu0
      %v4521 = vadd.f32 0.0, %v4520
      %v4522 = vpop.f32.mrf.mxu0
      %v4523 = vpop.f32.mrf.mxu0
      %v4524 = vadd.f32 0.0, %v4523
      %v4525 = vpop.f32.mrf.mxu0
      %4526 = vmatprep.mubr.bf16.mxu0 0
      %4527 = vmatmul.mubr.bf16.gmra.mxu0 %v4315
      %v4528 = vpop.f32.mrf.mxu0
      %v4529 = vadd.f32 0.0, %v4528
      %v4530 = vpop.f32.mrf.mxu0
      %v4531 = vpop.f32.mrf.mxu0
      %v4532 = vadd.f32 0.0, %v4531
      %v4533 = vpop.f32.mrf.mxu0
      %4534 = vmatprep.mubr.bf16.mxu0 0
      %4535 = vmatmul.mubr.bf16.gmra.mxu0 %v4319
      %v4536 = vpop.f32.mrf.mxu0
      %v4537 = vadd.f32 0.0, %v4536
      %v4538 = vpop.f32.mrf.mxu0
      %v4539 = vpop.f32.mrf.mxu0
      %v4540 = vadd.f32 0.0, %v4539
      %v4541 = vpop.f32.mrf.mxu0
      %4542 = vmatprep.mubr.bf16.mxu0 0
      %4543 = vmatmul.mubr.bf16.gmra.mxu0 %v4323
      %v4544 = vpop.f32.mrf.mxu0
      %v4545 = vadd.f32 0.0, %v4544
      %v4546 = vpop.f32.mrf.mxu0
      %v4547 = vpop.f32.mrf.mxu0
      %v4548 = vadd.f32 0.0, %v4547
      %v4549 = vpop.f32.mrf.mxu0
      %4550 = vmatprep.mubr.bf16.mxu0 0
      %4551 = vmatmul.mubr.bf16.gmra.mxu0 %v4327
      %v4552 = vpop.f32.mrf.mxu0
      %v4553 = vadd.f32 0.0, %v4552
      %v4554 = vpop.f32.mrf.mxu0
      %v4555 = vpop.f32.mrf.mxu0
      %v4556 = vadd.f32 0.0, %v4555
      %v4557 = vpop.f32.mrf.mxu0
      %4558 = vmatprep.mubr.bf16.mxu0 0
      %4559 = vmatmul.mubr.bf16.gmra.mxu0 %v4331
      %v4560 = vpop.f32.mrf.mxu0
      %v4561 = vadd.f32 0.0, %v4560
      %v4562 = vpop.f32.mrf.mxu0
      %v4563 = vpop.f32.mrf.mxu0
      %v4564 = vadd.f32 0.0, %v4563
      %v4565 = vpop.f32.mrf.mxu0
      %4566 = vmatprep.mubr.bf16.mxu0 0
      %4567 = vmatmul.mubr.bf16.gmra.mxu0 %v4335
      %v4568 = vpop.f32.mrf.mxu0
      %v4569 = vadd.f32 0.0, %v4568
      %v4570 = vpop.f32.mrf.mxu0
      %v4571 = vpop.f32.mrf.mxu0
      %v4572 = vadd.f32 0.0, %v4571
      %v4573 = vpop.f32.mrf.mxu0
      %4574 = vmatprep.mubr.bf16.mxu0 0
      %4575 = vmatmul.mubr.bf16.gmra.mxu0 %v4339
      %v4576 = vpop.f32.mrf.mxu0
      %v4577 = vadd.f32 0.0, %v4576
      %v4578 = vpop.f32.mrf.mxu0
      %v4579 = vpop.f32.mrf.mxu0
      %v4580 = vadd.f32 0.0, %v4579
      %v4581 = vpop.f32.mrf.mxu0
      %4582 = vmatprep.mubr.bf16.mxu0 0
      %4583 = vmatmul.mubr.bf16.gmra.mxu0 %v4343
      %v4584 = vpop.f32.mrf.mxu0
      %v4585 = vadd.f32 0.0, %v4584
      %v4586 = vpop.f32.mrf.mxu0
      %v4587 = vpop.f32.mrf.mxu0
      %v4588 = vadd.f32 0.0, %v4587
      %v4589 = vpop.f32.mrf.mxu0
      %4590 = vmatprep.mubr.bf16.mxu0 0
      %4591 = vmatmul.mubr.bf16.gmra.mxu0 %v4347
      %v4592 = vpop.f32.mrf.mxu0
      %v4593 = vadd.f32 0.0, %v4592
      %v4594 = vpop.f32.mrf.mxu0
      %v4595 = vpop.f32.mrf.mxu0
      %v4596 = vadd.f32 0.0, %v4595
      %v4597 = vpop.f32.mrf.mxu0
      %4598 = vmatprep.mubr.bf16.mxu0 0
      %4599 = vmatmul.mubr.bf16.gmra.mxu0 %v4351
      %v4600 = vpop.f32.mrf.mxu0
      %v4601 = vadd.f32 0.0, %v4600
      %v4602 = vpop.f32.mrf.mxu0
      %v4603 = vpop.f32.mrf.mxu0
      %v4604 = vadd.f32 0.0, %v4603
      %v4605 = vpop.f32.mrf.mxu0
      %4606 = vmatprep.mubr.bf16.mxu0 0
      %4607 = vmatmul.mubr.bf16.gmra.mxu0 %v4355
      %v4608 = vpop.f32.mrf.mxu0
      %v4609 = vadd.f32 0.0, %v4608
      %v4610 = vpop.f32.mrf.mxu0
      %v4611 = vpop.f32.mrf.mxu0
      %v4612 = vadd.f32 0.0, %v4611
      %v4613 = vpop.f32.mrf.mxu0
      %4614 = vmatprep.mubr.bf16.mxu0 0
      %4615 = vmatmul.mubr.bf16.gmra.mxu0 %v4359
      %v4616 = vpop.f32.mrf.mxu0
      %v4617 = vadd.f32 0.0, %v4616
      %v4618 = vpop.f32.mrf.mxu0
      %v4619 = vpop.f32.mrf.mxu0
      %v4620 = vadd.f32 0.0, %v4619
      %v4621 = vpop.f32.mrf.mxu0
      %4622 = vmatprep.mubr.bf16.mxu0 0
      %4623 = vmatmul.mubr.bf16.gmra.mxu0 %v4368
      %v4624 = vpop.f32.mrf.mxu0
      %v4625 = vadd.f32 0.0, %v4624
      %v4626 = vpop.f32.mrf.mxu0
      %v4627 = vpop.f32.mrf.mxu0
      %v4628 = vadd.f32 0.0, %v4627
      %v4629 = vpop.f32.mrf.mxu0
      %4630 = vmatprep.mubr.bf16.mxu0 0
      %4631 = vmatmul.mubr.bf16.gmra.mxu0 %v4367
      %v4632 = vpop.f32.mrf.mxu0
      %v4633 = vadd.f32 0.0, %v4632
      %v4634 = vpop.f32.mrf.mxu0
      %v4635 = vpop.f32.mrf.mxu0
      %v4636 = vpop.f32.mrf.mxu0
      %4637 = vdwg.mxu0
      %v4638 = vadd.f32 %v4213, %v4473
      %v4639 = vadd.f32 %v4214, %v4476
      %v4640 = vadd.f32 %v4215, %v4481
      %v4641 = vadd.f32 %v4216, %v4484
      %v4642 = vadd.f32 %v4217, %v4489
      %v4643 = vadd.f32 %v4218, %v4492
      %v4644 = vadd.f32 %v4219, %v4497
      %v4645 = vadd.f32 %v4220, %v4500
      %v4646 = vadd.f32 %v4221, %v4505
      %v4647 = vadd.f32 %v4222, %v4508
      %v4648 = vadd.f32 %v4223, %v4513
      %v4649 = vadd.f32 %v4224, %v4516
      %v4650 = vadd.f32 %v4225, %v4521
      %v4651 = vadd.f32 %v4226, %v4524
      %v4652 = vadd.f32 %v4227, %v4529
      %v4653 = vadd.f32 %v4228, %v4532
      %v4654 = vadd.f32 %v4229, %v4537
      %v4655 = vadd.f32 %v4230, %v4540
      %v4656 = vadd.f32 %v4231, %v4545
      %v4657 = vadd.f32 %v4232, %v4548
      %v4658 = vadd.f32 %v4233, %v4553
      %v4659 = vadd.f32 %v4234, %v4556
      %v4660 = vadd.f32 %v4235, %v4561
      %v4661 = vadd.f32 %v4236, %v4564
      %v4662 = vadd.f32 %v4237, %v4569
      %v4663 = vadd.f32 %v4238, %v4572
      %v4664 = vadd.f32 %v4239, %v4577
      %v4665 = vadd.f32 %v4240, %v4580
      %v4666 = vadd.f32 %v4241, %v4585
      %v4667 = vadd.f32 %v4242, %v4588
      %v4668 = vadd.f32 %v4243, %v4593
      %v4669 = vadd.f32 %v4244, %v4596
      %v4670 = vadd.f32 %v4245, %v4601
      %v4671 = vadd.f32 %v4246, %v4604
      %v4672 = vadd.f32 %v4247, %v4609
      %v4673 = vadd.f32 %v4248, %v4612
      %v4674 = vadd.f32 %v4249, %v4617
      %v4675 = vadd.f32 %v4250, %v4620
      %v4676 = vadd.f32 %v4251, %v4625
      %v4677 = vadd.f32 %v4252, %v4628
      %v4678 = vadd.f32 %v4253, %v4633
      %v4679 = vld [vmem:[%s1] sm:$0xff]
      %v4680 = vld [vmem:[%s1 + $0x8] sm:$0xff]
      %v4681 = vld [vmem:[%s1 + $0x10] sm:$0xff]
      %v4682 = vld [vmem:[%s1 + $0x18] sm:$0xff]
      %v4683 = vld [vmem:[%s1 + $0x20] sm:$0xff]
      %v4684 = vld [vmem:[%s1 + $0x28] sm:$0xff]
      %v4685 = vld [vmem:[%s1 + $0x30] sm:$0xff]
      %v4686 = vld [vmem:[%s1 + $0x38] sm:$0xff]
      %v4687 = vld [vmem:[%s1 + $0x40] sm:$0xff]
      %v4688 = vld [vmem:[%s1 + $0x48] sm:$0xff]
      %v4689 = vld [vmem:[%s1 + $0x50] sm:$0xff]
      %v4690 = vld [vmem:[%s1 + $0x58] sm:$0xff]
      %v4691 = vld [vmem:[%s1 + $0x60] sm:$0xff]
      %v4692 = vld [vmem:[%s1 + $0x68] sm:$0xff]
      %v4693 = vld [vmem:[%s1 + $0x70] sm:$0xff]
      %v4694 = vld [vmem:[%s1 + $0x78] sm:$0xff]
      %v4695 = vld [vmem:[%s1 + $0x80] sm:$0xff]
      %v4696 = vld [vmem:[%s1 + $0x88] sm:$0xff]
      %v4697 = vld [vmem:[%s1 + $0x90] sm:$0xff]
      %v4698 = vld [vmem:[%s1 + $0x98] sm:$0xff]
      %v4699 = vld [vmem:[%s1 + $0xa0] sm:$0xff]
      %v4700 = vld [vmem:[%s1 + $0xa8] sm:$0xff]
      %v4701 = vld [vmem:[%s1 + $0xb0] sm:$0xff]
      %v4702 = vld [vmem:[%s1 + $0xb8] sm:$0xff]
      %v4703 = vld [vmem:[%s1 + $0xc0] sm:$0xff]
      %v4704 = vld [vmem:[%s1 + $0xc8] sm:$0xff]
      %v4705 = vld [vmem:[%s1 + $0xd0] sm:$0xff]
      %v4706 = vld [vmem:[%s1 + $0xd8] sm:$0xff]
      %v4707 = vld [vmem:[%s1 + $0xe0] sm:$0xff]
      %v4708 = vld [vmem:[%s1 + $0xe8] sm:$0xff]
      %v4709 = vld [vmem:[%s1 + $0xf0] sm:$0xff]
      %v4710 = vld [vmem:[%s1 + $0xf8] sm:$0xff]
      %v4711 = vld [vmem:[%s1 + $0x100] sm:$0xff]
      %v4712 = vld [vmem:[%s1 + $0x108] sm:$0xff]
      %v4713 = vld [vmem:[%s1 + $0x110] sm:$0xff]
      %v4714 = vld [vmem:[%s1 + $0x118] sm:$0xff]
      %v4715 = vld [vmem:[%s1 + $0x120] sm:$0xff]
      %v4716 = vld [vmem:[%s1 + $0x128] sm:$0xff]
      %v4717 = vld [vmem:[%s1 + $0x130] sm:$0xff]
      %v4718 = vld [vmem:[%s1 + $0x138] sm:$0xff]
      %v4719 = vld [vmem:[%s1 + $0x140] sm:$0xff]
      %4721 = vset.pattern.permute.xlu0 0
      %4722 = vperm.xlu0 %4721, %v4679
      %v4723 = vpop.permute.xlu0 %4722
      %4726 = vset.pattern.permute.xlu0 0
      %4727 = vperm.xlu0 %4726, %v4680
      %v4728 = vpop.permute.xlu0 %4727
      %4731 = vset.pattern.permute.xlu0 0
      %4732 = vperm.xlu0 %4731, %v4681
      %v4733 = vpop.permute.xlu0 %4732
      %4736 = vset.pattern.permute.xlu0 0
      %4737 = vperm.xlu0 %4736, %v4682
      %v4738 = vpop.permute.xlu0 %4737
      %4741 = vset.pattern.permute.xlu0 0
      %4742 = vperm.xlu0 %4741, %v4683
      %v4743 = vpop.permute.xlu0 %4742
      %4746 = vset.pattern.permute.xlu0 0
      %4747 = vperm.xlu0 %4746, %v4684
      %v4748 = vpop.permute.xlu0 %4747
      %4751 = vset.pattern.permute.xlu0 0
      %4752 = vperm.xlu0 %4751, %v4685
      %v4753 = vpop.permute.xlu0 %4752
      %4756 = vset.pattern.permute.xlu0 0
      %4757 = vperm.xlu0 %4756, %v4686
      %v4758 = vpop.permute.xlu0 %4757
      %4761 = vset.pattern.permute.xlu0 0
      %4762 = vperm.xlu0 %4761, %v4687
      %v4763 = vpop.permute.xlu0 %4762
      %4766 = vset.pattern.permute.xlu0 0
      %4767 = vperm.xlu0 %4766, %v4688
      %v4768 = vpop.permute.xlu0 %4767
      %4771 = vset.pattern.permute.xlu0 0
      %4772 = vperm.xlu0 %4771, %v4689
      %v4773 = vpop.permute.xlu0 %4772
      %4776 = vset.pattern.permute.xlu0 0
      %4777 = vperm.xlu0 %4776, %v4690
      %v4778 = vpop.permute.xlu0 %4777
      %4781 = vset.pattern.permute.xlu0 0
      %4782 = vperm.xlu0 %4781, %v4691
      %v4783 = vpop.permute.xlu0 %4782
      %4786 = vset.pattern.permute.xlu0 0
      %4787 = vperm.xlu0 %4786, %v4692
      %v4788 = vpop.permute.xlu0 %4787
      %4791 = vset.pattern.permute.xlu0 0
      %4792 = vperm.xlu0 %4791, %v4693
      %v4793 = vpop.permute.xlu0 %4792
      %4796 = vset.pattern.permute.xlu0 0
      %4797 = vperm.xlu0 %4796, %v4694
      %v4798 = vpop.permute.xlu0 %4797
      %4801 = vset.pattern.permute.xlu0 0
      %4802 = vperm.xlu0 %4801, %v4695
      %v4803 = vpop.permute.xlu0 %4802
      %4806 = vset.pattern.permute.xlu0 0
      %4807 = vperm.xlu0 %4806, %v4696
      %v4808 = vpop.permute.xlu0 %4807
      %4811 = vset.pattern.permute.xlu0 0
      %4812 = vperm.xlu0 %4811, %v4697
      %v4813 = vpop.permute.xlu0 %4812
      %4816 = vset.pattern.permute.xlu0 0
      %4817 = vperm.xlu0 %4816, %v4698
      %v4818 = vpop.permute.xlu0 %4817
      %4821 = vset.pattern.permute.xlu0 0
      %4822 = vperm.xlu0 %4821, %v4699
      %v4823 = vpop.permute.xlu0 %4822
      %4826 = vset.pattern.permute.xlu0 0
      %4827 = vperm.xlu0 %4826, %v4700
      %v4828 = vpop.permute.xlu0 %4827
      %4831 = vset.pattern.permute.xlu0 0
      %4832 = vperm.xlu0 %4831, %v4701
      %v4833 = vpop.permute.xlu0 %4832
      %4836 = vset.pattern.permute.xlu0 0
      %4837 = vperm.xlu0 %4836, %v4702
      %v4838 = vpop.permute.xlu0 %4837
      %4841 = vset.pattern.permute.xlu0 0
      %4842 = vperm.xlu0 %4841, %v4703
      %v4843 = vpop.permute.xlu0 %4842
      %4846 = vset.pattern.permute.xlu0 0
      %4847 = vperm.xlu0 %4846, %v4704
      %v4848 = vpop.permute.xlu0 %4847
      %4851 = vset.pattern.permute.xlu0 0
      %4852 = vperm.xlu0 %4851, %v4705
      %v4853 = vpop.permute.xlu0 %4852
      %4856 = vset.pattern.permute.xlu0 0
      %4857 = vperm.xlu0 %4856, %v4706
      %v4858 = vpop.permute.xlu0 %4857
      %4861 = vset.pattern.permute.xlu0 0
      %4862 = vperm.xlu0 %4861, %v4707
      %v4863 = vpop.permute.xlu0 %4862
      %4866 = vset.pattern.permute.xlu0 0
      %4867 = vperm.xlu0 %4866, %v4708
      %v4868 = vpop.permute.xlu0 %4867
      %4871 = vset.pattern.permute.xlu0 0
      %4872 = vperm.xlu0 %4871, %v4709
      %v4873 = vpop.permute.xlu0 %4872
      %4876 = vset.pattern.permute.xlu0 0
      %4877 = vperm.xlu0 %4876, %v4710
      %v4878 = vpop.permute.xlu0 %4877
      %4881 = vset.pattern.permute.xlu0 0
      %4882 = vperm.xlu0 %4881, %v4711
      %v4883 = vpop.permute.xlu0 %4882
      %4886 = vset.pattern.permute.xlu0 0
      %4887 = vperm.xlu0 %4886, %v4712
      %v4888 = vpop.permute.xlu0 %4887
      %4891 = vset.pattern.permute.xlu0 0
      %4892 = vperm.xlu0 %4891, %v4713
      %v4893 = vpop.permute.xlu0 %4892
      %4896 = vset.pattern.permute.xlu0 0
      %4897 = vperm.xlu0 %4896, %v4714
      %v4898 = vpop.permute.xlu0 %4897
      %4901 = vset.pattern.permute.xlu0 0
      %4902 = vperm.xlu0 %4901, %v4715
      %v4903 = vpop.permute.xlu0 %4902
      %4906 = vset.pattern.permute.xlu0 0
      %4907 = vperm.xlu0 %4906, %v4716
      %v4908 = vpop.permute.xlu0 %4907
      %4911 = vset.pattern.permute.xlu0 0
      %4912 = vperm.xlu0 %4911, %v4717
      %v4913 = vpop.permute.xlu0 %4912
      %4916 = vset.pattern.permute.xlu0 0
      %4917 = vperm.xlu0 %4916, %v4718
      %v4918 = vpop.permute.xlu0 %4917
      %4921 = vset.pattern.permute.xlu0 0
      %4922 = vperm.xlu0 %4921, %v4719
      %v4923 = vpop.permute.xlu0 %4922
      %v4925 = vmul.f32 %v4638, %v4723
      %v4926 = vmul.f32 %v4639, %v4728
      %v4927 = vmul.f32 %v4640, %v4733
      %v4928 = vmul.f32 %v4641, %v4738
      %v4929 = vmul.f32 %v4642, %v4743
      %v4930 = vmul.f32 %v4643, %v4748
      %v4931 = vmul.f32 %v4644, %v4753
      %v4932 = vmul.f32 %v4645, %v4758
      %v4933 = vmul.f32 %v4646, %v4763
      %v4934 = vmul.f32 %v4647, %v4768
      %v4935 = vmul.f32 %v4648, %v4773
      %v4936 = vmul.f32 %v4649, %v4778
      %v4937 = vmul.f32 %v4650, %v4783
      %v4938 = vmul.f32 %v4651, %v4788
      %v4939 = vmul.f32 %v4652, %v4793
      %v4940 = vmul.f32 %v4653, %v4798
      %v4941 = vmul.f32 %v4654, %v4803
      %v4942 = vmul.f32 %v4655, %v4808
      %v4943 = vmul.f32 %v4656, %v4813
      %v4944 = vmul.f32 %v4657, %v4818
      %v4945 = vmul.f32 %v4658, %v4823
      %v4946 = vmul.f32 %v4659, %v4828
      %v4947 = vmul.f32 %v4660, %v4833
      %v4948 = vmul.f32 %v4661, %v4838
      %v4949 = vmul.f32 %v4662, %v4843
      %v4950 = vmul.f32 %v4663, %v4848
      %v4951 = vmul.f32 %v4664, %v4853
      %v4952 = vmul.f32 %v4665, %v4858
      %v4953 = vmul.f32 %v4666, %v4863
      %v4954 = vmul.f32 %v4667, %v4868
      %v4955 = vmul.f32 %v4668, %v4873
      %v4956 = vmul.f32 %v4669, %v4878
      %v4957 = vmul.f32 %v4670, %v4883
      %v4958 = vmul.f32 %v4671, %v4888
      %v4959 = vmul.f32 %v4672, %v4893
      %v4960 = vmul.f32 %v4673, %v4898
      %v4961 = vmul.f32 %v4674, %v4903
      %v4962 = vmul.f32 %v4675, %v4908
      %v4963 = vmul.f32 %v4676, %v4913
      %v4964 = vmul.f32 %v4677, %v4918
      %v4965 = vmul.f32 %v4678, %v4923
      %v4966 = vpack.c.bf16 %v4926, %v4925
      %v4967 = vpack.c.bf16 %v4928, %v4927
      %v4968 = vpack.c.bf16 %v4930, %v4929
      %v4969 = vpack.c.bf16 %v4932, %v4931
      %v4970 = vpack.c.bf16 %v4934, %v4933
      %v4971 = vpack.c.bf16 %v4936, %v4935
      %v4972 = vpack.c.bf16 %v4938, %v4937
      %v4973 = vpack.c.bf16 %v4940, %v4939
      %v4974 = vpack.c.bf16 %v4942, %v4941
      %v4975 = vpack.c.bf16 %v4944, %v4943
      %v4976 = vpack.c.bf16 %v4946, %v4945
      %v4977 = vpack.c.bf16 %v4948, %v4947
      %v4978 = vpack.c.bf16 %v4950, %v4949
      %v4979 = vpack.c.bf16 %v4952, %v4951
      %v4980 = vpack.c.bf16 %v4954, %v4953
      %v4981 = vpack.c.bf16 %v4956, %v4955
      %v4982 = vpack.c.bf16 %v4958, %v4957
      %v4983 = vpack.c.bf16 %v4960, %v4959
      %v4984 = vpack.c.bf16 %v4962, %v4961
      %v4985 = vpack.c.bf16 %v4964, %v4963
      %v4986 = vpack.c.bf16 %v4965, %v4965
      %v5008 = vunpack.c.l.b16 %v4966
      %v5009 = vunpack.c.h.b16 %v4966
      %v5010 = vunpack.c.l.b16 %v4967
      %v5011 = vunpack.c.h.b16 %v4967
      %v5012 = vunpack.c.l.b16 %v4968
      %v5013 = vunpack.c.h.b16 %v4968
      %v5014 = vunpack.c.l.b16 %v4969
      %v5015 = vunpack.c.h.b16 %v4969
      %v5016 = vunpack.c.l.b16 %v4970
      %v5017 = vunpack.c.h.b16 %v4970
      %v5018 = vunpack.c.l.b16 %v4971
      %v5019 = vunpack.c.h.b16 %v4971
      %v5020 = vunpack.c.l.b16 %v4972
      %v5021 = vunpack.c.h.b16 %v4972
      %v5022 = vunpack.c.l.b16 %v4973
      %v5023 = vunpack.c.h.b16 %v4973
      %v5024 = vunpack.c.l.b16 %v4974
      %v5025 = vunpack.c.h.b16 %v4974
      %v5026 = vunpack.c.l.b16 %v4975
      %v5027 = vunpack.c.h.b16 %v4975
      %v5028 = vunpack.c.l.b16 %v4976
      %v5029 = vunpack.c.h.b16 %v4976
      %v5030 = vunpack.c.l.b16 %v4977
      %v5031 = vunpack.c.h.b16 %v4977
      %v5032 = vunpack.c.l.b16 %v4978
      %v5033 = vunpack.c.h.b16 %v4978
      %v5034 = vunpack.c.l.b16 %v4979
      %v5035 = vunpack.c.h.b16 %v4979
      %v5036 = vunpack.c.l.b16 %v4980
      %v5037 = vunpack.c.h.b16 %v4980
      %v5038 = vunpack.c.l.b16 %v4981
      %v5039 = vunpack.c.h.b16 %v4981
      %v5040 = vunpack.c.l.b16 %v4982
      %v5041 = vunpack.c.h.b16 %v4982
      %v5042 = vunpack.c.l.b16 %v4983
      %v5043 = vunpack.c.h.b16 %v4983
      %v5044 = vunpack.c.l.b16 %v4984
      %v5045 = vunpack.c.h.b16 %v4984
      %v5046 = vunpack.c.l.b16 %v4985
      %v5047 = vunpack.c.h.b16 %v4985
      %v5048 = vunpack.c.l.b16 %v4986
      %v5049 = vpack.c.b16 %v5008, %v5008
      %v5050 = vpack.c.b16 %v5009, %v5009
      %v5051 = vpack.c.b16 %v5010, %v5010
      %v5052 = vpack.c.b16 %v5011, %v5011
      %v5053 = vpack.c.b16 %v5012, %v5012
      %v5054 = vpack.c.b16 %v5013, %v5013
      %v5055 = vpack.c.b16 %v5014, %v5014
      %v5056 = vpack.c.b16 %v5015, %v5015
      %v5057 = vpack.c.b16 %v5016, %v5016
      %v5058 = vpack.c.b16 %v5017, %v5017
      %v5059 = vpack.c.b16 %v5018, %v5018
      %v5060 = vpack.c.b16 %v5019, %v5019
      %v5061 = vpack.c.b16 %v5020, %v5020
      %v5062 = vpack.c.b16 %v5021, %v5021
      %v5063 = vpack.c.b16 %v5022, %v5022
      %v5064 = vpack.c.b16 %v5023, %v5023
      %v5065 = vpack.c.b16 %v5024, %v5024
      %v5066 = vpack.c.b16 %v5025, %v5025
      %v5067 = vpack.c.b16 %v5026, %v5026
      %v5068 = vpack.c.b16 %v5027, %v5027
      %v5069 = vpack.c.b16 %v5028, %v5028
      %v5070 = vpack.c.b16 %v5029, %v5029
      %v5071 = vpack.c.b16 %v5030, %v5030
      %v5072 = vpack.c.b16 %v5031, %v5031
      %v5073 = vpack.c.b16 %v5032, %v5032
      %v5074 = vpack.c.b16 %v5033, %v5033
      %v5075 = vpack.c.b16 %v5034, %v5034
      %v5076 = vpack.c.b16 %v5035, %v5035
      %v5077 = vpack.c.b16 %v5036, %v5036
      %v5078 = vpack.c.b16 %v5037, %v5037
      %v5079 = vpack.c.b16 %v5038, %v5038
      %v5080 = vpack.c.b16 %v5039, %v5039
      %v5081 = vpack.c.b16 %v5040, %v5040
      %v5082 = vpack.c.b16 %v5041, %v5041
      %v5083 = vpack.c.b16 %v5042, %v5042
      %v5084 = vpack.c.b16 %v5043, %v5043
      %v5085 = vpack.c.b16 %v5044, %v5044
      %v5086 = vpack.c.b16 %v5045, %v5045
      %v5087 = vpack.c.b16 %v5046, %v5046
      %v5088 = vpack.c.b16 %v5047, %v5047
      %v5089 = vpack.c.b16 %v5048, %v5048
      %5131 = vst [vmem:[%s204] sm:$0xf] %v5049
      %5132 = vst [vmem:[%s204 + $0x4] sm:$0xf] %v5050
      %5133 = vst [vmem:[%s204 + $0x8] sm:$0xf] %v5051
      %5134 = vst [vmem:[%s204 + $0xc] sm:$0xf] %v5052
      %5135 = vst [vmem:[%s204 + $0x10] sm:$0xf] %v5053
      %5136 = vst [vmem:[%s204 + $0x14] sm:$0xf] %v5054
      %5137 = vst [vmem:[%s204 + $0x18] sm:$0xf] %v5055
      %5138 = vst [vmem:[%s204 + $0x1c] sm:$0xf] %v5056
      %5139 = vst [vmem:[%s204 + $0x20] sm:$0xf] %v5057
      %5140 = vst [vmem:[%s204 + $0x24] sm:$0xf] %v5058
      %5141 = vst [vmem:[%s204 + $0x28] sm:$0xf] %v5059
      %5142 = vst [vmem:[%s204 + $0x2c] sm:$0xf] %v5060
      %5143 = vst [vmem:[%s204 + $0x30] sm:$0xf] %v5061
      %5144 = vst [vmem:[%s204 + $0x34] sm:$0xf] %v5062
      %5145 = vst [vmem:[%s204 + $0x38] sm:$0xf] %v5063
      %5146 = vst [vmem:[%s204 + $0x3c] sm:$0xf] %v5064
      %5147 = vst [vmem:[%s204 + $0x40] sm:$0xf] %v5065
      %5148 = vst [vmem:[%s204 + $0x44] sm:$0xf] %v5066
      %5149 = vst [vmem:[%s204 + $0x48] sm:$0xf] %v5067
      %5150 = vst [vmem:[%s204 + $0x4c] sm:$0xf] %v5068
      %5151 = vst [vmem:[%s204 + $0x50] sm:$0xf] %v5069
      %5152 = vst [vmem:[%s204 + $0x54] sm:$0xf] %v5070
      %5153 = vst [vmem:[%s204 + $0x58] sm:$0xf] %v5071
      %5154 = vst [vmem:[%s204 + $0x5c] sm:$0xf] %v5072
      %5155 = vst [vmem:[%s204 + $0x60] sm:$0xf] %v5073
      %5156 = vst [vmem:[%s204 + $0x64] sm:$0xf] %v5074
      %5157 = vst [vmem:[%s204 + $0x68] sm:$0xf] %v5075
      %5158 = vst [vmem:[%s204 + $0x6c] sm:$0xf] %v5076
      %5159 = vst [vmem:[%s204 + $0x70] sm:$0xf] %v5077
      %5160 = vst [vmem:[%s204 + $0x74] sm:$0xf] %v5078
      %5161 = vst [vmem:[%s204 + $0x78] sm:$0xf] %v5079
      %5162 = vst [vmem:[%s204 + $0x7c] sm:$0xf] %v5080
      %5163 = vst [vmem:[%s204 + $0x80] sm:$0xf] %v5081
      %5164 = vst [vmem:[%s204 + $0x84] sm:$0xf] %v5082
      %5165 = vst [vmem:[%s204 + $0x88] sm:$0xf] %v5083
      %5166 = vst [vmem:[%s204 + $0x8c] sm:$0xf] %v5084
      %5167 = vst [vmem:[%s204 + $0x90] sm:$0xf] %v5085
      %5168 = vst [vmem:[%s204 + $0x94] sm:$0xf] %v5086
      %5169 = vst [vmem:[%s204 + $0x98] sm:$0xf] %v5087
      %5170 = vst [vmem:[%s204 + $0x9c] sm:$0xf] %v5088
      %5171 = vst [vmem:[%s204 + $0xa0] sm:$0xf] %v5089
      %v5172 = vadd.f32 %v4925, %v4926
      %v5173 = vadd.f32 %v5172, %v4927
      %v5174 = vadd.f32 %v5173, %v4928
      %v5175 = vadd.f32 %v5174, %v4929
      %v5176 = vadd.f32 %v5175, %v4930
      %v5177 = vadd.f32 %v5176, %v4931
      %v5178 = vadd.f32 %v5177, %v4932
      %v5179 = vadd.f32 %v5178, %v4933
      %v5180 = vadd.f32 %v5179, %v4934
      %v5181 = vadd.f32 %v5180, %v4935
      %v5182 = vadd.f32 %v5181, %v4936
      %v5183 = vadd.f32 %v5182, %v4937
      %v5184 = vadd.f32 %v5183, %v4938
      %v5185 = vadd.f32 %v5184, %v4939
      %v5186 = vadd.f32 %v5185, %v4940
      %v5187 = vadd.f32 %v5186, %v4941
      %v5188 = vadd.f32 %v5187, %v4942
      %v5189 = vadd.f32 %v5188, %v4943
      %v5190 = vadd.f32 %v5189, %v4944
      %v5191 = vadd.f32 %v5190, %v4945
      %v5192 = vadd.f32 %v5191, %v4946
      %v5193 = vadd.f32 %v5192, %v4947
      %v5194 = vadd.f32 %v5193, %v4948
      %v5195 = vadd.f32 %v5194, %v4949
      %v5196 = vadd.f32 %v5195, %v4950
      %v5197 = vadd.f32 %v5196, %v4951
      %v5198 = vadd.f32 %v5197, %v4952
      %v5199 = vadd.f32 %v5198, %v4953
      %v5200 = vadd.f32 %v5199, %v4954
      %v5201 = vadd.f32 %v5200, %v4955
      %v5202 = vadd.f32 %v5201, %v4956
      %v5203 = vadd.f32 %v5202, %v4957
      %v5204 = vadd.f32 %v5203, %v4958
      %v5205 = vadd.f32 %v5204, %v4959
      %v5206 = vadd.f32 %v5205, %v4960
      %v5207 = vadd.f32 %v5206, %v4961
      %v5208 = vadd.f32 %v5207, %v4962
      %v5209 = vadd.f32 %v5208, %v4963
      %v5210 = vadd.f32 %v5209, %v4964
      %v5211 = vadd.f32 %v5210, %v4965
      %v5212 = vrot.slane %v5211, 4
      %v5213 = vadd.f32 %v5211, %v5212
      %v5214 = vrot.slane %v5213, 2
      %v5215 = vadd.f32 %v5213, %v5214
      %v5216 = vrot.slane %v5215, 1
      %v5217 = vadd.f32 %v5215, %v5216
      %v5218 = vmul.f32 %v4925, %v4925
      %v5219 = vmul.f32 %v4926, %v4926
      %v5220 = vmul.f32 %v4927, %v4927
      %v5221 = vmul.f32 %v4928, %v4928
      %v5222 = vmul.f32 %v4929, %v4929
      %v5223 = vmul.f32 %v4930, %v4930
      %v5224 = vmul.f32 %v4931, %v4931
      %v5225 = vmul.f32 %v4932, %v4932
      %v5226 = vmul.f32 %v4933, %v4933
      %v5227 = vmul.f32 %v4934, %v4934
      %v5228 = vmul.f32 %v4935, %v4935
      %v5229 = vmul.f32 %v4936, %v4936
      %v5230 = vmul.f32 %v4937, %v4937
      %v5231 = vmul.f32 %v4938, %v4938
      %v5232 = vmul.f32 %v4939, %v4939
      %v5233 = vmul.f32 %v4940, %v4940
      %v5234 = vmul.f32 %v4941, %v4941
      %v5235 = vmul.f32 %v4942, %v4942
      %v5236 = vmul.f32 %v4943, %v4943
      %v5237 = vmul.f32 %v4944, %v4944
      %v5238 = vmul.f32 %v4945, %v4945
      %v5239 = vmul.f32 %v4946, %v4946
      %v5240 = vmul.f32 %v4947, %v4947
      %v5241 = vmul.f32 %v4948, %v4948
      %v5242 = vmul.f32 %v4949, %v4949
      %v5243 = vmul.f32 %v4950, %v4950
      %v5244 = vmul.f32 %v4951, %v4951
      %v5245 = vmul.f32 %v4952, %v4952
      %v5246 = vmul.f32 %v4953, %v4953
      %v5247 = vmul.f32 %v4954, %v4954
      %v5248 = vmul.f32 %v4955, %v4955
      %v5249 = vmul.f32 %v4956, %v4956
      %v5250 = vmul.f32 %v4957, %v4957
      %v5251 = vmul.f32 %v4958, %v4958
      %v5252 = vmul.f32 %v4959, %v4959
      %v5253 = vmul.f32 %v4960, %v4960
      %v5254 = vmul.f32 %v4961, %v4961
      %v5255 = vmul.f32 %v4962, %v4962
      %v5256 = vmul.f32 %v4963, %v4963
      %v5257 = vmul.f32 %v4964, %v4964
      %v5258 = vmul.f32 %v4965, %v4965
      %v5259 = vadd.f32 %v5218, %v5219
      %v5260 = vadd.f32 %v5259, %v5220
      %v5261 = vadd.f32 %v5260, %v5221
      %v5262 = vadd.f32 %v5261, %v5222
      %v5263 = vadd.f32 %v5262, %v5223
      %v5264 = vadd.f32 %v5263, %v5224
      %v5265 = vadd.f32 %v5264, %v5225
      %v5266 = vadd.f32 %v5265, %v5226
      %v5267 = vadd.f32 %v5266, %v5227
      %v5268 = vadd.f32 %v5267, %v5228
      %v5269 = vadd.f32 %v5268, %v5229
      %v5270 = vadd.f32 %v5269, %v5230
      %v5271 = vadd.f32 %v5270, %v5231
      %v5272 = vadd.f32 %v5271, %v5232
      %v5273 = vadd.f32 %v5272, %v5233
      %v5274 = vadd.f32 %v5273, %v5234
      %v5275 = vadd.f32 %v5274, %v5235
      %v5276 = vadd.f32 %v5275, %v5236
      %v5277 = vadd.f32 %v5276, %v5237
      %v5278 = vadd.f32 %v5277, %v5238
      %v5279 = vadd.f32 %v5278, %v5239
      %v5280 = vadd.f32 %v5279, %v5240
      %v5281 = vadd.f32 %v5280, %v5241
      %v5282 = vadd.f32 %v5281, %v5242
      %v5283 = vadd.f32 %v5282, %v5243
      %v5284 = vadd.f32 %v5283, %v5244
      %v5285 = vadd.f32 %v5284, %v5245
      %v5286 = vadd.f32 %v5285, %v5246
      %v5287 = vadd.f32 %v5286, %v5247
      %v5288 = vadd.f32 %v5287, %v5248
      %v5289 = vadd.f32 %v5288, %v5249
      %v5290 = vadd.f32 %v5289, %v5250
      %v5291 = vadd.f32 %v5290, %v5251
      %v5292 = vadd.f32 %v5291, %v5252
      %v5293 = vadd.f32 %v5292, %v5253
      %v5294 = vadd.f32 %v5293, %v5254
      %v5295 = vadd.f32 %v5294, %v5255
      %v5296 = vadd.f32 %v5295, %v5256
      %v5297 = vadd.f32 %v5296, %v5257
      %v5298 = vadd.f32 %v5297, %v5258
      %v5299 = vrot.slane %v5298, 4
      %v5300 = vadd.f32 %v5298, %v5299
      %v5301 = vrot.slane %v5300, 2
      %v5302 = vadd.f32 %v5300, %v5301
      %v5303 = vrot.slane %v5302, 1
      %v5304 = vadd.f32 %v5302, %v5303
      %vm5305 = vcmask 1040384
      %v5306 = vsel %vm5305, %v5217, %v5304
      %5307 = vst [vmem:[%s208] sm:$0x3] %v5306
      %p5308 = scmp.lt.s32.totalorder %s16, 1
      %s5309 = scalar_select %p5308, %s16, 1
      %s5310 = smul.addr %s5309, 41
      %s5311 = smul.addr %s5310, 4
      %s5312 = scalar_lea.vmem %s3, %s5311
      %p5313 = scmp.lt.s32.totalorder %s16, 1
      %s5314 = scalar_select %p5313, %s16, 1
      %s5315 = smul.addr %s5314, 2
      %s5316 = scalar_lea.vmem %s4, %s5315
      // Predicated region
      $region33: #{basic_block_forward.2} parent=31 // pred_check
        %p5317 = pneg %p102
      $region34: #{basic_block_forward.2} parent=31 // pred_check_branch
        %5319 = sbr.rel (%p5317) target = $region36
      $region35: #{basic_block_forward.2} parent=31 // pred_region
        _
      $region36: #{basic_block_forward.2} parent=31 // pred_fallthru
        _
      // Predicated region
      $region37: #{basic_block_forward.2} parent=31 // pred_check
        %p5320 = pneg %p128
      $region38: #{basic_block_forward.2} parent=31 // pred_check_branch
        %5322 = sbr.rel (%p5320) target = $region40
      $region39: #{basic_block_forward.2} parent=31 // pred_region
        _
      $region40: #{basic_block_forward.2} parent=31 // pred_fallthru
        _
    $region32: #{basic_block_forward.2} parent=5 // pred_fallthru
      _
    %p5323 = scmp.le.s32.totalorder 2, %s11
    // Predicated region
    $region41: #{basic_block_forward.2} parent=5 // pred_check
      %p5324 = pneg %p5323
    $region42: #{basic_block_forward.2} parent=5 // pred_check_branch
      %5326 = sbr.rel (%p5324) target = $region44
    $region43: #{basic_block_forward.2} parent=5 // pred_region
      %s5327 = ssub.s32 %s11, 2
      // Predicated region
      $region45: #{basic_block_forward.2} parent=43 // pred_check
        %p5328 = pneg %p108
      $region46: #{basic_block_forward.2} parent=43 // pred_check_branch
        %5330 = sbr.rel (%p5328) target = $region48
      $region47: #{basic_block_forward.2} parent=43 // pred_region
        %p5331 = scmp.lt.s32.totalorder %s17, 1
        %s5332 = scalar_select %p5331, %s17, 1
        %s5333 = smul.addr %s5332, 41
        %s5334 = smul.addr %s5333, 4
        %s5335 = scalar_lea.vmem %s3, %s5334
      $region48: #{basic_block_forward.2} parent=43 // pred_fallthru
        _
      // Predicated region
      $region49: #{basic_block_forward.2} parent=43 // pred_check
        %p5336 = pneg %p134
      $region50: #{basic_block_forward.2} parent=43 // pred_check_branch
        %5338 = sbr.rel (%p5336) target = $region52
      $region51: #{basic_block_forward.2} parent=43 // pred_region
        %p5339 = scmp.lt.s32.totalorder %s17, 1
        %s5340 = scalar_select %p5339, %s17, 1
        %s5341 = smul.addr %s5340, 2
        %s5342 = scalar_lea.vmem %s4, %s5341
      $region52: #{basic_block_forward.2} parent=43 // pred_fallthru
        _
    $region44: #{basic_block_forward.2} parent=5 // pred_fallthru
      _
  $region6: #{basic_block_forward.2} parent=0 // loop_footer
    %s15 = sadd.s32 1, %s11
  $region7: #{basic_block_forward.2} parent=0 // loop_footer_branch
    %10 = sbr.rel target = $region3
  $region8: #{basic_block_forward.2} parent=0 // loop_exit
    _

// kernel: basic_block_forward.3
$region0: #{basic_block_forward.3}
  #allocation0 [shape = 'u32[]', space=smem, size = 0x4, offset = 0x4, fixed_abs, tag = 'smem constant byte address 0x4 - core index']
  #allocation1 [shape = 'u32[144,128]{1,0:T(1,128)}', space=vmem, size = 0x12000, scoped, tag = 'internal scratch']
  #allocation2 [shape = 'bf16[376,128]{1,0:T(8,128)(2,1)}', space=vmem, size = 0x17800, scoped, tag = 'scratch operand']
  %s0 = inlined_call_operand.vmem [shape: bf16[2,328,128], index: 0, kind: input, shape index: {}]
  %s1 = inlined_call_operand.vmem [shape: f32[328,1], index: 1, kind: input, shape index: {}]
  %s2 = inlined_call_operand.vmem [shape: f32[1,128], index: 2, kind: input, shape index: {}]
  %s3 = inlined_call_operand.vmem [shape: f32[1,128], index: 3, kind: input, shape index: {}]
  %s4 = inlined_call_operand.vmem [shape: bf16[3,3,128,128], index: 4, kind: input, shape index: {}]
  %s5 = inlined_call_operand.vmem [shape: bf16[2,328,128], index: 5, kind: output, shape index: {0}]
  %s6 = inlined_call_operand.vmem [shape: f32[2,2,128], index: 6, kind: output, shape index: {1}]
  %7 = xla_tuple %s5, %s6
  %s8 = sld [smem:[#allocation0]]
  $region65: #{basic_block_forward.3} parent=0
    _
  %s10 = ssub.s32 1, %s8
  %s11 = scalar_select 0, %s10, %s8
  loop: start=0, step=1, limit=4
  $region2: #{basic_block_forward.3} parent=0 // loop_pre_header
    _
  $region3: #{basic_block_forward.3} parent=0 // loop_header
    %s13 = sphi 0, %s17
    %p14 = scmp.ge.s32.totalorder %s13, 4
    %s23 = sphi 0, %s25
    %s26 = sphi 0, %s23
    %s27 = sphi 0, %s26
    %s43 = sphi 0, %s27
    %s47 = sphi 0, %s47
    %s49 = sphi 0, %s47
    %s50 = sphi 0, %s49
    %s64 = sphi 0, %s50
    %s68 = sphi 0, %s68
    %s70 = sphi 0, %s68
    %s71 = sphi 0, %s70
    %s85 = sphi 0, %s71
    %s89 = sphi 0, %s89
    %s91 = sphi 0, %s89
    %s92 = sphi 0, %s91
    %s106 = sphi 0, %s92
    %s110 = sphi 0, %s110
    %s112 = sphi 0, %s110
    %s113 = sphi 0, %s112
    %s127 = sphi 0, %s113
    %s133 = sphi 0, %s135
    %s136 = sphi 0, %s133
    %s137 = sphi 0, %s136
    %s153 = sphi 0, %s137
    %s159 = sphi 0, %s161
    %s162 = sphi 0, %s159
    %s163 = sphi 0, %s162
    %s179 = sphi 0, %s163
  $region4: #{basic_block_forward.3} parent=0 // loop_header_branch
    %16 = sbr.rel (%p14) target = $region8
  $region5: #{basic_block_forward.3} parent=0 // loop_body
    %s18 = ssub.s32 %s13, 1
    %s19 = ssub.s32 %s13, 2
    %s20 = sadd.s32 %s13, 1
    %s21 = ssub.s32 %s13, %s20
    %p22 = scmp.eq.s32.totalorder %s21, 0
    %s24 = sadd.s32 %s23, 1
    %s25 = scalar_select %p22, %s23, %s24
    %p28 = pneg %p22
    %p29 = scmp.eq.s32.totalorder %s13, 1
    %p30 = por %p28, %p29
    %p31 = scmp.ne.s32.totalorder %s23, %s26
    %p32 = scmp.eq.s32.totalorder %s13, 0
    %p33 = por %p31, %p32
    %p34 = scmp.ne.s32.totalorder %s23, %s26
    %p35 = scmp.eq.s32.totalorder %s18, 1
    %p36 = por %p34, %p35
    %p37 = scmp.ne.s32.totalorder %s26, %s27
    %p38 = scmp.eq.s32.totalorder %s18, 0
    %p39 = por %p37, %p38
    %p40 = scmp.ne.s32.totalorder %s26, %s27
    %p41 = scmp.eq.s32.totalorder %s19, 1
    %p42 = por %p40, %p41
    %p44 = scmp.ne.s32.totalorder %s27, %s43
    %p45 = scmp.eq.s32.totalorder %s19, 0
    %p46 = por %p44, %p45
    %s48 = sadd.s32 %s47, 1
    %p51 = scmp.eq.s32.totalorder %s13, 1
    %p52 = scmp.ne.s32.totalorder %s47, %s49
    %p53 = scmp.eq.s32.totalorder %s13, 0
    %p54 = por %p52, %p53
    %p55 = scmp.ne.s32.totalorder %s47, %s49
    %p56 = scmp.eq.s32.totalorder %s18, 1
    %p57 = por %p55, %p56
    %p58 = scmp.ne.s32.totalorder %s49, %s50
    %p59 = scmp.eq.s32.totalorder %s18, 0
    %p60 = por %p58, %p59
    %p61 = scmp.ne.s32.totalorder %s49, %s50
    %p62 = scmp.eq.s32.totalorder %s19, 1
    %p63 = por %p61, %p62
    %p65 = scmp.ne.s32.totalorder %s50, %s64
    %p66 = scmp.eq.s32.totalorder %s19, 0
    %p67 = por %p65, %p66
    %s69 = sadd.s32 %s68, 1
    %p72 = scmp.eq.s32.totalorder %s13, 1
    %p73 = scmp.ne.s32.totalorder %s68, %s70
    %p74 = scmp.eq.s32.totalorder %s13, 0
    %p75 = por %p73, %p74
    %p76 = scmp.ne.s32.totalorder %s68, %s70
    %p77 = scmp.eq.s32.totalorder %s18, 1
    %p78 = por %p76, %p77
    %p79 = scmp.ne.s32.totalorder %s70, %s71
    %p80 = scmp.eq.s32.totalorder %s18, 0
    %p81 = por %p79, %p80
    %p82 = scmp.ne.s32.totalorder %s70, %s71
    %p83 = scmp.eq.s32.totalorder %s19, 1
    %p84 = por %p82, %p83
    %p86 = scmp.ne.s32.totalorder %s71, %s85
    %p87 = scmp.eq.s32.totalorder %s19, 0
    %p88 = por %p86, %p87
    %s90 = sadd.s32 %s89, 1
    %p93 = scmp.eq.s32.totalorder %s13, 1
    %p94 = scmp.ne.s32.totalorder %s89, %s91
    %p95 = scmp.eq.s32.totalorder %s13, 0
    %p96 = por %p94, %p95
    %p97 = scmp.ne.s32.totalorder %s89, %s91
    %p98 = scmp.eq.s32.totalorder %s18, 1
    %p99 = por %p97, %p98
    %p100 = scmp.ne.s32.totalorder %s91, %s92
    %p101 = scmp.eq.s32.totalorder %s18, 0
    %p102 = por %p100, %p101
    %p103 = scmp.ne.s32.totalorder %s91, %s92
    %p104 = scmp.eq.s32.totalorder %s19, 1
    %p105 = por %p103, %p104
    %p107 = scmp.ne.s32.totalorder %s92, %s106
    %p108 = scmp.eq.s32.totalorder %s19, 0
    %p109 = por %p107, %p108
    %s111 = sadd.s32 %s110, 1
    %p114 = scmp.eq.s32.totalorder %s13, 1
    %p115 = scmp.ne.s32.totalorder %s110, %s112
    %p116 = scmp.eq.s32.totalorder %s13, 0
    %p117 = por %p115, %p116
    %p118 = scmp.ne.s32.totalorder %s110, %s112
    %p119 = scmp.eq.s32.totalorder %s18, 1
    %p120 = por %p118, %p119
    %p121 = scmp.ne.s32.totalorder %s112, %s113
    %p122 = scmp.eq.s32.totalorder %s18, 0
    %p123 = por %p121, %p122
    %p124 = scmp.ne.s32.totalorder %s112, %s113
    %p125 = scmp.eq.s32.totalorder %s19, 1
    %p126 = por %p124, %p125
    %p128 = scmp.ne.s32.totalorder %s113, %s127
    %p129 = scmp.eq.s32.totalorder %s19, 0
    %p130 = por %p128, %p129
    %s131 = ssub.s32 %s13, %s20
    %p132 = scmp.eq.s32.totalorder %s131, 0
    %s134 = sadd.s32 %s133, 1
    %s135 = scalar_select %p132, %s133, %s134
    %p138 = pneg %p132
    %p139 = scmp.eq.s32.totalorder %s13, 1
    %p140 = por %p138, %p139
    %p141 = scmp.ne.s32.totalorder %s133, %s136
    %p142 = scmp.eq.s32.totalorder %s13, 0
    %p143 = por %p141, %p142
    %p144 = scmp.ne.s32.totalorder %s133, %s136
    %p145 = scmp.eq.s32.totalorder %s18, 1
    %p146 = por %p144, %p145
    %p147 = scmp.ne.s32.totalorder %s136, %s137
    %p148 = scmp.eq.s32.totalorder %s18, 0
    %p149 = por %p147, %p148
    %p150 = scmp.ne.s32.totalorder %s136, %s137
    %p151 = scmp.eq.s32.totalorder %s19, 1
    %p152 = por %p150, %p151
    %p154 = scmp.ne.s32.totalorder %s137, %s153
    %p155 = scmp.eq.s32.totalorder %s19, 0
    %p156 = por %p154, %p155
    %s157 = ssub.s32 %s13, %s20
    %p158 = scmp.eq.s32.totalorder %s157, 0
    %s160 = sadd.s32 %s159, 1
    %s161 = scalar_select %p158, %s159, %s160
    %p164 = pneg %p158
    %p165 = scmp.eq.s32.totalorder %s13, 1
    %p166 = por %p164, %p165
    %p167 = scmp.ne.s32.totalorder %s159, %s162
    %p168 = scmp.eq.s32.totalorder %s13, 0
    %p169 = por %p167, %p168
    %p170 = scmp.ne.s32.totalorder %s159, %s162
    %p171 = scmp.eq.s32.totalorder %s18, 1
    %p172 = por %p170, %p171
    %p173 = scmp.ne.s32.totalorder %s162, %s163
    %p174 = scmp.eq.s32.totalorder %s18, 0
    %p175 = por %p173, %p174
    %p176 = scmp.ne.s32.totalorder %s162, %s163
    %p177 = scmp.eq.s32.totalorder %s19, 1
    %p178 = por %p176, %p177
    %p180 = scmp.ne.s32.totalorder %s163, %s179
    %p181 = scmp.eq.s32.totalorder %s19, 0
    %p182 = por %p180, %p181
    %p183 = scmp.le.s32.totalorder 1, %s13
    %p184 = scmp.lt.s32.totalorder %s13, 3
    %p185 = pnand %p183, %p184
    %p186 = pneg %p185
    // Predicated region
    $region9: #{basic_block_forward.3} parent=5 // pred_check
      _
    $region10: #{basic_block_forward.3} parent=5 // pred_check_branch
      %188 = sbr.rel (%p185) target = $region12
    $region11: #{basic_block_forward.3} parent=5 // pred_region
      %s189 = ssub.s32 %s13, 1
      // Predicated region
      $region13: #{basic_block_forward.3} parent=11 // pred_check
        %p190 = pneg %p60
      $region14: #{basic_block_forward.3} parent=11 // pred_check_branch
        %192 = sbr.rel (%p190) target = $region16
      $region15: #{basic_block_forward.3} parent=11 // pred_region
        _
      $region16: #{basic_block_forward.3} parent=11 // pred_fallthru
        _
      // Predicated region
      $region17: #{basic_block_forward.3} parent=11 // pred_check
        %p193 = pneg %p81
      $region18: #{basic_block_forward.3} parent=11 // pred_check_branch
        %195 = sbr.rel (%p193) target = $region20
      $region19: #{basic_block_forward.3} parent=11 // pred_region
        _
      $region20: #{basic_block_forward.3} parent=11 // pred_fallthru
        _
      // Predicated region
      $region21: #{basic_block_forward.3} parent=11 // pred_check
        %p196 = pneg %p102
      $region22: #{basic_block_forward.3} parent=11 // pred_check_branch
        %198 = sbr.rel (%p196) target = $region24
      $region23: #{basic_block_forward.3} parent=11 // pred_region
        _
      $region24: #{basic_block_forward.3} parent=11 // pred_fallthru
        _
      // Predicated region
      $region25: #{basic_block_forward.3} parent=11 // pred_check
        %p199 = pneg %p123
      $region26: #{basic_block_forward.3} parent=11 // pred_check_branch
        %201 = sbr.rel (%p199) target = $region28
      $region27: #{basic_block_forward.3} parent=11 // pred_region
        _
      $region28: #{basic_block_forward.3} parent=11 // pred_fallthru
        _
    $region12: #{basic_block_forward.3} parent=5 // pred_fallthru
      _
    %p202 = scmp.lt.s32.totalorder %s13, 2
    // Predicated region
    $region29: #{basic_block_forward.3} parent=5 // pred_check
      %p203 = pneg %p202
    $region30: #{basic_block_forward.3} parent=5 // pred_check_branch
      %205 = sbr.rel (%p203) target = $region32
    $region31: #{basic_block_forward.3} parent=5 // pred_region
      // Predicated region
      $region33: #{basic_block_forward.3} parent=31 // pred_check
        %p206 = pneg %p33
      $region34: #{basic_block_forward.3} parent=31 // pred_check_branch
        %208 = sbr.rel (%p206) target = $region36
      $region35: #{basic_block_forward.3} parent=31 // pred_region
        %p209 = scmp.lt.s32.totalorder %s13, 1
        %s210 = scalar_select %p209, %s13, 1
        %s211 = smul.addr %s210, 41
        %s212 = smul.addr %s211, 4
        %s213 = scalar_lea.vmem %s0, %s212
      $region36: #{basic_block_forward.3} parent=31 // pred_fallthru
        _
    $region32: #{basic_block_forward.3} parent=5 // pred_fallthru
      _
    %p214 = scmp.le.s32.totalorder 1, %s13
    %p215 = scmp.lt.s32.totalorder %s13, 3
    %p216 = pnand %p214, %p215
    %p217 = pneg %p216
    // Predicated region
    $region37: #{basic_block_forward.3} parent=5 // pred_check
      _
    $region38: #{basic_block_forward.3} parent=5 // pred_check_branch
      %219 = sbr.rel (%p216) target = $region40
    $region39: #{basic_block_forward.3} parent=5 // pred_region
      %s220 = ssub.s32 %s13, 1
      %p221 = scmp.lt.s32.totalorder %s18, 1
      %s222 = scalar_select %p221, %s18, 1
      %s223 = smul.addr %s222, 41
      %s224 = smul.addr %s223, 4
      %s225 = scalar_lea.vmem %s0, %s224
      %p226 = pneg %p39
      %p227 = pneg %p36
      %p228 = pneg %p60
      %p229 = pneg %p57
      %p230 = pneg %p81
      %p231 = pneg %p78
      %p232 = pneg %p102
      %p233 = pneg %p99
      %p234 = pneg %p123
      %p235 = pneg %p120
      %p236 = pneg %p149
      %p237 = pneg %p146
      %p238 = scmp.lt.s32.totalorder %s18, 1
      %s239 = scalar_select %p238, %s18, 1
      %s240 = smul.addr %s239, 41
      %s241 = smul.addr %s240, 4
      %s242 = scalar_lea.vmem %s5, %s241
      %p243 = pneg %p175
      %p244 = pneg %p172
      %p245 = scmp.lt.s32.totalorder %s18, 1
      %s246 = scalar_select %p245, %s18, 1
      %s247 = smul.addr %s246, 2
      %s248 = scalar_lea.vmem %s6, %s247
      %p249 = scmp.lt.s32.totalorder %s18, 1
      %s250 = scalar_select %p249, %s18, 1
      %s251 = smul.addr %s250, 41
      %s252 = smul.addr %s251, 4
      %s253 = scalar_lea.vmem %s0, %s252
      %p254 = scmp.lt.s32.totalorder %s18, 1
      %s255 = scalar_select %p254, %s18, 1
      %s256 = smul.addr %s255, 41
      %s257 = smul.addr %s256, 4
      %s258 = scalar_lea.vmem %s5, %s257
      %p259 = scmp.lt.s32.totalorder %s18, 1
      %s260 = scalar_select %p259, %s18, 1
      %s261 = smul.addr %s260, 2
      %s262 = scalar_lea.vmem %s6, %s261
      %p264 = scmp.eq.s32.totalorder %s18, 0
      // Predicated region
      $region41: #{basic_block_forward.3} parent=39 // pred_check
        %p265 = pneg %p264
      $region42: #{basic_block_forward.3} parent=39 // pred_check_branch
        %267 = sbr.rel (%p265) target = $region44
      $region43: #{basic_block_forward.3} parent=39 // pred_region
        %268 = vst [vmem:[#allocation2] sm:$0xf] 0
        %269 = vst [vmem:[#allocation2 + $0x4] sm:$0xf] 0
        %270 = vst [vmem:[#allocation2 + $0x8] sm:$0xf] 0
        %271 = vst [vmem:[#allocation2 + $0xb0] sm:$0xf] 0
        %272 = vst [vmem:[#allocation2 + $0xb4] sm:$0xf] 0
        %273 = vst [vmem:[#allocation2 + $0xb8] sm:$0xf] 0
      $region44: #{basic_block_forward.3} parent=39 // pred_fallthru
        _
      %v274 = vld [vmem:[%s253] sm:$0xf]
      %v275 = vld [vmem:[%s253 + $0x4] sm:$0xf]
      %v276 = vld [vmem:[%s253 + $0x8] sm:$0xf]
      %v277 = vld [vmem:[%s253 + $0xc] sm:$0xf]
      %v278 = vld [vmem:[%s253 + $0x10] sm:$0xf]
      %v279 = vld [vmem:[%s253 + $0x14] sm:$0xf]
      %v280 = vld [vmem:[%s253 + $0x18] sm:$0xf]
      %v281 = vld [vmem:[%s253 + $0x1c] sm:$0xf]
      %v282 = vld [vmem:[%s253 + $0x20] sm:$0xf]
      %v283 = vld [vmem:[%s253 + $0x24] sm:$0xf]
      %v284 = vld [vmem:[%s253 + $0x28] sm:$0xf]
      %v285 = vld [vmem:[%s253 + $0x2c] sm:$0xf]
      %v286 = vld [vmem:[%s253 + $0x30] sm:$0xf]
      %v287 = vld [vmem:[%s253 + $0x34] sm:$0xf]
      %v288 = vld [vmem:[%s253 + $0x38] sm:$0xf]
      %v289 = vld [vmem:[%s253 + $0x3c] sm:$0xf]
      %v290 = vld [vmem:[%s253 + $0x40] sm:$0xf]
      %v291 = vld [vmem:[%s253 + $0x44] sm:$0xf]
      %v292 = vld [vmem:[%s253 + $0x48] sm:$0xf]
      %v293 = vld [vmem:[%s253 + $0x4c] sm:$0xf]
      %v294 = vld [vmem:[%s253 + $0x50] sm:$0xf]
      %v295 = vld [vmem:[%s253 + $0x54] sm:$0xf]
      %v296 = vld [vmem:[%s253 + $0x58] sm:$0xf]
      %v297 = vld [vmem:[%s253 + $0x5c] sm:$0xf]
      %v298 = vld [vmem:[%s253 + $0x60] sm:$0xf]
      %v299 = vld [vmem:[%s253 + $0x64] sm:$0xf]
      %v300 = vld [vmem:[%s253 + $0x68] sm:$0xf]
      %v301 = vld [vmem:[%s253 + $0x6c] sm:$0xf]
      %v302 = vld [vmem:[%s253 + $0x70] sm:$0xf]
      %v303 = vld [vmem:[%s253 + $0x74] sm:$0xf]
      %v304 = vld [vmem:[%s253 + $0x78] sm:$0xf]
      %v305 = vld [vmem:[%s253 + $0x7c] sm:$0xf]
      %v306 = vld [vmem:[%s253 + $0x80] sm:$0xf]
      %v307 = vld [vmem:[%s253 + $0x84] sm:$0xf]
      %v308 = vld [vmem:[%s253 + $0x88] sm:$0xf]
      %v309 = vld [vmem:[%s253 + $0x8c] sm:$0xf]
      %v310 = vld [vmem:[%s253 + $0x90] sm:$0xf]
      %v311 = vld [vmem:[%s253 + $0x94] sm:$0xf]
      %v312 = vld [vmem:[%s253 + $0x98] sm:$0xf]
      %v313 = vld [vmem:[%s253 + $0x9c] sm:$0xf]
      %v314 = vld [vmem:[%s253 + $0xa0] sm:$0xf]
      %v315 = vunpack.c.l.bf16 %v274
      %v316 = vunpack.c.l.bf16 %v275
      %v317 = vunpack.c.l.bf16 %v276
      %v318 = vunpack.c.l.bf16 %v277
      %v319 = vunpack.c.l.bf16 %v278
      %v320 = vunpack.c.l.bf16 %v279
      %v321 = vunpack.c.l.bf16 %v280
      %v322 = vunpack.c.l.bf16 %v281
      %v323 = vunpack.c.l.bf16 %v282
      %v324 = vunpack.c.l.bf16 %v283
      %v325 = vunpack.c.l.bf16 %v284
      %v326 = vunpack.c.l.bf16 %v285
      %v327 = vunpack.c.l.bf16 %v286
      %v328 = vunpack.c.l.bf16 %v287
      %v329 = vunpack.c.l.bf16 %v288
      %v330 = vunpack.c.l.bf16 %v289
      %v331 = vunpack.c.l.bf16 %v290
      %v332 = vunpack.c.l.bf16 %v291
      %v333 = vunpack.c.l.bf16 %v292
      %v334 = vunpack.c.l.bf16 %v293
      %v335 = vunpack.c.l.bf16 %v294
      %v336 = vunpack.c.l.bf16 %v295
      %v337 = vunpack.c.l.bf16 %v296
      %v338 = vunpack.c.l.bf16 %v297
      %v339 = vunpack.c.l.bf16 %v298
      %v340 = vunpack.c.l.bf16 %v299
      %v341 = vunpack.c.l.bf16 %v300
      %v342 = vunpack.c.l.bf16 %v301
      %v343 = vunpack.c.l.bf16 %v302
      %v344 = vunpack.c.l.bf16 %v303
      %v345 = vunpack.c.l.bf16 %v304
      %v346 = vunpack.c.l.bf16 %v305
      %v347 = vunpack.c.l.bf16 %v306
      %v348 = vunpack.c.l.bf16 %v307
      %v349 = vunpack.c.l.bf16 %v308
      %v350 = vunpack.c.l.bf16 %v309
      %v351 = vunpack.c.l.bf16 %v310
      %v352 = vunpack.c.l.bf16 %v311
      %v353 = vunpack.c.l.bf16 %v312
      %v354 = vunpack.c.l.bf16 %v313
      %v355 = vunpack.c.l.bf16 %v314
      %v356 = vld [vmem:[%s2] sm:$0x1]
      %v358 = vlaneseq
      %v359 = vshrl.u32 %v358, 7
      %v360 = vsub.s32 0, %v359
      %v361 = vrot.slane %v356, %v360
      %v363 = vmul.f32 %v315, %v361
      %v364 = vmul.f32 %v316, %v361
      %v365 = vmul.f32 %v317, %v361
      %v366 = vmul.f32 %v318, %v361
      %v367 = vmul.f32 %v319, %v361
      %v368 = vmul.f32 %v320, %v361
      %v369 = vmul.f32 %v321, %v361
      %v370 = vmul.f32 %v322, %v361
      %v371 = vmul.f32 %v323, %v361
      %v372 = vmul.f32 %v324, %v361
      %v373 = vmul.f32 %v325, %v361
      %v374 = vmul.f32 %v326, %v361
      %v375 = vmul.f32 %v327, %v361
      %v376 = vmul.f32 %v328, %v361
      %v377 = vmul.f32 %v329, %v361
      %v378 = vmul.f32 %v330, %v361
      %v379 = vmul.f32 %v331, %v361
      %v380 = vmul.f32 %v332, %v361
      %v381 = vmul.f32 %v333, %v361
      %v382 = vmul.f32 %v334, %v361
      %v383 = vmul.f32 %v335, %v361
      %v384 = vmul.f32 %v336, %v361
      %v385 = vmul.f32 %v337, %v361
      %v386 = vmul.f32 %v338, %v361
      %v387 = vmul.f32 %v339, %v361
      %v388 = vmul.f32 %v340, %v361
      %v389 = vmul.f32 %v341, %v361
      %v390 = vmul.f32 %v342, %v361
      %v391 = vmul.f32 %v343, %v361
      %v392 = vmul.f32 %v344, %v361
      %v393 = vmul.f32 %v345, %v361
      %v394 = vmul.f32 %v346, %v361
      %v395 = vmul.f32 %v347, %v361
      %v396 = vmul.f32 %v348, %v361
      %v397 = vmul.f32 %v349, %v361
      %v398 = vmul.f32 %v350, %v361
      %v399 = vmul.f32 %v351, %v361
      %v400 = vmul.f32 %v352, %v361
      %v401 = vmul.f32 %v353, %v361
      %v402 = vmul.f32 %v354, %v361
      %v403 = vmul.f32 %v355, %v361
      %v404 = vld [vmem:[%s3] sm:$0x1]
      %v406 = vlaneseq
      %v407 = vshrl.u32 %v406, 7
      %v408 = vsub.s32 0, %v407
      %v409 = vrot.slane %v404, %v408
      %v411 = vadd.f32 %v363, %v409
      %v412 = vadd.f32 %v364, %v409
      %v413 = vadd.f32 %v365, %v409
      %v414 = vadd.f32 %v366, %v409
      %v415 = vadd.f32 %v367, %v409
      %v416 = vadd.f32 %v368, %v409
      %v417 = vadd.f32 %v369, %v409
      %v418 = vadd.f32 %v370, %v409
      %v419 = vadd.f32 %v371, %v409
      %v420 = vadd.f32 %v372, %v409
      %v421 = vadd.f32 %v373, %v409
      %v422 = vadd.f32 %v374, %v409
      %v423 = vadd.f32 %v375, %v409
      %v424 = vadd.f32 %v376, %v409
      %v425 = vadd.f32 %v377, %v409
      %v426 = vadd.f32 %v378, %v409
      %v427 = vadd.f32 %v379, %v409
      %v428 = vadd.f32 %v380, %v409
      %v429 = vadd.f32 %v381, %v409
      %v430 = vadd.f32 %v382, %v409
      %v431 = vadd.f32 %v383, %v409
      %v432 = vadd.f32 %v384, %v409
      %v433 = vadd.f32 %v385, %v409
      %v434 = vadd.f32 %v386, %v409
      %v435 = vadd.f32 %v387, %v409
      %v436 = vadd.f32 %v388, %v409
      %v437 = vadd.f32 %v389, %v409
      %v438 = vadd.f32 %v390, %v409
      %v439 = vadd.f32 %v391, %v409
      %v440 = vadd.f32 %v392, %v409
      %v441 = vadd.f32 %v393, %v409
      %v442 = vadd.f32 %v394, %v409
      %v443 = vadd.f32 %v395, %v409
      %v444 = vadd.f32 %v396, %v409
      %v445 = vadd.f32 %v397, %v409
      %v446 = vadd.f32 %v398, %v409
      %v447 = vadd.f32 %v399, %v409
      %v448 = vadd.f32 %v400, %v409
      %v449 = vadd.f32 %v401, %v409
      %v450 = vadd.f32 %v402, %v409
      %v451 = vadd.f32 %v403, %v409
      %v452 = vmax.f32 %v411, 0.0
      %v453 = vmax.f32 %v412, 0.0
      %v454 = vmax.f32 %v413, 0.0
      %v455 = vmax.f32 %v414, 0.0
      %v456 = vmax.f32 %v415, 0.0
      %v457 = vmax.f32 %v416, 0.0
      %v458 = vmax.f32 %v417, 0.0
      %v459 = vmax.f32 %v418, 0.0
      %v460 = vmax.f32 %v419, 0.0
      %v461 = vmax.f32 %v420, 0.0
      %v462 = vmax.f32 %v421, 0.0
      %v463 = vmax.f32 %v422, 0.0
      %v464 = vmax.f32 %v423, 0.0
      %v465 = vmax.f32 %v424, 0.0
      %v466 = vmax.f32 %v425, 0.0
      %v467 = vmax.f32 %v426, 0.0
      %v468 = vmax.f32 %v427, 0.0
      %v469 = vmax.f32 %v428, 0.0
      %v470 = vmax.f32 %v429, 0.0
      %v471 = vmax.f32 %v430, 0.0
      %v472 = vmax.f32 %v431, 0.0
      %v473 = vmax.f32 %v432, 0.0
      %v474 = vmax.f32 %v433, 0.0
      %v475 = vmax.f32 %v434, 0.0
      %v476 = vmax.f32 %v435, 0.0
      %v477 = vmax.f32 %v436, 0.0
      %v478 = vmax.f32 %v437, 0.0
      %v479 = vmax.f32 %v438, 0.0
      %v480 = vmax.f32 %v439, 0.0
      %v481 = vmax.f32 %v440, 0.0
      %v482 = vmax.f32 %v441, 0.0
      %v483 = vmax.f32 %v442, 0.0
      %v484 = vmax.f32 %v443, 0.0
      %v485 = vmax.f32 %v444, 0.0
      %v486 = vmax.f32 %v445, 0.0
      %v487 = vmax.f32 %v446, 0.0
      %v488 = vmax.f32 %v447, 0.0
      %v489 = vmax.f32 %v448, 0.0
      %v490 = vmax.f32 %v449, 0.0
      %v491 = vmax.f32 %v450, 0.0
      %v492 = vmax.f32 %v451, 0.0
      %v493 = vld [vmem:[%s1] sm:$0xff]
      %v494 = vld [vmem:[%s1 + $0x8] sm:$0xff]
      %v495 = vld [vmem:[%s1 + $0x10] sm:$0xff]
      %v496 = vld [vmem:[%s1 + $0x18] sm:$0xff]
      %v497 = vld [vmem:[%s1 + $0x20] sm:$0xff]
      %v498 = vld [vmem:[%s1 + $0x28] sm:$0xff]
      %v499 = vld [vmem:[%s1 + $0x30] sm:$0xff]
      %v500 = vld [vmem:[%s1 + $0x38] sm:$0xff]
      %v501 = vld [vmem:[%s1 + $0x40] sm:$0xff]
      %v502 = vld [vmem:[%s1 + $0x48] sm:$0xff]
      %v503 = vld [vmem:[%s1 + $0x50] sm:$0xff]
      %v504 = vld [vmem:[%s1 + $0x58] sm:$0xff]
      %v505 = vld [vmem:[%s1 + $0x60] sm:$0xff]
      %v506 = vld [vmem:[%s1 + $0x68] sm:$0xff]
      %v507 = vld [vmem:[%s1 + $0x70] sm:$0xff]
      %v508 = vld [vmem:[%s1 + $0x78] sm:$0xff]
      %v509 = vld [vmem:[%s1 + $0x80] sm:$0xff]
      %v510 = vld [vmem:[%s1 + $0x88] sm:$0xff]
      %v511 = vld [vmem:[%s1 + $0x90] sm:$0xff]
      %v512 = vld [vmem:[%s1 + $0x98] sm:$0xff]
      %v513 = vld [vmem:[%s1 + $0xa0] sm:$0xff]
      %v514 = vld [vmem:[%s1 + $0xa8] sm:$0xff]
      %v515 = vld [vmem:[%s1 + $0xb0] sm:$0xff]
      %v516 = vld [vmem:[%s1 + $0xb8] sm:$0xff]
      %v517 = vld [vmem:[%s1 + $0xc0] sm:$0xff]
      %v518 = vld [vmem:[%s1 + $0xc8] sm:$0xff]
      %v519 = vld [vmem:[%s1 + $0xd0] sm:$0xff]
      %v520 = vld [vmem:[%s1 + $0xd8] sm:$0xff]
      %v521 = vld [vmem:[%s1 + $0xe0] sm:$0xff]
      %v522 = vld [vmem:[%s1 + $0xe8] sm:$0xff]
      %v523 = vld [vmem:[%s1 + $0xf0] sm:$0xff]
      %v524 = vld [vmem:[%s1 + $0xf8] sm:$0xff]
      %v525 = vld [vmem:[%s1 + $0x100] sm:$0xff]
      %v526 = vld [vmem:[%s1 + $0x108] sm:$0xff]
      %v527 = vld [vmem:[%s1 + $0x110] sm:$0xff]
      %v528 = vld [vmem:[%s1 + $0x118] sm:$0xff]
      %v529 = vld [vmem:[%s1 + $0x120] sm:$0xff]
      %v530 = vld [vmem:[%s1 + $0x128] sm:$0xff]
      %v531 = vld [vmem:[%s1 + $0x130] sm:$0xff]
      %v532 = vld [vmem:[%s1 + $0x138] sm:$0xff]
      %v533 = vld [vmem:[%s1 + $0x140] sm:$0xff]
      %535 = vset.pattern.permute.xlu0 0
      %536 = vperm.xlu0 %535, %v493
      %v537 = vpop.permute.xlu0 %536
      %540 = vset.pattern.permute.xlu0 0
      %541 = vperm.xlu0 %540, %v494
      %v542 = vpop.permute.xlu0 %541
      %545 = vset.pattern.permute.xlu0 0
      %546 = vperm.xlu0 %545, %v495
      %v547 = vpop.permute.xlu0 %546
      %550 = vset.pattern.permute.xlu0 0
      %551 = vperm.xlu0 %550, %v496
      %v552 = vpop.permute.xlu0 %551
      %555 = vset.pattern.permute.xlu0 0
      %556 = vperm.xlu0 %555, %v497
      %v557 = vpop.permute.xlu0 %556
      %560 = vset.pattern.permute.xlu0 0
      %561 = vperm.xlu0 %560, %v498
      %v562 = vpop.permute.xlu0 %561
      %565 = vset.pattern.permute.xlu0 0
      %566 = vperm.xlu0 %565, %v499
      %v567 = vpop.permute.xlu0 %566
      %570 = vset.pattern.permute.xlu0 0
      %571 = vperm.xlu0 %570, %v500
      %v572 = vpop.permute.xlu0 %571
      %575 = vset.pattern.permute.xlu0 0
      %576 = vperm.xlu0 %575, %v501
      %v577 = vpop.permute.xlu0 %576
      %580 = vset.pattern.permute.xlu0 0
      %581 = vperm.xlu0 %580, %v502
      %v582 = vpop.permute.xlu0 %581
      %585 = vset.pattern.permute.xlu0 0
      %586 = vperm.xlu0 %585, %v503
      %v587 = vpop.permute.xlu0 %586
      %590 = vset.pattern.permute.xlu0 0
      %591 = vperm.xlu0 %590, %v504
      %v592 = vpop.permute.xlu0 %591
      %595 = vset.pattern.permute.xlu0 0
      %596 = vperm.xlu0 %595, %v505
      %v597 = vpop.permute.xlu0 %596
      %600 = vset.pattern.permute.xlu0 0
      %601 = vperm.xlu0 %600, %v506
      %v602 = vpop.permute.xlu0 %601
      %605 = vset.pattern.permute.xlu0 0
      %606 = vperm.xlu0 %605, %v507
      %v607 = vpop.permute.xlu0 %606
      %610 = vset.pattern.permute.xlu0 0
      %611 = vperm.xlu0 %610, %v508
      %v612 = vpop.permute.xlu0 %611
      %615 = vset.pattern.permute.xlu0 0
      %616 = vperm.xlu0 %615, %v509
      %v617 = vpop.permute.xlu0 %616
      %620 = vset.pattern.permute.xlu0 0
      %621 = vperm.xlu0 %620, %v510
      %v622 = vpop.permute.xlu0 %621
      %625 = vset.pattern.permute.xlu0 0
      %626 = vperm.xlu0 %625, %v511
      %v627 = vpop.permute.xlu0 %626
      %630 = vset.pattern.permute.xlu0 0
      %631 = vperm.xlu0 %630, %v512
      %v632 = vpop.permute.xlu0 %631
      %635 = vset.pattern.permute.xlu0 0
      %636 = vperm.xlu0 %635, %v513
      %v637 = vpop.permute.xlu0 %636
      %640 = vset.pattern.permute.xlu0 0
      %641 = vperm.xlu0 %640, %v514
      %v642 = vpop.permute.xlu0 %641
      %645 = vset.pattern.permute.xlu0 0
      %646 = vperm.xlu0 %645, %v515
      %v647 = vpop.permute.xlu0 %646
      %650 = vset.pattern.permute.xlu0 0
      %651 = vperm.xlu0 %650, %v516
      %v652 = vpop.permute.xlu0 %651
      %655 = vset.pattern.permute.xlu0 0
      %656 = vperm.xlu0 %655, %v517
      %v657 = vpop.permute.xlu0 %656
      %660 = vset.pattern.permute.xlu0 0
      %661 = vperm.xlu0 %660, %v518
      %v662 = vpop.permute.xlu0 %661
      %665 = vset.pattern.permute.xlu0 0
      %666 = vperm.xlu0 %665, %v519
      %v667 = vpop.permute.xlu0 %666
      %670 = vset.pattern.permute.xlu0 0
      %671 = vperm.xlu0 %670, %v520
      %v672 = vpop.permute.xlu0 %671
      %675 = vset.pattern.permute.xlu0 0
      %676 = vperm.xlu0 %675, %v521
      %v677 = vpop.permute.xlu0 %676
      %680 = vset.pattern.permute.xlu0 0
      %681 = vperm.xlu0 %680, %v522
      %v682 = vpop.permute.xlu0 %681
      %685 = vset.pattern.permute.xlu0 0
      %686 = vperm.xlu0 %685, %v523
      %v687 = vpop.permute.xlu0 %686
      %690 = vset.pattern.permute.xlu0 0
      %691 = vperm.xlu0 %690, %v524
      %v692 = vpop.permute.xlu0 %691
      %695 = vset.pattern.permute.xlu0 0
      %696 = vperm.xlu0 %695, %v525
      %v697 = vpop.permute.xlu0 %696
      %700 = vset.pattern.permute.xlu0 0
      %701 = vperm.xlu0 %700, %v526
      %v702 = vpop.permute.xlu0 %701
      %705 = vset.pattern.permute.xlu0 0
      %706 = vperm.xlu0 %705, %v527
      %v707 = vpop.permute.xlu0 %706
      %710 = vset.pattern.permute.xlu0 0
      %711 = vperm.xlu0 %710, %v528
      %v712 = vpop.permute.xlu0 %711
      %715 = vset.pattern.permute.xlu0 0
      %716 = vperm.xlu0 %715, %v529
      %v717 = vpop.permute.xlu0 %716
      %720 = vset.pattern.permute.xlu0 0
      %721 = vperm.xlu0 %720, %v530
      %v722 = vpop.permute.xlu0 %721
      %725 = vset.pattern.permute.xlu0 0
      %726 = vperm.xlu0 %725, %v531
      %v727 = vpop.permute.xlu0 %726
      %730 = vset.pattern.permute.xlu0 0
      %731 = vperm.xlu0 %730, %v532
      %v732 = vpop.permute.xlu0 %731
      %735 = vset.pattern.permute.xlu0 0
      %736 = vperm.xlu0 %735, %v533
      %v737 = vpop.permute.xlu0 %736
      %v739 = vmul.f32 %v452, %v537
      %v740 = vmul.f32 %v453, %v542
      %v741 = vmul.f32 %v454, %v547
      %v742 = vmul.f32 %v455, %v552
      %v743 = vmul.f32 %v456, %v557
      %v744 = vmul.f32 %v457, %v562
      %v745 = vmul.f32 %v458, %v567
      %v746 = vmul.f32 %v459, %v572
      %v747 = vmul.f32 %v460, %v577
      %v748 = vmul.f32 %v461, %v582
      %v749 = vmul.f32 %v462, %v587
      %v750 = vmul.f32 %v463, %v592
      %v751 = vmul.f32 %v464, %v597
      %v752 = vmul.f32 %v465, %v602
      %v753 = vmul.f32 %v466, %v607
      %v754 = vmul.f32 %v467, %v612
      %v755 = vmul.f32 %v468, %v617
      %v756 = vmul.f32 %v469, %v622
      %v757 = vmul.f32 %v470, %v627
      %v758 = vmul.f32 %v471, %v632
      %v759 = vmul.f32 %v472, %v637
      %v760 = vmul.f32 %v473, %v642
      %v761 = vmul.f32 %v474, %v647
      %v762 = vmul.f32 %v475, %v652
      %v763 = vmul.f32 %v476, %v657
      %v764 = vmul.f32 %v477, %v662
      %v765 = vmul.f32 %v478, %v667
      %v766 = vmul.f32 %v479, %v672
      %v767 = vmul.f32 %v480, %v677
      %v768 = vmul.f32 %v481, %v682
      %v769 = vmul.f32 %v482, %v687
      %v770 = vmul.f32 %v483, %v692
      %v771 = vmul.f32 %v484, %v697
      %v772 = vmul.f32 %v485, %v702
      %v773 = vmul.f32 %v486, %v707
      %v774 = vmul.f32 %v487, %v712
      %v775 = vmul.f32 %v488, %v717
      %v776 = vmul.f32 %v489, %v722
      %v777 = vmul.f32 %v490, %v727
      %v778 = vmul.f32 %v491, %v732
      %v779 = vmul.f32 %v492, %v737
      %v780 = vpack.c.bf16 %v740, %v739
      %v781 = vpack.c.bf16 %v742, %v741
      %v782 = vpack.c.bf16 %v744, %v743
      %v783 = vpack.c.bf16 %v746, %v745
      %v784 = vpack.c.bf16 %v748, %v747
      %v785 = vpack.c.bf16 %v750, %v749
      %v786 = vpack.c.bf16 %v752, %v751
      %v787 = vpack.c.bf16 %v754, %v753
      %v788 = vpack.c.bf16 %v756, %v755
      %v789 = vpack.c.bf16 %v758, %v757
      %v790 = vpack.c.bf16 %v760, %v759
      %v791 = vpack.c.bf16 %v762, %v761
      %v792 = vpack.c.bf16 %v764, %v763
      %v793 = vpack.c.bf16 %v766, %v765
      %v794 = vpack.c.bf16 %v768, %v767
      %v795 = vpack.c.bf16 %v770, %v769
      %v796 = vpack.c.bf16 %v772, %v771
      %v797 = vpack.c.bf16 %v774, %v773
      %v798 = vpack.c.bf16 %v776, %v775
      %v799 = vpack.c.bf16 %v778, %v777
      %v800 = vpack.c.bf16 %v779, %v779
      %v822 = vunpack.c.l.b16 %v780
      %v823 = vunpack.c.h.b16 %v780
      %v824 = vunpack.c.l.b16 %v781
      %v825 = vunpack.c.h.b16 %v781
      %v826 = vunpack.c.l.b16 %v782
      %v827 = vunpack.c.h.b16 %v782
      %v828 = vunpack.c.l.b16 %v783
      %v829 = vunpack.c.h.b16 %v783
      %v830 = vunpack.c.l.b16 %v784
      %v831 = vunpack.c.h.b16 %v784
      %v832 = vunpack.c.l.b16 %v785
      %v833 = vunpack.c.h.b16 %v785
      %v834 = vunpack.c.l.b16 %v786
      %v835 = vunpack.c.h.b16 %v786
      %v836 = vunpack.c.l.b16 %v787
      %v837 = vunpack.c.h.b16 %v787
      %v838 = vunpack.c.l.b16 %v788
      %v839 = vunpack.c.h.b16 %v788
      %v840 = vunpack.c.l.b16 %v789
      %v841 = vunpack.c.h.b16 %v789
      %v842 = vunpack.c.l.b16 %v790
      %v843 = vunpack.c.h.b16 %v790
      %v844 = vunpack.c.l.b16 %v791
      %v845 = vunpack.c.h.b16 %v791
      %v846 = vunpack.c.l.b16 %v792
      %v847 = vunpack.c.h.b16 %v792
      %v848 = vunpack.c.l.b16 %v793
      %v849 = vunpack.c.h.b16 %v793
      %v850 = vunpack.c.l.b16 %v794
      %v851 = vunpack.c.h.b16 %v794
      %v852 = vunpack.c.l.b16 %v795
      %v853 = vunpack.c.h.b16 %v795
      %v854 = vunpack.c.l.b16 %v796
      %v855 = vunpack.c.h.b16 %v796
      %v856 = vunpack.c.l.b16 %v797
      %v857 = vunpack.c.h.b16 %v797
      %v858 = vunpack.c.l.b16 %v798
      %v859 = vunpack.c.h.b16 %v798
      %v860 = vunpack.c.l.b16 %v799
      %v861 = vunpack.c.h.b16 %v799
      %v862 = vunpack.c.l.b16 %v800
      %v863 = vpack.c.b16 %v822, %v822
      %v864 = vpack.c.b16 %v823, %v823
      %v865 = vpack.c.b16 %v824, %v824
      %v866 = vpack.c.b16 %v825, %v825
      %v867 = vpack.c.b16 %v826, %v826
      %v868 = vpack.c.b16 %v827, %v827
      %v869 = vpack.c.b16 %v828, %v828
      %v870 = vpack.c.b16 %v829, %v829
      %v871 = vpack.c.b16 %v830, %v830
      %v872 = vpack.c.b16 %v831, %v831
      %v873 = vpack.c.b16 %v832, %v832
      %v874 = vpack.c.b16 %v833, %v833
      %v875 = vpack.c.b16 %v834, %v834
      %v876 = vpack.c.b16 %v835, %v835
      %v877 = vpack.c.b16 %v836, %v836
      %v878 = vpack.c.b16 %v837, %v837
      %v879 = vpack.c.b16 %v838, %v838
      %v880 = vpack.c.b16 %v839, %v839
      %v881 = vpack.c.b16 %v840, %v840
      %v882 = vpack.c.b16 %v841, %v841
      %v883 = vpack.c.b16 %v842, %v842
      %v884 = vpack.c.b16 %v843, %v843
      %v885 = vpack.c.b16 %v844, %v844
      %v886 = vpack.c.b16 %v845, %v845
      %v887 = vpack.c.b16 %v846, %v846
      %v888 = vpack.c.b16 %v847, %v847
      %v889 = vpack.c.b16 %v848, %v848
      %v890 = vpack.c.b16 %v849, %v849
      %v891 = vpack.c.b16 %v850, %v850
      %v892 = vpack.c.b16 %v851, %v851
      %v893 = vpack.c.b16 %v852, %v852
      %v894 = vpack.c.b16 %v853, %v853
      %v895 = vpack.c.b16 %v854, %v854
      %v896 = vpack.c.b16 %v855, %v855
      %v897 = vpack.c.b16 %v856, %v856
      %v898 = vpack.c.b16 %v857, %v857
      %v899 = vpack.c.b16 %v858, %v858
      %v900 = vpack.c.b16 %v859, %v859
      %v901 = vpack.c.b16 %v860, %v860
      %v902 = vpack.c.b16 %v861, %v861
      %v903 = vpack.c.b16 %v862, %v862
      %945 = vst [vmem:[#allocation2 + $0xc] sm:$0xf] %v863
      %946 = vst [vmem:[#allocation2 + $0x10] sm:$0xf] %v864
      %947 = vst [vmem:[#allocation2 + $0x14] sm:$0xf] %v865
      %948 = vst [vmem:[#allocation2 + $0x18] sm:$0xf] %v866
      %949 = vst [vmem:[#allocation2 + $0x1c] sm:$0xf] %v867
      %950 = vst [vmem:[#allocation2 + $0x20] sm:$0xf] %v868
      %951 = vst [vmem:[#allocation2 + $0x24] sm:$0xf] %v869
      %952 = vst [vmem:[#allocation2 + $0x28] sm:$0xf] %v870
      %953 = vst [vmem:[#allocation2 + $0x2c] sm:$0xf] %v871
      %954 = vst [vmem:[#allocation2 + $0x30] sm:$0xf] %v872
      %955 = vst [vmem:[#allocation2 + $0x34] sm:$0xf] %v873
      %956 = vst [vmem:[#allocation2 + $0x38] sm:$0xf] %v874
      %957 = vst [vmem:[#allocation2 + $0x3c] sm:$0xf] %v875
      %958 = vst [vmem:[#allocation2 + $0x40] sm:$0xf] %v876
      %959 = vst [vmem:[#allocation2 + $0x44] sm:$0xf] %v877
      %960 = vst [vmem:[#allocation2 + $0x48] sm:$0xf] %v878
      %961 = vst [vmem:[#allocation2 + $0x4c] sm:$0xf] %v879
      %962 = vst [vmem:[#allocation2 + $0x50] sm:$0xf] %v880
      %963 = vst [vmem:[#allocation2 + $0x54] sm:$0xf] %v881
      %964 = vst [vmem:[#allocation2 + $0x58] sm:$0xf] %v882
      %965 = vst [vmem:[#allocation2 + $0x5c] sm:$0xf] %v883
      %966 = vst [vmem:[#allocation2 + $0x60] sm:$0xf] %v884
      %967 = vst [vmem:[#allocation2 + $0x64] sm:$0xf] %v885
      %968 = vst [vmem:[#allocation2 + $0x68] sm:$0xf] %v886
      %969 = vst [vmem:[#allocation2 + $0x6c] sm:$0xf] %v887
      %970 = vst [vmem:[#allocation2 + $0x70] sm:$0xf] %v888
      %971 = vst [vmem:[#allocation2 + $0x74] sm:$0xf] %v889
      %972 = vst [vmem:[#allocation2 + $0x78] sm:$0xf] %v890
      %973 = vst [vmem:[#allocation2 + $0x7c] sm:$0xf] %v891
      %974 = vst [vmem:[#allocation2 + $0x80] sm:$0xf] %v892
      %975 = vst [vmem:[#allocation2 + $0x84] sm:$0xf] %v893
      %976 = vst [vmem:[#allocation2 + $0x88] sm:$0xf] %v894
      %977 = vst [vmem:[#allocation2 + $0x8c] sm:$0xf] %v895
      %978 = vst [vmem:[#allocation2 + $0x90] sm:$0xf] %v896
      %979 = vst [vmem:[#allocation2 + $0x94] sm:$0xf] %v897
      %980 = vst [vmem:[#allocation2 + $0x98] sm:$0xf] %v898
      %981 = vst [vmem:[#allocation2 + $0x9c] sm:$0xf] %v899
      %982 = vst [vmem:[#allocation2 + $0xa0] sm:$0xf] %v900
      %983 = vst [vmem:[#allocation2 + $0xa4] sm:$0xf] %v901
      %984 = vst [vmem:[#allocation2 + $0xa8] sm:$0xf] %v902
      %985 = vst [vmem:[#allocation2 + $0xac] sm:$0xf] %v903
      %v986 = vld [vmem:[#allocation2] sm:$0xc]
      %v987 = vld [vmem:[#allocation2 + $0x4] sm:$0xf]
      %v988 = vld [vmem:[#allocation2 + $0x8] sm:$0xf]
      %v989 = vld [vmem:[#allocation2 + $0xc] sm:$0xf]
      %v990 = vld [vmem:[#allocation2 + $0x10] sm:$0xf]
      %v991 = vld [vmem:[#allocation2 + $0x14] sm:$0xf]
      %v992 = vld [vmem:[#allocation2 + $0x18] sm:$0xf]
      %v993 = vld [vmem:[#allocation2 + $0x1c] sm:$0xf]
      %v994 = vld [vmem:[#allocation2 + $0x20] sm:$0xf]
      %v995 = vld [vmem:[#allocation2 + $0x24] sm:$0xf]
      %v996 = vld [vmem:[#allocation2 + $0x28] sm:$0xf]
      %v997 = vld [vmem:[#allocation2 + $0x2c] sm:$0xf]
      %v998 = vld [vmem:[#allocation2 + $0x30] sm:$0xf]
      %v999 = vld [vmem:[#allocation2 + $0x34] sm:$0xf]
      %v1000 = vld [vmem:[#allocation2 + $0x38] sm:$0xf]
      %v1001 = vld [vmem:[#allocation2 + $0x3c] sm:$0xf]
      %v1002 = vld [vmem:[#allocation2 + $0x40] sm:$0xf]
      %v1003 = vld [vmem:[#allocation2 + $0x44] sm:$0xf]
      %v1004 = vld [vmem:[#allocation2 + $0x48] sm:$0xf]
      %v1005 = vld [vmem:[#allocation2 + $0x4c] sm:$0xf]
      %v1006 = vld [vmem:[#allocation2 + $0x50] sm:$0xf]
      %v1007 = vld [vmem:[#allocation2 + $0x54] sm:$0xf]
      %v1008 = vld [vmem:[#allocation2 + $0x58] sm:$0xf]
      %v1009 = vld [vmem:[#allocation2 + $0x5c] sm:$0xf]
      %v1010 = vld [vmem:[#allocation2 + $0x60] sm:$0xf]
      %v1011 = vld [vmem:[#allocation2 + $0x64] sm:$0xf]
      %v1012 = vld [vmem:[#allocation2 + $0x68] sm:$0xf]
      %v1013 = vld [vmem:[#allocation2 + $0x6c] sm:$0xf]
      %v1014 = vld [vmem:[#allocation2 + $0x70] sm:$0xf]
      %v1015 = vld [vmem:[#allocation2 + $0x74] sm:$0xf]
      %v1016 = vld [vmem:[#allocation2 + $0x78] sm:$0xf]
      %v1017 = vld [vmem:[#allocation2 + $0x7c] sm:$0xf]
      %v1018 = vld [vmem:[#allocation2 + $0x80] sm:$0xf]
      %v1019 = vld [vmem:[#allocation2 + $0x84] sm:$0xf]
      %v1020 = vld [vmem:[#allocation2 + $0x88] sm:$0xf]
      %v1021 = vld [vmem:[#allocation2 + $0x8c] sm:$0xf]
      %v1022 = vld [vmem:[#allocation2 + $0x90] sm:$0xf]
      %v1023 = vld [vmem:[#allocation2 + $0x94] sm:$0xf]
      %v1024 = vld [vmem:[#allocation2 + $0x98] sm:$0xf]
      %v1025 = vld [vmem:[#allocation2 + $0x9c] sm:$0xf]
      %v1026 = vld [vmem:[#allocation2 + $0xa0] sm:$0xf]
      %v1027 = vld [vmem:[#allocation2 + $0xa4] sm:$0x7]
      %v1028 = vld [vmem:[%s4] sm:$0xf]
      %v1029 = vld [vmem:[%s4 + $0x4] sm:$0xf]
      %v1030 = vld [vmem:[%s4 + $0x8] sm:$0xf]
      %v1031 = vld [vmem:[%s4 + $0xc] sm:$0xf]
      %v1032 = vld [vmem:[%s4 + $0x10] sm:$0xf]
      %v1033 = vld [vmem:[%s4 + $0x14] sm:$0xf]
      %v1034 = vld [vmem:[%s4 + $0x18] sm:$0xf]
      %v1035 = vld [vmem:[%s4 + $0x1c] sm:$0xf]
      %v1036 = vld [vmem:[%s4 + $0x20] sm:$0xf]
      %v1037 = vld [vmem:[%s4 + $0x24] sm:$0xf]
      %v1038 = vld [vmem:[%s4 + $0x28] sm:$0xf]
      %v1039 = vld [vmem:[%s4 + $0x2c] sm:$0xf]
      %v1040 = vld [vmem:[%s4 + $0x30] sm:$0xf]
      %v1041 = vld [vmem:[%s4 + $0x34] sm:$0xf]
      %v1042 = vld [vmem:[%s4 + $0x38] sm:$0xf]
      %v1043 = vld [vmem:[%s4 + $0x3c] sm:$0xf]
      %v1044 = vld [vmem:[#allocation2] sm:$0x8]
      %s1045 = scalar_lea.vmem %s4, 64
      %v1046 = vld [vmem:[%s1045] sm:$0xf]
      %v1047 = vld [vmem:[%s1045 + $0x4] sm:$0xf]
      %v1048 = vld [vmem:[%s1045 + $0x8] sm:$0xf]
      %v1049 = vld [vmem:[%s1045 + $0xc] sm:$0xf]
      %v1050 = vld [vmem:[%s1045 + $0x10] sm:$0xf]
      %v1051 = vld [vmem:[%s1045 + $0x14] sm:$0xf]
      %v1052 = vld [vmem:[%s1045 + $0x18] sm:$0xf]
      %v1053 = vld [vmem:[%s1045 + $0x1c] sm:$0xf]
      %v1054 = vld [vmem:[%s1045 + $0x20] sm:$0xf]
      %v1055 = vld [vmem:[%s1045 + $0x24] sm:$0xf]
      %v1056 = vld [vmem:[%s1045 + $0x28] sm:$0xf]
      %v1057 = vld [vmem:[%s1045 + $0x2c] sm:$0xf]
      %v1058 = vld [vmem:[%s1045 + $0x30] sm:$0xf]
      %v1059 = vld [vmem:[%s1045 + $0x34] sm:$0xf]
      %v1060 = vld [vmem:[%s1045 + $0x38] sm:$0xf]
      %v1061 = vld [vmem:[%s1045 + $0x3c] sm:$0xf]
      %v1104 = vunpack.c.l.b16 %v1044
      %v1105 = vunpack.c.l.b16 %v987
      %v1106 = vunpack.c.l.b16 %v988
      %v1107 = vunpack.c.l.b16 %v989
      %v1108 = vunpack.c.l.b16 %v990
      %v1109 = vunpack.c.l.b16 %v991
      %v1110 = vunpack.c.l.b16 %v992
      %v1111 = vunpack.c.l.b16 %v993
      %v1112 = vunpack.c.l.b16 %v994
      %v1113 = vunpack.c.l.b16 %v995
      %v1114 = vunpack.c.l.b16 %v996
      %v1115 = vunpack.c.l.b16 %v997
      %v1116 = vunpack.c.l.b16 %v998
      %v1117 = vunpack.c.l.b16 %v999
      %v1118 = vunpack.c.l.b16 %v1000
      %v1119 = vunpack.c.l.b16 %v1001
      %v1120 = vunpack.c.l.b16 %v1002
      %v1121 = vunpack.c.l.b16 %v1003
      %v1122 = vunpack.c.l.b16 %v1004
      %v1123 = vunpack.c.l.b16 %v1005
      %v1124 = vunpack.c.l.b16 %v1006
      %v1125 = vunpack.c.l.b16 %v1007
      %v1126 = vunpack.c.l.b16 %v1008
      %v1127 = vunpack.c.l.b16 %v1009
      %v1128 = vunpack.c.l.b16 %v1010
      %v1129 = vunpack.c.l.b16 %v1011
      %v1130 = vunpack.c.l.b16 %v1012
      %v1131 = vunpack.c.l.b16 %v1013
      %v1132 = vunpack.c.l.b16 %v1014
      %v1133 = vunpack.c.l.b16 %v1015
      %v1134 = vunpack.c.l.b16 %v1016
      %v1135 = vunpack.c.l.b16 %v1017
      %v1136 = vunpack.c.l.b16 %v1018
      %v1137 = vunpack.c.l.b16 %v1019
      %v1138 = vunpack.c.l.b16 %v1020
      %v1139 = vunpack.c.l.b16 %v1021
      %v1140 = vunpack.c.l.b16 %v1022
      %v1141 = vunpack.c.l.b16 %v1023
      %v1142 = vunpack.c.l.b16 %v1024
      %v1143 = vunpack.c.l.b16 %v1025
      %v1144 = vunpack.c.l.b16 %v1026
      %v1145 = vunpack.c.l.b16 %v1027
      %v1146 = vpack.c.b16 %v1105, %v1104
      %v1147 = vpack.c.b16 %v1107, %v1106
      %v1148 = vpack.c.b16 %v1109, %v1108
      %v1149 = vpack.c.b16 %v1111, %v1110
      %v1150 = vpack.c.b16 %v1113, %v1112
      %v1151 = vpack.c.b16 %v1115, %v1114
      %v1152 = vpack.c.b16 %v1117, %v1116
      %v1153 = vpack.c.b16 %v1119, %v1118
      %v1154 = vpack.c.b16 %v1121, %v1120
      %v1155 = vpack.c.b16 %v1123, %v1122
      %v1156 = vpack.c.b16 %v1125, %v1124
      %v1157 = vpack.c.b16 %v1127, %v1126
      %v1158 = vpack.c.b16 %v1129, %v1128
      %v1159 = vpack.c.b16 %v1131, %v1130
      %v1160 = vpack.c.b16 %v1133, %v1132
      %v1161 = vpack.c.b16 %v1135, %v1134
      %v1162 = vpack.c.b16 %v1137, %v1136
      %v1163 = vpack.c.b16 %v1139, %v1138
      %v1164 = vpack.c.b16 %v1141, %v1140
      %v1165 = vpack.c.b16 %v1143, %v1142
      %v1166 = vpack.c.b16 %v1145, %v1144
      %vm1167 = vcmask 1044480
      %v1168 = vrot.slane %v1146, 3
      %v1169 = vrot.slane %v1147, 3
      %v1170 = vsel %vm1167, %v1168, %v1169
      %v1171 = vrot.slane %v1148, 3
      %v1172 = vsel %vm1167, %v1169, %v1171
      %v1173 = vrot.slane %v1149, 3
      %v1174 = vsel %vm1167, %v1171, %v1173
      %v1175 = vrot.slane %v1150, 3
      %v1176 = vsel %vm1167, %v1173, %v1175
      %v1177 = vrot.slane %v1151, 3
      %v1178 = vsel %vm1167, %v1175, %v1177
      %v1179 = vrot.slane %v1152, 3
      %v1180 = vsel %vm1167, %v1177, %v1179
      %v1181 = vrot.slane %v1153, 3
      %v1182 = vsel %vm1167, %v1179, %v1181
      %v1183 = vrot.slane %v1154, 3
      %v1184 = vsel %vm1167, %v1181, %v1183
      %v1185 = vrot.slane %v1155, 3
      %v1186 = vsel %vm1167, %v1183, %v1185
      %v1187 = vrot.slane %v1156, 3
      %v1188 = vsel %vm1167, %v1185, %v1187
      %v1189 = vrot.slane %v1157, 3
      %v1190 = vsel %vm1167, %v1187, %v1189
      %v1191 = vrot.slane %v1158, 3
      %v1192 = vsel %vm1167, %v1189, %v1191
      %v1193 = vrot.slane %v1159, 3
      %v1194 = vsel %vm1167, %v1191, %v1193
      %v1195 = vrot.slane %v1160, 3
      %v1196 = vsel %vm1167, %v1193, %v1195
      %v1197 = vrot.slane %v1161, 3
      %v1198 = vsel %vm1167, %v1195, %v1197
      %v1199 = vrot.slane %v1162, 3
      %v1200 = vsel %vm1167, %v1197, %v1199
      %v1201 = vrot.slane %v1163, 3
      %v1202 = vsel %vm1167, %v1199, %v1201
      %v1203 = vrot.slane %v1164, 3
      %v1204 = vsel %vm1167, %v1201, %v1203
      %v1205 = vrot.slane %v1165, 3
      %v1206 = vsel %vm1167, %v1203, %v1205
      %v1207 = vrot.slane %v1166, 3
      %v1208 = vsel %vm1167, %v1205, %v1207
      %v1246 = vunpack.c.l.b16 %v1046
      %v1247 = vunpack.c.l.b16 %v1047
      %v1248 = vunpack.c.l.b16 %v1048
      %v1249 = vunpack.c.l.b16 %v1049
      %v1250 = vunpack.c.l.b16 %v1050
      %v1251 = vunpack.c.l.b16 %v1051
      %v1252 = vunpack.c.l.b16 %v1052
      %v1253 = vunpack.c.l.b16 %v1053
      %v1254 = vunpack.c.l.b16 %v1054
      %v1255 = vunpack.c.l.b16 %v1055
      %v1256 = vunpack.c.l.b16 %v1056
      %v1257 = vunpack.c.l.b16 %v1057
      %v1258 = vunpack.c.l.b16 %v1058
      %v1259 = vunpack.c.l.b16 %v1059
      %v1260 = vunpack.c.l.b16 %v1060
      %v1261 = vunpack.c.l.b16 %v1061
      %v1262 = vpack.c.b16 %v1247, %v1246
      %v1263 = vpack.c.b16 %v1249, %v1248
      %v1264 = vpack.c.b16 %v1251, %v1250
      %v1265 = vpack.c.b16 %v1253, %v1252
      %v1266 = vpack.c.b16 %v1255, %v1254
      %v1267 = vpack.c.b16 %v1257, %v1256
      %v1268 = vpack.c.b16 %v1259, %v1258
      %v1269 = vpack.c.b16 %v1261, %v1260
      %1278 = vmatprep.subr.bf16.mxu0 0
      %1279 = vmatpush1.bf16.msra.mxu0 %v1269
      %1280 = vmatprep.subr.bf16.mxu0 0
      %1281 = vmatpush1.bf16.msra.mxu0 %v1268
      %1282 = vmatprep.subr.bf16.mxu0 0
      %1283 = vmatpush1.bf16.msra.mxu0 %v1267
      %1284 = vmatprep.subr.bf16.mxu0 0
      %1285 = vmatpush1.bf16.msra.mxu0 %v1266
      %1286 = vmatprep.subr.bf16.mxu0 0
      %1287 = vmatpush1.bf16.msra.mxu0 %v1265
      %1288 = vmatprep.subr.bf16.mxu0 0
      %1289 = vmatpush1.bf16.msra.mxu0 %v1264
      %1290 = vmatprep.subr.bf16.mxu0 0
      %1291 = vmatpush1.bf16.msra.mxu0 %v1263
      %1292 = vmatprep.subr.bf16.mxu0 0
      %1293 = vmatpush1.bf16.msra.mxu0 %v1262
      %1294 = vmatprep.subr.bf16.mxu0 0
      %1295 = vmatpush2.bf16.msra.mxu0 0
      %1296 = vmatprep.subr.bf16.mxu0 0
      %1297 = vmatpush2.bf16.msra.mxu0 0
      %1298 = vmatprep.subr.bf16.mxu0 0
      %1299 = vmatpush2.bf16.msra.mxu0 0
      %1300 = vmatprep.subr.bf16.mxu0 0
      %1301 = vmatpush2.bf16.msra.mxu0 0
      %1302 = vmatprep.subr.bf16.mxu0 0
      %1303 = vmatpush2.bf16.msra.mxu0 0
      %1304 = vmatprep.subr.bf16.mxu0 0
      %1305 = vmatpush2.bf16.msra.mxu0 0
      %1306 = vmatprep.subr.bf16.mxu0 0
      %1307 = vmatpush2.bf16.msra.mxu0 0
      %1308 = vmatprep.subr.bf16.mxu0 0
      %1309 = vmatpush2.bf16.msra.mxu0 0
      %1310 = vmatprep.mubr.bf16.mxu0 0
      %1311 = vmatmul.mubr.bf16.gmra.mxu0 %v1170
      %v1312 = vpop.f32.mrf.mxu0
      %v1313 = vadd.f32 0.0, %v1312
      %v1314 = vpop.f32.mrf.mxu0
      %v1315 = vpop.f32.mrf.mxu0
      %v1316 = vadd.f32 0.0, %v1315
      %v1317 = vpop.f32.mrf.mxu0
      %1318 = vmatprep.mubr.bf16.mxu0 0
      %1319 = vmatmul.mubr.bf16.gmra.mxu0 %v1172
      %v1320 = vpop.f32.mrf.mxu0
      %v1321 = vadd.f32 0.0, %v1320
      %v1322 = vpop.f32.mrf.mxu0
      %v1323 = vpop.f32.mrf.mxu0
      %v1324 = vadd.f32 0.0, %v1323
      %v1325 = vpop.f32.mrf.mxu0
      %1326 = vmatprep.mubr.bf16.mxu0 0
      %1327 = vmatmul.mubr.bf16.gmra.mxu0 %v1174
      %v1328 = vpop.f32.mrf.mxu0
      %v1329 = vadd.f32 0.0, %v1328
      %v1330 = vpop.f32.mrf.mxu0
      %v1331 = vpop.f32.mrf.mxu0
      %v1332 = vadd.f32 0.0, %v1331
      %v1333 = vpop.f32.mrf.mxu0
      %1334 = vmatprep.mubr.bf16.mxu0 0
      %1335 = vmatmul.mubr.bf16.gmra.mxu0 %v1176
      %v1336 = vpop.f32.mrf.mxu0
      %v1337 = vadd.f32 0.0, %v1336
      %v1338 = vpop.f32.mrf.mxu0
      %v1339 = vpop.f32.mrf.mxu0
      %v1340 = vadd.f32 0.0, %v1339
      %v1341 = vpop.f32.mrf.mxu0
      %1342 = vmatprep.mubr.bf16.mxu0 0
      %1343 = vmatmul.mubr.bf16.gmra.mxu0 %v1178
      %v1344 = vpop.f32.mrf.mxu0
      %v1345 = vadd.f32 0.0, %v1344
      %v1346 = vpop.f32.mrf.mxu0
      %v1347 = vpop.f32.mrf.mxu0
      %v1348 = vadd.f32 0.0, %v1347
      %v1349 = vpop.f32.mrf.mxu0
      %1350 = vmatprep.mubr.bf16.mxu0 0
      %1351 = vmatmul.mubr.bf16.gmra.mxu0 %v1180
      %v1352 = vpop.f32.mrf.mxu0
      %v1353 = vadd.f32 0.0, %v1352
      %v1354 = vpop.f32.mrf.mxu0
      %v1355 = vpop.f32.mrf.mxu0
      %v1356 = vadd.f32 0.0, %v1355
      %v1357 = vpop.f32.mrf.mxu0
      %1358 = vmatprep.mubr.bf16.mxu0 0
      %1359 = vmatmul.mubr.bf16.gmra.mxu0 %v1182
      %v1360 = vpop.f32.mrf.mxu0
      %v1361 = vadd.f32 0.0, %v1360
      %v1362 = vpop.f32.mrf.mxu0
      %v1363 = vpop.f32.mrf.mxu0
      %v1364 = vadd.f32 0.0, %v1363
      %v1365 = vpop.f32.mrf.mxu0
      %1366 = vmatprep.mubr.bf16.mxu0 0
      %1367 = vmatmul.mubr.bf16.gmra.mxu0 %v1184
      %v1368 = vpop.f32.mrf.mxu0
      %v1369 = vadd.f32 0.0, %v1368
      %v1370 = vpop.f32.mrf.mxu0
      %v1371 = vpop.f32.mrf.mxu0
      %v1372 = vadd.f32 0.0, %v1371
      %v1373 = vpop.f32.mrf.mxu0
      %1374 = vmatprep.mubr.bf16.mxu0 0
      %1375 = vmatmul.mubr.bf16.gmra.mxu0 %v1186
      %v1376 = vpop.f32.mrf.mxu0
      %v1377 = vadd.f32 0.0, %v1376
      %v1378 = vpop.f32.mrf.mxu0
      %v1379 = vpop.f32.mrf.mxu0
      %v1380 = vadd.f32 0.0, %v1379
      %v1381 = vpop.f32.mrf.mxu0
      %1382 = vmatprep.mubr.bf16.mxu0 0
      %1383 = vmatmul.mubr.bf16.gmra.mxu0 %v1188
      %v1384 = vpop.f32.mrf.mxu0
      %v1385 = vadd.f32 0.0, %v1384
      %v1386 = vpop.f32.mrf.mxu0
      %v1387 = vpop.f32.mrf.mxu0
      %v1388 = vadd.f32 0.0, %v1387
      %v1389 = vpop.f32.mrf.mxu0
      %1390 = vmatprep.mubr.bf16.mxu0 0
      %1391 = vmatmul.mubr.bf16.gmra.mxu0 %v1190
      %v1392 = vpop.f32.mrf.mxu0
      %v1393 = vadd.f32 0.0, %v1392
      %v1394 = vpop.f32.mrf.mxu0
      %v1395 = vpop.f32.mrf.mxu0
      %v1396 = vadd.f32 0.0, %v1395
      %v1397 = vpop.f32.mrf.mxu0
      %1398 = vmatprep.mubr.bf16.mxu0 0
      %1399 = vmatmul.mubr.bf16.gmra.mxu0 %v1192
      %v1400 = vpop.f32.mrf.mxu0
      %v1401 = vadd.f32 0.0, %v1400
      %v1402 = vpop.f32.mrf.mxu0
      %v1403 = vpop.f32.mrf.mxu0
      %v1404 = vadd.f32 0.0, %v1403
      %v1405 = vpop.f32.mrf.mxu0
      %1406 = vmatprep.mubr.bf16.mxu0 0
      %1407 = vmatmul.mubr.bf16.gmra.mxu0 %v1194
      %v1408 = vpop.f32.mrf.mxu0
      %v1409 = vadd.f32 0.0, %v1408
      %v1410 = vpop.f32.mrf.mxu0
      %v1411 = vpop.f32.mrf.mxu0
      %v1412 = vadd.f32 0.0, %v1411
      %v1413 = vpop.f32.mrf.mxu0
      %1414 = vmatprep.mubr.bf16.mxu0 0
      %1415 = vmatmul.mubr.bf16.gmra.mxu0 %v1196
      %v1416 = vpop.f32.mrf.mxu0
      %v1417 = vadd.f32 0.0, %v1416
      %v1418 = vpop.f32.mrf.mxu0
      %v1419 = vpop.f32.mrf.mxu0
      %v1420 = vadd.f32 0.0, %v1419
      %v1421 = vpop.f32.mrf.mxu0
      %1422 = vmatprep.mubr.bf16.mxu0 0
      %1423 = vmatmul.mubr.bf16.gmra.mxu0 %v1198
      %v1424 = vpop.f32.mrf.mxu0
      %v1425 = vadd.f32 0.0, %v1424
      %v1426 = vpop.f32.mrf.mxu0
      %v1427 = vpop.f32.mrf.mxu0
      %v1428 = vadd.f32 0.0, %v1427
      %v1429 = vpop.f32.mrf.mxu0
      %1430 = vmatprep.mubr.bf16.mxu0 0
      %1431 = vmatmul.mubr.bf16.gmra.mxu0 %v1200
      %v1432 = vpop.f32.mrf.mxu0
      %v1433 = vadd.f32 0.0, %v1432
      %v1434 = vpop.f32.mrf.mxu0
      %v1435 = vpop.f32.mrf.mxu0
      %v1436 = vadd.f32 0.0, %v1435
      %v1437 = vpop.f32.mrf.mxu0
      %1438 = vmatprep.mubr.bf16.mxu0 0
      %1439 = vmatmul.mubr.bf16.gmra.mxu0 %v1202
      %v1440 = vpop.f32.mrf.mxu0
      %v1441 = vadd.f32 0.0, %v1440
      %v1442 = vpop.f32.mrf.mxu0
      %v1443 = vpop.f32.mrf.mxu0
      %v1444 = vadd.f32 0.0, %v1443
      %v1445 = vpop.f32.mrf.mxu0
      %1446 = vmatprep.mubr.bf16.mxu0 0
      %1447 = vmatmul.mubr.bf16.gmra.mxu0 %v1204
      %v1448 = vpop.f32.mrf.mxu0
      %v1449 = vadd.f32 0.0, %v1448
      %v1450 = vpop.f32.mrf.mxu0
      %v1451 = vpop.f32.mrf.mxu0
      %v1452 = vadd.f32 0.0, %v1451
      %v1453 = vpop.f32.mrf.mxu0
      %1454 = vmatprep.mubr.bf16.mxu0 0
      %1455 = vmatmul.mubr.bf16.gmra.mxu0 %v1206
      %v1456 = vpop.f32.mrf.mxu0
      %v1457 = vadd.f32 0.0, %v1456
      %v1458 = vpop.f32.mrf.mxu0
      %v1459 = vpop.f32.mrf.mxu0
      %v1460 = vadd.f32 0.0, %v1459
      %v1461 = vpop.f32.mrf.mxu0
      %1462 = vmatprep.mubr.bf16.mxu0 0
      %1463 = vmatmul.mubr.bf16.gmra.mxu0 %v1208
      %v1464 = vpop.f32.mrf.mxu0
      %v1465 = vadd.f32 0.0, %v1464
      %v1466 = vpop.f32.mrf.mxu0
      %v1467 = vpop.f32.mrf.mxu0
      %v1468 = vadd.f32 0.0, %v1467
      %v1469 = vpop.f32.mrf.mxu0
      %1470 = vmatprep.mubr.bf16.mxu0 0
      %1471 = vmatmul.mubr.bf16.gmra.mxu0 %v1207
      %v1472 = vpop.f32.mrf.mxu0
      %v1473 = vadd.f32 0.0, %v1472
      %v1474 = vpop.f32.mrf.mxu0
      %v1475 = vpop.f32.mrf.mxu0
      %v1476 = vpop.f32.mrf.mxu0
      %1477 = vdwg.mxu0
      %v1479 = vunpack.c.l.b16 %v986
      %v1480 = vpack.c.b16 %v1105, %v1479
      %vm1481 = vsmask.f32 5376
      %v1483 = vshrl.u32 %v1480, 16
      %v1485 = vrot.slane %v1483, 2
      %v1486 = vshll.u32 %v1480, 16
      %v1488 = vrot.slane %v1486, 3
      %v1489 = vor.u32 %v1485, %v1488
      %v1491 = vshrl.u32 %v1147, 16
      %v1493 = vrot.slane %v1491, 2
      %v1494 = vshll.u32 %v1147, 16
      %v1496 = vrot.slane %v1494, 3
      %v1497 = vor.u32 %v1493, %v1496
      %v1498 = vsel %vm1481, %v1489, %v1497
      %v1500 = vshrl.u32 %v1148, 16
      %v1502 = vrot.slane %v1500, 2
      %v1503 = vshll.u32 %v1148, 16
      %v1505 = vrot.slane %v1503, 3
      %v1506 = vor.u32 %v1502, %v1505
      %v1507 = vsel %vm1481, %v1497, %v1506
      %v1509 = vshrl.u32 %v1149, 16
      %v1511 = vrot.slane %v1509, 2
      %v1512 = vshll.u32 %v1149, 16
      %v1514 = vrot.slane %v1512, 3
      %v1515 = vor.u32 %v1511, %v1514
      %v1516 = vsel %vm1481, %v1506, %v1515
      %v1518 = vshrl.u32 %v1150, 16
      %v1520 = vrot.slane %v1518, 2
      %v1521 = vshll.u32 %v1150, 16
      %v1523 = vrot.slane %v1521, 3
      %v1524 = vor.u32 %v1520, %v1523
      %v1525 = vsel %vm1481, %v1515, %v1524
      %v1527 = vshrl.u32 %v1151, 16
      %v1529 = vrot.slane %v1527, 2
      %v1530 = vshll.u32 %v1151, 16
      %v1532 = vrot.slane %v1530, 3
      %v1533 = vor.u32 %v1529, %v1532
      %v1534 = vsel %vm1481, %v1524, %v1533
      %v1536 = vshrl.u32 %v1152, 16
      %v1538 = vrot.slane %v1536, 2
      %v1539 = vshll.u32 %v1152, 16
      %v1541 = vrot.slane %v1539, 3
      %v1542 = vor.u32 %v1538, %v1541
      %v1543 = vsel %vm1481, %v1533, %v1542
      %v1545 = vshrl.u32 %v1153, 16
      %v1547 = vrot.slane %v1545, 2
      %v1548 = vshll.u32 %v1153, 16
      %v1550 = vrot.slane %v1548, 3
      %v1551 = vor.u32 %v1547, %v1550
      %v1552 = vsel %vm1481, %v1542, %v1551
      %v1554 = vshrl.u32 %v1154, 16
      %v1556 = vrot.slane %v1554, 2
      %v1557 = vshll.u32 %v1154, 16
      %v1559 = vrot.slane %v1557, 3
      %v1560 = vor.u32 %v1556, %v1559
      %v1561 = vsel %vm1481, %v1551, %v1560
      %v1563 = vshrl.u32 %v1155, 16
      %v1565 = vrot.slane %v1563, 2
      %v1566 = vshll.u32 %v1155, 16
      %v1568 = vrot.slane %v1566, 3
      %v1569 = vor.u32 %v1565, %v1568
      %v1570 = vsel %vm1481, %v1560, %v1569
      %v1572 = vshrl.u32 %v1156, 16
      %v1574 = vrot.slane %v1572, 2
      %v1575 = vshll.u32 %v1156, 16
      %v1577 = vrot.slane %v1575, 3
      %v1578 = vor.u32 %v1574, %v1577
      %v1579 = vsel %vm1481, %v1569, %v1578
      %v1581 = vshrl.u32 %v1157, 16
      %v1583 = vrot.slane %v1581, 2
      %v1584 = vshll.u32 %v1157, 16
      %v1586 = vrot.slane %v1584, 3
      %v1587 = vor.u32 %v1583, %v1586
      %v1588 = vsel %vm1481, %v1578, %v1587
      %v1590 = vshrl.u32 %v1158, 16
      %v1592 = vrot.slane %v1590, 2
      %v1593 = vshll.u32 %v1158, 16
      %v1595 = vrot.slane %v1593, 3
      %v1596 = vor.u32 %v1592, %v1595
      %v1597 = vsel %vm1481, %v1587, %v1596
      %v1599 = vshrl.u32 %v1159, 16
      %v1601 = vrot.slane %v1599, 2
      %v1602 = vshll.u32 %v1159, 16
      %v1604 = vrot.slane %v1602, 3
      %v1605 = vor.u32 %v1601, %v1604
      %v1606 = vsel %vm1481, %v1596, %v1605
      %v1608 = vshrl.u32 %v1160, 16
      %v1610 = vrot.slane %v1608, 2
      %v1611 = vshll.u32 %v1160, 16
      %v1613 = vrot.slane %v1611, 3
      %v1614 = vor.u32 %v1610, %v1613
      %v1615 = vsel %vm1481, %v1605, %v1614
      %v1617 = vshrl.u32 %v1161, 16
      %v1619 = vrot.slane %v1617, 2
      %v1620 = vshll.u32 %v1161, 16
      %v1622 = vrot.slane %v1620, 3
      %v1623 = vor.u32 %v1619, %v1622
      %v1624 = vsel %vm1481, %v1614, %v1623
      %v1626 = vshrl.u32 %v1162, 16
      %v1628 = vrot.slane %v1626, 2
      %v1629 = vshll.u32 %v1162, 16
      %v1631 = vrot.slane %v1629, 3
      %v1632 = vor.u32 %v1628, %v1631
      %v1633 = vsel %vm1481, %v1623, %v1632
      %v1635 = vshrl.u32 %v1163, 16
      %v1637 = vrot.slane %v1635, 2
      %v1638 = vshll.u32 %v1163, 16
      %v1640 = vrot.slane %v1638, 3
      %v1641 = vor.u32 %v1637, %v1640
      %v1642 = vsel %vm1481, %v1632, %v1641
      %v1644 = vshrl.u32 %v1164, 16
      %v1646 = vrot.slane %v1644, 2
      %v1647 = vshll.u32 %v1164, 16
      %v1649 = vrot.slane %v1647, 3
      %v1650 = vor.u32 %v1646, %v1649
      %v1651 = vsel %vm1481, %v1641, %v1650
      %v1653 = vshrl.u32 %v1165, 16
      %v1655 = vrot.slane %v1653, 2
      %v1656 = vshll.u32 %v1165, 16
      %v1658 = vrot.slane %v1656, 3
      %v1659 = vor.u32 %v1655, %v1658
      %v1660 = vsel %vm1481, %v1650, %v1659
      %v1662 = vshrl.u32 %v1166, 16
      %v1664 = vrot.slane %v1662, 2
      %v1665 = vshll.u32 %v1166, 16
      %v1667 = vrot.slane %v1665, 3
      %v1668 = vor.u32 %v1664, %v1667
      %v1669 = vsel %vm1481, %v1659, %v1668
      %v1707 = vunpack.c.l.b16 %v1028
      %v1708 = vunpack.c.l.b16 %v1029
      %v1709 = vunpack.c.l.b16 %v1030
      %v1710 = vunpack.c.l.b16 %v1031
      %v1711 = vunpack.c.l.b16 %v1032
      %v1712 = vunpack.c.l.b16 %v1033
      %v1713 = vunpack.c.l.b16 %v1034
      %v1714 = vunpack.c.l.b16 %v1035
      %v1715 = vunpack.c.l.b16 %v1036
      %v1716 = vunpack.c.l.b16 %v1037
      %v1717 = vunpack.c.l.b16 %v1038
      %v1718 = vunpack.c.l.b16 %v1039
      %v1719 = vunpack.c.l.b16 %v1040
      %v1720 = vunpack.c.l.b16 %v1041
      %v1721 = vunpack.c.l.b16 %v1042
      %v1722 = vunpack.c.l.b16 %v1043
      %v1723 = vpack.c.b16 %v1708, %v1707
      %v1724 = vpack.c.b16 %v1710, %v1709
      %v1725 = vpack.c.b16 %v1712, %v1711
      %v1726 = vpack.c.b16 %v1714, %v1713
      %v1727 = vpack.c.b16 %v1716, %v1715
      %v1728 = vpack.c.b16 %v1718, %v1717
      %v1729 = vpack.c.b16 %v1720, %v1719
      %v1730 = vpack.c.b16 %v1722, %v1721
      %1739 = vmatprep.subr.bf16.mxu0 0
      %1740 = vmatpush1.bf16.msra.mxu0 %v1730
      %1741 = vmatprep.subr.bf16.mxu0 0
      %1742 = vmatpush1.bf16.msra.mxu0 %v1729
      %1743 = vmatprep.subr.bf16.mxu0 0
      %1744 = vmatpush1.bf16.msra.mxu0 %v1728
      %1745 = vmatprep.subr.bf16.mxu0 0
      %1746 = vmatpush1.bf16.msra.mxu0 %v1727
      %1747 = vmatprep.subr.bf16.mxu0 0
      %1748 = vmatpush1.bf16.msra.mxu0 %v1726
      %1749 = vmatprep.subr.bf16.mxu0 0
      %1750 = vmatpush1.bf16.msra.mxu0 %v1725
      %1751 = vmatprep.subr.bf16.mxu0 0
      %1752 = vmatpush1.bf16.msra.mxu0 %v1724
      %1753 = vmatprep.subr.bf16.mxu0 0
      %1754 = vmatpush1.bf16.msra.mxu0 %v1723
      %1755 = vmatprep.subr.bf16.mxu0 0
      %1756 = vmatpush2.bf16.msra.mxu0 0
      %1757 = vmatprep.subr.bf16.mxu0 0
      %1758 = vmatpush2.bf16.msra.mxu0 0
      %1759 = vmatprep.subr.bf16.mxu0 0
      %1760 = vmatpush2.bf16.msra.mxu0 0
      %1761 = vmatprep.subr.bf16.mxu0 0
      %1762 = vmatpush2.bf16.msra.mxu0 0
      %1763 = vmatprep.subr.bf16.mxu0 0
      %1764 = vmatpush2.bf16.msra.mxu0 0
      %1765 = vmatprep.subr.bf16.mxu0 0
      %1766 = vmatpush2.bf16.msra.mxu0 0
      %1767 = vmatprep.subr.bf16.mxu0 0
      %1768 = vmatpush2.bf16.msra.mxu0 0
      %1769 = vmatprep.subr.bf16.mxu0 0
      %1770 = vmatpush2.bf16.msra.mxu0 0
      %1771 = vmatprep.mubr.bf16.mxu0 0
      %1772 = vmatmul.mubr.bf16.gmra.mxu0 %v1498
      %v1773 = vpop.f32.mrf.mxu0
      %v1774 = vadd.f32 %v1313, %v1773
      %v1775 = vpop.f32.mrf.mxu0
      %v1776 = vpop.f32.mrf.mxu0
      %v1777 = vadd.f32 %v1316, %v1776
      %v1778 = vpop.f32.mrf.mxu0
      %1779 = vmatprep.mubr.bf16.mxu0 0
      %1780 = vmatmul.mubr.bf16.gmra.mxu0 %v1507
      %v1781 = vpop.f32.mrf.mxu0
      %v1782 = vadd.f32 %v1321, %v1781
      %v1783 = vpop.f32.mrf.mxu0
      %v1784 = vpop.f32.mrf.mxu0
      %v1785 = vadd.f32 %v1324, %v1784
      %v1786 = vpop.f32.mrf.mxu0
      %1787 = vmatprep.mubr.bf16.mxu0 0
      %1788 = vmatmul.mubr.bf16.gmra.mxu0 %v1516
      %v1789 = vpop.f32.mrf.mxu0
      %v1790 = vadd.f32 %v1329, %v1789
      %v1791 = vpop.f32.mrf.mxu0
      %v1792 = vpop.f32.mrf.mxu0
      %v1793 = vadd.f32 %v1332, %v1792
      %v1794 = vpop.f32.mrf.mxu0
      %1795 = vmatprep.mubr.bf16.mxu0 0
      %1796 = vmatmul.mubr.bf16.gmra.mxu0 %v1525
      %v1797 = vpop.f32.mrf.mxu0
      %v1798 = vadd.f32 %v1337, %v1797
      %v1799 = vpop.f32.mrf.mxu0
      %v1800 = vpop.f32.mrf.mxu0
      %v1801 = vadd.f32 %v1340, %v1800
      %v1802 = vpop.f32.mrf.mxu0
      %1803 = vmatprep.mubr.bf16.mxu0 0
      %1804 = vmatmul.mubr.bf16.gmra.mxu0 %v1534
      %v1805 = vpop.f32.mrf.mxu0
      %v1806 = vadd.f32 %v1345, %v1805
      %v1807 = vpop.f32.mrf.mxu0
      %v1808 = vpop.f32.mrf.mxu0
      %v1809 = vadd.f32 %v1348, %v1808
      %v1810 = vpop.f32.mrf.mxu0
      %1811 = vmatprep.mubr.bf16.mxu0 0
      %1812 = vmatmul.mubr.bf16.gmra.mxu0 %v1543
      %v1813 = vpop.f32.mrf.mxu0
      %v1814 = vadd.f32 %v1353, %v1813
      %v1815 = vpop.f32.mrf.mxu0
      %v1816 = vpop.f32.mrf.mxu0
      %v1817 = vadd.f32 %v1356, %v1816
      %v1818 = vpop.f32.mrf.mxu0
      %1819 = vmatprep.mubr.bf16.mxu0 0
      %1820 = vmatmul.mubr.bf16.gmra.mxu0 %v1552
      %v1821 = vpop.f32.mrf.mxu0
      %v1822 = vadd.f32 %v1361, %v1821
      %v1823 = vpop.f32.mrf.mxu0
      %v1824 = vpop.f32.mrf.mxu0
      %v1825 = vadd.f32 %v1364, %v1824
      %v1826 = vpop.f32.mrf.mxu0
      %1827 = vmatprep.mubr.bf16.mxu0 0
      %1828 = vmatmul.mubr.bf16.gmra.mxu0 %v1561
      %v1829 = vpop.f32.mrf.mxu0
      %v1830 = vadd.f32 %v1369, %v1829
      %v1831 = vpop.f32.mrf.mxu0
      %v1832 = vpop.f32.mrf.mxu0
      %v1833 = vadd.f32 %v1372, %v1832
      %v1834 = vpop.f32.mrf.mxu0
      %1835 = vmatprep.mubr.bf16.mxu0 0
      %1836 = vmatmul.mubr.bf16.gmra.mxu0 %v1570
      %v1837 = vpop.f32.mrf.mxu0
      %v1838 = vadd.f32 %v1377, %v1837
      %v1839 = vpop.f32.mrf.mxu0
      %v1840 = vpop.f32.mrf.mxu0
      %v1841 = vadd.f32 %v1380, %v1840
      %v1842 = vpop.f32.mrf.mxu0
      %1843 = vmatprep.mubr.bf16.mxu0 0
      %1844 = vmatmul.mubr.bf16.gmra.mxu0 %v1579
      %v1845 = vpop.f32.mrf.mxu0
      %v1846 = vadd.f32 %v1385, %v1845
      %v1847 = vpop.f32.mrf.mxu0
      %v1848 = vpop.f32.mrf.mxu0
      %v1849 = vadd.f32 %v1388, %v1848
      %v1850 = vpop.f32.mrf.mxu0
      %1851 = vmatprep.mubr.bf16.mxu0 0
      %1852 = vmatmul.mubr.bf16.gmra.mxu0 %v1588
      %v1853 = vpop.f32.mrf.mxu0
      %v1854 = vadd.f32 %v1393, %v1853
      %v1855 = vpop.f32.mrf.mxu0
      %v1856 = vpop.f32.mrf.mxu0
      %v1857 = vadd.f32 %v1396, %v1856
      %v1858 = vpop.f32.mrf.mxu0
      %1859 = vmatprep.mubr.bf16.mxu0 0
      %1860 = vmatmul.mubr.bf16.gmra.mxu0 %v1597
      %v1861 = vpop.f32.mrf.mxu0
      %v1862 = vadd.f32 %v1401, %v1861
      %v1863 = vpop.f32.mrf.mxu0
      %v1864 = vpop.f32.mrf.mxu0
      %v1865 = vadd.f32 %v1404, %v1864
      %v1866 = vpop.f32.mrf.mxu0
      %1867 = vmatprep.mubr.bf16.mxu0 0
      %1868 = vmatmul.mubr.bf16.gmra.mxu0 %v1606
      %v1869 = vpop.f32.mrf.mxu0
      %v1870 = vadd.f32 %v1409, %v1869
      %v1871 = vpop.f32.mrf.mxu0
      %v1872 = vpop.f32.mrf.mxu0
      %v1873 = vadd.f32 %v1412, %v1872
      %v1874 = vpop.f32.mrf.mxu0
      %1875 = vmatprep.mubr.bf16.mxu0 0
      %1876 = vmatmul.mubr.bf16.gmra.mxu0 %v1615
      %v1877 = vpop.f32.mrf.mxu0
      %v1878 = vadd.f32 %v1417, %v1877
      %v1879 = vpop.f32.mrf.mxu0
      %v1880 = vpop.f32.mrf.mxu0
      %v1881 = vadd.f32 %v1420, %v1880
      %v1882 = vpop.f32.mrf.mxu0
      %1883 = vmatprep.mubr.bf16.mxu0 0
      %1884 = vmatmul.mubr.bf16.gmra.mxu0 %v1624
      %v1885 = vpop.f32.mrf.mxu0
      %v1886 = vadd.f32 %v1425, %v1885
      %v1887 = vpop.f32.mrf.mxu0
      %v1888 = vpop.f32.mrf.mxu0
      %v1889 = vadd.f32 %v1428, %v1888
      %v1890 = vpop.f32.mrf.mxu0
      %1891 = vmatprep.mubr.bf16.mxu0 0
      %1892 = vmatmul.mubr.bf16.gmra.mxu0 %v1633
      %v1893 = vpop.f32.mrf.mxu0
      %v1894 = vadd.f32 %v1433, %v1893
      %v1895 = vpop.f32.mrf.mxu0
      %v1896 = vpop.f32.mrf.mxu0
      %v1897 = vadd.f32 %v1436, %v1896
      %v1898 = vpop.f32.mrf.mxu0
      %1899 = vmatprep.mubr.bf16.mxu0 0
      %1900 = vmatmul.mubr.bf16.gmra.mxu0 %v1642
      %v1901 = vpop.f32.mrf.mxu0
      %v1902 = vadd.f32 %v1441, %v1901
      %v1903 = vpop.f32.mrf.mxu0
      %v1904 = vpop.f32.mrf.mxu0
      %v1905 = vadd.f32 %v1444, %v1904
      %v1906 = vpop.f32.mrf.mxu0
      %1907 = vmatprep.mubr.bf16.mxu0 0
      %1908 = vmatmul.mubr.bf16.gmra.mxu0 %v1651
      %v1909 = vpop.f32.mrf.mxu0
      %v1910 = vadd.f32 %v1449, %v1909
      %v1911 = vpop.f32.mrf.mxu0
      %v1912 = vpop.f32.mrf.mxu0
      %v1913 = vadd.f32 %v1452, %v1912
      %v1914 = vpop.f32.mrf.mxu0
      %1915 = vmatprep.mubr.bf16.mxu0 0
      %1916 = vmatmul.mubr.bf16.gmra.mxu0 %v1660
      %v1917 = vpop.f32.mrf.mxu0
      %v1918 = vadd.f32 %v1457, %v1917
      %v1919 = vpop.f32.mrf.mxu0
      %v1920 = vpop.f32.mrf.mxu0
      %v1921 = vadd.f32 %v1460, %v1920
      %v1922 = vpop.f32.mrf.mxu0
      %1923 = vmatprep.mubr.bf16.mxu0 0
      %1924 = vmatmul.mubr.bf16.gmra.mxu0 %v1669
      %v1925 = vpop.f32.mrf.mxu0
      %v1926 = vadd.f32 %v1465, %v1925
      %v1927 = vpop.f32.mrf.mxu0
      %v1928 = vpop.f32.mrf.mxu0
      %v1929 = vadd.f32 %v1468, %v1928
      %v1930 = vpop.f32.mrf.mxu0
      %1931 = vmatprep.mubr.bf16.mxu0 0
      %1932 = vmatmul.mubr.bf16.gmra.mxu0 %v1668
      %v1933 = vpop.f32.mrf.mxu0
      %v1934 = vadd.f32 %v1473, %v1933
      %v1935 = vpop.f32.mrf.mxu0
      %v1936 = vpop.f32.mrf.mxu0
      %v1937 = vpop.f32.mrf.mxu0
      %1938 = vdwg.mxu0
      %v1939 = vld [vmem:[#allocation2 + $0xa4] sm:$0xf]
      %s1940 = scalar_lea.vmem %s4, 128
      %v1941 = vld [vmem:[%s1940] sm:$0xf]
      %v1942 = vld [vmem:[%s1940 + $0x4] sm:$0xf]
      %v1943 = vld [vmem:[%s1940 + $0x8] sm:$0xf]
      %v1944 = vld [vmem:[%s1940 + $0xc] sm:$0xf]
      %v1945 = vld [vmem:[%s1940 + $0x10] sm:$0xf]
      %v1946 = vld [vmem:[%s1940 + $0x14] sm:$0xf]
      %v1947 = vld [vmem:[%s1940 + $0x18] sm:$0xf]
      %v1948 = vld [vmem:[%s1940 + $0x1c] sm:$0xf]
      %v1949 = vld [vmem:[%s1940 + $0x20] sm:$0xf]
      %v1950 = vld [vmem:[%s1940 + $0x24] sm:$0xf]
      %v1951 = vld [vmem:[%s1940 + $0x28] sm:$0xf]
      %v1952 = vld [vmem:[%s1940 + $0x2c] sm:$0xf]
      %v1953 = vld [vmem:[%s1940 + $0x30] sm:$0xf]
      %v1954 = vld [vmem:[%s1940 + $0x34] sm:$0xf]
      %v1955 = vld [vmem:[%s1940 + $0x38] sm:$0xf]
      %v1956 = vld [vmem:[%s1940 + $0x3c] sm:$0xf]
      %v1958 = vunpack.c.l.b16 %v1939
      %v1959 = vpack.c.b16 %v1958, %v1144
      %vm1960 = vsmask.f32 4352
      %v1962 = vshrl.u32 %v1146, 16
      %v1964 = vrot.slane %v1962, 3
      %v1965 = vshll.u32 %v1146, 16
      %v1967 = vrot.slane %v1965, 4
      %v1968 = vor.u32 %v1964, %v1967
      %v1969 = vrot.slane %v1491, 3
      %v1970 = vrot.slane %v1494, 4
      %v1971 = vor.u32 %v1969, %v1970
      %v1972 = vsel %vm1960, %v1968, %v1971
      %v1973 = vrot.slane %v1500, 3
      %v1974 = vrot.slane %v1503, 4
      %v1975 = vor.u32 %v1973, %v1974
      %v1976 = vsel %vm1960, %v1971, %v1975
      %v1977 = vrot.slane %v1509, 3
      %v1978 = vrot.slane %v1512, 4
      %v1979 = vor.u32 %v1977, %v1978
      %v1980 = vsel %vm1960, %v1975, %v1979
      %v1981 = vrot.slane %v1518, 3
      %v1982 = vrot.slane %v1521, 4
      %v1983 = vor.u32 %v1981, %v1982
      %v1984 = vsel %vm1960, %v1979, %v1983
      %v1985 = vrot.slane %v1527, 3
      %v1986 = vrot.slane %v1530, 4
      %v1987 = vor.u32 %v1985, %v1986
      %v1988 = vsel %vm1960, %v1983, %v1987
      %v1989 = vrot.slane %v1536, 3
      %v1990 = vrot.slane %v1539, 4
      %v1991 = vor.u32 %v1989, %v1990
      %v1992 = vsel %vm1960, %v1987, %v1991
      %v1993 = vrot.slane %v1545, 3
      %v1994 = vrot.slane %v1548, 4
      %v1995 = vor.u32 %v1993, %v1994
      %v1996 = vsel %vm1960, %v1991, %v1995
      %v1997 = vrot.slane %v1554, 3
      %v1998 = vrot.slane %v1557, 4
      %v1999 = vor.u32 %v1997, %v1998
      %v2000 = vsel %vm1960, %v1995, %v1999
      %v2001 = vrot.slane %v1563, 3
      %v2002 = vrot.slane %v1566, 4
      %v2003 = vor.u32 %v2001, %v2002
      %v2004 = vsel %vm1960, %v1999, %v2003
      %v2005 = vrot.slane %v1572, 3
      %v2006 = vrot.slane %v1575, 4
      %v2007 = vor.u32 %v2005, %v2006
      %v2008 = vsel %vm1960, %v2003, %v2007
      %v2009 = vrot.slane %v1581, 3
      %v2010 = vrot.slane %v1584, 4
      %v2011 = vor.u32 %v2009, %v2010
      %v2012 = vsel %vm1960, %v2007, %v2011
      %v2013 = vrot.slane %v1590, 3
      %v2014 = vrot.slane %v1593, 4
      %v2015 = vor.u32 %v2013, %v2014
      %v2016 = vsel %vm1960, %v2011, %v2015
      %v2017 = vrot.slane %v1599, 3
      %v2018 = vrot.slane %v1602, 4
      %v2019 = vor.u32 %v2017, %v2018
      %v2020 = vsel %vm1960, %v2015, %v2019
      %v2021 = vrot.slane %v1608, 3
      %v2022 = vrot.slane %v1611, 4
      %v2023 = vor.u32 %v2021, %v2022
      %v2024 = vsel %vm1960, %v2019, %v2023
      %v2025 = vrot.slane %v1617, 3
      %v2026 = vrot.slane %v1620, 4
      %v2027 = vor.u32 %v2025, %v2026
      %v2028 = vsel %vm1960, %v2023, %v2027
      %v2029 = vrot.slane %v1626, 3
      %v2030 = vrot.slane %v1629, 4
      %v2031 = vor.u32 %v2029, %v2030
      %v2032 = vsel %vm1960, %v2027, %v2031
      %v2033 = vrot.slane %v1635, 3
      %v2034 = vrot.slane %v1638, 4
      %v2035 = vor.u32 %v2033, %v2034
      %v2036 = vsel %vm1960, %v2031, %v2035
      %v2037 = vrot.slane %v1644, 3
      %v2038 = vrot.slane %v1647, 4
      %v2039 = vor.u32 %v2037, %v2038
      %v2040 = vsel %vm1960, %v2035, %v2039
      %v2041 = vrot.slane %v1653, 3
      %v2042 = vrot.slane %v1656, 4
      %v2043 = vor.u32 %v2041, %v2042
      %v2044 = vsel %vm1960, %v2039, %v2043
      %v2046 = vshrl.u32 %v1959, 16
      %v2048 = vrot.slane %v2046, 3
      %v2049 = vshll.u32 %v1959, 16
      %v2051 = vrot.slane %v2049, 4
      %v2052 = vor.u32 %v2048, %v2051
      %v2053 = vsel %vm1960, %v2043, %v2052
      %v2091 = vunpack.c.l.b16 %v1941
      %v2092 = vunpack.c.l.b16 %v1942
      %v2093 = vunpack.c.l.b16 %v1943
      %v2094 = vunpack.c.l.b16 %v1944
      %v2095 = vunpack.c.l.b16 %v1945
      %v2096 = vunpack.c.l.b16 %v1946
      %v2097 = vunpack.c.l.b16 %v1947
      %v2098 = vunpack.c.l.b16 %v1948
      %v2099 = vunpack.c.l.b16 %v1949
      %v2100 = vunpack.c.l.b16 %v1950
      %v2101 = vunpack.c.l.b16 %v1951
      %v2102 = vunpack.c.l.b16 %v1952
      %v2103 = vunpack.c.l.b16 %v1953
      %v2104 = vunpack.c.l.b16 %v1954
      %v2105 = vunpack.c.l.b16 %v1955
      %v2106 = vunpack.c.l.b16 %v1956
      %v2107 = vpack.c.b16 %v2092, %v2091
      %v2108 = vpack.c.b16 %v2094, %v2093
      %v2109 = vpack.c.b16 %v2096, %v2095
      %v2110 = vpack.c.b16 %v2098, %v2097
      %v2111 = vpack.c.b16 %v2100, %v2099
      %v2112 = vpack.c.b16 %v2102, %v2101
      %v2113 = vpack.c.b16 %v2104, %v2103
      %v2114 = vpack.c.b16 %v2106, %v2105
      %2123 = vmatprep.subr.bf16.mxu0 0
      %2124 = vmatpush1.bf16.msra.mxu0 %v2114
      %2125 = vmatprep.subr.bf16.mxu0 0
      %2126 = vmatpush1.bf16.msra.mxu0 %v2113
      %2127 = vmatprep.subr.bf16.mxu0 0
      %2128 = vmatpush1.bf16.msra.mxu0 %v2112
      %2129 = vmatprep.subr.bf16.mxu0 0
      %2130 = vmatpush1.bf16.msra.mxu0 %v2111
      %2131 = vmatprep.subr.bf16.mxu0 0
      %2132 = vmatpush1.bf16.msra.mxu0 %v2110
      %2133 = vmatprep.subr.bf16.mxu0 0
      %2134 = vmatpush1.bf16.msra.mxu0 %v2109
      %2135 = vmatprep.subr.bf16.mxu0 0
      %2136 = vmatpush1.bf16.msra.mxu0 %v2108
      %2137 = vmatprep.subr.bf16.mxu0 0
      %2138 = vmatpush1.bf16.msra.mxu0 %v2107
      %2139 = vmatprep.subr.bf16.mxu0 0
      %2140 = vmatpush2.bf16.msra.mxu0 0
      %2141 = vmatprep.subr.bf16.mxu0 0
      %2142 = vmatpush2.bf16.msra.mxu0 0
      %2143 = vmatprep.subr.bf16.mxu0 0
      %2144 = vmatpush2.bf16.msra.mxu0 0
      %2145 = vmatprep.subr.bf16.mxu0 0
      %2146 = vmatpush2.bf16.msra.mxu0 0
      %2147 = vmatprep.subr.bf16.mxu0 0
      %2148 = vmatpush2.bf16.msra.mxu0 0
      %2149 = vmatprep.subr.bf16.mxu0 0
      %2150 = vmatpush2.bf16.msra.mxu0 0
      %2151 = vmatprep.subr.bf16.mxu0 0
      %2152 = vmatpush2.bf16.msra.mxu0 0
      %2153 = vmatprep.subr.bf16.mxu0 0
      %2154 = vmatpush2.bf16.msra.mxu0 0
      %2155 = vmatprep.mubr.bf16.mxu0 0
      %2156 = vmatmul.mubr.bf16.gmra.mxu0 %v1972
      %v2157 = vpop.f32.mrf.mxu0
      %v2158 = vadd.f32 0.0, %v2157
      %v2159 = vpop.f32.mrf.mxu0
      %v2160 = vpop.f32.mrf.mxu0
      %v2161 = vadd.f32 0.0, %v2160
      %v2162 = vpop.f32.mrf.mxu0
      %2163 = vmatprep.mubr.bf16.mxu0 0
      %2164 = vmatmul.mubr.bf16.gmra.mxu0 %v1976
      %v2165 = vpop.f32.mrf.mxu0
      %v2166 = vadd.f32 0.0, %v2165
      %v2167 = vpop.f32.mrf.mxu0
      %v2168 = vpop.f32.mrf.mxu0
      %v2169 = vadd.f32 0.0, %v2168
      %v2170 = vpop.f32.mrf.mxu0
      %2171 = vmatprep.mubr.bf16.mxu0 0
      %2172 = vmatmul.mubr.bf16.gmra.mxu0 %v1980
      %v2173 = vpop.f32.mrf.mxu0
      %v2174 = vadd.f32 0.0, %v2173
      %v2175 = vpop.f32.mrf.mxu0
      %v2176 = vpop.f32.mrf.mxu0
      %v2177 = vadd.f32 0.0, %v2176
      %v2178 = vpop.f32.mrf.mxu0
      %2179 = vmatprep.mubr.bf16.mxu0 0
      %2180 = vmatmul.mubr.bf16.gmra.mxu0 %v1984
      %v2181 = vpop.f32.mrf.mxu0
      %v2182 = vadd.f32 0.0, %v2181
      %v2183 = vpop.f32.mrf.mxu0
      %v2184 = vpop.f32.mrf.mxu0
      %v2185 = vadd.f32 0.0, %v2184
      %v2186 = vpop.f32.mrf.mxu0
      %2187 = vmatprep.mubr.bf16.mxu0 0
      %2188 = vmatmul.mubr.bf16.gmra.mxu0 %v1988
      %v2189 = vpop.f32.mrf.mxu0
      %v2190 = vadd.f32 0.0, %v2189
      %v2191 = vpop.f32.mrf.mxu0
      %v2192 = vpop.f32.mrf.mxu0
      %v2193 = vadd.f32 0.0, %v2192
      %v2194 = vpop.f32.mrf.mxu0
      %2195 = vmatprep.mubr.bf16.mxu0 0
      %2196 = vmatmul.mubr.bf16.gmra.mxu0 %v1992
      %v2197 = vpop.f32.mrf.mxu0
      %v2198 = vadd.f32 0.0, %v2197
      %v2199 = vpop.f32.mrf.mxu0
      %v2200 = vpop.f32.mrf.mxu0
      %v2201 = vadd.f32 0.0, %v2200
      %v2202 = vpop.f32.mrf.mxu0
      %2203 = vmatprep.mubr.bf16.mxu0 0
      %2204 = vmatmul.mubr.bf16.gmra.mxu0 %v1996
      %v2205 = vpop.f32.mrf.mxu0
      %v2206 = vadd.f32 0.0, %v2205
      %v2207 = vpop.f32.mrf.mxu0
      %v2208 = vpop.f32.mrf.mxu0
      %v2209 = vadd.f32 0.0, %v2208
      %v2210 = vpop.f32.mrf.mxu0
      %2211 = vmatprep.mubr.bf16.mxu0 0
      %2212 = vmatmul.mubr.bf16.gmra.mxu0 %v2000
      %v2213 = vpop.f32.mrf.mxu0
      %v2214 = vadd.f32 0.0, %v2213
      %v2215 = vpop.f32.mrf.mxu0
      %v2216 = vpop.f32.mrf.mxu0
      %v2217 = vadd.f32 0.0, %v2216
      %v2218 = vpop.f32.mrf.mxu0
      %2219 = vmatprep.mubr.bf16.mxu0 0
      %2220 = vmatmul.mubr.bf16.gmra.mxu0 %v2004
      %v2221 = vpop.f32.mrf.mxu0
      %v2222 = vadd.f32 0.0, %v2221
      %v2223 = vpop.f32.mrf.mxu0
      %v2224 = vpop.f32.mrf.mxu0
      %v2225 = vadd.f32 0.0, %v2224
      %v2226 = vpop.f32.mrf.mxu0
      %2227 = vmatprep.mubr.bf16.mxu0 0
      %2228 = vmatmul.mubr.bf16.gmra.mxu0 %v2008
      %v2229 = vpop.f32.mrf.mxu0
      %v2230 = vadd.f32 0.0, %v2229
      %v2231 = vpop.f32.mrf.mxu0
      %v2232 = vpop.f32.mrf.mxu0
      %v2233 = vadd.f32 0.0, %v2232
      %v2234 = vpop.f32.mrf.mxu0
      %2235 = vmatprep.mubr.bf16.mxu0 0
      %2236 = vmatmul.mubr.bf16.gmra.mxu0 %v2012
      %v2237 = vpop.f32.mrf.mxu0
      %v2238 = vadd.f32 0.0, %v2237
      %v2239 = vpop.f32.mrf.mxu0
      %v2240 = vpop.f32.mrf.mxu0
      %v2241 = vadd.f32 0.0, %v2240
      %v2242 = vpop.f32.mrf.mxu0
      %2243 = vmatprep.mubr.bf16.mxu0 0
      %2244 = vmatmul.mubr.bf16.gmra.mxu0 %v2016
      %v2245 = vpop.f32.mrf.mxu0
      %v2246 = vadd.f32 0.0, %v2245
      %v2247 = vpop.f32.mrf.mxu0
      %v2248 = vpop.f32.mrf.mxu0
      %v2249 = vadd.f32 0.0, %v2248
      %v2250 = vpop.f32.mrf.mxu0
      %2251 = vmatprep.mubr.bf16.mxu0 0
      %2252 = vmatmul.mubr.bf16.gmra.mxu0 %v2020
      %v2253 = vpop.f32.mrf.mxu0
      %v2254 = vadd.f32 0.0, %v2253
      %v2255 = vpop.f32.mrf.mxu0
      %v2256 = vpop.f32.mrf.mxu0
      %v2257 = vadd.f32 0.0, %v2256
      %v2258 = vpop.f32.mrf.mxu0
      %2259 = vmatprep.mubr.bf16.mxu0 0
      %2260 = vmatmul.mubr.bf16.gmra.mxu0 %v2024
      %v2261 = vpop.f32.mrf.mxu0
      %v2262 = vadd.f32 0.0, %v2261
      %v2263 = vpop.f32.mrf.mxu0
      %v2264 = vpop.f32.mrf.mxu0
      %v2265 = vadd.f32 0.0, %v2264
      %v2266 = vpop.f32.mrf.mxu0
      %2267 = vmatprep.mubr.bf16.mxu0 0
      %2268 = vmatmul.mubr.bf16.gmra.mxu0 %v2028
      %v2269 = vpop.f32.mrf.mxu0
      %v2270 = vadd.f32 0.0, %v2269
      %v2271 = vpop.f32.mrf.mxu0
      %v2272 = vpop.f32.mrf.mxu0
      %v2273 = vadd.f32 0.0, %v2272
      %v2274 = vpop.f32.mrf.mxu0
      %2275 = vmatprep.mubr.bf16.mxu0 0
      %2276 = vmatmul.mubr.bf16.gmra.mxu0 %v2032
      %v2277 = vpop.f32.mrf.mxu0
      %v2278 = vadd.f32 0.0, %v2277
      %v2279 = vpop.f32.mrf.mxu0
      %v2280 = vpop.f32.mrf.mxu0
      %v2281 = vadd.f32 0.0, %v2280
      %v2282 = vpop.f32.mrf.mxu0
      %2283 = vmatprep.mubr.bf16.mxu0 0
      %2284 = vmatmul.mubr.bf16.gmra.mxu0 %v2036
      %v2285 = vpop.f32.mrf.mxu0
      %v2286 = vadd.f32 0.0, %v2285
      %v2287 = vpop.f32.mrf.mxu0
      %v2288 = vpop.f32.mrf.mxu0
      %v2289 = vadd.f32 0.0, %v2288
      %v2290 = vpop.f32.mrf.mxu0
      %2291 = vmatprep.mubr.bf16.mxu0 0
      %2292 = vmatmul.mubr.bf16.gmra.mxu0 %v2040
      %v2293 = vpop.f32.mrf.mxu0
      %v2294 = vadd.f32 0.0, %v2293
      %v2295 = vpop.f32.mrf.mxu0
      %v2296 = vpop.f32.mrf.mxu0
      %v2297 = vadd.f32 0.0, %v2296
      %v2298 = vpop.f32.mrf.mxu0
      %2299 = vmatprep.mubr.bf16.mxu0 0
      %2300 = vmatmul.mubr.bf16.gmra.mxu0 %v2044
      %v2301 = vpop.f32.mrf.mxu0
      %v2302 = vadd.f32 0.0, %v2301
      %v2303 = vpop.f32.mrf.mxu0
      %v2304 = vpop.f32.mrf.mxu0
      %v2305 = vadd.f32 0.0, %v2304
      %v2306 = vpop.f32.mrf.mxu0
      %2307 = vmatprep.mubr.bf16.mxu0 0
      %2308 = vmatmul.mubr.bf16.gmra.mxu0 %v2053
      %v2309 = vpop.f32.mrf.mxu0
      %v2310 = vadd.f32 0.0, %v2309
      %v2311 = vpop.f32.mrf.mxu0
      %v2312 = vpop.f32.mrf.mxu0
      %v2313 = vadd.f32 0.0, %v2312
      %v2314 = vpop.f32.mrf.mxu0
      %2315 = vmatprep.mubr.bf16.mxu0 0
      %2316 = vmatmul.mubr.bf16.gmra.mxu0 %v2052
      %v2317 = vpop.f32.mrf.mxu0
      %v2318 = vadd.f32 0.0, %v2317
      %v2319 = vpop.f32.mrf.mxu0
      %v2320 = vpop.f32.mrf.mxu0
      %v2321 = vpop.f32.mrf.mxu0
      %2322 = vdwg.mxu0
      %v2323 = vadd.f32 %v1774, %v2158
      %v2324 = vadd.f32 %v1777, %v2161
      %v2325 = vadd.f32 %v1782, %v2166
      %v2326 = vadd.f32 %v1785, %v2169
      %v2327 = vadd.f32 %v1790, %v2174
      %v2328 = vadd.f32 %v1793, %v2177
      %v2329 = vadd.f32 %v1798, %v2182
      %v2330 = vadd.f32 %v1801, %v2185
      %v2331 = vadd.f32 %v1806, %v2190
      %v2332 = vadd.f32 %v1809, %v2193
      %v2333 = vadd.f32 %v1814, %v2198
      %v2334 = vadd.f32 %v1817, %v2201
      %v2335 = vadd.f32 %v1822, %v2206
      %v2336 = vadd.f32 %v1825, %v2209
      %v2337 = vadd.f32 %v1830, %v2214
      %v2338 = vadd.f32 %v1833, %v2217
      %v2339 = vadd.f32 %v1838, %v2222
      %v2340 = vadd.f32 %v1841, %v2225
      %v2341 = vadd.f32 %v1846, %v2230
      %v2342 = vadd.f32 %v1849, %v2233
      %v2343 = vadd.f32 %v1854, %v2238
      %v2344 = vadd.f32 %v1857, %v2241
      %v2345 = vadd.f32 %v1862, %v2246
      %v2346 = vadd.f32 %v1865, %v2249
      %v2347 = vadd.f32 %v1870, %v2254
      %v2348 = vadd.f32 %v1873, %v2257
      %v2349 = vadd.f32 %v1878, %v2262
      %v2350 = vadd.f32 %v1881, %v2265
      %v2351 = vadd.f32 %v1886, %v2270
      %v2352 = vadd.f32 %v1889, %v2273
      %v2353 = vadd.f32 %v1894, %v2278
      %v2354 = vadd.f32 %v1897, %v2281
      %v2355 = vadd.f32 %v1902, %v2286
      %v2356 = vadd.f32 %v1905, %v2289
      %v2357 = vadd.f32 %v1910, %v2294
      %v2358 = vadd.f32 %v1913, %v2297
      %v2359 = vadd.f32 %v1918, %v2302
      %v2360 = vadd.f32 %v1921, %v2305
      %v2361 = vadd.f32 %v1926, %v2310
      %v2362 = vadd.f32 %v1929, %v2313
      %v2363 = vadd.f32 %v1934, %v2318
      %v2364 = vld [vmem:[#allocation2 + $0x8] sm:$0x8]
      %v2365 = vld [vmem:[#allocation2 + $0xc] sm:$0xf]
      %v2366 = vld [vmem:[#allocation2 + $0x10] sm:$0xf]
      %v2367 = vld [vmem:[#allocation2 + $0x14] sm:$0xf]
      %v2368 = vld [vmem:[#allocation2 + $0x18] sm:$0xf]
      %v2369 = vld [vmem:[#allocation2 + $0x1c] sm:$0xf]
      %v2370 = vld [vmem:[#allocation2 + $0x20] sm:$0xf]
      %v2371 = vld [vmem:[#allocation2 + $0x24] sm:$0xf]
      %v2372 = vld [vmem:[#allocation2 + $0x28] sm:$0xf]
      %v2373 = vld [vmem:[#allocation2 + $0x2c] sm:$0xf]
      %v2374 = vld [vmem:[#allocation2 + $0x30] sm:$0xf]
      %v2375 = vld [vmem:[#allocation2 + $0x34] sm:$0xf]
      %v2376 = vld [vmem:[#allocation2 + $0x38] sm:$0xf]
      %v2377 = vld [vmem:[#allocation2 + $0x3c] sm:$0xf]
      %v2378 = vld [vmem:[#allocation2 + $0x40] sm:$0xf]
      %v2379 = vld [vmem:[#allocation2 + $0x44] sm:$0xf]
      %v2380 = vld [vmem:[#allocation2 + $0x48] sm:$0xf]
      %v2381 = vld [vmem:[#allocation2 + $0x4c] sm:$0xf]
      %v2382 = vld [vmem:[#allocation2 + $0x50] sm:$0xf]
      %v2383 = vld [vmem:[#allocation2 + $0x54] sm:$0xf]
      %v2384 = vld [vmem:[#allocation2 + $0x58] sm:$0xf]
      %v2385 = vld [vmem:[#allocation2 + $0x5c] sm:$0xf]
      %v2386 = vld [vmem:[#allocation2 + $0x60] sm:$0xf]
      %v2387 = vld [vmem:[#allocation2 + $0x64] sm:$0xf]
      %v2388 = vld [vmem:[#allocation2 + $0x68] sm:$0xf]
      %v2389 = vld [vmem:[#allocation2 + $0x6c] sm:$0xf]
      %v2390 = vld [vmem:[#allocation2 + $0x70] sm:$0xf]
      %v2391 = vld [vmem:[#allocation2 + $0x74] sm:$0xf]
      %v2392 = vld [vmem:[#allocation2 + $0x78] sm:$0xf]
      %v2393 = vld [vmem:[#allocation2 + $0x7c] sm:$0xf]
      %v2394 = vld [vmem:[#allocation2 + $0x80] sm:$0xf]
      %v2395 = vld [vmem:[#allocation2 + $0x84] sm:$0xf]
      %v2396 = vld [vmem:[#allocation2 + $0x88] sm:$0xf]
      %v2397 = vld [vmem:[#allocation2 + $0x8c] sm:$0xf]
      %v2398 = vld [vmem:[#allocation2 + $0x90] sm:$0xf]
      %v2399 = vld [vmem:[#allocation2 + $0x94] sm:$0xf]
      %v2400 = vld [vmem:[#allocation2 + $0x98] sm:$0xf]
      %v2401 = vld [vmem:[#allocation2 + $0x9c] sm:$0xf]
      %v2402 = vld [vmem:[#allocation2 + $0xa0] sm:$0xf]
      %v2403 = vld [vmem:[#allocation2 + $0xa4] sm:$0xf]
      %v2404 = vld [vmem:[#allocation2 + $0xa8] sm:$0xf]
      %v2405 = vld [vmem:[#allocation2 + $0xac] sm:$0xf]
      %s2406 = scalar_lea.vmem %s4, 192
      %v2407 = vld [vmem:[%s2406] sm:$0xf]
      %v2408 = vld [vmem:[%s2406 + $0x4] sm:$0xf]
      %v2409 = vld [vmem:[%s2406 + $0x8] sm:$0xf]
      %v2410 = vld [vmem:[%s2406 + $0xc] sm:$0xf]
      %v2411 = vld [vmem:[%s2406 + $0x10] sm:$0xf]
      %v2412 = vld [vmem:[%s2406 + $0x14] sm:$0xf]
      %v2413 = vld [vmem:[%s2406 + $0x18] sm:$0xf]
      %v2414 = vld [vmem:[%s2406 + $0x1c] sm:$0xf]
      %v2415 = vld [vmem:[%s2406 + $0x20] sm:$0xf]
      %v2416 = vld [vmem:[%s2406 + $0x24] sm:$0xf]
      %v2417 = vld [vmem:[%s2406 + $0x28] sm:$0xf]
      %v2418 = vld [vmem:[%s2406 + $0x2c] sm:$0xf]
      %v2419 = vld [vmem:[%s2406 + $0x30] sm:$0xf]
      %v2420 = vld [vmem:[%s2406 + $0x34] sm:$0xf]
      %v2421 = vld [vmem:[%s2406 + $0x38] sm:$0xf]
      %v2422 = vld [vmem:[%s2406 + $0x3c] sm:$0xf]
      %v2465 = vunpack.c.l.b16 %v2364
      %v2466 = vunpack.c.l.b16 %v2365
      %v2467 = vunpack.c.l.b16 %v2366
      %v2468 = vunpack.c.l.b16 %v2367
      %v2469 = vunpack.c.l.b16 %v2368
      %v2470 = vunpack.c.l.b16 %v2369
      %v2471 = vunpack.c.l.b16 %v2370
      %v2472 = vunpack.c.l.b16 %v2371
      %v2473 = vunpack.c.l.b16 %v2372
      %v2474 = vunpack.c.l.b16 %v2373
      %v2475 = vunpack.c.l.b16 %v2374
      %v2476 = vunpack.c.l.b16 %v2375
      %v2477 = vunpack.c.l.b16 %v2376
      %v2478 = vunpack.c.l.b16 %v2377
      %v2479 = vunpack.c.l.b16 %v2378
      %v2480 = vunpack.c.l.b16 %v2379
      %v2481 = vunpack.c.l.b16 %v2380
      %v2482 = vunpack.c.l.b16 %v2381
      %v2483 = vunpack.c.l.b16 %v2382
      %v2484 = vunpack.c.l.b16 %v2383
      %v2485 = vunpack.c.l.b16 %v2384
      %v2486 = vunpack.c.l.b16 %v2385
      %v2487 = vunpack.c.l.b16 %v2386
      %v2488 = vunpack.c.l.b16 %v2387
      %v2489 = vunpack.c.l.b16 %v2388
      %v2490 = vunpack.c.l.b16 %v2389
      %v2491 = vunpack.c.l.b16 %v2390
      %v2492 = vunpack.c.l.b16 %v2391
      %v2493 = vunpack.c.l.b16 %v2392
      %v2494 = vunpack.c.l.b16 %v2393
      %v2495 = vunpack.c.l.b16 %v2394
      %v2496 = vunpack.c.l.b16 %v2395
      %v2497 = vunpack.c.l.b16 %v2396
      %v2498 = vunpack.c.l.b16 %v2397
      %v2499 = vunpack.c.l.b16 %v2398
      %v2500 = vunpack.c.l.b16 %v2399
      %v2501 = vunpack.c.l.b16 %v2400
      %v2502 = vunpack.c.l.b16 %v2401
      %v2503 = vunpack.c.l.b16 %v2402
      %v2504 = vunpack.c.l.b16 %v2403
      %v2505 = vunpack.c.l.b16 %v2404
      %v2506 = vunpack.c.l.b16 %v2405
      %v2507 = vpack.c.b16 %v2466, %v2465
      %v2508 = vpack.c.b16 %v2468, %v2467
      %v2509 = vpack.c.b16 %v2470, %v2469
      %v2510 = vpack.c.b16 %v2472, %v2471
      %v2511 = vpack.c.b16 %v2474, %v2473
      %v2512 = vpack.c.b16 %v2476, %v2475
      %v2513 = vpack.c.b16 %v2478, %v2477
      %v2514 = vpack.c.b16 %v2480, %v2479
      %v2515 = vpack.c.b16 %v2482, %v2481
      %v2516 = vpack.c.b16 %v2484, %v2483
      %v2517 = vpack.c.b16 %v2486, %v2485
      %v2518 = vpack.c.b16 %v2488, %v2487
      %v2519 = vpack.c.b16 %v2490, %v2489
      %v2520 = vpack.c.b16 %v2492, %v2491
      %v2521 = vpack.c.b16 %v2494, %v2493
      %v2522 = vpack.c.b16 %v2496, %v2495
      %v2523 = vpack.c.b16 %v2498, %v2497
      %v2524 = vpack.c.b16 %v2500, %v2499
      %v2525 = vpack.c.b16 %v2502, %v2501
      %v2526 = vpack.c.b16 %v2504, %v2503
      %v2527 = vpack.c.b16 %v2506, %v2505
      %v2529 = vshrl.u32 %v2507, 16
      %v2531 = vrot.slane %v2529, 3
      %v2532 = vshll.u32 %v2507, 16
      %v2534 = vrot.slane %v2532, 4
      %v2535 = vor.u32 %v2531, %v2534
      %v2537 = vshrl.u32 %v2508, 16
      %v2539 = vrot.slane %v2537, 3
      %v2540 = vshll.u32 %v2508, 16
      %v2542 = vrot.slane %v2540, 4
      %v2543 = vor.u32 %v2539, %v2542
      %v2544 = vsel %vm1960, %v2535, %v2543
      %v2546 = vshrl.u32 %v2509, 16
      %v2548 = vrot.slane %v2546, 3
      %v2549 = vshll.u32 %v2509, 16
      %v2551 = vrot.slane %v2549, 4
      %v2552 = vor.u32 %v2548, %v2551
      %v2553 = vsel %vm1960, %v2543, %v2552
      %v2555 = vshrl.u32 %v2510, 16
      %v2557 = vrot.slane %v2555, 3
      %v2558 = vshll.u32 %v2510, 16
      %v2560 = vrot.slane %v2558, 4
      %v2561 = vor.u32 %v2557, %v2560
      %v2562 = vsel %vm1960, %v2552, %v2561
      %v2564 = vshrl.u32 %v2511, 16
      %v2566 = vrot.slane %v2564, 3
      %v2567 = vshll.u32 %v2511, 16
      %v2569 = vrot.slane %v2567, 4
      %v2570 = vor.u32 %v2566, %v2569
      %v2571 = vsel %vm1960, %v2561, %v2570
      %v2573 = vshrl.u32 %v2512, 16
      %v2575 = vrot.slane %v2573, 3
      %v2576 = vshll.u32 %v2512, 16
      %v2578 = vrot.slane %v2576, 4
      %v2579 = vor.u32 %v2575, %v2578
      %v2580 = vsel %vm1960, %v2570, %v2579
      %v2582 = vshrl.u32 %v2513, 16
      %v2584 = vrot.slane %v2582, 3
      %v2585 = vshll.u32 %v2513, 16
      %v2587 = vrot.slane %v2585, 4
      %v2588 = vor.u32 %v2584, %v2587
      %v2589 = vsel %vm1960, %v2579, %v2588
      %v2591 = vshrl.u32 %v2514, 16
      %v2593 = vrot.slane %v2591, 3
      %v2594 = vshll.u32 %v2514, 16
      %v2596 = vrot.slane %v2594, 4
      %v2597 = vor.u32 %v2593, %v2596
      %v2598 = vsel %vm1960, %v2588, %v2597
      %v2600 = vshrl.u32 %v2515, 16
      %v2602 = vrot.slane %v2600, 3
      %v2603 = vshll.u32 %v2515, 16
      %v2605 = vrot.slane %v2603, 4
      %v2606 = vor.u32 %v2602, %v2605
      %v2607 = vsel %vm1960, %v2597, %v2606
      %v2609 = vshrl.u32 %v2516, 16
      %v2611 = vrot.slane %v2609, 3
      %v2612 = vshll.u32 %v2516, 16
      %v2614 = vrot.slane %v2612, 4
      %v2615 = vor.u32 %v2611, %v2614
      %v2616 = vsel %vm1960, %v2606, %v2615
      %v2618 = vshrl.u32 %v2517, 16
      %v2620 = vrot.slane %v2618, 3
      %v2621 = vshll.u32 %v2517, 16
      %v2623 = vrot.slane %v2621, 4
      %v2624 = vor.u32 %v2620, %v2623
      %v2625 = vsel %vm1960, %v2615, %v2624
      %v2627 = vshrl.u32 %v2518, 16
      %v2629 = vrot.slane %v2627, 3
      %v2630 = vshll.u32 %v2518, 16
      %v2632 = vrot.slane %v2630, 4
      %v2633 = vor.u32 %v2629, %v2632
      %v2634 = vsel %vm1960, %v2624, %v2633
      %v2636 = vshrl.u32 %v2519, 16
      %v2638 = vrot.slane %v2636, 3
      %v2639 = vshll.u32 %v2519, 16
      %v2641 = vrot.slane %v2639, 4
      %v2642 = vor.u32 %v2638, %v2641
      %v2643 = vsel %vm1960, %v2633, %v2642
      %v2645 = vshrl.u32 %v2520, 16
      %v2647 = vrot.slane %v2645, 3
      %v2648 = vshll.u32 %v2520, 16
      %v2650 = vrot.slane %v2648, 4
      %v2651 = vor.u32 %v2647, %v2650
      %v2652 = vsel %vm1960, %v2642, %v2651
      %v2654 = vshrl.u32 %v2521, 16
      %v2656 = vrot.slane %v2654, 3
      %v2657 = vshll.u32 %v2521, 16
      %v2659 = vrot.slane %v2657, 4
      %v2660 = vor.u32 %v2656, %v2659
      %v2661 = vsel %vm1960, %v2651, %v2660
      %v2663 = vshrl.u32 %v2522, 16
      %v2665 = vrot.slane %v2663, 3
      %v2666 = vshll.u32 %v2522, 16
      %v2668 = vrot.slane %v2666, 4
      %v2669 = vor.u32 %v2665, %v2668
      %v2670 = vsel %vm1960, %v2660, %v2669
      %v2672 = vshrl.u32 %v2523, 16
      %v2674 = vrot.slane %v2672, 3
      %v2675 = vshll.u32 %v2523, 16
      %v2677 = vrot.slane %v2675, 4
      %v2678 = vor.u32 %v2674, %v2677
      %v2679 = vsel %vm1960, %v2669, %v2678
      %v2681 = vshrl.u32 %v2524, 16
      %v2683 = vrot.slane %v2681, 3
      %v2684 = vshll.u32 %v2524, 16
      %v2686 = vrot.slane %v2684, 4
      %v2687 = vor.u32 %v2683, %v2686
      %v2688 = vsel %vm1960, %v2678, %v2687
      %v2690 = vshrl.u32 %v2525, 16
      %v2692 = vrot.slane %v2690, 3
      %v2693 = vshll.u32 %v2525, 16
      %v2695 = vrot.slane %v2693, 4
      %v2696 = vor.u32 %v2692, %v2695
      %v2697 = vsel %vm1960, %v2687, %v2696
      %v2699 = vshrl.u32 %v2526, 16
      %v2701 = vrot.slane %v2699, 3
      %v2702 = vshll.u32 %v2526, 16
      %v2704 = vrot.slane %v2702, 4
      %v2705 = vor.u32 %v2701, %v2704
      %v2706 = vsel %vm1960, %v2696, %v2705
      %v2708 = vshrl.u32 %v2527, 16
      %v2710 = vrot.slane %v2708, 3
      %v2711 = vshll.u32 %v2527, 16
      %v2713 = vrot.slane %v2711, 4
      %v2714 = vor.u32 %v2710, %v2713
      %v2715 = vsel %vm1960, %v2705, %v2714
      %v2753 = vunpack.c.l.b16 %v2407
      %v2754 = vunpack.c.l.b16 %v2408
      %v2755 = vunpack.c.l.b16 %v2409
      %v2756 = vunpack.c.l.b16 %v2410
      %v2757 = vunpack.c.l.b16 %v2411
      %v2758 = vunpack.c.l.b16 %v2412
      %v2759 = vunpack.c.l.b16 %v2413
      %v2760 = vunpack.c.l.b16 %v2414
      %v2761 = vunpack.c.l.b16 %v2415
      %v2762 = vunpack.c.l.b16 %v2416
      %v2763 = vunpack.c.l.b16 %v2417
      %v2764 = vunpack.c.l.b16 %v2418
      %v2765 = vunpack.c.l.b16 %v2419
      %v2766 = vunpack.c.l.b16 %v2420
      %v2767 = vunpack.c.l.b16 %v2421
      %v2768 = vunpack.c.l.b16 %v2422
      %v2769 = vpack.c.b16 %v2754, %v2753
      %v2770 = vpack.c.b16 %v2756, %v2755
      %v2771 = vpack.c.b16 %v2758, %v2757
      %v2772 = vpack.c.b16 %v2760, %v2759
      %v2773 = vpack.c.b16 %v2762, %v2761
      %v2774 = vpack.c.b16 %v2764, %v2763
      %v2775 = vpack.c.b16 %v2766, %v2765
      %v2776 = vpack.c.b16 %v2768, %v2767
      %2785 = vmatprep.subr.bf16.mxu0 0
      %2786 = vmatpush1.bf16.msra.mxu0 %v2776
      %2787 = vmatprep.subr.bf16.mxu0 0
      %2788 = vmatpush1.bf16.msra.mxu0 %v2775
      %2789 = vmatprep.subr.bf16.mxu0 0
      %2790 = vmatpush1.bf16.msra.mxu0 %v2774
      %2791 = vmatprep.subr.bf16.mxu0 0
      %2792 = vmatpush1.bf16.msra.mxu0 %v2773
      %2793 = vmatprep.subr.bf16.mxu0 0
      %2794 = vmatpush1.bf16.msra.mxu0 %v2772
      %2795 = vmatprep.subr.bf16.mxu0 0
      %2796 = vmatpush1.bf16.msra.mxu0 %v2771
      %2797 = vmatprep.subr.bf16.mxu0 0
      %2798 = vmatpush1.bf16.msra.mxu0 %v2770
      %2799 = vmatprep.subr.bf16.mxu0 0
      %2800 = vmatpush1.bf16.msra.mxu0 %v2769
      %2801 = vmatprep.subr.bf16.mxu0 0
      %2802 = vmatpush2.bf16.msra.mxu0 0
      %2803 = vmatprep.subr.bf16.mxu0 0
      %2804 = vmatpush2.bf16.msra.mxu0 0
      %2805 = vmatprep.subr.bf16.mxu0 0
      %2806 = vmatpush2.bf16.msra.mxu0 0
      %2807 = vmatprep.subr.bf16.mxu0 0
      %2808 = vmatpush2.bf16.msra.mxu0 0
      %2809 = vmatprep.subr.bf16.mxu0 0
      %2810 = vmatpush2.bf16.msra.mxu0 0
      %2811 = vmatprep.subr.bf16.mxu0 0
      %2812 = vmatpush2.bf16.msra.mxu0 0
      %2813 = vmatprep.subr.bf16.mxu0 0
      %2814 = vmatpush2.bf16.msra.mxu0 0
      %2815 = vmatprep.subr.bf16.mxu0 0
      %2816 = vmatpush2.bf16.msra.mxu0 0
      %2817 = vmatprep.mubr.bf16.mxu0 0
      %2818 = vmatmul.mubr.bf16.gmra.mxu0 %v2544
      %v2819 = vpop.f32.mrf.mxu0
      %v2820 = vadd.f32 0.0, %v2819
      %v2821 = vpop.f32.mrf.mxu0
      %v2822 = vpop.f32.mrf.mxu0
      %v2823 = vadd.f32 0.0, %v2822
      %v2824 = vpop.f32.mrf.mxu0
      %2825 = vmatprep.mubr.bf16.mxu0 0
      %2826 = vmatmul.mubr.bf16.gmra.mxu0 %v2553
      %v2827 = vpop.f32.mrf.mxu0
      %v2828 = vadd.f32 0.0, %v2827
      %v2829 = vpop.f32.mrf.mxu0
      %v2830 = vpop.f32.mrf.mxu0
      %v2831 = vadd.f32 0.0, %v2830
      %v2832 = vpop.f32.mrf.mxu0
      %2833 = vmatprep.mubr.bf16.mxu0 0
      %2834 = vmatmul.mubr.bf16.gmra.mxu0 %v2562
      %v2835 = vpop.f32.mrf.mxu0
      %v2836 = vadd.f32 0.0, %v2835
      %v2837 = vpop.f32.mrf.mxu0
      %v2838 = vpop.f32.mrf.mxu0
      %v2839 = vadd.f32 0.0, %v2838
      %v2840 = vpop.f32.mrf.mxu0
      %2841 = vmatprep.mubr.bf16.mxu0 0
      %2842 = vmatmul.mubr.bf16.gmra.mxu0 %v2571
      %v2843 = vpop.f32.mrf.mxu0
      %v2844 = vadd.f32 0.0, %v2843
      %v2845 = vpop.f32.mrf.mxu0
      %v2846 = vpop.f32.mrf.mxu0
      %v2847 = vadd.f32 0.0, %v2846
      %v2848 = vpop.f32.mrf.mxu0
      %2849 = vmatprep.mubr.bf16.mxu0 0
      %2850 = vmatmul.mubr.bf16.gmra.mxu0 %v2580
      %v2851 = vpop.f32.mrf.mxu0
      %v2852 = vadd.f32 0.0, %v2851
      %v2853 = vpop.f32.mrf.mxu0
      %v2854 = vpop.f32.mrf.mxu0
      %v2855 = vadd.f32 0.0, %v2854
      %v2856 = vpop.f32.mrf.mxu0
      %2857 = vmatprep.mubr.bf16.mxu0 0
      %2858 = vmatmul.mubr.bf16.gmra.mxu0 %v2589
      %v2859 = vpop.f32.mrf.mxu0
      %v2860 = vadd.f32 0.0, %v2859
      %v2861 = vpop.f32.mrf.mxu0
      %v2862 = vpop.f32.mrf.mxu0
      %v2863 = vadd.f32 0.0, %v2862
      %v2864 = vpop.f32.mrf.mxu0
      %2865 = vmatprep.mubr.bf16.mxu0 0
      %2866 = vmatmul.mubr.bf16.gmra.mxu0 %v2598
      %v2867 = vpop.f32.mrf.mxu0
      %v2868 = vadd.f32 0.0, %v2867
      %v2869 = vpop.f32.mrf.mxu0
      %v2870 = vpop.f32.mrf.mxu0
      %v2871 = vadd.f32 0.0, %v2870
      %v2872 = vpop.f32.mrf.mxu0
      %2873 = vmatprep.mubr.bf16.mxu0 0
      %2874 = vmatmul.mubr.bf16.gmra.mxu0 %v2607
      %v2875 = vpop.f32.mrf.mxu0
      %v2876 = vadd.f32 0.0, %v2875
      %v2877 = vpop.f32.mrf.mxu0
      %v2878 = vpop.f32.mrf.mxu0
      %v2879 = vadd.f32 0.0, %v2878
      %v2880 = vpop.f32.mrf.mxu0
      %2881 = vmatprep.mubr.bf16.mxu0 0
      %2882 = vmatmul.mubr.bf16.gmra.mxu0 %v2616
      %v2883 = vpop.f32.mrf.mxu0
      %v2884 = vadd.f32 0.0, %v2883
      %v2885 = vpop.f32.mrf.mxu0
      %v2886 = vpop.f32.mrf.mxu0
      %v2887 = vadd.f32 0.0, %v2886
      %v2888 = vpop.f32.mrf.mxu0
      %2889 = vmatprep.mubr.bf16.mxu0 0
      %2890 = vmatmul.mubr.bf16.gmra.mxu0 %v2625
      %v2891 = vpop.f32.mrf.mxu0
      %v2892 = vadd.f32 0.0, %v2891
      %v2893 = vpop.f32.mrf.mxu0
      %v2894 = vpop.f32.mrf.mxu0
      %v2895 = vadd.f32 0.0, %v2894
      %v2896 = vpop.f32.mrf.mxu0
      %2897 = vmatprep.mubr.bf16.mxu0 0
      %2898 = vmatmul.mubr.bf16.gmra.mxu0 %v2634
      %v2899 = vpop.f32.mrf.mxu0
      %v2900 = vadd.f32 0.0, %v2899
      %v2901 = vpop.f32.mrf.mxu0
      %v2902 = vpop.f32.mrf.mxu0
      %v2903 = vadd.f32 0.0, %v2902
      %v2904 = vpop.f32.mrf.mxu0
      %2905 = vmatprep.mubr.bf16.mxu0 0
      %2906 = vmatmul.mubr.bf16.gmra.mxu0 %v2643
      %v2907 = vpop.f32.mrf.mxu0
      %v2908 = vadd.f32 0.0, %v2907
      %v2909 = vpop.f32.mrf.mxu0
      %v2910 = vpop.f32.mrf.mxu0
      %v2911 = vadd.f32 0.0, %v2910
      %v2912 = vpop.f32.mrf.mxu0
      %2913 = vmatprep.mubr.bf16.mxu0 0
      %2914 = vmatmul.mubr.bf16.gmra.mxu0 %v2652
      %v2915 = vpop.f32.mrf.mxu0
      %v2916 = vadd.f32 0.0, %v2915
      %v2917 = vpop.f32.mrf.mxu0
      %v2918 = vpop.f32.mrf.mxu0
      %v2919 = vadd.f32 0.0, %v2918
      %v2920 = vpop.f32.mrf.mxu0
      %2921 = vmatprep.mubr.bf16.mxu0 0
      %2922 = vmatmul.mubr.bf16.gmra.mxu0 %v2661
      %v2923 = vpop.f32.mrf.mxu0
      %v2924 = vadd.f32 0.0, %v2923
      %v2925 = vpop.f32.mrf.mxu0
      %v2926 = vpop.f32.mrf.mxu0
      %v2927 = vadd.f32 0.0, %v2926
      %v2928 = vpop.f32.mrf.mxu0
      %2929 = vmatprep.mubr.bf16.mxu0 0
      %2930 = vmatmul.mubr.bf16.gmra.mxu0 %v2670
      %v2931 = vpop.f32.mrf.mxu0
      %v2932 = vadd.f32 0.0, %v2931
      %v2933 = vpop.f32.mrf.mxu0
      %v2934 = vpop.f32.mrf.mxu0
      %v2935 = vadd.f32 0.0, %v2934
      %v2936 = vpop.f32.mrf.mxu0
      %2937 = vmatprep.mubr.bf16.mxu0 0
      %2938 = vmatmul.mubr.bf16.gmra.mxu0 %v2679
      %v2939 = vpop.f32.mrf.mxu0
      %v2940 = vadd.f32 0.0, %v2939
      %v2941 = vpop.f32.mrf.mxu0
      %v2942 = vpop.f32.mrf.mxu0
      %v2943 = vadd.f32 0.0, %v2942
      %v2944 = vpop.f32.mrf.mxu0
      %2945 = vmatprep.mubr.bf16.mxu0 0
      %2946 = vmatmul.mubr.bf16.gmra.mxu0 %v2688
      %v2947 = vpop.f32.mrf.mxu0
      %v2948 = vadd.f32 0.0, %v2947
      %v2949 = vpop.f32.mrf.mxu0
      %v2950 = vpop.f32.mrf.mxu0
      %v2951 = vadd.f32 0.0, %v2950
      %v2952 = vpop.f32.mrf.mxu0
      %2953 = vmatprep.mubr.bf16.mxu0 0
      %2954 = vmatmul.mubr.bf16.gmra.mxu0 %v2697
      %v2955 = vpop.f32.mrf.mxu0
      %v2956 = vadd.f32 0.0, %v2955
      %v2957 = vpop.f32.mrf.mxu0
      %v2958 = vpop.f32.mrf.mxu0
      %v2959 = vadd.f32 0.0, %v2958
      %v2960 = vpop.f32.mrf.mxu0
      %2961 = vmatprep.mubr.bf16.mxu0 0
      %2962 = vmatmul.mubr.bf16.gmra.mxu0 %v2706
      %v2963 = vpop.f32.mrf.mxu0
      %v2964 = vadd.f32 0.0, %v2963
      %v2965 = vpop.f32.mrf.mxu0
      %v2966 = vpop.f32.mrf.mxu0
      %v2967 = vadd.f32 0.0, %v2966
      %v2968 = vpop.f32.mrf.mxu0
      %2969 = vmatprep.mubr.bf16.mxu0 0
      %2970 = vmatmul.mubr.bf16.gmra.mxu0 %v2715
      %v2971 = vpop.f32.mrf.mxu0
      %v2972 = vadd.f32 0.0, %v2971
      %v2973 = vpop.f32.mrf.mxu0
      %v2974 = vpop.f32.mrf.mxu0
      %v2975 = vadd.f32 0.0, %v2974
      %v2976 = vpop.f32.mrf.mxu0
      %2977 = vmatprep.mubr.bf16.mxu0 0
      %2978 = vmatmul.mubr.bf16.gmra.mxu0 %v2714
      %v2979 = vpop.f32.mrf.mxu0
      %v2980 = vadd.f32 0.0, %v2979
      %v2981 = vpop.f32.mrf.mxu0
      %v2982 = vpop.f32.mrf.mxu0
      %v2983 = vpop.f32.mrf.mxu0
      %2984 = vdwg.mxu0
      %v2985 = vadd.f32 %v2323, %v2820
      %v2986 = vadd.f32 %v2324, %v2823
      %v2987 = vadd.f32 %v2325, %v2828
      %v2988 = vadd.f32 %v2326, %v2831
      %v2989 = vadd.f32 %v2327, %v2836
      %v2990 = vadd.f32 %v2328, %v2839
      %v2991 = vadd.f32 %v2329, %v2844
      %v2992 = vadd.f32 %v2330, %v2847
      %v2993 = vadd.f32 %v2331, %v2852
      %v2994 = vadd.f32 %v2332, %v2855
      %v2995 = vadd.f32 %v2333, %v2860
      %v2996 = vadd.f32 %v2334, %v2863
      %v2997 = vadd.f32 %v2335, %v2868
      %v2998 = vadd.f32 %v2336, %v2871
      %v2999 = vadd.f32 %v2337, %v2876
      %v3000 = vadd.f32 %v2338, %v2879
      %v3001 = vadd.f32 %v2339, %v2884
      %v3002 = vadd.f32 %v2340, %v2887
      %v3003 = vadd.f32 %v2341, %v2892
      %v3004 = vadd.f32 %v2342, %v2895
      %v3005 = vadd.f32 %v2343, %v2900
      %v3006 = vadd.f32 %v2344, %v2903
      %v3007 = vadd.f32 %v2345, %v2908
      %v3008 = vadd.f32 %v2346, %v2911
      %v3009 = vadd.f32 %v2347, %v2916
      %v3010 = vadd.f32 %v2348, %v2919
      %v3011 = vadd.f32 %v2349, %v2924
      %v3012 = vadd.f32 %v2350, %v2927
      %v3013 = vadd.f32 %v2351, %v2932
      %v3014 = vadd.f32 %v2352, %v2935
      %v3015 = vadd.f32 %v2353, %v2940
      %v3016 = vadd.f32 %v2354, %v2943
      %v3017 = vadd.f32 %v2355, %v2948
      %v3018 = vadd.f32 %v2356, %v2951
      %v3019 = vadd.f32 %v2357, %v2956
      %v3020 = vadd.f32 %v2358, %v2959
      %v3021 = vadd.f32 %v2359, %v2964
      %v3022 = vadd.f32 %v2360, %v2967
      %v3023 = vadd.f32 %v2361, %v2972
      %v3024 = vadd.f32 %v2362, %v2975
      %v3025 = vadd.f32 %v2363, %v2980
      %s3026 = scalar_lea.vmem %s4, 256
      %v3027 = vld [vmem:[%s3026] sm:$0xf]
      %v3028 = vld [vmem:[%s3026 + $0x4] sm:$0xf]
      %v3029 = vld [vmem:[%s3026 + $0x8] sm:$0xf]
      %v3030 = vld [vmem:[%s3026 + $0xc] sm:$0xf]
      %v3031 = vld [vmem:[%s3026 + $0x10] sm:$0xf]
      %v3032 = vld [vmem:[%s3026 + $0x14] sm:$0xf]
      %v3033 = vld [vmem:[%s3026 + $0x18] sm:$0xf]
      %v3034 = vld [vmem:[%s3026 + $0x1c] sm:$0xf]
      %v3035 = vld [vmem:[%s3026 + $0x20] sm:$0xf]
      %v3036 = vld [vmem:[%s3026 + $0x24] sm:$0xf]
      %v3037 = vld [vmem:[%s3026 + $0x28] sm:$0xf]
      %v3038 = vld [vmem:[%s3026 + $0x2c] sm:$0xf]
      %v3039 = vld [vmem:[%s3026 + $0x30] sm:$0xf]
      %v3040 = vld [vmem:[%s3026 + $0x34] sm:$0xf]
      %v3041 = vld [vmem:[%s3026 + $0x38] sm:$0xf]
      %v3042 = vld [vmem:[%s3026 + $0x3c] sm:$0xf]
      %v3043 = vpack.c.b16 %v2467, %v2466
      %v3044 = vpack.c.b16 %v2469, %v2468
      %v3045 = vpack.c.b16 %v2471, %v2470
      %v3046 = vpack.c.b16 %v2473, %v2472
      %v3047 = vpack.c.b16 %v2475, %v2474
      %v3048 = vpack.c.b16 %v2477, %v2476
      %v3049 = vpack.c.b16 %v2479, %v2478
      %v3050 = vpack.c.b16 %v2481, %v2480
      %v3051 = vpack.c.b16 %v2483, %v2482
      %v3052 = vpack.c.b16 %v2485, %v2484
      %v3053 = vpack.c.b16 %v2487, %v2486
      %v3054 = vpack.c.b16 %v2489, %v2488
      %v3055 = vpack.c.b16 %v2491, %v2490
      %v3056 = vpack.c.b16 %v2493, %v2492
      %v3057 = vpack.c.b16 %v2495, %v2494
      %v3058 = vpack.c.b16 %v2497, %v2496
      %v3059 = vpack.c.b16 %v2499, %v2498
      %v3060 = vpack.c.b16 %v2501, %v2500
      %v3061 = vpack.c.b16 %v2503, %v2502
      %v3062 = vpack.c.b16 %v2505, %v2504
      %v3063 = vpack.c.b16 %v2506, %v2506
      %v3101 = vunpack.c.l.b16 %v3027
      %v3102 = vunpack.c.l.b16 %v3028
      %v3103 = vunpack.c.l.b16 %v3029
      %v3104 = vunpack.c.l.b16 %v3030
      %v3105 = vunpack.c.l.b16 %v3031
      %v3106 = vunpack.c.l.b16 %v3032
      %v3107 = vunpack.c.l.b16 %v3033
      %v3108 = vunpack.c.l.b16 %v3034
      %v3109 = vunpack.c.l.b16 %v3035
      %v3110 = vunpack.c.l.b16 %v3036
      %v3111 = vunpack.c.l.b16 %v3037
      %v3112 = vunpack.c.l.b16 %v3038
      %v3113 = vunpack.c.l.b16 %v3039
      %v3114 = vunpack.c.l.b16 %v3040
      %v3115 = vunpack.c.l.b16 %v3041
      %v3116 = vunpack.c.l.b16 %v3042
      %v3117 = vpack.c.b16 %v3102, %v3101
      %v3118 = vpack.c.b16 %v3104, %v3103
      %v3119 = vpack.c.b16 %v3106, %v3105
      %v3120 = vpack.c.b16 %v3108, %v3107
      %v3121 = vpack.c.b16 %v3110, %v3109
      %v3122 = vpack.c.b16 %v3112, %v3111
      %v3123 = vpack.c.b16 %v3114, %v3113
      %v3124 = vpack.c.b16 %v3116, %v3115
      %3133 = vmatprep.subr.bf16.mxu0 0
      %3134 = vmatpush1.bf16.msra.mxu0 %v3124
      %3135 = vmatprep.subr.bf16.mxu0 0
      %3136 = vmatpush1.bf16.msra.mxu0 %v3123
      %3137 = vmatprep.subr.bf16.mxu0 0
      %3138 = vmatpush1.bf16.msra.mxu0 %v3122
      %3139 = vmatprep.subr.bf16.mxu0 0
      %3140 = vmatpush1.bf16.msra.mxu0 %v3121
      %3141 = vmatprep.subr.bf16.mxu0 0
      %3142 = vmatpush1.bf16.msra.mxu0 %v3120
      %3143 = vmatprep.subr.bf16.mxu0 0
      %3144 = vmatpush1.bf16.msra.mxu0 %v3119
      %3145 = vmatprep.subr.bf16.mxu0 0
      %3146 = vmatpush1.bf16.msra.mxu0 %v3118
      %3147 = vmatprep.subr.bf16.mxu0 0
      %3148 = vmatpush1.bf16.msra.mxu0 %v3117
      %3149 = vmatprep.subr.bf16.mxu0 0
      %3150 = vmatpush2.bf16.msra.mxu0 0
      %3151 = vmatprep.subr.bf16.mxu0 0
      %3152 = vmatpush2.bf16.msra.mxu0 0
      %3153 = vmatprep.subr.bf16.mxu0 0
      %3154 = vmatpush2.bf16.msra.mxu0 0
      %3155 = vmatprep.subr.bf16.mxu0 0
      %3156 = vmatpush2.bf16.msra.mxu0 0
      %3157 = vmatprep.subr.bf16.mxu0 0
      %3158 = vmatpush2.bf16.msra.mxu0 0
      %3159 = vmatprep.subr.bf16.mxu0 0
      %3160 = vmatpush2.bf16.msra.mxu0 0
      %3161 = vmatprep.subr.bf16.mxu0 0
      %3162 = vmatpush2.bf16.msra.mxu0 0
      %3163 = vmatprep.subr.bf16.mxu0 0
      %3164 = vmatpush2.bf16.msra.mxu0 0
      %3165 = vmatprep.mubr.bf16.mxu0 0
      %3166 = vmatmul.mubr.bf16.gmra.mxu0 %v3043
      %v3167 = vpop.f32.mrf.mxu0
      %v3168 = vadd.f32 0.0, %v3167
      %v3169 = vpop.f32.mrf.mxu0
      %v3170 = vpop.f32.mrf.mxu0
      %v3171 = vadd.f32 0.0, %v3170
      %v3172 = vpop.f32.mrf.mxu0
      %3173 = vmatprep.mubr.bf16.mxu0 0
      %3174 = vmatmul.mubr.bf16.gmra.mxu0 %v3044
      %v3175 = vpop.f32.mrf.mxu0
      %v3176 = vadd.f32 0.0, %v3175
      %v3177 = vpop.f32.mrf.mxu0
      %v3178 = vpop.f32.mrf.mxu0
      %v3179 = vadd.f32 0.0, %v3178
      %v3180 = vpop.f32.mrf.mxu0
      %3181 = vmatprep.mubr.bf16.mxu0 0
      %3182 = vmatmul.mubr.bf16.gmra.mxu0 %v3045
      %v3183 = vpop.f32.mrf.mxu0
      %v3184 = vadd.f32 0.0, %v3183
      %v3185 = vpop.f32.mrf.mxu0
      %v3186 = vpop.f32.mrf.mxu0
      %v3187 = vadd.f32 0.0, %v3186
      %v3188 = vpop.f32.mrf.mxu0
      %3189 = vmatprep.mubr.bf16.mxu0 0
      %3190 = vmatmul.mubr.bf16.gmra.mxu0 %v3046
      %v3191 = vpop.f32.mrf.mxu0
      %v3192 = vadd.f32 0.0, %v3191
      %v3193 = vpop.f32.mrf.mxu0
      %v3194 = vpop.f32.mrf.mxu0
      %v3195 = vadd.f32 0.0, %v3194
      %v3196 = vpop.f32.mrf.mxu0
      %3197 = vmatprep.mubr.bf16.mxu0 0
      %3198 = vmatmul.mubr.bf16.gmra.mxu0 %v3047
      %v3199 = vpop.f32.mrf.mxu0
      %v3200 = vadd.f32 0.0, %v3199
      %v3201 = vpop.f32.mrf.mxu0
      %v3202 = vpop.f32.mrf.mxu0
      %v3203 = vadd.f32 0.0, %v3202
      %v3204 = vpop.f32.mrf.mxu0
      %3205 = vmatprep.mubr.bf16.mxu0 0
      %3206 = vmatmul.mubr.bf16.gmra.mxu0 %v3048
      %v3207 = vpop.f32.mrf.mxu0
      %v3208 = vadd.f32 0.0, %v3207
      %v3209 = vpop.f32.mrf.mxu0
      %v3210 = vpop.f32.mrf.mxu0
      %v3211 = vadd.f32 0.0, %v3210
      %v3212 = vpop.f32.mrf.mxu0
      %3213 = vmatprep.mubr.bf16.mxu0 0
      %3214 = vmatmul.mubr.bf16.gmra.mxu0 %v3049
      %v3215 = vpop.f32.mrf.mxu0
      %v3216 = vadd.f32 0.0, %v3215
      %v3217 = vpop.f32.mrf.mxu0
      %v3218 = vpop.f32.mrf.mxu0
      %v3219 = vadd.f32 0.0, %v3218
      %v3220 = vpop.f32.mrf.mxu0
      %3221 = vmatprep.mubr.bf16.mxu0 0
      %3222 = vmatmul.mubr.bf16.gmra.mxu0 %v3050
      %v3223 = vpop.f32.mrf.mxu0
      %v3224 = vadd.f32 0.0, %v3223
      %v3225 = vpop.f32.mrf.mxu0
      %v3226 = vpop.f32.mrf.mxu0
      %v3227 = vadd.f32 0.0, %v3226
      %v3228 = vpop.f32.mrf.mxu0
      %3229 = vmatprep.mubr.bf16.mxu0 0
      %3230 = vmatmul.mubr.bf16.gmra.mxu0 %v3051
      %v3231 = vpop.f32.mrf.mxu0
      %v3232 = vadd.f32 0.0, %v3231
      %v3233 = vpop.f32.mrf.mxu0
      %v3234 = vpop.f32.mrf.mxu0
      %v3235 = vadd.f32 0.0, %v3234
      %v3236 = vpop.f32.mrf.mxu0
      %3237 = vmatprep.mubr.bf16.mxu0 0
      %3238 = vmatmul.mubr.bf16.gmra.mxu0 %v3052
      %v3239 = vpop.f32.mrf.mxu0
      %v3240 = vadd.f32 0.0, %v3239
      %v3241 = vpop.f32.mrf.mxu0
      %v3242 = vpop.f32.mrf.mxu0
      %v3243 = vadd.f32 0.0, %v3242
      %v3244 = vpop.f32.mrf.mxu0
      %3245 = vmatprep.mubr.bf16.mxu0 0
      %3246 = vmatmul.mubr.bf16.gmra.mxu0 %v3053
      %v3247 = vpop.f32.mrf.mxu0
      %v3248 = vadd.f32 0.0, %v3247
      %v3249 = vpop.f32.mrf.mxu0
      %v3250 = vpop.f32.mrf.mxu0
      %v3251 = vadd.f32 0.0, %v3250
      %v3252 = vpop.f32.mrf.mxu0
      %3253 = vmatprep.mubr.bf16.mxu0 0
      %3254 = vmatmul.mubr.bf16.gmra.mxu0 %v3054
      %v3255 = vpop.f32.mrf.mxu0
      %v3256 = vadd.f32 0.0, %v3255
      %v3257 = vpop.f32.mrf.mxu0
      %v3258 = vpop.f32.mrf.mxu0
      %v3259 = vadd.f32 0.0, %v3258
      %v3260 = vpop.f32.mrf.mxu0
      %3261 = vmatprep.mubr.bf16.mxu0 0
      %3262 = vmatmul.mubr.bf16.gmra.mxu0 %v3055
      %v3263 = vpop.f32.mrf.mxu0
      %v3264 = vadd.f32 0.0, %v3263
      %v3265 = vpop.f32.mrf.mxu0
      %v3266 = vpop.f32.mrf.mxu0
      %v3267 = vadd.f32 0.0, %v3266
      %v3268 = vpop.f32.mrf.mxu0
      %3269 = vmatprep.mubr.bf16.mxu0 0
      %3270 = vmatmul.mubr.bf16.gmra.mxu0 %v3056
      %v3271 = vpop.f32.mrf.mxu0
      %v3272 = vadd.f32 0.0, %v3271
      %v3273 = vpop.f32.mrf.mxu0
      %v3274 = vpop.f32.mrf.mxu0
      %v3275 = vadd.f32 0.0, %v3274
      %v3276 = vpop.f32.mrf.mxu0
      %3277 = vmatprep.mubr.bf16.mxu0 0
      %3278 = vmatmul.mubr.bf16.gmra.mxu0 %v3057
      %v3279 = vpop.f32.mrf.mxu0
      %v3280 = vadd.f32 0.0, %v3279
      %v3281 = vpop.f32.mrf.mxu0
      %v3282 = vpop.f32.mrf.mxu0
      %v3283 = vadd.f32 0.0, %v3282
      %v3284 = vpop.f32.mrf.mxu0
      %3285 = vmatprep.mubr.bf16.mxu0 0
      %3286 = vmatmul.mubr.bf16.gmra.mxu0 %v3058
      %v3287 = vpop.f32.mrf.mxu0
      %v3288 = vadd.f32 0.0, %v3287
      %v3289 = vpop.f32.mrf.mxu0
      %v3290 = vpop.f32.mrf.mxu0
      %v3291 = vadd.f32 0.0, %v3290
      %v3292 = vpop.f32.mrf.mxu0
      %3293 = vmatprep.mubr.bf16.mxu0 0
      %3294 = vmatmul.mubr.bf16.gmra.mxu0 %v3059
      %v3295 = vpop.f32.mrf.mxu0
      %v3296 = vadd.f32 0.0, %v3295
      %v3297 = vpop.f32.mrf.mxu0
      %v3298 = vpop.f32.mrf.mxu0
      %v3299 = vadd.f32 0.0, %v3298
      %v3300 = vpop.f32.mrf.mxu0
      %3301 = vmatprep.mubr.bf16.mxu0 0
      %3302 = vmatmul.mubr.bf16.gmra.mxu0 %v3060
      %v3303 = vpop.f32.mrf.mxu0
      %v3304 = vadd.f32 0.0, %v3303
      %v3305 = vpop.f32.mrf.mxu0
      %v3306 = vpop.f32.mrf.mxu0
      %v3307 = vadd.f32 0.0, %v3306
      %v3308 = vpop.f32.mrf.mxu0
      %3309 = vmatprep.mubr.bf16.mxu0 0
      %3310 = vmatmul.mubr.bf16.gmra.mxu0 %v3061
      %v3311 = vpop.f32.mrf.mxu0
      %v3312 = vadd.f32 0.0, %v3311
      %v3313 = vpop.f32.mrf.mxu0
      %v3314 = vpop.f32.mrf.mxu0
      %v3315 = vadd.f32 0.0, %v3314
      %v3316 = vpop.f32.mrf.mxu0
      %3317 = vmatprep.mubr.bf16.mxu0 0
      %3318 = vmatmul.mubr.bf16.gmra.mxu0 %v3062
      %v3319 = vpop.f32.mrf.mxu0
      %v3320 = vadd.f32 0.0, %v3319
      %v3321 = vpop.f32.mrf.mxu0
      %v3322 = vpop.f32.mrf.mxu0
      %v3323 = vadd.f32 0.0, %v3322
      %v3324 = vpop.f32.mrf.mxu0
      %3325 = vmatprep.mubr.bf16.mxu0 0
      %3326 = vmatmul.mubr.bf16.gmra.mxu0 %v3063
      %v3327 = vpop.f32.mrf.mxu0
      %v3328 = vadd.f32 0.0, %v3327
      %v3329 = vpop.f32.mrf.mxu0
      %v3330 = vpop.f32.mrf.mxu0
      %v3331 = vpop.f32.mrf.mxu0
      %3332 = vdwg.mxu0
      %v3333 = vadd.f32 %v2985, %v3168
      %v3334 = vadd.f32 %v2986, %v3171
      %v3335 = vadd.f32 %v2987, %v3176
      %v3336 = vadd.f32 %v2988, %v3179
      %v3337 = vadd.f32 %v2989, %v3184
      %v3338 = vadd.f32 %v2990, %v3187
      %v3339 = vadd.f32 %v2991, %v3192
      %v3340 = vadd.f32 %v2992, %v3195
      %v3341 = vadd.f32 %v2993, %v3200
      %v3342 = vadd.f32 %v2994, %v3203
      %v3343 = vadd.f32 %v2995, %v3208
      %v3344 = vadd.f32 %v2996, %v3211
      %v3345 = vadd.f32 %v2997, %v3216
      %v3346 = vadd.f32 %v2998, %v3219
      %v3347 = vadd.f32 %v2999, %v3224
      %v3348 = vadd.f32 %v3000, %v3227
      %v3349 = vadd.f32 %v3001, %v3232
      %v3350 = vadd.f32 %v3002, %v3235
      %v3351 = vadd.f32 %v3003, %v3240
      %v3352 = vadd.f32 %v3004, %v3243
      %v3353 = vadd.f32 %v3005, %v3248
      %v3354 = vadd.f32 %v3006, %v3251
      %v3355 = vadd.f32 %v3007, %v3256
      %v3356 = vadd.f32 %v3008, %v3259
      %v3357 = vadd.f32 %v3009, %v3264
      %v3358 = vadd.f32 %v3010, %v3267
      %v3359 = vadd.f32 %v3011, %v3272
      %v3360 = vadd.f32 %v3012, %v3275
      %v3361 = vadd.f32 %v3013, %v3280
      %v3362 = vadd.f32 %v3014, %v3283
      %v3363 = vadd.f32 %v3015, %v3288
      %v3364 = vadd.f32 %v3016, %v3291
      %v3365 = vadd.f32 %v3017, %v3296
      %v3366 = vadd.f32 %v3018, %v3299
      %v3367 = vadd.f32 %v3019, %v3304
      %v3368 = vadd.f32 %v3020, %v3307
      %v3369 = vadd.f32 %v3021, %v3312
      %v3370 = vadd.f32 %v3022, %v3315
      %v3371 = vadd.f32 %v3023, %v3320
      %v3372 = vadd.f32 %v3024, %v3323
      %v3373 = vadd.f32 %v3025, %v3328
      %v3374 = vld [vmem:[#allocation2 + $0xc] sm:$0xf]
      %v3375 = vld [vmem:[#allocation2 + $0x10] sm:$0xf]
      %v3376 = vld [vmem:[#allocation2 + $0x14] sm:$0xf]
      %v3377 = vld [vmem:[#allocation2 + $0x18] sm:$0xf]
      %v3378 = vld [vmem:[#allocation2 + $0x1c] sm:$0xf]
      %v3379 = vld [vmem:[#allocation2 + $0x20] sm:$0xf]
      %v3380 = vld [vmem:[#allocation2 + $0x24] sm:$0xf]
      %v3381 = vld [vmem:[#allocation2 + $0x28] sm:$0xf]
      %v3382 = vld [vmem:[#allocation2 + $0x2c] sm:$0xf]
      %v3383 = vld [vmem:[#allocation2 + $0x30] sm:$0xf]
      %v3384 = vld [vmem:[#allocation2 + $0x34] sm:$0xf]
      %v3385 = vld [vmem:[#allocation2 + $0x38] sm:$0xf]
      %v3386 = vld [vmem:[#allocation2 + $0x3c] sm:$0xf]
      %v3387 = vld [vmem:[#allocation2 + $0x40] sm:$0xf]
      %v3388 = vld [vmem:[#allocation2 + $0x44] sm:$0xf]
      %v3389 = vld [vmem:[#allocation2 + $0x48] sm:$0xf]
      %v3390 = vld [vmem:[#allocation2 + $0x4c] sm:$0xf]
      %v3391 = vld [vmem:[#allocation2 + $0x50] sm:$0xf]
      %v3392 = vld [vmem:[#allocation2 + $0x54] sm:$0xf]
      %v3393 = vld [vmem:[#allocation2 + $0x58] sm:$0xf]
      %v3394 = vld [vmem:[#allocation2 + $0x5c] sm:$0xf]
      %v3395 = vld [vmem:[#allocation2 + $0x60] sm:$0xf]
      %v3396 = vld [vmem:[#allocation2 + $0x64] sm:$0xf]
      %v3397 = vld [vmem:[#allocation2 + $0x68] sm:$0xf]
      %v3398 = vld [vmem:[#allocation2 + $0x6c] sm:$0xf]
      %v3399 = vld [vmem:[#allocation2 + $0x70] sm:$0xf]
      %v3400 = vld [vmem:[#allocation2 + $0x74] sm:$0xf]
      %v3401 = vld [vmem:[#allocation2 + $0x78] sm:$0xf]
      %v3402 = vld [vmem:[#allocation2 + $0x7c] sm:$0xf]
      %v3403 = vld [vmem:[#allocation2 + $0x80] sm:$0xf]
      %v3404 = vld [vmem:[#allocation2 + $0x84] sm:$0xf]
      %v3405 = vld [vmem:[#allocation2 + $0x88] sm:$0xf]
      %v3406 = vld [vmem:[#allocation2 + $0x8c] sm:$0xf]
      %v3407 = vld [vmem:[#allocation2 + $0x90] sm:$0xf]
      %v3408 = vld [vmem:[#allocation2 + $0x94] sm:$0xf]
      %v3409 = vld [vmem:[#allocation2 + $0x98] sm:$0xf]
      %v3410 = vld [vmem:[#allocation2 + $0x9c] sm:$0xf]
      %v3411 = vld [vmem:[#allocation2 + $0xa0] sm:$0xf]
      %v3412 = vld [vmem:[#allocation2 + $0xa4] sm:$0xf]
      %v3413 = vld [vmem:[#allocation2 + $0xa8] sm:$0xf]
      %v3414 = vld [vmem:[#allocation2 + $0xac] sm:$0xf]
      %v3415 = vld [vmem:[#allocation2 + $0xb0] sm:$0x1]
      %s3416 = scalar_lea.vmem %s4, 320
      %v3417 = vld [vmem:[%s3416] sm:$0xf]
      %v3418 = vld [vmem:[%s3416 + $0x4] sm:$0xf]
      %v3419 = vld [vmem:[%s3416 + $0x8] sm:$0xf]
      %v3420 = vld [vmem:[%s3416 + $0xc] sm:$0xf]
      %v3421 = vld [vmem:[%s3416 + $0x10] sm:$0xf]
      %v3422 = vld [vmem:[%s3416 + $0x14] sm:$0xf]
      %v3423 = vld [vmem:[%s3416 + $0x18] sm:$0xf]
      %v3424 = vld [vmem:[%s3416 + $0x1c] sm:$0xf]
      %v3425 = vld [vmem:[%s3416 + $0x20] sm:$0xf]
      %v3426 = vld [vmem:[%s3416 + $0x24] sm:$0xf]
      %v3427 = vld [vmem:[%s3416 + $0x28] sm:$0xf]
      %v3428 = vld [vmem:[%s3416 + $0x2c] sm:$0xf]
      %v3429 = vld [vmem:[%s3416 + $0x30] sm:$0xf]
      %v3430 = vld [vmem:[%s3416 + $0x34] sm:$0xf]
      %v3431 = vld [vmem:[%s3416 + $0x38] sm:$0xf]
      %v3432 = vld [vmem:[%s3416 + $0x3c] sm:$0xf]
      %v3475 = vunpack.c.l.b16 %v3374
      %v3476 = vunpack.c.l.b16 %v3375
      %v3477 = vunpack.c.l.b16 %v3376
      %v3478 = vunpack.c.l.b16 %v3377
      %v3479 = vunpack.c.l.b16 %v3378
      %v3480 = vunpack.c.l.b16 %v3379
      %v3481 = vunpack.c.l.b16 %v3380
      %v3482 = vunpack.c.l.b16 %v3381
      %v3483 = vunpack.c.l.b16 %v3382
      %v3484 = vunpack.c.l.b16 %v3383
      %v3485 = vunpack.c.l.b16 %v3384
      %v3486 = vunpack.c.l.b16 %v3385
      %v3487 = vunpack.c.l.b16 %v3386
      %v3488 = vunpack.c.l.b16 %v3387
      %v3489 = vunpack.c.l.b16 %v3388
      %v3490 = vunpack.c.l.b16 %v3389
      %v3491 = vunpack.c.l.b16 %v3390
      %v3492 = vunpack.c.l.b16 %v3391
      %v3493 = vunpack.c.l.b16 %v3392
      %v3494 = vunpack.c.l.b16 %v3393
      %v3495 = vunpack.c.l.b16 %v3394
      %v3496 = vunpack.c.l.b16 %v3395
      %v3497 = vunpack.c.l.b16 %v3396
      %v3498 = vunpack.c.l.b16 %v3397
      %v3499 = vunpack.c.l.b16 %v3398
      %v3500 = vunpack.c.l.b16 %v3399
      %v3501 = vunpack.c.l.b16 %v3400
      %v3502 = vunpack.c.l.b16 %v3401
      %v3503 = vunpack.c.l.b16 %v3402
      %v3504 = vunpack.c.l.b16 %v3403
      %v3505 = vunpack.c.l.b16 %v3404
      %v3506 = vunpack.c.l.b16 %v3405
      %v3507 = vunpack.c.l.b16 %v3406
      %v3508 = vunpack.c.l.b16 %v3407
      %v3509 = vunpack.c.l.b16 %v3408
      %v3510 = vunpack.c.l.b16 %v3409
      %v3511 = vunpack.c.l.b16 %v3410
      %v3512 = vunpack.c.l.b16 %v3411
      %v3513 = vunpack.c.l.b16 %v3412
      %v3514 = vunpack.c.l.b16 %v3413
      %v3515 = vunpack.c.l.b16 %v3414
      %v3516 = vunpack.c.l.b16 %v3415
      %v3517 = vpack.c.b16 %v3476, %v3475
      %v3518 = vpack.c.b16 %v3478, %v3477
      %v3519 = vpack.c.b16 %v3480, %v3479
      %v3520 = vpack.c.b16 %v3482, %v3481
      %v3521 = vpack.c.b16 %v3484, %v3483
      %v3522 = vpack.c.b16 %v3486, %v3485
      %v3523 = vpack.c.b16 %v3488, %v3487
      %v3524 = vpack.c.b16 %v3490, %v3489
      %v3525 = vpack.c.b16 %v3492, %v3491
      %v3526 = vpack.c.b16 %v3494, %v3493
      %v3527 = vpack.c.b16 %v3496, %v3495
      %v3528 = vpack.c.b16 %v3498, %v3497
      %v3529 = vpack.c.b16 %v3500, %v3499
      %v3530 = vpack.c.b16 %v3502, %v3501
      %v3531 = vpack.c.b16 %v3504, %v3503
      %v3532 = vpack.c.b16 %v3506, %v3505
      %v3533 = vpack.c.b16 %v3508, %v3507
      %v3534 = vpack.c.b16 %v3510, %v3509
      %v3535 = vpack.c.b16 %v3512, %v3511
      %v3536 = vpack.c.b16 %v3514, %v3513
      %v3537 = vpack.c.b16 %v3516, %v3515
      %vm3538 = vsmask.f32 7424
      %v3540 = vshrl.u32 %v3517, 16
      %v3542 = vshll.u32 %v3517, 16
      %v3544 = vrot.slane %v3542, 1
      %v3545 = vor.u32 %v3540, %v3544
      %v3547 = vshll.u32 %v3518, 16
      %v3549 = vrot.slane %v3547, 1
      %v3550 = vsel %vm3538, %v3545, %v3549
      %v3551 = vshrl.u32 %v3518, 16
      %v3553 = vor.u32 %v3551, %v3549
      %v3555 = vshll.u32 %v3519, 16
      %v3557 = vrot.slane %v3555, 1
      %v3558 = vsel %vm3538, %v3553, %v3557
      %v3559 = vshrl.u32 %v3519, 16
      %v3561 = vor.u32 %v3559, %v3557
      %v3563 = vshll.u32 %v3520, 16
      %v3565 = vrot.slane %v3563, 1
      %v3566 = vsel %vm3538, %v3561, %v3565
      %v3567 = vshrl.u32 %v3520, 16
      %v3569 = vor.u32 %v3567, %v3565
      %v3571 = vshll.u32 %v3521, 16
      %v3573 = vrot.slane %v3571, 1
      %v3574 = vsel %vm3538, %v3569, %v3573
      %v3575 = vshrl.u32 %v3521, 16
      %v3577 = vor.u32 %v3575, %v3573
      %v3579 = vshll.u32 %v3522, 16
      %v3581 = vrot.slane %v3579, 1
      %v3582 = vsel %vm3538, %v3577, %v3581
      %v3583 = vshrl.u32 %v3522, 16
      %v3585 = vor.u32 %v3583, %v3581
      %v3587 = vshll.u32 %v3523, 16
      %v3589 = vrot.slane %v3587, 1
      %v3590 = vsel %vm3538, %v3585, %v3589
      %v3591 = vshrl.u32 %v3523, 16
      %v3593 = vor.u32 %v3591, %v3589
      %v3595 = vshll.u32 %v3524, 16
      %v3597 = vrot.slane %v3595, 1
      %v3598 = vsel %vm3538, %v3593, %v3597
      %v3599 = vshrl.u32 %v3524, 16
      %v3601 = vor.u32 %v3599, %v3597
      %v3603 = vshll.u32 %v3525, 16
      %v3605 = vrot.slane %v3603, 1
      %v3606 = vsel %vm3538, %v3601, %v3605
      %v3607 = vshrl.u32 %v3525, 16
      %v3609 = vor.u32 %v3607, %v3605
      %v3611 = vshll.u32 %v3526, 16
      %v3613 = vrot.slane %v3611, 1
      %v3614 = vsel %vm3538, %v3609, %v3613
      %v3615 = vshrl.u32 %v3526, 16
      %v3617 = vor.u32 %v3615, %v3613
      %v3619 = vshll.u32 %v3527, 16
      %v3621 = vrot.slane %v3619, 1
      %v3622 = vsel %vm3538, %v3617, %v3621
      %v3623 = vshrl.u32 %v3527, 16
      %v3625 = vor.u32 %v3623, %v3621
      %v3627 = vshll.u32 %v3528, 16
      %v3629 = vrot.slane %v3627, 1
      %v3630 = vsel %vm3538, %v3625, %v3629
      %v3631 = vshrl.u32 %v3528, 16
      %v3633 = vor.u32 %v3631, %v3629
      %v3635 = vshll.u32 %v3529, 16
      %v3637 = vrot.slane %v3635, 1
      %v3638 = vsel %vm3538, %v3633, %v3637
      %v3639 = vshrl.u32 %v3529, 16
      %v3641 = vor.u32 %v3639, %v3637
      %v3643 = vshll.u32 %v3530, 16
      %v3645 = vrot.slane %v3643, 1
      %v3646 = vsel %vm3538, %v3641, %v3645
      %v3647 = vshrl.u32 %v3530, 16
      %v3649 = vor.u32 %v3647, %v3645
      %v3651 = vshll.u32 %v3531, 16
      %v3653 = vrot.slane %v3651, 1
      %v3654 = vsel %vm3538, %v3649, %v3653
      %v3655 = vshrl.u32 %v3531, 16
      %v3657 = vor.u32 %v3655, %v3653
      %v3659 = vshll.u32 %v3532, 16
      %v3661 = vrot.slane %v3659, 1
      %v3662 = vsel %vm3538, %v3657, %v3661
      %v3663 = vshrl.u32 %v3532, 16
      %v3665 = vor.u32 %v3663, %v3661
      %v3667 = vshll.u32 %v3533, 16
      %v3669 = vrot.slane %v3667, 1
      %v3670 = vsel %vm3538, %v3665, %v3669
      %v3671 = vshrl.u32 %v3533, 16
      %v3673 = vor.u32 %v3671, %v3669
      %v3675 = vshll.u32 %v3534, 16
      %v3677 = vrot.slane %v3675, 1
      %v3678 = vsel %vm3538, %v3673, %v3677
      %v3679 = vshrl.u32 %v3534, 16
      %v3681 = vor.u32 %v3679, %v3677
      %v3683 = vshll.u32 %v3535, 16
      %v3685 = vrot.slane %v3683, 1
      %v3686 = vsel %vm3538, %v3681, %v3685
      %v3687 = vshrl.u32 %v3535, 16
      %v3689 = vor.u32 %v3687, %v3685
      %v3691 = vshll.u32 %v3536, 16
      %v3693 = vrot.slane %v3691, 1
      %v3694 = vsel %vm3538, %v3689, %v3693
      %v3695 = vshrl.u32 %v3536, 16
      %v3697 = vor.u32 %v3695, %v3693
      %v3699 = vshll.u32 %v3537, 16
      %v3701 = vrot.slane %v3699, 1
      %v3702 = vsel %vm3538, %v3697, %v3701
      %v3703 = vshrl.u32 %v3537, 16
      %v3705 = vor.u32 %v3703, %v3701
      %v3743 = vunpack.c.l.b16 %v3417
      %v3744 = vunpack.c.l.b16 %v3418
      %v3745 = vunpack.c.l.b16 %v3419
      %v3746 = vunpack.c.l.b16 %v3420
      %v3747 = vunpack.c.l.b16 %v3421
      %v3748 = vunpack.c.l.b16 %v3422
      %v3749 = vunpack.c.l.b16 %v3423
      %v3750 = vunpack.c.l.b16 %v3424
      %v3751 = vunpack.c.l.b16 %v3425
      %v3752 = vunpack.c.l.b16 %v3426
      %v3753 = vunpack.c.l.b16 %v3427
      %v3754 = vunpack.c.l.b16 %v3428
      %v3755 = vunpack.c.l.b16 %v3429
      %v3756 = vunpack.c.l.b16 %v3430
      %v3757 = vunpack.c.l.b16 %v3431
      %v3758 = vunpack.c.l.b16 %v3432
      %v3759 = vpack.c.b16 %v3744, %v3743
      %v3760 = vpack.c.b16 %v3746, %v3745
      %v3761 = vpack.c.b16 %v3748, %v3747
      %v3762 = vpack.c.b16 %v3750, %v3749
      %v3763 = vpack.c.b16 %v3752, %v3751
      %v3764 = vpack.c.b16 %v3754, %v3753
      %v3765 = vpack.c.b16 %v3756, %v3755
      %v3766 = vpack.c.b16 %v3758, %v3757
      %3775 = vmatprep.subr.bf16.mxu0 0
      %3776 = vmatpush1.bf16.msra.mxu0 %v3766
      %3777 = vmatprep.subr.bf16.mxu0 0
      %3778 = vmatpush1.bf16.msra.mxu0 %v3765
      %3779 = vmatprep.subr.bf16.mxu0 0
      %3780 = vmatpush1.bf16.msra.mxu0 %v3764
      %3781 = vmatprep.subr.bf16.mxu0 0
      %3782 = vmatpush1.bf16.msra.mxu0 %v3763
      %3783 = vmatprep.subr.bf16.mxu0 0
      %3784 = vmatpush1.bf16.msra.mxu0 %v3762
      %3785 = vmatprep.subr.bf16.mxu0 0
      %3786 = vmatpush1.bf16.msra.mxu0 %v3761
      %3787 = vmatprep.subr.bf16.mxu0 0
      %3788 = vmatpush1.bf16.msra.mxu0 %v3760
      %3789 = vmatprep.subr.bf16.mxu0 0
      %3790 = vmatpush1.bf16.msra.mxu0 %v3759
      %3791 = vmatprep.subr.bf16.mxu0 0
      %3792 = vmatpush2.bf16.msra.mxu0 0
      %3793 = vmatprep.subr.bf16.mxu0 0
      %3794 = vmatpush2.bf16.msra.mxu0 0
      %3795 = vmatprep.subr.bf16.mxu0 0
      %3796 = vmatpush2.bf16.msra.mxu0 0
      %3797 = vmatprep.subr.bf16.mxu0 0
      %3798 = vmatpush2.bf16.msra.mxu0 0
      %3799 = vmatprep.subr.bf16.mxu0 0
      %3800 = vmatpush2.bf16.msra.mxu0 0
      %3801 = vmatprep.subr.bf16.mxu0 0
      %3802 = vmatpush2.bf16.msra.mxu0 0
      %3803 = vmatprep.subr.bf16.mxu0 0
      %3804 = vmatpush2.bf16.msra.mxu0 0
      %3805 = vmatprep.subr.bf16.mxu0 0
      %3806 = vmatpush2.bf16.msra.mxu0 0
      %3807 = vmatprep.mubr.bf16.mxu0 0
      %3808 = vmatmul.mubr.bf16.gmra.mxu0 %v3550
      %v3809 = vpop.f32.mrf.mxu0
      %v3810 = vadd.f32 0.0, %v3809
      %v3811 = vpop.f32.mrf.mxu0
      %v3812 = vpop.f32.mrf.mxu0
      %v3813 = vadd.f32 0.0, %v3812
      %v3814 = vpop.f32.mrf.mxu0
      %3815 = vmatprep.mubr.bf16.mxu0 0
      %3816 = vmatmul.mubr.bf16.gmra.mxu0 %v3558
      %v3817 = vpop.f32.mrf.mxu0
      %v3818 = vadd.f32 0.0, %v3817
      %v3819 = vpop.f32.mrf.mxu0
      %v3820 = vpop.f32.mrf.mxu0
      %v3821 = vadd.f32 0.0, %v3820
      %v3822 = vpop.f32.mrf.mxu0
      %3823 = vmatprep.mubr.bf16.mxu0 0
      %3824 = vmatmul.mubr.bf16.gmra.mxu0 %v3566
      %v3825 = vpop.f32.mrf.mxu0
      %v3826 = vadd.f32 0.0, %v3825
      %v3827 = vpop.f32.mrf.mxu0
      %v3828 = vpop.f32.mrf.mxu0
      %v3829 = vadd.f32 0.0, %v3828
      %v3830 = vpop.f32.mrf.mxu0
      %3831 = vmatprep.mubr.bf16.mxu0 0
      %3832 = vmatmul.mubr.bf16.gmra.mxu0 %v3574
      %v3833 = vpop.f32.mrf.mxu0
      %v3834 = vadd.f32 0.0, %v3833
      %v3835 = vpop.f32.mrf.mxu0
      %v3836 = vpop.f32.mrf.mxu0
      %v3837 = vadd.f32 0.0, %v3836
      %v3838 = vpop.f32.mrf.mxu0
      %3839 = vmatprep.mubr.bf16.mxu0 0
      %3840 = vmatmul.mubr.bf16.gmra.mxu0 %v3582
      %v3841 = vpop.f32.mrf.mxu0
      %v3842 = vadd.f32 0.0, %v3841
      %v3843 = vpop.f32.mrf.mxu0
      %v3844 = vpop.f32.mrf.mxu0
      %v3845 = vadd.f32 0.0, %v3844
      %v3846 = vpop.f32.mrf.mxu0
      %3847 = vmatprep.mubr.bf16.mxu0 0
      %3848 = vmatmul.mubr.bf16.gmra.mxu0 %v3590
      %v3849 = vpop.f32.mrf.mxu0
      %v3850 = vadd.f32 0.0, %v3849
      %v3851 = vpop.f32.mrf.mxu0
      %v3852 = vpop.f32.mrf.mxu0
      %v3853 = vadd.f32 0.0, %v3852
      %v3854 = vpop.f32.mrf.mxu0
      %3855 = vmatprep.mubr.bf16.mxu0 0
      %3856 = vmatmul.mubr.bf16.gmra.mxu0 %v3598
      %v3857 = vpop.f32.mrf.mxu0
      %v3858 = vadd.f32 0.0, %v3857
      %v3859 = vpop.f32.mrf.mxu0
      %v3860 = vpop.f32.mrf.mxu0
      %v3861 = vadd.f32 0.0, %v3860
      %v3862 = vpop.f32.mrf.mxu0
      %3863 = vmatprep.mubr.bf16.mxu0 0
      %3864 = vmatmul.mubr.bf16.gmra.mxu0 %v3606
      %v3865 = vpop.f32.mrf.mxu0
      %v3866 = vadd.f32 0.0, %v3865
      %v3867 = vpop.f32.mrf.mxu0
      %v3868 = vpop.f32.mrf.mxu0
      %v3869 = vadd.f32 0.0, %v3868
      %v3870 = vpop.f32.mrf.mxu0
      %3871 = vmatprep.mubr.bf16.mxu0 0
      %3872 = vmatmul.mubr.bf16.gmra.mxu0 %v3614
      %v3873 = vpop.f32.mrf.mxu0
      %v3874 = vadd.f32 0.0, %v3873
      %v3875 = vpop.f32.mrf.mxu0
      %v3876 = vpop.f32.mrf.mxu0
      %v3877 = vadd.f32 0.0, %v3876
      %v3878 = vpop.f32.mrf.mxu0
      %3879 = vmatprep.mubr.bf16.mxu0 0
      %3880 = vmatmul.mubr.bf16.gmra.mxu0 %v3622
      %v3881 = vpop.f32.mrf.mxu0
      %v3882 = vadd.f32 0.0, %v3881
      %v3883 = vpop.f32.mrf.mxu0
      %v3884 = vpop.f32.mrf.mxu0
      %v3885 = vadd.f32 0.0, %v3884
      %v3886 = vpop.f32.mrf.mxu0
      %3887 = vmatprep.mubr.bf16.mxu0 0
      %3888 = vmatmul.mubr.bf16.gmra.mxu0 %v3630
      %v3889 = vpop.f32.mrf.mxu0
      %v3890 = vadd.f32 0.0, %v3889
      %v3891 = vpop.f32.mrf.mxu0
      %v3892 = vpop.f32.mrf.mxu0
      %v3893 = vadd.f32 0.0, %v3892
      %v3894 = vpop.f32.mrf.mxu0
      %3895 = vmatprep.mubr.bf16.mxu0 0
      %3896 = vmatmul.mubr.bf16.gmra.mxu0 %v3638
      %v3897 = vpop.f32.mrf.mxu0
      %v3898 = vadd.f32 0.0, %v3897
      %v3899 = vpop.f32.mrf.mxu0
      %v3900 = vpop.f32.mrf.mxu0
      %v3901 = vadd.f32 0.0, %v3900
      %v3902 = vpop.f32.mrf.mxu0
      %3903 = vmatprep.mubr.bf16.mxu0 0
      %3904 = vmatmul.mubr.bf16.gmra.mxu0 %v3646
      %v3905 = vpop.f32.mrf.mxu0
      %v3906 = vadd.f32 0.0, %v3905
      %v3907 = vpop.f32.mrf.mxu0
      %v3908 = vpop.f32.mrf.mxu0
      %v3909 = vadd.f32 0.0, %v3908
      %v3910 = vpop.f32.mrf.mxu0
      %3911 = vmatprep.mubr.bf16.mxu0 0
      %3912 = vmatmul.mubr.bf16.gmra.mxu0 %v3654
      %v3913 = vpop.f32.mrf.mxu0
      %v3914 = vadd.f32 0.0, %v3913
      %v3915 = vpop.f32.mrf.mxu0
      %v3916 = vpop.f32.mrf.mxu0
      %v3917 = vadd.f32 0.0, %v3916
      %v3918 = vpop.f32.mrf.mxu0
      %3919 = vmatprep.mubr.bf16.mxu0 0
      %3920 = vmatmul.mubr.bf16.gmra.mxu0 %v3662
      %v3921 = vpop.f32.mrf.mxu0
      %v3922 = vadd.f32 0.0, %v3921
      %v3923 = vpop.f32.mrf.mxu0
      %v3924 = vpop.f32.mrf.mxu0
      %v3925 = vadd.f32 0.0, %v3924
      %v3926 = vpop.f32.mrf.mxu0
      %3927 = vmatprep.mubr.bf16.mxu0 0
      %3928 = vmatmul.mubr.bf16.gmra.mxu0 %v3670
      %v3929 = vpop.f32.mrf.mxu0
      %v3930 = vadd.f32 0.0, %v3929
      %v3931 = vpop.f32.mrf.mxu0
      %v3932 = vpop.f32.mrf.mxu0
      %v3933 = vadd.f32 0.0, %v3932
      %v3934 = vpop.f32.mrf.mxu0
      %3935 = vmatprep.mubr.bf16.mxu0 0
      %3936 = vmatmul.mubr.bf16.gmra.mxu0 %v3678
      %v3937 = vpop.f32.mrf.mxu0
      %v3938 = vadd.f32 0.0, %v3937
      %v3939 = vpop.f32.mrf.mxu0
      %v3940 = vpop.f32.mrf.mxu0
      %v3941 = vadd.f32 0.0, %v3940
      %v3942 = vpop.f32.mrf.mxu0
      %3943 = vmatprep.mubr.bf16.mxu0 0
      %3944 = vmatmul.mubr.bf16.gmra.mxu0 %v3686
      %v3945 = vpop.f32.mrf.mxu0
      %v3946 = vadd.f32 0.0, %v3945
      %v3947 = vpop.f32.mrf.mxu0
      %v3948 = vpop.f32.mrf.mxu0
      %v3949 = vadd.f32 0.0, %v3948
      %v3950 = vpop.f32.mrf.mxu0
      %3951 = vmatprep.mubr.bf16.mxu0 0
      %3952 = vmatmul.mubr.bf16.gmra.mxu0 %v3694
      %v3953 = vpop.f32.mrf.mxu0
      %v3954 = vadd.f32 0.0, %v3953
      %v3955 = vpop.f32.mrf.mxu0
      %v3956 = vpop.f32.mrf.mxu0
      %v3957 = vadd.f32 0.0, %v3956
      %v3958 = vpop.f32.mrf.mxu0
      %3959 = vmatprep.mubr.bf16.mxu0 0
      %3960 = vmatmul.mubr.bf16.gmra.mxu0 %v3702
      %v3961 = vpop.f32.mrf.mxu0
      %v3962 = vadd.f32 0.0, %v3961
      %v3963 = vpop.f32.mrf.mxu0
      %v3964 = vpop.f32.mrf.mxu0
      %v3965 = vadd.f32 0.0, %v3964
      %v3966 = vpop.f32.mrf.mxu0
      %3967 = vmatprep.mubr.bf16.mxu0 0
      %3968 = vmatmul.mubr.bf16.gmra.mxu0 %v3705
      %v3969 = vpop.f32.mrf.mxu0
      %v3970 = vadd.f32 0.0, %v3969
      %v3971 = vpop.f32.mrf.mxu0
      %v3972 = vpop.f32.mrf.mxu0
      %v3973 = vpop.f32.mrf.mxu0
      %3974 = vdwg.mxu0
      %v3975 = vadd.f32 %v3333, %v3810
      %v3976 = vadd.f32 %v3334, %v3813
      %v3977 = vadd.f32 %v3335, %v3818
      %v3978 = vadd.f32 %v3336, %v3821
      %v3979 = vadd.f32 %v3337, %v3826
      %v3980 = vadd.f32 %v3338, %v3829
      %v3981 = vadd.f32 %v3339, %v3834
      %v3982 = vadd.f32 %v3340, %v3837
      %v3983 = vadd.f32 %v3341, %v3842
      %v3984 = vadd.f32 %v3342, %v3845
      %v3985 = vadd.f32 %v3343, %v3850
      %v3986 = vadd.f32 %v3344, %v3853
      %v3987 = vadd.f32 %v3345, %v3858
      %v3988 = vadd.f32 %v3346, %v3861
      %v3989 = vadd.f32 %v3347, %v3866
      %v3990 = vadd.f32 %v3348, %v3869
      %v3991 = vadd.f32 %v3349, %v3874
      %v3992 = vadd.f32 %v3350, %v3877
      %v3993 = vadd.f32 %v3351, %v3882
      %v3994 = vadd.f32 %v3352, %v3885
      %v3995 = vadd.f32 %v3353, %v3890
      %v3996 = vadd.f32 %v3354, %v3893
      %v3997 = vadd.f32 %v3355, %v3898
      %v3998 = vadd.f32 %v3356, %v3901
      %v3999 = vadd.f32 %v3357, %v3906
      %v4000 = vadd.f32 %v3358, %v3909
      %v4001 = vadd.f32 %v3359, %v3914
      %v4002 = vadd.f32 %v3360, %v3917
      %v4003 = vadd.f32 %v3361, %v3922
      %v4004 = vadd.f32 %v3362, %v3925
      %v4005 = vadd.f32 %v3363, %v3930
      %v4006 = vadd.f32 %v3364, %v3933
      %v4007 = vadd.f32 %v3365, %v3938
      %v4008 = vadd.f32 %v3366, %v3941
      %v4009 = vadd.f32 %v3367, %v3946
      %v4010 = vadd.f32 %v3368, %v3949
      %v4011 = vadd.f32 %v3369, %v3954
      %v4012 = vadd.f32 %v3370, %v3957
      %v4013 = vadd.f32 %v3371, %v3962
      %v4014 = vadd.f32 %v3372, %v3965
      %v4015 = vadd.f32 %v3373, %v3970
      %v4016 = vld [vmem:[#allocation2 + $0x14] sm:$0xf]
      %v4017 = vld [vmem:[#allocation2 + $0x18] sm:$0xf]
      %v4018 = vld [vmem:[#allocation2 + $0x1c] sm:$0xf]
      %v4019 = vld [vmem:[#allocation2 + $0x20] sm:$0xf]
      %v4020 = vld [vmem:[#allocation2 + $0x24] sm:$0xf]
      %v4021 = vld [vmem:[#allocation2 + $0x28] sm:$0xf]
      %v4022 = vld [vmem:[#allocation2 + $0x2c] sm:$0xf]
      %v4023 = vld [vmem:[#allocation2 + $0x30] sm:$0xf]
      %v4024 = vld [vmem:[#allocation2 + $0x34] sm:$0xf]
      %v4025 = vld [vmem:[#allocation2 + $0x38] sm:$0xf]
      %v4026 = vld [vmem:[#allocation2 + $0x3c] sm:$0xf]
      %v4027 = vld [vmem:[#allocation2 + $0x40] sm:$0xf]
      %v4028 = vld [vmem:[#allocation2 + $0x44] sm:$0xf]
      %v4029 = vld [vmem:[#allocation2 + $0x48] sm:$0xf]
      %v4030 = vld [vmem:[#allocation2 + $0x4c] sm:$0xf]
      %v4031 = vld [vmem:[#allocation2 + $0x50] sm:$0xf]
      %v4032 = vld [vmem:[#allocation2 + $0x54] sm:$0xf]
      %v4033 = vld [vmem:[#allocation2 + $0x58] sm:$0xf]
      %v4034 = vld [vmem:[#allocation2 + $0x5c] sm:$0xf]
      %v4035 = vld [vmem:[#allocation2 + $0x60] sm:$0xf]
      %v4036 = vld [vmem:[#allocation2 + $0x64] sm:$0xf]
      %v4037 = vld [vmem:[#allocation2 + $0x68] sm:$0xf]
      %v4038 = vld [vmem:[#allocation2 + $0x6c] sm:$0xf]
      %v4039 = vld [vmem:[#allocation2 + $0x70] sm:$0xf]
      %v4040 = vld [vmem:[#allocation2 + $0x74] sm:$0xf]
      %v4041 = vld [vmem:[#allocation2 + $0x78] sm:$0xf]
      %v4042 = vld [vmem:[#allocation2 + $0x7c] sm:$0xf]
      %v4043 = vld [vmem:[#allocation2 + $0x80] sm:$0xf]
      %v4044 = vld [vmem:[#allocation2 + $0x84] sm:$0xf]
      %v4045 = vld [vmem:[#allocation2 + $0x88] sm:$0xf]
      %v4046 = vld [vmem:[#allocation2 + $0x8c] sm:$0xf]
      %v4047 = vld [vmem:[#allocation2 + $0x90] sm:$0xf]
      %v4048 = vld [vmem:[#allocation2 + $0x94] sm:$0xf]
      %v4049 = vld [vmem:[#allocation2 + $0x98] sm:$0xf]
      %v4050 = vld [vmem:[#allocation2 + $0x9c] sm:$0xf]
      %v4051 = vld [vmem:[#allocation2 + $0xa0] sm:$0xf]
      %v4052 = vld [vmem:[#allocation2 + $0xa4] sm:$0xf]
      %v4053 = vld [vmem:[#allocation2 + $0xa8] sm:$0xf]
      %v4054 = vld [vmem:[#allocation2 + $0xac] sm:$0xf]
      %v4055 = vld [vmem:[#allocation2 + $0xb0] sm:$0xf]
      %v4056 = vld [vmem:[#allocation2 + $0xb4] sm:$0xf]
      %v4057 = vld [vmem:[#allocation2 + $0xb8] sm:$0x1]
      %s4058 = scalar_lea.vmem %s4, 384
      %v4059 = vld [vmem:[%s4058] sm:$0xf]
      %v4060 = vld [vmem:[%s4058 + $0x4] sm:$0xf]
      %v4061 = vld [vmem:[%s4058 + $0x8] sm:$0xf]
      %v4062 = vld [vmem:[%s4058 + $0xc] sm:$0xf]
      %v4063 = vld [vmem:[%s4058 + $0x10] sm:$0xf]
      %v4064 = vld [vmem:[%s4058 + $0x14] sm:$0xf]
      %v4065 = vld [vmem:[%s4058 + $0x18] sm:$0xf]
      %v4066 = vld [vmem:[%s4058 + $0x1c] sm:$0xf]
      %v4067 = vld [vmem:[%s4058 + $0x20] sm:$0xf]
      %v4068 = vld [vmem:[%s4058 + $0x24] sm:$0xf]
      %v4069 = vld [vmem:[%s4058 + $0x28] sm:$0xf]
      %v4070 = vld [vmem:[%s4058 + $0x2c] sm:$0xf]
      %v4071 = vld [vmem:[%s4058 + $0x30] sm:$0xf]
      %v4072 = vld [vmem:[%s4058 + $0x34] sm:$0xf]
      %v4073 = vld [vmem:[%s4058 + $0x38] sm:$0xf]
      %v4074 = vld [vmem:[%s4058 + $0x3c] sm:$0xf]
      %v4117 = vunpack.c.l.b16 %v4016
      %v4118 = vunpack.c.l.b16 %v4017
      %v4119 = vunpack.c.l.b16 %v4018
      %v4120 = vunpack.c.l.b16 %v4019
      %v4121 = vunpack.c.l.b16 %v4020
      %v4122 = vunpack.c.l.b16 %v4021
      %v4123 = vunpack.c.l.b16 %v4022
      %v4124 = vunpack.c.l.b16 %v4023
      %v4125 = vunpack.c.l.b16 %v4024
      %v4126 = vunpack.c.l.b16 %v4025
      %v4127 = vunpack.c.l.b16 %v4026
      %v4128 = vunpack.c.l.b16 %v4027
      %v4129 = vunpack.c.l.b16 %v4028
      %v4130 = vunpack.c.l.b16 %v4029
      %v4131 = vunpack.c.l.b16 %v4030
      %v4132 = vunpack.c.l.b16 %v4031
      %v4133 = vunpack.c.l.b16 %v4032
      %v4134 = vunpack.c.l.b16 %v4033
      %v4135 = vunpack.c.l.b16 %v4034
      %v4136 = vunpack.c.l.b16 %v4035
      %v4137 = vunpack.c.l.b16 %v4036
      %v4138 = vunpack.c.l.b16 %v4037
      %v4139 = vunpack.c.l.b16 %v4038
      %v4140 = vunpack.c.l.b16 %v4039
      %v4141 = vunpack.c.l.b16 %v4040
      %v4142 = vunpack.c.l.b16 %v4041
      %v4143 = vunpack.c.l.b16 %v4042
      %v4144 = vunpack.c.l.b16 %v4043
      %v4145 = vunpack.c.l.b16 %v4044
      %v4146 = vunpack.c.l.b16 %v4045
      %v4147 = vunpack.c.l.b16 %v4046
      %v4148 = vunpack.c.l.b16 %v4047
      %v4149 = vunpack.c.l.b16 %v4048
      %v4150 = vunpack.c.l.b16 %v4049
      %v4151 = vunpack.c.l.b16 %v4050
      %v4152 = vunpack.c.l.b16 %v4051
      %v4153 = vunpack.c.l.b16 %v4052
      %v4154 = vunpack.c.l.b16 %v4053
      %v4155 = vunpack.c.l.b16 %v4054
      %v4156 = vunpack.c.l.b16 %v4055
      %v4157 = vunpack.c.l.b16 %v4056
      %v4158 = vunpack.c.l.b16 %v4057
      %v4159 = vpack.c.b16 %v4118, %v4117
      %v4160 = vpack.c.b16 %v4120, %v4119
      %v4161 = vpack.c.b16 %v4122, %v4121
      %v4162 = vpack.c.b16 %v4124, %v4123
      %v4163 = vpack.c.b16 %v4126, %v4125
      %v4164 = vpack.c.b16 %v4128, %v4127
      %v4165 = vpack.c.b16 %v4130, %v4129
      %v4166 = vpack.c.b16 %v4132, %v4131
      %v4167 = vpack.c.b16 %v4134, %v4133
      %v4168 = vpack.c.b16 %v4136, %v4135
      %v4169 = vpack.c.b16 %v4138, %v4137
      %v4170 = vpack.c.b16 %v4140, %v4139
      %v4171 = vpack.c.b16 %v4142, %v4141
      %v4172 = vpack.c.b16 %v4144, %v4143
      %v4173 = vpack.c.b16 %v4146, %v4145
      %v4174 = vpack.c.b16 %v4148, %v4147
      %v4175 = vpack.c.b16 %v4150, %v4149
      %v4176 = vpack.c.b16 %v4152, %v4151
      %v4177 = vpack.c.b16 %v4154, %v4153
      %v4178 = vpack.c.b16 %v4156, %v4155
      %v4179 = vpack.c.b16 %v4158, %v4157
      %v4181 = vshrl.u32 %v4159, 16
      %v4183 = vshll.u32 %v4159, 16
      %v4185 = vrot.slane %v4183, 1
      %v4186 = vor.u32 %v4181, %v4185
      %v4188 = vshll.u32 %v4160, 16
      %v4190 = vrot.slane %v4188, 1
      %v4191 = vsel %vm3538, %v4186, %v4190
      %v4192 = vshrl.u32 %v4160, 16
      %v4194 = vor.u32 %v4192, %v4190
      %v4196 = vshll.u32 %v4161, 16
      %v4198 = vrot.slane %v4196, 1
      %v4199 = vsel %vm3538, %v4194, %v4198
      %v4200 = vshrl.u32 %v4161, 16
      %v4202 = vor.u32 %v4200, %v4198
      %v4204 = vshll.u32 %v4162, 16
      %v4206 = vrot.slane %v4204, 1
      %v4207 = vsel %vm3538, %v4202, %v4206
      %v4208 = vshrl.u32 %v4162, 16
      %v4210 = vor.u32 %v4208, %v4206
      %v4212 = vshll.u32 %v4163, 16
      %v4214 = vrot.slane %v4212, 1
      %v4215 = vsel %vm3538, %v4210, %v4214
      %v4216 = vshrl.u32 %v4163, 16
      %v4218 = vor.u32 %v4216, %v4214
      %v4220 = vshll.u32 %v4164, 16
      %v4222 = vrot.slane %v4220, 1
      %v4223 = vsel %vm3538, %v4218, %v4222
      %v4224 = vshrl.u32 %v4164, 16
      %v4226 = vor.u32 %v4224, %v4222
      %v4228 = vshll.u32 %v4165, 16
      %v4230 = vrot.slane %v4228, 1
      %v4231 = vsel %vm3538, %v4226, %v4230
      %v4232 = vshrl.u32 %v4165, 16
      %v4234 = vor.u32 %v4232, %v4230
      %v4236 = vshll.u32 %v4166, 16
      %v4238 = vrot.slane %v4236, 1
      %v4239 = vsel %vm3538, %v4234, %v4238
      %v4240 = vshrl.u32 %v4166, 16
      %v4242 = vor.u32 %v4240, %v4238
      %v4244 = vshll.u32 %v4167, 16
      %v4246 = vrot.slane %v4244, 1
      %v4247 = vsel %vm3538, %v4242, %v4246
      %v4248 = vshrl.u32 %v4167, 16
      %v4250 = vor.u32 %v4248, %v4246
      %v4252 = vshll.u32 %v4168, 16
      %v4254 = vrot.slane %v4252, 1
      %v4255 = vsel %vm3538, %v4250, %v4254
      %v4256 = vshrl.u32 %v4168, 16
      %v4258 = vor.u32 %v4256, %v4254
      %v4260 = vshll.u32 %v4169, 16
      %v4262 = vrot.slane %v4260, 1
      %v4263 = vsel %vm3538, %v4258, %v4262
      %v4264 = vshrl.u32 %v4169, 16
      %v4266 = vor.u32 %v4264, %v4262
      %v4268 = vshll.u32 %v4170, 16
      %v4270 = vrot.slane %v4268, 1
      %v4271 = vsel %vm3538, %v4266, %v4270
      %v4272 = vshrl.u32 %v4170, 16
      %v4274 = vor.u32 %v4272, %v4270
      %v4276 = vshll.u32 %v4171, 16
      %v4278 = vrot.slane %v4276, 1
      %v4279 = vsel %vm3538, %v4274, %v4278
      %v4280 = vshrl.u32 %v4171, 16
      %v4282 = vor.u32 %v4280, %v4278
      %v4284 = vshll.u32 %v4172, 16
      %v4286 = vrot.slane %v4284, 1
      %v4287 = vsel %vm3538, %v4282, %v4286
      %v4288 = vshrl.u32 %v4172, 16
      %v4290 = vor.u32 %v4288, %v4286
      %v4292 = vshll.u32 %v4173, 16
      %v4294 = vrot.slane %v4292, 1
      %v4295 = vsel %vm3538, %v4290, %v4294
      %v4296 = vshrl.u32 %v4173, 16
      %v4298 = vor.u32 %v4296, %v4294
      %v4300 = vshll.u32 %v4174, 16
      %v4302 = vrot.slane %v4300, 1
      %v4303 = vsel %vm3538, %v4298, %v4302
      %v4304 = vshrl.u32 %v4174, 16
      %v4306 = vor.u32 %v4304, %v4302
      %v4308 = vshll.u32 %v4175, 16
      %v4310 = vrot.slane %v4308, 1
      %v4311 = vsel %vm3538, %v4306, %v4310
      %v4312 = vshrl.u32 %v4175, 16
      %v4314 = vor.u32 %v4312, %v4310
      %v4316 = vshll.u32 %v4176, 16
      %v4318 = vrot.slane %v4316, 1
      %v4319 = vsel %vm3538, %v4314, %v4318
      %v4320 = vshrl.u32 %v4176, 16
      %v4322 = vor.u32 %v4320, %v4318
      %v4324 = vshll.u32 %v4177, 16
      %v4326 = vrot.slane %v4324, 1
      %v4327 = vsel %vm3538, %v4322, %v4326
      %v4328 = vshrl.u32 %v4177, 16
      %v4330 = vor.u32 %v4328, %v4326
      %v4332 = vshll.u32 %v4178, 16
      %v4334 = vrot.slane %v4332, 1
      %v4335 = vsel %vm3538, %v4330, %v4334
      %v4336 = vshrl.u32 %v4178, 16
      %v4338 = vor.u32 %v4336, %v4334
      %v4340 = vshll.u32 %v4179, 16
      %v4342 = vrot.slane %v4340, 1
      %v4343 = vsel %vm3538, %v4338, %v4342
      %v4344 = vshrl.u32 %v4179, 16
      %v4346 = vor.u32 %v4344, %v4342
      %v4384 = vunpack.c.l.b16 %v4059
      %v4385 = vunpack.c.l.b16 %v4060
      %v4386 = vunpack.c.l.b16 %v4061
      %v4387 = vunpack.c.l.b16 %v4062
      %v4388 = vunpack.c.l.b16 %v4063
      %v4389 = vunpack.c.l.b16 %v4064
      %v4390 = vunpack.c.l.b16 %v4065
      %v4391 = vunpack.c.l.b16 %v4066
      %v4392 = vunpack.c.l.b16 %v4067
      %v4393 = vunpack.c.l.b16 %v4068
      %v4394 = vunpack.c.l.b16 %v4069
      %v4395 = vunpack.c.l.b16 %v4070
      %v4396 = vunpack.c.l.b16 %v4071
      %v4397 = vunpack.c.l.b16 %v4072
      %v4398 = vunpack.c.l.b16 %v4073
      %v4399 = vunpack.c.l.b16 %v4074
      %v4400 = vpack.c.b16 %v4385, %v4384
      %v4401 = vpack.c.b16 %v4387, %v4386
      %v4402 = vpack.c.b16 %v4389, %v4388
      %v4403 = vpack.c.b16 %v4391, %v4390
      %v4404 = vpack.c.b16 %v4393, %v4392
      %v4405 = vpack.c.b16 %v4395, %v4394
      %v4406 = vpack.c.b16 %v4397, %v4396
      %v4407 = vpack.c.b16 %v4399, %v4398
      %4416 = vmatprep.subr.bf16.mxu0 0
      %4417 = vmatpush1.bf16.msra.mxu0 %v4407
      %4418 = vmatprep.subr.bf16.mxu0 0
      %4419 = vmatpush1.bf16.msra.mxu0 %v4406
      %4420 = vmatprep.subr.bf16.mxu0 0
      %4421 = vmatpush1.bf16.msra.mxu0 %v4405
      %4422 = vmatprep.subr.bf16.mxu0 0
      %4423 = vmatpush1.bf16.msra.mxu0 %v4404
      %4424 = vmatprep.subr.bf16.mxu0 0
      %4425 = vmatpush1.bf16.msra.mxu0 %v4403
      %4426 = vmatprep.subr.bf16.mxu0 0
      %4427 = vmatpush1.bf16.msra.mxu0 %v4402
      %4428 = vmatprep.subr.bf16.mxu0 0
      %4429 = vmatpush1.bf16.msra.mxu0 %v4401
      %4430 = vmatprep.subr.bf16.mxu0 0
      %4431 = vmatpush1.bf16.msra.mxu0 %v4400
      %4432 = vmatprep.subr.bf16.mxu0 0
      %4433 = vmatpush2.bf16.msra.mxu0 0
      %4434 = vmatprep.subr.bf16.mxu0 0
      %4435 = vmatpush2.bf16.msra.mxu0 0
      %4436 = vmatprep.subr.bf16.mxu0 0
      %4437 = vmatpush2.bf16.msra.mxu0 0
      %4438 = vmatprep.subr.bf16.mxu0 0
      %4439 = vmatpush2.bf16.msra.mxu0 0
      %4440 = vmatprep.subr.bf16.mxu0 0
      %4441 = vmatpush2.bf16.msra.mxu0 0
      %4442 = vmatprep.subr.bf16.mxu0 0
      %4443 = vmatpush2.bf16.msra.mxu0 0
      %4444 = vmatprep.subr.bf16.mxu0 0
      %4445 = vmatpush2.bf16.msra.mxu0 0
      %4446 = vmatprep.subr.bf16.mxu0 0
      %4447 = vmatpush2.bf16.msra.mxu0 0
      %4448 = vmatprep.mubr.bf16.mxu0 0
      %4449 = vmatmul.mubr.bf16.gmra.mxu0 %v4191
      %v4450 = vpop.f32.mrf.mxu0
      %v4451 = vadd.f32 0.0, %v4450
      %v4452 = vpop.f32.mrf.mxu0
      %v4453 = vpop.f32.mrf.mxu0
      %v4454 = vadd.f32 0.0, %v4453
      %v4455 = vpop.f32.mrf.mxu0
      %4456 = vmatprep.mubr.bf16.mxu0 0
      %4457 = vmatmul.mubr.bf16.gmra.mxu0 %v4199
      %v4458 = vpop.f32.mrf.mxu0
      %v4459 = vadd.f32 0.0, %v4458
      %v4460 = vpop.f32.mrf.mxu0
      %v4461 = vpop.f32.mrf.mxu0
      %v4462 = vadd.f32 0.0, %v4461
      %v4463 = vpop.f32.mrf.mxu0
      %4464 = vmatprep.mubr.bf16.mxu0 0
      %4465 = vmatmul.mubr.bf16.gmra.mxu0 %v4207
      %v4466 = vpop.f32.mrf.mxu0
      %v4467 = vadd.f32 0.0, %v4466
      %v4468 = vpop.f32.mrf.mxu0
      %v4469 = vpop.f32.mrf.mxu0
      %v4470 = vadd.f32 0.0, %v4469
      %v4471 = vpop.f32.mrf.mxu0
      %4472 = vmatprep.mubr.bf16.mxu0 0
      %4473 = vmatmul.mubr.bf16.gmra.mxu0 %v4215
      %v4474 = vpop.f32.mrf.mxu0
      %v4475 = vadd.f32 0.0, %v4474
      %v4476 = vpop.f32.mrf.mxu0
      %v4477 = vpop.f32.mrf.mxu0
      %v4478 = vadd.f32 0.0, %v4477
      %v4479 = vpop.f32.mrf.mxu0
      %4480 = vmatprep.mubr.bf16.mxu0 0
      %4481 = vmatmul.mubr.bf16.gmra.mxu0 %v4223
      %v4482 = vpop.f32.mrf.mxu0
      %v4483 = vadd.f32 0.0, %v4482
      %v4484 = vpop.f32.mrf.mxu0
      %v4485 = vpop.f32.mrf.mxu0
      %v4486 = vadd.f32 0.0, %v4485
      %v4487 = vpop.f32.mrf.mxu0
      %4488 = vmatprep.mubr.bf16.mxu0 0
      %4489 = vmatmul.mubr.bf16.gmra.mxu0 %v4231
      %v4490 = vpop.f32.mrf.mxu0
      %v4491 = vadd.f32 0.0, %v4490
      %v4492 = vpop.f32.mrf.mxu0
      %v4493 = vpop.f32.mrf.mxu0
      %v4494 = vadd.f32 0.0, %v4493
      %v4495 = vpop.f32.mrf.mxu0
      %4496 = vmatprep.mubr.bf16.mxu0 0
      %4497 = vmatmul.mubr.bf16.gmra.mxu0 %v4239
      %v4498 = vpop.f32.mrf.mxu0
      %v4499 = vadd.f32 0.0, %v4498
      %v4500 = vpop.f32.mrf.mxu0
      %v4501 = vpop.f32.mrf.mxu0
      %v4502 = vadd.f32 0.0, %v4501
      %v4503 = vpop.f32.mrf.mxu0
      %4504 = vmatprep.mubr.bf16.mxu0 0
      %4505 = vmatmul.mubr.bf16.gmra.mxu0 %v4247
      %v4506 = vpop.f32.mrf.mxu0
      %v4507 = vadd.f32 0.0, %v4506
      %v4508 = vpop.f32.mrf.mxu0
      %v4509 = vpop.f32.mrf.mxu0
      %v4510 = vadd.f32 0.0, %v4509
      %v4511 = vpop.f32.mrf.mxu0
      %4512 = vmatprep.mubr.bf16.mxu0 0
      %4513 = vmatmul.mubr.bf16.gmra.mxu0 %v4255
      %v4514 = vpop.f32.mrf.mxu0
      %v4515 = vadd.f32 0.0, %v4514
      %v4516 = vpop.f32.mrf.mxu0
      %v4517 = vpop.f32.mrf.mxu0
      %v4518 = vadd.f32 0.0, %v4517
      %v4519 = vpop.f32.mrf.mxu0
      %4520 = vmatprep.mubr.bf16.mxu0 0
      %4521 = vmatmul.mubr.bf16.gmra.mxu0 %v4263
      %v4522 = vpop.f32.mrf.mxu0
      %v4523 = vadd.f32 0.0, %v4522
      %v4524 = vpop.f32.mrf.mxu0
      %v4525 = vpop.f32.mrf.mxu0
      %v4526 = vadd.f32 0.0, %v4525
      %v4527 = vpop.f32.mrf.mxu0
      %4528 = vmatprep.mubr.bf16.mxu0 0
      %4529 = vmatmul.mubr.bf16.gmra.mxu0 %v4271
      %v4530 = vpop.f32.mrf.mxu0
      %v4531 = vadd.f32 0.0, %v4530
      %v4532 = vpop.f32.mrf.mxu0
      %v4533 = vpop.f32.mrf.mxu0
      %v4534 = vadd.f32 0.0, %v4533
      %v4535 = vpop.f32.mrf.mxu0
      %4536 = vmatprep.mubr.bf16.mxu0 0
      %4537 = vmatmul.mubr.bf16.gmra.mxu0 %v4279
      %v4538 = vpop.f32.mrf.mxu0
      %v4539 = vadd.f32 0.0, %v4538
      %v4540 = vpop.f32.mrf.mxu0
      %v4541 = vpop.f32.mrf.mxu0
      %v4542 = vadd.f32 0.0, %v4541
      %v4543 = vpop.f32.mrf.mxu0
      %4544 = vmatprep.mubr.bf16.mxu0 0
      %4545 = vmatmul.mubr.bf16.gmra.mxu0 %v4287
      %v4546 = vpop.f32.mrf.mxu0
      %v4547 = vadd.f32 0.0, %v4546
      %v4548 = vpop.f32.mrf.mxu0
      %v4549 = vpop.f32.mrf.mxu0
      %v4550 = vadd.f32 0.0, %v4549
      %v4551 = vpop.f32.mrf.mxu0
      %4552 = vmatprep.mubr.bf16.mxu0 0
      %4553 = vmatmul.mubr.bf16.gmra.mxu0 %v4295
      %v4554 = vpop.f32.mrf.mxu0
      %v4555 = vadd.f32 0.0, %v4554
      %v4556 = vpop.f32.mrf.mxu0
      %v4557 = vpop.f32.mrf.mxu0
      %v4558 = vadd.f32 0.0, %v4557
      %v4559 = vpop.f32.mrf.mxu0
      %4560 = vmatprep.mubr.bf16.mxu0 0
      %4561 = vmatmul.mubr.bf16.gmra.mxu0 %v4303
      %v4562 = vpop.f32.mrf.mxu0
      %v4563 = vadd.f32 0.0, %v4562
      %v4564 = vpop.f32.mrf.mxu0
      %v4565 = vpop.f32.mrf.mxu0
      %v4566 = vadd.f32 0.0, %v4565
      %v4567 = vpop.f32.mrf.mxu0
      %4568 = vmatprep.mubr.bf16.mxu0 0
      %4569 = vmatmul.mubr.bf16.gmra.mxu0 %v4311
      %v4570 = vpop.f32.mrf.mxu0
      %v4571 = vadd.f32 0.0, %v4570
      %v4572 = vpop.f32.mrf.mxu0
      %v4573 = vpop.f32.mrf.mxu0
      %v4574 = vadd.f32 0.0, %v4573
      %v4575 = vpop.f32.mrf.mxu0
      %4576 = vmatprep.mubr.bf16.mxu0 0
      %4577 = vmatmul.mubr.bf16.gmra.mxu0 %v4319
      %v4578 = vpop.f32.mrf.mxu0
      %v4579 = vadd.f32 0.0, %v4578
      %v4580 = vpop.f32.mrf.mxu0
      %v4581 = vpop.f32.mrf.mxu0
      %v4582 = vadd.f32 0.0, %v4581
      %v4583 = vpop.f32.mrf.mxu0
      %4584 = vmatprep.mubr.bf16.mxu0 0
      %4585 = vmatmul.mubr.bf16.gmra.mxu0 %v4327
      %v4586 = vpop.f32.mrf.mxu0
      %v4587 = vadd.f32 0.0, %v4586
      %v4588 = vpop.f32.mrf.mxu0
      %v4589 = vpop.f32.mrf.mxu0
      %v4590 = vadd.f32 0.0, %v4589
      %v4591 = vpop.f32.mrf.mxu0
      %4592 = vmatprep.mubr.bf16.mxu0 0
      %4593 = vmatmul.mubr.bf16.gmra.mxu0 %v4335
      %v4594 = vpop.f32.mrf.mxu0
      %v4595 = vadd.f32 0.0, %v4594
      %v4596 = vpop.f32.mrf.mxu0
      %v4597 = vpop.f32.mrf.mxu0
      %v4598 = vadd.f32 0.0, %v4597
      %v4599 = vpop.f32.mrf.mxu0
      %4600 = vmatprep.mubr.bf16.mxu0 0
      %4601 = vmatmul.mubr.bf16.gmra.mxu0 %v4343
      %v4602 = vpop.f32.mrf.mxu0
      %v4603 = vadd.f32 0.0, %v4602
      %v4604 = vpop.f32.mrf.mxu0
      %v4605 = vpop.f32.mrf.mxu0
      %v4606 = vadd.f32 0.0, %v4605
      %v4607 = vpop.f32.mrf.mxu0
      %4608 = vmatprep.mubr.bf16.mxu0 0
      %4609 = vmatmul.mubr.bf16.gmra.mxu0 %v4346
      %v4610 = vpop.f32.mrf.mxu0
      %v4611 = vadd.f32 0.0, %v4610
      %v4612 = vpop.f32.mrf.mxu0
      %v4613 = vpop.f32.mrf.mxu0
      %v4614 = vpop.f32.mrf.mxu0
      %4615 = vdwg.mxu0
      %v4616 = vadd.f32 %v3975, %v4451
      %v4617 = vadd.f32 %v3976, %v4454
      %v4618 = vadd.f32 %v3977, %v4459
      %v4619 = vadd.f32 %v3978, %v4462
      %v4620 = vadd.f32 %v3979, %v4467
      %v4621 = vadd.f32 %v3980, %v4470
      %v4622 = vadd.f32 %v3981, %v4475
      %v4623 = vadd.f32 %v3982, %v4478
      %v4624 = vadd.f32 %v3983, %v4483
      %v4625 = vadd.f32 %v3984, %v4486
      %v4626 = vadd.f32 %v3985, %v4491
      %v4627 = vadd.f32 %v3986, %v4494
      %v4628 = vadd.f32 %v3987, %v4499
      %v4629 = vadd.f32 %v3988, %v4502
      %v4630 = vadd.f32 %v3989, %v4507
      %v4631 = vadd.f32 %v3990, %v4510
      %v4632 = vadd.f32 %v3991, %v4515
      %v4633 = vadd.f32 %v3992, %v4518
      %v4634 = vadd.f32 %v3993, %v4523
      %v4635 = vadd.f32 %v3994, %v4526
      %v4636 = vadd.f32 %v3995, %v4531
      %v4637 = vadd.f32 %v3996, %v4534
      %v4638 = vadd.f32 %v3997, %v4539
      %v4639 = vadd.f32 %v3998, %v4542
      %v4640 = vadd.f32 %v3999, %v4547
      %v4641 = vadd.f32 %v4000, %v4550
      %v4642 = vadd.f32 %v4001, %v4555
      %v4643 = vadd.f32 %v4002, %v4558
      %v4644 = vadd.f32 %v4003, %v4563
      %v4645 = vadd.f32 %v4004, %v4566
      %v4646 = vadd.f32 %v4005, %v4571
      %v4647 = vadd.f32 %v4006, %v4574
      %v4648 = vadd.f32 %v4007, %v4579
      %v4649 = vadd.f32 %v4008, %v4582
      %v4650 = vadd.f32 %v4009, %v4587
      %v4651 = vadd.f32 %v4010, %v4590
      %v4652 = vadd.f32 %v4011, %v4595
      %v4653 = vadd.f32 %v4012, %v4598
      %v4654 = vadd.f32 %v4013, %v4603
      %v4655 = vadd.f32 %v4014, %v4606
      %v4656 = vadd.f32 %v4015, %v4611
      %v4657 = vld [vmem:[#allocation2 + $0x14] sm:$0xe]
      %s4658 = scalar_lea.vmem %s4, 448
      %v4659 = vld [vmem:[%s4658] sm:$0xf]
      %v4660 = vld [vmem:[%s4658 + $0x4] sm:$0xf]
      %v4661 = vld [vmem:[%s4658 + $0x8] sm:$0xf]
      %v4662 = vld [vmem:[%s4658 + $0xc] sm:$0xf]
      %v4663 = vld [vmem:[%s4658 + $0x10] sm:$0xf]
      %v4664 = vld [vmem:[%s4658 + $0x14] sm:$0xf]
      %v4665 = vld [vmem:[%s4658 + $0x18] sm:$0xf]
      %v4666 = vld [vmem:[%s4658 + $0x1c] sm:$0xf]
      %v4667 = vld [vmem:[%s4658 + $0x20] sm:$0xf]
      %v4668 = vld [vmem:[%s4658 + $0x24] sm:$0xf]
      %v4669 = vld [vmem:[%s4658 + $0x28] sm:$0xf]
      %v4670 = vld [vmem:[%s4658 + $0x2c] sm:$0xf]
      %v4671 = vld [vmem:[%s4658 + $0x30] sm:$0xf]
      %v4672 = vld [vmem:[%s4658 + $0x34] sm:$0xf]
      %v4673 = vld [vmem:[%s4658 + $0x38] sm:$0xf]
      %v4674 = vld [vmem:[%s4658 + $0x3c] sm:$0xf]
      %v4676 = vunpack.c.l.b16 %v4657
      %v4677 = vpack.c.b16 %v4118, %v4676
      %vm4678 = vcmask 1046528
      %v4679 = vrot.slane %v4677, 1
      %v4680 = vrot.slane %v4160, 1
      %v4681 = vsel %vm4678, %v4679, %v4680
      %v4682 = vrot.slane %v4161, 1
      %v4683 = vsel %vm4678, %v4680, %v4682
      %v4684 = vrot.slane %v4162, 1
      %v4685 = vsel %vm4678, %v4682, %v4684
      %v4686 = vrot.slane %v4163, 1
      %v4687 = vsel %vm4678, %v4684, %v4686
      %v4688 = vrot.slane %v4164, 1
      %v4689 = vsel %vm4678, %v4686, %v4688
      %v4690 = vrot.slane %v4165, 1
      %v4691 = vsel %vm4678, %v4688, %v4690
      %v4692 = vrot.slane %v4166, 1
      %v4693 = vsel %vm4678, %v4690, %v4692
      %v4694 = vrot.slane %v4167, 1
      %v4695 = vsel %vm4678, %v4692, %v4694
      %v4696 = vrot.slane %v4168, 1
      %v4697 = vsel %vm4678, %v4694, %v4696
      %v4698 = vrot.slane %v4169, 1
      %v4699 = vsel %vm4678, %v4696, %v4698
      %v4700 = vrot.slane %v4170, 1
      %v4701 = vsel %vm4678, %v4698, %v4700
      %v4702 = vrot.slane %v4171, 1
      %v4703 = vsel %vm4678, %v4700, %v4702
      %v4704 = vrot.slane %v4172, 1
      %v4705 = vsel %vm4678, %v4702, %v4704
      %v4706 = vrot.slane %v4173, 1
      %v4707 = vsel %vm4678, %v4704, %v4706
      %v4708 = vrot.slane %v4174, 1
      %v4709 = vsel %vm4678, %v4706, %v4708
      %v4710 = vrot.slane %v4175, 1
      %v4711 = vsel %vm4678, %v4708, %v4710
      %v4712 = vrot.slane %v4176, 1
      %v4713 = vsel %vm4678, %v4710, %v4712
      %v4714 = vrot.slane %v4177, 1
      %v4715 = vsel %vm4678, %v4712, %v4714
      %v4716 = vrot.slane %v4178, 1
      %v4717 = vsel %vm4678, %v4714, %v4716
      %v4718 = vrot.slane %v4179, 1
      %v4719 = vsel %vm4678, %v4716, %v4718
      %v4757 = vunpack.c.l.b16 %v4659
      %v4758 = vunpack.c.l.b16 %v4660
      %v4759 = vunpack.c.l.b16 %v4661
      %v4760 = vunpack.c.l.b16 %v4662
      %v4761 = vunpack.c.l.b16 %v4663
      %v4762 = vunpack.c.l.b16 %v4664
      %v4763 = vunpack.c.l.b16 %v4665
      %v4764 = vunpack.c.l.b16 %v4666
      %v4765 = vunpack.c.l.b16 %v4667
      %v4766 = vunpack.c.l.b16 %v4668
      %v4767 = vunpack.c.l.b16 %v4669
      %v4768 = vunpack.c.l.b16 %v4670
      %v4769 = vunpack.c.l.b16 %v4671
      %v4770 = vunpack.c.l.b16 %v4672
      %v4771 = vunpack.c.l.b16 %v4673
      %v4772 = vunpack.c.l.b16 %v4674
      %v4773 = vpack.c.b16 %v4758, %v4757
      %v4774 = vpack.c.b16 %v4760, %v4759
      %v4775 = vpack.c.b16 %v4762, %v4761
      %v4776 = vpack.c.b16 %v4764, %v4763
      %v4777 = vpack.c.b16 %v4766, %v4765
      %v4778 = vpack.c.b16 %v4768, %v4767
      %v4779 = vpack.c.b16 %v4770, %v4769
      %v4780 = vpack.c.b16 %v4772, %v4771
      %4789 = vmatprep.subr.bf16.mxu0 0
      %4790 = vmatpush1.bf16.msra.mxu0 %v4780
      %4791 = vmatprep.subr.bf16.mxu0 0
      %4792 = vmatpush1.bf16.msra.mxu0 %v4779
      %4793 = vmatprep.subr.bf16.mxu0 0
      %4794 = vmatpush1.bf16.msra.mxu0 %v4778
      %4795 = vmatprep.subr.bf16.mxu0 0
      %4796 = vmatpush1.bf16.msra.mxu0 %v4777
      %4797 = vmatprep.subr.bf16.mxu0 0
      %4798 = vmatpush1.bf16.msra.mxu0 %v4776
      %4799 = vmatprep.subr.bf16.mxu0 0
      %4800 = vmatpush1.bf16.msra.mxu0 %v4775
      %4801 = vmatprep.subr.bf16.mxu0 0
      %4802 = vmatpush1.bf16.msra.mxu0 %v4774
      %4803 = vmatprep.subr.bf16.mxu0 0
      %4804 = vmatpush1.bf16.msra.mxu0 %v4773
      %4805 = vmatprep.subr.bf16.mxu0 0
      %4806 = vmatpush2.bf16.msra.mxu0 0
      %4807 = vmatprep.subr.bf16.mxu0 0
      %4808 = vmatpush2.bf16.msra.mxu0 0
      %4809 = vmatprep.subr.bf16.mxu0 0
      %4810 = vmatpush2.bf16.msra.mxu0 0
      %4811 = vmatprep.subr.bf16.mxu0 0
      %4812 = vmatpush2.bf16.msra.mxu0 0
      %4813 = vmatprep.subr.bf16.mxu0 0
      %4814 = vmatpush2.bf16.msra.mxu0 0
      %4815 = vmatprep.subr.bf16.mxu0 0
      %4816 = vmatpush2.bf16.msra.mxu0 0
      %4817 = vmatprep.subr.bf16.mxu0 0
      %4818 = vmatpush2.bf16.msra.mxu0 0
      %4819 = vmatprep.subr.bf16.mxu0 0
      %4820 = vmatpush2.bf16.msra.mxu0 0
      %4821 = vmatprep.mubr.bf16.mxu0 0
      %4822 = vmatmul.mubr.bf16.gmra.mxu0 %v4681
      %v4823 = vpop.f32.mrf.mxu0
      %v4824 = vadd.f32 0.0, %v4823
      %v4825 = vpop.f32.mrf.mxu0
      %v4826 = vpop.f32.mrf.mxu0
      %v4827 = vadd.f32 0.0, %v4826
      %v4828 = vpop.f32.mrf.mxu0
      %4829 = vmatprep.mubr.bf16.mxu0 0
      %4830 = vmatmul.mubr.bf16.gmra.mxu0 %v4683
      %v4831 = vpop.f32.mrf.mxu0
      %v4832 = vadd.f32 0.0, %v4831
      %v4833 = vpop.f32.mrf.mxu0
      %v4834 = vpop.f32.mrf.mxu0
      %v4835 = vadd.f32 0.0, %v4834
      %v4836 = vpop.f32.mrf.mxu0
      %4837 = vmatprep.mubr.bf16.mxu0 0
      %4838 = vmatmul.mubr.bf16.gmra.mxu0 %v4685
      %v4839 = vpop.f32.mrf.mxu0
      %v4840 = vadd.f32 0.0, %v4839
      %v4841 = vpop.f32.mrf.mxu0
      %v4842 = vpop.f32.mrf.mxu0
      %v4843 = vadd.f32 0.0, %v4842
      %v4844 = vpop.f32.mrf.mxu0
      %4845 = vmatprep.mubr.bf16.mxu0 0
      %4846 = vmatmul.mubr.bf16.gmra.mxu0 %v4687
      %v4847 = vpop.f32.mrf.mxu0
      %v4848 = vadd.f32 0.0, %v4847
      %v4849 = vpop.f32.mrf.mxu0
      %v4850 = vpop.f32.mrf.mxu0
      %v4851 = vadd.f32 0.0, %v4850
      %v4852 = vpop.f32.mrf.mxu0
      %4853 = vmatprep.mubr.bf16.mxu0 0
      %4854 = vmatmul.mubr.bf16.gmra.mxu0 %v4689
      %v4855 = vpop.f32.mrf.mxu0
      %v4856 = vadd.f32 0.0, %v4855
      %v4857 = vpop.f32.mrf.mxu0
      %v4858 = vpop.f32.mrf.mxu0
      %v4859 = vadd.f32 0.0, %v4858
      %v4860 = vpop.f32.mrf.mxu0
      %4861 = vmatprep.mubr.bf16.mxu0 0
      %4862 = vmatmul.mubr.bf16.gmra.mxu0 %v4691
      %v4863 = vpop.f32.mrf.mxu0
      %v4864 = vadd.f32 0.0, %v4863
      %v4865 = vpop.f32.mrf.mxu0
      %v4866 = vpop.f32.mrf.mxu0
      %v4867 = vadd.f32 0.0, %v4866
      %v4868 = vpop.f32.mrf.mxu0
      %4869 = vmatprep.mubr.bf16.mxu0 0
      %4870 = vmatmul.mubr.bf16.gmra.mxu0 %v4693
      %v4871 = vpop.f32.mrf.mxu0
      %v4872 = vadd.f32 0.0, %v4871
      %v4873 = vpop.f32.mrf.mxu0
      %v4874 = vpop.f32.mrf.mxu0
      %v4875 = vadd.f32 0.0, %v4874
      %v4876 = vpop.f32.mrf.mxu0
      %4877 = vmatprep.mubr.bf16.mxu0 0
      %4878 = vmatmul.mubr.bf16.gmra.mxu0 %v4695
      %v4879 = vpop.f32.mrf.mxu0
      %v4880 = vadd.f32 0.0, %v4879
      %v4881 = vpop.f32.mrf.mxu0
      %v4882 = vpop.f32.mrf.mxu0
      %v4883 = vadd.f32 0.0, %v4882
      %v4884 = vpop.f32.mrf.mxu0
      %4885 = vmatprep.mubr.bf16.mxu0 0
      %4886 = vmatmul.mubr.bf16.gmra.mxu0 %v4697
      %v4887 = vpop.f32.mrf.mxu0
      %v4888 = vadd.f32 0.0, %v4887
      %v4889 = vpop.f32.mrf.mxu0
      %v4890 = vpop.f32.mrf.mxu0
      %v4891 = vadd.f32 0.0, %v4890
      %v4892 = vpop.f32.mrf.mxu0
      %4893 = vmatprep.mubr.bf16.mxu0 0
      %4894 = vmatmul.mubr.bf16.gmra.mxu0 %v4699
      %v4895 = vpop.f32.mrf.mxu0
      %v4896 = vadd.f32 0.0, %v4895
      %v4897 = vpop.f32.mrf.mxu0
      %v4898 = vpop.f32.mrf.mxu0
      %v4899 = vadd.f32 0.0, %v4898
      %v4900 = vpop.f32.mrf.mxu0
      %4901 = vmatprep.mubr.bf16.mxu0 0
      %4902 = vmatmul.mubr.bf16.gmra.mxu0 %v4701
      %v4903 = vpop.f32.mrf.mxu0
      %v4904 = vadd.f32 0.0, %v4903
      %v4905 = vpop.f32.mrf.mxu0
      %v4906 = vpop.f32.mrf.mxu0
      %v4907 = vadd.f32 0.0, %v4906
      %v4908 = vpop.f32.mrf.mxu0
      %4909 = vmatprep.mubr.bf16.mxu0 0
      %4910 = vmatmul.mubr.bf16.gmra.mxu0 %v4703
      %v4911 = vpop.f32.mrf.mxu0
      %v4912 = vadd.f32 0.0, %v4911
      %v4913 = vpop.f32.mrf.mxu0
      %v4914 = vpop.f32.mrf.mxu0
      %v4915 = vadd.f32 0.0, %v4914
      %v4916 = vpop.f32.mrf.mxu0
      %4917 = vmatprep.mubr.bf16.mxu0 0
      %4918 = vmatmul.mubr.bf16.gmra.mxu0 %v4705
      %v4919 = vpop.f32.mrf.mxu0
      %v4920 = vadd.f32 0.0, %v4919
      %v4921 = vpop.f32.mrf.mxu0
      %v4922 = vpop.f32.mrf.mxu0
      %v4923 = vadd.f32 0.0, %v4922
      %v4924 = vpop.f32.mrf.mxu0
      %4925 = vmatprep.mubr.bf16.mxu0 0
      %4926 = vmatmul.mubr.bf16.gmra.mxu0 %v4707
      %v4927 = vpop.f32.mrf.mxu0
      %v4928 = vadd.f32 0.0, %v4927
      %v4929 = vpop.f32.mrf.mxu0
      %v4930 = vpop.f32.mrf.mxu0
      %v4931 = vadd.f32 0.0, %v4930
      %v4932 = vpop.f32.mrf.mxu0
      %4933 = vmatprep.mubr.bf16.mxu0 0
      %4934 = vmatmul.mubr.bf16.gmra.mxu0 %v4709
      %v4935 = vpop.f32.mrf.mxu0
      %v4936 = vadd.f32 0.0, %v4935
      %v4937 = vpop.f32.mrf.mxu0
      %v4938 = vpop.f32.mrf.mxu0
      %v4939 = vadd.f32 0.0, %v4938
      %v4940 = vpop.f32.mrf.mxu0
      %4941 = vmatprep.mubr.bf16.mxu0 0
      %4942 = vmatmul.mubr.bf16.gmra.mxu0 %v4711
      %v4943 = vpop.f32.mrf.mxu0
      %v4944 = vadd.f32 0.0, %v4943
      %v4945 = vpop.f32.mrf.mxu0
      %v4946 = vpop.f32.mrf.mxu0
      %v4947 = vadd.f32 0.0, %v4946
      %v4948 = vpop.f32.mrf.mxu0
      %4949 = vmatprep.mubr.bf16.mxu0 0
      %4950 = vmatmul.mubr.bf16.gmra.mxu0 %v4713
      %v4951 = vpop.f32.mrf.mxu0
      %v4952 = vadd.f32 0.0, %v4951
      %v4953 = vpop.f32.mrf.mxu0
      %v4954 = vpop.f32.mrf.mxu0
      %v4955 = vadd.f32 0.0, %v4954
      %v4956 = vpop.f32.mrf.mxu0
      %4957 = vmatprep.mubr.bf16.mxu0 0
      %4958 = vmatmul.mubr.bf16.gmra.mxu0 %v4715
      %v4959 = vpop.f32.mrf.mxu0
      %v4960 = vadd.f32 0.0, %v4959
      %v4961 = vpop.f32.mrf.mxu0
      %v4962 = vpop.f32.mrf.mxu0
      %v4963 = vadd.f32 0.0, %v4962
      %v4964 = vpop.f32.mrf.mxu0
      %4965 = vmatprep.mubr.bf16.mxu0 0
      %4966 = vmatmul.mubr.bf16.gmra.mxu0 %v4717
      %v4967 = vpop.f32.mrf.mxu0
      %v4968 = vadd.f32 0.0, %v4967
      %v4969 = vpop.f32.mrf.mxu0
      %v4970 = vpop.f32.mrf.mxu0
      %v4971 = vadd.f32 0.0, %v4970
      %v4972 = vpop.f32.mrf.mxu0
      %4973 = vmatprep.mubr.bf16.mxu0 0
      %4974 = vmatmul.mubr.bf16.gmra.mxu0 %v4719
      %v4975 = vpop.f32.mrf.mxu0
      %v4976 = vadd.f32 0.0, %v4975
      %v4977 = vpop.f32.mrf.mxu0
      %v4978 = vpop.f32.mrf.mxu0
      %v4979 = vadd.f32 0.0, %v4978
      %v4980 = vpop.f32.mrf.mxu0
      %4981 = vmatprep.mubr.bf16.mxu0 0
      %4982 = vmatmul.mubr.bf16.gmra.mxu0 %v4718
      %v4983 = vpop.f32.mrf.mxu0
      %v4984 = vadd.f32 0.0, %v4983
      %v4985 = vpop.f32.mrf.mxu0
      %v4986 = vpop.f32.mrf.mxu0
      %v4987 = vpop.f32.mrf.mxu0
      %4988 = vdwg.mxu0
      %v4989 = vadd.f32 %v4616, %v4824
      %v4990 = vadd.f32 %v4617, %v4827
      %v4991 = vadd.f32 %v4618, %v4832
      %v4992 = vadd.f32 %v4619, %v4835
      %v4993 = vadd.f32 %v4620, %v4840
      %v4994 = vadd.f32 %v4621, %v4843
      %v4995 = vadd.f32 %v4622, %v4848
      %v4996 = vadd.f32 %v4623, %v4851
      %v4997 = vadd.f32 %v4624, %v4856
      %v4998 = vadd.f32 %v4625, %v4859
      %v4999 = vadd.f32 %v4626, %v4864
      %v5000 = vadd.f32 %v4627, %v4867
      %v5001 = vadd.f32 %v4628, %v4872
      %v5002 = vadd.f32 %v4629, %v4875
      %v5003 = vadd.f32 %v4630, %v4880
      %v5004 = vadd.f32 %v4631, %v4883
      %v5005 = vadd.f32 %v4632, %v4888
      %v5006 = vadd.f32 %v4633, %v4891
      %v5007 = vadd.f32 %v4634, %v4896
      %v5008 = vadd.f32 %v4635, %v4899
      %v5009 = vadd.f32 %v4636, %v4904
      %v5010 = vadd.f32 %v4637, %v4907
      %v5011 = vadd.f32 %v4638, %v4912
      %v5012 = vadd.f32 %v4639, %v4915
      %v5013 = vadd.f32 %v4640, %v4920
      %v5014 = vadd.f32 %v4641, %v4923
      %v5015 = vadd.f32 %v4642, %v4928
      %v5016 = vadd.f32 %v4643, %v4931
      %v5017 = vadd.f32 %v4644, %v4936
      %v5018 = vadd.f32 %v4645, %v4939
      %v5019 = vadd.f32 %v4646, %v4944
      %v5020 = vadd.f32 %v4647, %v4947
      %v5021 = vadd.f32 %v4648, %v4952
      %v5022 = vadd.f32 %v4649, %v4955
      %v5023 = vadd.f32 %v4650, %v4960
      %v5024 = vadd.f32 %v4651, %v4963
      %v5025 = vadd.f32 %v4652, %v4968
      %v5026 = vadd.f32 %v4653, %v4971
      %v5027 = vadd.f32 %v4654, %v4976
      %v5028 = vadd.f32 %v4655, %v4979
      %v5029 = vadd.f32 %v4656, %v4984
      %v5030 = vld [vmem:[#allocation2 + $0xb8] sm:$0x3]
      %s5031 = scalar_lea.vmem %s4, 512
      %v5032 = vld [vmem:[%s5031] sm:$0xf]
      %v5033 = vld [vmem:[%s5031 + $0x4] sm:$0xf]
      %v5034 = vld [vmem:[%s5031 + $0x8] sm:$0xf]
      %v5035 = vld [vmem:[%s5031 + $0xc] sm:$0xf]
      %v5036 = vld [vmem:[%s5031 + $0x10] sm:$0xf]
      %v5037 = vld [vmem:[%s5031 + $0x14] sm:$0xf]
      %v5038 = vld [vmem:[%s5031 + $0x18] sm:$0xf]
      %v5039 = vld [vmem:[%s5031 + $0x1c] sm:$0xf]
      %v5040 = vld [vmem:[%s5031 + $0x20] sm:$0xf]
      %v5041 = vld [vmem:[%s5031 + $0x24] sm:$0xf]
      %v5042 = vld [vmem:[%s5031 + $0x28] sm:$0xf]
      %v5043 = vld [vmem:[%s5031 + $0x2c] sm:$0xf]
      %v5044 = vld [vmem:[%s5031 + $0x30] sm:$0xf]
      %v5045 = vld [vmem:[%s5031 + $0x34] sm:$0xf]
      %v5046 = vld [vmem:[%s5031 + $0x38] sm:$0xf]
      %v5047 = vld [vmem:[%s5031 + $0x3c] sm:$0xf]
      %v5049 = vunpack.c.l.b16 %v5030
      %v5050 = vpack.c.b16 %v5049, %v4157
      %vm5051 = vsmask.f32 6400
      %v5053 = vshrl.u32 %v4677, 16
      %v5055 = vrot.slane %v5053, 1
      %v5056 = vshll.u32 %v4677, 16
      %v5058 = vrot.slane %v5056, 2
      %v5059 = vor.u32 %v5055, %v5058
      %v5060 = vrot.slane %v4192, 1
      %v5061 = vrot.slane %v4188, 2
      %v5062 = vor.u32 %v5060, %v5061
      %v5063 = vsel %vm5051, %v5059, %v5062
      %v5064 = vrot.slane %v4200, 1
      %v5065 = vrot.slane %v4196, 2
      %v5066 = vor.u32 %v5064, %v5065
      %v5067 = vsel %vm5051, %v5062, %v5066
      %v5068 = vrot.slane %v4208, 1
      %v5069 = vrot.slane %v4204, 2
      %v5070 = vor.u32 %v5068, %v5069
      %v5071 = vsel %vm5051, %v5066, %v5070
      %v5072 = vrot.slane %v4216, 1
      %v5073 = vrot.slane %v4212, 2
      %v5074 = vor.u32 %v5072, %v5073
      %v5075 = vsel %vm5051, %v5070, %v5074
      %v5076 = vrot.slane %v4224, 1
      %v5077 = vrot.slane %v4220, 2
      %v5078 = vor.u32 %v5076, %v5077
      %v5079 = vsel %vm5051, %v5074, %v5078
      %v5080 = vrot.slane %v4232, 1
      %v5081 = vrot.slane %v4228, 2
      %v5082 = vor.u32 %v5080, %v5081
      %v5083 = vsel %vm5051, %v5078, %v5082
      %v5084 = vrot.slane %v4240, 1
      %v5085 = vrot.slane %v4236, 2
      %v5086 = vor.u32 %v5084, %v5085
      %v5087 = vsel %vm5051, %v5082, %v5086
      %v5088 = vrot.slane %v4248, 1
      %v5089 = vrot.slane %v4244, 2
      %v5090 = vor.u32 %v5088, %v5089
      %v5091 = vsel %vm5051, %v5086, %v5090
      %v5092 = vrot.slane %v4256, 1
      %v5093 = vrot.slane %v4252, 2
      %v5094 = vor.u32 %v5092, %v5093
      %v5095 = vsel %vm5051, %v5090, %v5094
      %v5096 = vrot.slane %v4264, 1
      %v5097 = vrot.slane %v4260, 2
      %v5098 = vor.u32 %v5096, %v5097
      %v5099 = vsel %vm5051, %v5094, %v5098
      %v5100 = vrot.slane %v4272, 1
      %v5101 = vrot.slane %v4268, 2
      %v5102 = vor.u32 %v5100, %v5101
      %v5103 = vsel %vm5051, %v5098, %v5102
      %v5104 = vrot.slane %v4280, 1
      %v5105 = vrot.slane %v4276, 2
      %v5106 = vor.u32 %v5104, %v5105
      %v5107 = vsel %vm5051, %v5102, %v5106
      %v5108 = vrot.slane %v4288, 1
      %v5109 = vrot.slane %v4284, 2
      %v5110 = vor.u32 %v5108, %v5109
      %v5111 = vsel %vm5051, %v5106, %v5110
      %v5112 = vrot.slane %v4296, 1
      %v5113 = vrot.slane %v4292, 2
      %v5114 = vor.u32 %v5112, %v5113
      %v5115 = vsel %vm5051, %v5110, %v5114
      %v5116 = vrot.slane %v4304, 1
      %v5117 = vrot.slane %v4300, 2
      %v5118 = vor.u32 %v5116, %v5117
      %v5119 = vsel %vm5051, %v5114, %v5118
      %v5120 = vrot.slane %v4312, 1
      %v5121 = vrot.slane %v4308, 2
      %v5122 = vor.u32 %v5120, %v5121
      %v5123 = vsel %vm5051, %v5118, %v5122
      %v5124 = vrot.slane %v4320, 1
      %v5125 = vrot.slane %v4316, 2
      %v5126 = vor.u32 %v5124, %v5125
      %v5127 = vsel %vm5051, %v5122, %v5126
      %v5128 = vrot.slane %v4328, 1
      %v5129 = vrot.slane %v4324, 2
      %v5130 = vor.u32 %v5128, %v5129
      %v5131 = vsel %vm5051, %v5126, %v5130
      %v5132 = vrot.slane %v4336, 1
      %v5133 = vrot.slane %v4332, 2
      %v5134 = vor.u32 %v5132, %v5133
      %v5135 = vsel %vm5051, %v5130, %v5134
      %v5137 = vshrl.u32 %v5050, 16
      %v5139 = vrot.slane %v5137, 1
      %v5140 = vshll.u32 %v5050, 16
      %v5142 = vrot.slane %v5140, 2
      %v5143 = vor.u32 %v5139, %v5142
      %v5144 = vsel %vm5051, %v5134, %v5143
      %v5182 = vunpack.c.l.b16 %v5032
      %v5183 = vunpack.c.l.b16 %v5033
      %v5184 = vunpack.c.l.b16 %v5034
      %v5185 = vunpack.c.l.b16 %v5035
      %v5186 = vunpack.c.l.b16 %v5036
      %v5187 = vunpack.c.l.b16 %v5037
      %v5188 = vunpack.c.l.b16 %v5038
      %v5189 = vunpack.c.l.b16 %v5039
      %v5190 = vunpack.c.l.b16 %v5040
      %v5191 = vunpack.c.l.b16 %v5041
      %v5192 = vunpack.c.l.b16 %v5042
      %v5193 = vunpack.c.l.b16 %v5043
      %v5194 = vunpack.c.l.b16 %v5044
      %v5195 = vunpack.c.l.b16 %v5045
      %v5196 = vunpack.c.l.b16 %v5046
      %v5197 = vunpack.c.l.b16 %v5047
      %v5198 = vpack.c.b16 %v5183, %v5182
      %v5199 = vpack.c.b16 %v5185, %v5184
      %v5200 = vpack.c.b16 %v5187, %v5186
      %v5201 = vpack.c.b16 %v5189, %v5188
      %v5202 = vpack.c.b16 %v5191, %v5190
      %v5203 = vpack.c.b16 %v5193, %v5192
      %v5204 = vpack.c.b16 %v5195, %v5194
      %v5205 = vpack.c.b16 %v5197, %v5196
      %5214 = vmatprep.subr.bf16.mxu0 0
      %5215 = vmatpush1.bf16.msra.mxu0 %v5205
      %5216 = vmatprep.subr.bf16.mxu0 0
      %5217 = vmatpush1.bf16.msra.mxu0 %v5204
      %5218 = vmatprep.subr.bf16.mxu0 0
      %5219 = vmatpush1.bf16.msra.mxu0 %v5203
      %5220 = vmatprep.subr.bf16.mxu0 0
      %5221 = vmatpush1.bf16.msra.mxu0 %v5202
      %5222 = vmatprep.subr.bf16.mxu0 0
      %5223 = vmatpush1.bf16.msra.mxu0 %v5201
      %5224 = vmatprep.subr.bf16.mxu0 0
      %5225 = vmatpush1.bf16.msra.mxu0 %v5200
      %5226 = vmatprep.subr.bf16.mxu0 0
      %5227 = vmatpush1.bf16.msra.mxu0 %v5199
      %5228 = vmatprep.subr.bf16.mxu0 0
      %5229 = vmatpush1.bf16.msra.mxu0 %v5198
      %5230 = vmatprep.subr.bf16.mxu0 0
      %5231 = vmatpush2.bf16.msra.mxu0 0
      %5232 = vmatprep.subr.bf16.mxu0 0
      %5233 = vmatpush2.bf16.msra.mxu0 0
      %5234 = vmatprep.subr.bf16.mxu0 0
      %5235 = vmatpush2.bf16.msra.mxu0 0
      %5236 = vmatprep.subr.bf16.mxu0 0
      %5237 = vmatpush2.bf16.msra.mxu0 0
      %5238 = vmatprep.subr.bf16.mxu0 0
      %5239 = vmatpush2.bf16.msra.mxu0 0
      %5240 = vmatprep.subr.bf16.mxu0 0
      %5241 = vmatpush2.bf16.msra.mxu0 0
      %5242 = vmatprep.subr.bf16.mxu0 0
      %5243 = vmatpush2.bf16.msra.mxu0 0
      %5244 = vmatprep.subr.bf16.mxu0 0
      %5245 = vmatpush2.bf16.msra.mxu0 0
      %5246 = vmatprep.mubr.bf16.mxu0 0
      %5247 = vmatmul.mubr.bf16.gmra.mxu0 %v5063
      %v5248 = vpop.f32.mrf.mxu0
      %v5249 = vadd.f32 0.0, %v5248
      %v5250 = vpop.f32.mrf.mxu0
      %v5251 = vpop.f32.mrf.mxu0
      %v5252 = vadd.f32 0.0, %v5251
      %v5253 = vpop.f32.mrf.mxu0
      %5254 = vmatprep.mubr.bf16.mxu0 0
      %5255 = vmatmul.mubr.bf16.gmra.mxu0 %v5067
      %v5256 = vpop.f32.mrf.mxu0
      %v5257 = vadd.f32 0.0, %v5256
      %v5258 = vpop.f32.mrf.mxu0
      %v5259 = vpop.f32.mrf.mxu0
      %v5260 = vadd.f32 0.0, %v5259
      %v5261 = vpop.f32.mrf.mxu0
      %5262 = vmatprep.mubr.bf16.mxu0 0
      %5263 = vmatmul.mubr.bf16.gmra.mxu0 %v5071
      %v5264 = vpop.f32.mrf.mxu0
      %v5265 = vadd.f32 0.0, %v5264
      %v5266 = vpop.f32.mrf.mxu0
      %v5267 = vpop.f32.mrf.mxu0
      %v5268 = vadd.f32 0.0, %v5267
      %v5269 = vpop.f32.mrf.mxu0
      %5270 = vmatprep.mubr.bf16.mxu0 0
      %5271 = vmatmul.mubr.bf16.gmra.mxu0 %v5075
      %v5272 = vpop.f32.mrf.mxu0
      %v5273 = vadd.f32 0.0, %v5272
      %v5274 = vpop.f32.mrf.mxu0
      %v5275 = vpop.f32.mrf.mxu0
      %v5276 = vadd.f32 0.0, %v5275
      %v5277 = vpop.f32.mrf.mxu0
      %5278 = vmatprep.mubr.bf16.mxu0 0
      %5279 = vmatmul.mubr.bf16.gmra.mxu0 %v5079
      %v5280 = vpop.f32.mrf.mxu0
      %v5281 = vadd.f32 0.0, %v5280
      %v5282 = vpop.f32.mrf.mxu0
      %v5283 = vpop.f32.mrf.mxu0
      %v5284 = vadd.f32 0.0, %v5283
      %v5285 = vpop.f32.mrf.mxu0
      %5286 = vmatprep.mubr.bf16.mxu0 0
      %5287 = vmatmul.mubr.bf16.gmra.mxu0 %v5083
      %v5288 = vpop.f32.mrf.mxu0
      %v5289 = vadd.f32 0.0, %v5288
      %v5290 = vpop.f32.mrf.mxu0
      %v5291 = vpop.f32.mrf.mxu0
      %v5292 = vadd.f32 0.0, %v5291
      %v5293 = vpop.f32.mrf.mxu0
      %5294 = vmatprep.mubr.bf16.mxu0 0
      %5295 = vmatmul.mubr.bf16.gmra.mxu0 %v5087
      %v5296 = vpop.f32.mrf.mxu0
      %v5297 = vadd.f32 0.0, %v5296
      %v5298 = vpop.f32.mrf.mxu0
      %v5299 = vpop.f32.mrf.mxu0
      %v5300 = vadd.f32 0.0, %v5299
      %v5301 = vpop.f32.mrf.mxu0
      %5302 = vmatprep.mubr.bf16.mxu0 0
      %5303 = vmatmul.mubr.bf16.gmra.mxu0 %v5091
      %v5304 = vpop.f32.mrf.mxu0
      %v5305 = vadd.f32 0.0, %v5304
      %v5306 = vpop.f32.mrf.mxu0
      %v5307 = vpop.f32.mrf.mxu0
      %v5308 = vadd.f32 0.0, %v5307
      %v5309 = vpop.f32.mrf.mxu0
      %5310 = vmatprep.mubr.bf16.mxu0 0
      %5311 = vmatmul.mubr.bf16.gmra.mxu0 %v5095
      %v5312 = vpop.f32.mrf.mxu0
      %v5313 = vadd.f32 0.0, %v5312
      %v5314 = vpop.f32.mrf.mxu0
      %v5315 = vpop.f32.mrf.mxu0
      %v5316 = vadd.f32 0.0, %v5315
      %v5317 = vpop.f32.mrf.mxu0
      %5318 = vmatprep.mubr.bf16.mxu0 0
      %5319 = vmatmul.mubr.bf16.gmra.mxu0 %v5099
      %v5320 = vpop.f32.mrf.mxu0
      %v5321 = vadd.f32 0.0, %v5320
      %v5322 = vpop.f32.mrf.mxu0
      %v5323 = vpop.f32.mrf.mxu0
      %v5324 = vadd.f32 0.0, %v5323
      %v5325 = vpop.f32.mrf.mxu0
      %5326 = vmatprep.mubr.bf16.mxu0 0
      %5327 = vmatmul.mubr.bf16.gmra.mxu0 %v5103
      %v5328 = vpop.f32.mrf.mxu0
      %v5329 = vadd.f32 0.0, %v5328
      %v5330 = vpop.f32.mrf.mxu0
      %v5331 = vpop.f32.mrf.mxu0
      %v5332 = vadd.f32 0.0, %v5331
      %v5333 = vpop.f32.mrf.mxu0
      %5334 = vmatprep.mubr.bf16.mxu0 0
      %5335 = vmatmul.mubr.bf16.gmra.mxu0 %v5107
      %v5336 = vpop.f32.mrf.mxu0
      %v5337 = vadd.f32 0.0, %v5336
      %v5338 = vpop.f32.mrf.mxu0
      %v5339 = vpop.f32.mrf.mxu0
      %v5340 = vadd.f32 0.0, %v5339
      %v5341 = vpop.f32.mrf.mxu0
      %5342 = vmatprep.mubr.bf16.mxu0 0
      %5343 = vmatmul.mubr.bf16.gmra.mxu0 %v5111
      %v5344 = vpop.f32.mrf.mxu0
      %v5345 = vadd.f32 0.0, %v5344
      %v5346 = vpop.f32.mrf.mxu0
      %v5347 = vpop.f32.mrf.mxu0
      %v5348 = vadd.f32 0.0, %v5347
      %v5349 = vpop.f32.mrf.mxu0
      %5350 = vmatprep.mubr.bf16.mxu0 0
      %5351 = vmatmul.mubr.bf16.gmra.mxu0 %v5115
      %v5352 = vpop.f32.mrf.mxu0
      %v5353 = vadd.f32 0.0, %v5352
      %v5354 = vpop.f32.mrf.mxu0
      %v5355 = vpop.f32.mrf.mxu0
      %v5356 = vadd.f32 0.0, %v5355
      %v5357 = vpop.f32.mrf.mxu0
      %5358 = vmatprep.mubr.bf16.mxu0 0
      %5359 = vmatmul.mubr.bf16.gmra.mxu0 %v5119
      %v5360 = vpop.f32.mrf.mxu0
      %v5361 = vadd.f32 0.0, %v5360
      %v5362 = vpop.f32.mrf.mxu0
      %v5363 = vpop.f32.mrf.mxu0
      %v5364 = vadd.f32 0.0, %v5363
      %v5365 = vpop.f32.mrf.mxu0
      %5366 = vmatprep.mubr.bf16.mxu0 0
      %5367 = vmatmul.mubr.bf16.gmra.mxu0 %v5123
      %v5368 = vpop.f32.mrf.mxu0
      %v5369 = vadd.f32 0.0, %v5368
      %v5370 = vpop.f32.mrf.mxu0
      %v5371 = vpop.f32.mrf.mxu0
      %v5372 = vadd.f32 0.0, %v5371
      %v5373 = vpop.f32.mrf.mxu0
      %5374 = vmatprep.mubr.bf16.mxu0 0
      %5375 = vmatmul.mubr.bf16.gmra.mxu0 %v5127
      %v5376 = vpop.f32.mrf.mxu0
      %v5377 = vadd.f32 0.0, %v5376
      %v5378 = vpop.f32.mrf.mxu0
      %v5379 = vpop.f32.mrf.mxu0
      %v5380 = vadd.f32 0.0, %v5379
      %v5381 = vpop.f32.mrf.mxu0
      %5382 = vmatprep.mubr.bf16.mxu0 0
      %5383 = vmatmul.mubr.bf16.gmra.mxu0 %v5131
      %v5384 = vpop.f32.mrf.mxu0
      %v5385 = vadd.f32 0.0, %v5384
      %v5386 = vpop.f32.mrf.mxu0
      %v5387 = vpop.f32.mrf.mxu0
      %v5388 = vadd.f32 0.0, %v5387
      %v5389 = vpop.f32.mrf.mxu0
      %5390 = vmatprep.mubr.bf16.mxu0 0
      %5391 = vmatmul.mubr.bf16.gmra.mxu0 %v5135
      %v5392 = vpop.f32.mrf.mxu0
      %v5393 = vadd.f32 0.0, %v5392
      %v5394 = vpop.f32.mrf.mxu0
      %v5395 = vpop.f32.mrf.mxu0
      %v5396 = vadd.f32 0.0, %v5395
      %v5397 = vpop.f32.mrf.mxu0
      %5398 = vmatprep.mubr.bf16.mxu0 0
      %5399 = vmatmul.mubr.bf16.gmra.mxu0 %v5144
      %v5400 = vpop.f32.mrf.mxu0
      %v5401 = vadd.f32 0.0, %v5400
      %v5402 = vpop.f32.mrf.mxu0
      %v5403 = vpop.f32.mrf.mxu0
      %v5404 = vadd.f32 0.0, %v5403
      %v5405 = vpop.f32.mrf.mxu0
      %5406 = vmatprep.mubr.bf16.mxu0 0
      %5407 = vmatmul.mubr.bf16.gmra.mxu0 %v5143
      %v5408 = vpop.f32.mrf.mxu0
      %v5409 = vadd.f32 0.0, %v5408
      %v5410 = vpop.f32.mrf.mxu0
      %v5411 = vpop.f32.mrf.mxu0
      %v5412 = vpop.f32.mrf.mxu0
      %5413 = vdwg.mxu0
      %v5414 = vadd.f32 %v4989, %v5249
      %v5415 = vadd.f32 %v4990, %v5252
      %v5416 = vadd.f32 %v4991, %v5257
      %v5417 = vadd.f32 %v4992, %v5260
      %v5418 = vadd.f32 %v4993, %v5265
      %v5419 = vadd.f32 %v4994, %v5268
      %v5420 = vadd.f32 %v4995, %v5273
      %v5421 = vadd.f32 %v4996, %v5276
      %v5422 = vadd.f32 %v4997, %v5281
      %v5423 = vadd.f32 %v4998, %v5284
      %v5424 = vadd.f32 %v4999, %v5289
      %v5425 = vadd.f32 %v5000, %v5292
      %v5426 = vadd.f32 %v5001, %v5297
      %v5427 = vadd.f32 %v5002, %v5300
      %v5428 = vadd.f32 %v5003, %v5305
      %v5429 = vadd.f32 %v5004, %v5308
      %v5430 = vadd.f32 %v5005, %v5313
      %v5431 = vadd.f32 %v5006, %v5316
      %v5432 = vadd.f32 %v5007, %v5321
      %v5433 = vadd.f32 %v5008, %v5324
      %v5434 = vadd.f32 %v5009, %v5329
      %v5435 = vadd.f32 %v5010, %v5332
      %v5436 = vadd.f32 %v5011, %v5337
      %v5437 = vadd.f32 %v5012, %v5340
      %v5438 = vadd.f32 %v5013, %v5345
      %v5439 = vadd.f32 %v5014, %v5348
      %v5440 = vadd.f32 %v5015, %v5353
      %v5441 = vadd.f32 %v5016, %v5356
      %v5442 = vadd.f32 %v5017, %v5361
      %v5443 = vadd.f32 %v5018, %v5364
      %v5444 = vadd.f32 %v5019, %v5369
      %v5445 = vadd.f32 %v5020, %v5372
      %v5446 = vadd.f32 %v5021, %v5377
      %v5447 = vadd.f32 %v5022, %v5380
      %v5448 = vadd.f32 %v5023, %v5385
      %v5449 = vadd.f32 %v5024, %v5388
      %v5450 = vadd.f32 %v5025, %v5393
      %v5451 = vadd.f32 %v5026, %v5396
      %v5452 = vadd.f32 %v5027, %v5401
      %v5453 = vadd.f32 %v5028, %v5404
      %v5454 = vadd.f32 %v5029, %v5409
      %v5455 = vld [vmem:[%s1] sm:$0xff]
      %v5456 = vld [vmem:[%s1 + $0x8] sm:$0xff]
      %v5457 = vld [vmem:[%s1 + $0x10] sm:$0xff]
      %v5458 = vld [vmem:[%s1 + $0x18] sm:$0xff]
      %v5459 = vld [vmem:[%s1 + $0x20] sm:$0xff]
      %v5460 = vld [vmem:[%s1 + $0x28] sm:$0xff]
      %v5461 = vld [vmem:[%s1 + $0x30] sm:$0xff]
      %v5462 = vld [vmem:[%s1 + $0x38] sm:$0xff]
      %v5463 = vld [vmem:[%s1 + $0x40] sm:$0xff]
      %v5464 = vld [vmem:[%s1 + $0x48] sm:$0xff]
      %v5465 = vld [vmem:[%s1 + $0x50] sm:$0xff]
      %v5466 = vld [vmem:[%s1 + $0x58] sm:$0xff]
      %v5467 = vld [vmem:[%s1 + $0x60] sm:$0xff]
      %v5468 = vld [vmem:[%s1 + $0x68] sm:$0xff]
      %v5469 = vld [vmem:[%s1 + $0x70] sm:$0xff]
      %v5470 = vld [vmem:[%s1 + $0x78] sm:$0xff]
      %v5471 = vld [vmem:[%s1 + $0x80] sm:$0xff]
      %v5472 = vld [vmem:[%s1 + $0x88] sm:$0xff]
      %v5473 = vld [vmem:[%s1 + $0x90] sm:$0xff]
      %v5474 = vld [vmem:[%s1 + $0x98] sm:$0xff]
      %v5475 = vld [vmem:[%s1 + $0xa0] sm:$0xff]
      %v5476 = vld [vmem:[%s1 + $0xa8] sm:$0xff]
      %v5477 = vld [vmem:[%s1 + $0xb0] sm:$0xff]
      %v5478 = vld [vmem:[%s1 + $0xb8] sm:$0xff]
      %v5479 = vld [vmem:[%s1 + $0xc0] sm:$0xff]
      %v5480 = vld [vmem:[%s1 + $0xc8] sm:$0xff]
      %v5481 = vld [vmem:[%s1 + $0xd0] sm:$0xff]
      %v5482 = vld [vmem:[%s1 + $0xd8] sm:$0xff]
      %v5483 = vld [vmem:[%s1 + $0xe0] sm:$0xff]
      %v5484 = vld [vmem:[%s1 + $0xe8] sm:$0xff]
      %v5485 = vld [vmem:[%s1 + $0xf0] sm:$0xff]
      %v5486 = vld [vmem:[%s1 + $0xf8] sm:$0xff]
      %v5487 = vld [vmem:[%s1 + $0x100] sm:$0xff]
      %v5488 = vld [vmem:[%s1 + $0x108] sm:$0xff]
      %v5489 = vld [vmem:[%s1 + $0x110] sm:$0xff]
      %v5490 = vld [vmem:[%s1 + $0x118] sm:$0xff]
      %v5491 = vld [vmem:[%s1 + $0x120] sm:$0xff]
      %v5492 = vld [vmem:[%s1 + $0x128] sm:$0xff]
      %v5493 = vld [vmem:[%s1 + $0x130] sm:$0xff]
      %v5494 = vld [vmem:[%s1 + $0x138] sm:$0xff]
      %v5495 = vld [vmem:[%s1 + $0x140] sm:$0xff]
      %5497 = vset.pattern.permute.xlu0 0
      %5498 = vperm.xlu0 %5497, %v5455
      %v5499 = vpop.permute.xlu0 %5498
      %5502 = vset.pattern.permute.xlu0 0
      %5503 = vperm.xlu0 %5502, %v5456
      %v5504 = vpop.permute.xlu0 %5503
      %5507 = vset.pattern.permute.xlu0 0
      %5508 = vperm.xlu0 %5507, %v5457
      %v5509 = vpop.permute.xlu0 %5508
      %5512 = vset.pattern.permute.xlu0 0
      %5513 = vperm.xlu0 %5512, %v5458
      %v5514 = vpop.permute.xlu0 %5513
      %5517 = vset.pattern.permute.xlu0 0
      %5518 = vperm.xlu0 %5517, %v5459
      %v5519 = vpop.permute.xlu0 %5518
      %5522 = vset.pattern.permute.xlu0 0
      %5523 = vperm.xlu0 %5522, %v5460
      %v5524 = vpop.permute.xlu0 %5523
      %5527 = vset.pattern.permute.xlu0 0
      %5528 = vperm.xlu0 %5527, %v5461
      %v5529 = vpop.permute.xlu0 %5528
      %5532 = vset.pattern.permute.xlu0 0
      %5533 = vperm.xlu0 %5532, %v5462
      %v5534 = vpop.permute.xlu0 %5533
      %5537 = vset.pattern.permute.xlu0 0
      %5538 = vperm.xlu0 %5537, %v5463
      %v5539 = vpop.permute.xlu0 %5538
      %5542 = vset.pattern.permute.xlu0 0
      %5543 = vperm.xlu0 %5542, %v5464
      %v5544 = vpop.permute.xlu0 %5543
      %5547 = vset.pattern.permute.xlu0 0
      %5548 = vperm.xlu0 %5547, %v5465
      %v5549 = vpop.permute.xlu0 %5548
      %5552 = vset.pattern.permute.xlu0 0
      %5553 = vperm.xlu0 %5552, %v5466
      %v5554 = vpop.permute.xlu0 %5553
      %5557 = vset.pattern.permute.xlu0 0
      %5558 = vperm.xlu0 %5557, %v5467
      %v5559 = vpop.permute.xlu0 %5558
      %5562 = vset.pattern.permute.xlu0 0
      %5563 = vperm.xlu0 %5562, %v5468
      %v5564 = vpop.permute.xlu0 %5563
      %5567 = vset.pattern.permute.xlu0 0
      %5568 = vperm.xlu0 %5567, %v5469
      %v5569 = vpop.permute.xlu0 %5568
      %5572 = vset.pattern.permute.xlu0 0
      %5573 = vperm.xlu0 %5572, %v5470
      %v5574 = vpop.permute.xlu0 %5573
      %5577 = vset.pattern.permute.xlu0 0
      %5578 = vperm.xlu0 %5577, %v5471
      %v5579 = vpop.permute.xlu0 %5578
      %5582 = vset.pattern.permute.xlu0 0
      %5583 = vperm.xlu0 %5582, %v5472
      %v5584 = vpop.permute.xlu0 %5583
      %5587 = vset.pattern.permute.xlu0 0
      %5588 = vperm.xlu0 %5587, %v5473
      %v5589 = vpop.permute.xlu0 %5588
      %5592 = vset.pattern.permute.xlu0 0
      %5593 = vperm.xlu0 %5592, %v5474
      %v5594 = vpop.permute.xlu0 %5593
      %5597 = vset.pattern.permute.xlu0 0
      %5598 = vperm.xlu0 %5597, %v5475
      %v5599 = vpop.permute.xlu0 %5598
      %5602 = vset.pattern.permute.xlu0 0
      %5603 = vperm.xlu0 %5602, %v5476
      %v5604 = vpop.permute.xlu0 %5603
      %5607 = vset.pattern.permute.xlu0 0
      %5608 = vperm.xlu0 %5607, %v5477
      %v5609 = vpop.permute.xlu0 %5608
      %5612 = vset.pattern.permute.xlu0 0
      %5613 = vperm.xlu0 %5612, %v5478
      %v5614 = vpop.permute.xlu0 %5613
      %5617 = vset.pattern.permute.xlu0 0
      %5618 = vperm.xlu0 %5617, %v5479
      %v5619 = vpop.permute.xlu0 %5618
      %5622 = vset.pattern.permute.xlu0 0
      %5623 = vperm.xlu0 %5622, %v5480
      %v5624 = vpop.permute.xlu0 %5623
      %5627 = vset.pattern.permute.xlu0 0
      %5628 = vperm.xlu0 %5627, %v5481
      %v5629 = vpop.permute.xlu0 %5628
      %5632 = vset.pattern.permute.xlu0 0
      %5633 = vperm.xlu0 %5632, %v5482
      %v5634 = vpop.permute.xlu0 %5633
      %5637 = vset.pattern.permute.xlu0 0
      %5638 = vperm.xlu0 %5637, %v5483
      %v5639 = vpop.permute.xlu0 %5638
      %5642 = vset.pattern.permute.xlu0 0
      %5643 = vperm.xlu0 %5642, %v5484
      %v5644 = vpop.permute.xlu0 %5643
      %5647 = vset.pattern.permute.xlu0 0
      %5648 = vperm.xlu0 %5647, %v5485
      %v5649 = vpop.permute.xlu0 %5648
      %5652 = vset.pattern.permute.xlu0 0
      %5653 = vperm.xlu0 %5652, %v5486
      %v5654 = vpop.permute.xlu0 %5653
      %5657 = vset.pattern.permute.xlu0 0
      %5658 = vperm.xlu0 %5657, %v5487
      %v5659 = vpop.permute.xlu0 %5658
      %5662 = vset.pattern.permute.xlu0 0
      %5663 = vperm.xlu0 %5662, %v5488
      %v5664 = vpop.permute.xlu0 %5663
      %5667 = vset.pattern.permute.xlu0 0
      %5668 = vperm.xlu0 %5667, %v5489
      %v5669 = vpop.permute.xlu0 %5668
      %5672 = vset.pattern.permute.xlu0 0
      %5673 = vperm.xlu0 %5672, %v5490
      %v5674 = vpop.permute.xlu0 %5673
      %5677 = vset.pattern.permute.xlu0 0
      %5678 = vperm.xlu0 %5677, %v5491
      %v5679 = vpop.permute.xlu0 %5678
      %5682 = vset.pattern.permute.xlu0 0
      %5683 = vperm.xlu0 %5682, %v5492
      %v5684 = vpop.permute.xlu0 %5683
      %5687 = vset.pattern.permute.xlu0 0
      %5688 = vperm.xlu0 %5687, %v5493
      %v5689 = vpop.permute.xlu0 %5688
      %5692 = vset.pattern.permute.xlu0 0
      %5693 = vperm.xlu0 %5692, %v5494
      %v5694 = vpop.permute.xlu0 %5693
      %5697 = vset.pattern.permute.xlu0 0
      %5698 = vperm.xlu0 %5697, %v5495
      %v5699 = vpop.permute.xlu0 %5698
      %v5701 = vmul.f32 %v5414, %v5499
      %v5702 = vmul.f32 %v5415, %v5504
      %v5703 = vmul.f32 %v5416, %v5509
      %v5704 = vmul.f32 %v5417, %v5514
      %v5705 = vmul.f32 %v5418, %v5519
      %v5706 = vmul.f32 %v5419, %v5524
      %v5707 = vmul.f32 %v5420, %v5529
      %v5708 = vmul.f32 %v5421, %v5534
      %v5709 = vmul.f32 %v5422, %v5539
      %v5710 = vmul.f32 %v5423, %v5544
      %v5711 = vmul.f32 %v5424, %v5549
      %v5712 = vmul.f32 %v5425, %v5554
      %v5713 = vmul.f32 %v5426, %v5559
      %v5714 = vmul.f32 %v5427, %v5564
      %v5715 = vmul.f32 %v5428, %v5569
      %v5716 = vmul.f32 %v5429, %v5574
      %v5717 = vmul.f32 %v5430, %v5579
      %v5718 = vmul.f32 %v5431, %v5584
      %v5719 = vmul.f32 %v5432, %v5589
      %v5720 = vmul.f32 %v5433, %v5594
      %v5721 = vmul.f32 %v5434, %v5599
      %v5722 = vmul.f32 %v5435, %v5604
      %v5723 = vmul.f32 %v5436, %v5609
      %v5724 = vmul.f32 %v5437, %v5614
      %v5725 = vmul.f32 %v5438, %v5619
      %v5726 = vmul.f32 %v5439, %v5624
      %v5727 = vmul.f32 %v5440, %v5629
      %v5728 = vmul.f32 %v5441, %v5634
      %v5729 = vmul.f32 %v5442, %v5639
      %v5730 = vmul.f32 %v5443, %v5644
      %v5731 = vmul.f32 %v5444, %v5649
      %v5732 = vmul.f32 %v5445, %v5654
      %v5733 = vmul.f32 %v5446, %v5659
      %v5734 = vmul.f32 %v5447, %v5664
      %v5735 = vmul.f32 %v5448, %v5669
      %v5736 = vmul.f32 %v5449, %v5674
      %v5737 = vmul.f32 %v5450, %v5679
      %v5738 = vmul.f32 %v5451, %v5684
      %v5739 = vmul.f32 %v5452, %v5689
      %v5740 = vmul.f32 %v5453, %v5694
      %v5741 = vmul.f32 %v5454, %v5699
      %v5742 = vpack.c.bf16 %v5702, %v5701
      %v5743 = vpack.c.bf16 %v5704, %v5703
      %v5744 = vpack.c.bf16 %v5706, %v5705
      %v5745 = vpack.c.bf16 %v5708, %v5707
      %v5746 = vpack.c.bf16 %v5710, %v5709
      %v5747 = vpack.c.bf16 %v5712, %v5711
      %v5748 = vpack.c.bf16 %v5714, %v5713
      %v5749 = vpack.c.bf16 %v5716, %v5715
      %v5750 = vpack.c.bf16 %v5718, %v5717
      %v5751 = vpack.c.bf16 %v5720, %v5719
      %v5752 = vpack.c.bf16 %v5722, %v5721
      %v5753 = vpack.c.bf16 %v5724, %v5723
      %v5754 = vpack.c.bf16 %v5726, %v5725
      %v5755 = vpack.c.bf16 %v5728, %v5727
      %v5756 = vpack.c.bf16 %v5730, %v5729
      %v5757 = vpack.c.bf16 %v5732, %v5731
      %v5758 = vpack.c.bf16 %v5734, %v5733
      %v5759 = vpack.c.bf16 %v5736, %v5735
      %v5760 = vpack.c.bf16 %v5738, %v5737
      %v5761 = vpack.c.bf16 %v5740, %v5739
      %v5762 = vpack.c.bf16 %v5741, %v5741
      %v5784 = vunpack.c.l.b16 %v5742
      %v5785 = vunpack.c.h.b16 %v5742
      %v5786 = vunpack.c.l.b16 %v5743
      %v5787 = vunpack.c.h.b16 %v5743
      %v5788 = vunpack.c.l.b16 %v5744
      %v5789 = vunpack.c.h.b16 %v5744
      %v5790 = vunpack.c.l.b16 %v5745
      %v5791 = vunpack.c.h.b16 %v5745
      %v5792 = vunpack.c.l.b16 %v5746
      %v5793 = vunpack.c.h.b16 %v5746
      %v5794 = vunpack.c.l.b16 %v5747
      %v5795 = vunpack.c.h.b16 %v5747
      %v5796 = vunpack.c.l.b16 %v5748
      %v5797 = vunpack.c.h.b16 %v5748
      %v5798 = vunpack.c.l.b16 %v5749
      %v5799 = vunpack.c.h.b16 %v5749
      %v5800 = vunpack.c.l.b16 %v5750
      %v5801 = vunpack.c.h.b16 %v5750
      %v5802 = vunpack.c.l.b16 %v5751
      %v5803 = vunpack.c.h.b16 %v5751
      %v5804 = vunpack.c.l.b16 %v5752
      %v5805 = vunpack.c.h.b16 %v5752
      %v5806 = vunpack.c.l.b16 %v5753
      %v5807 = vunpack.c.h.b16 %v5753
      %v5808 = vunpack.c.l.b16 %v5754
      %v5809 = vunpack.c.h.b16 %v5754
      %v5810 = vunpack.c.l.b16 %v5755
      %v5811 = vunpack.c.h.b16 %v5755
      %v5812 = vunpack.c.l.b16 %v5756
      %v5813 = vunpack.c.h.b16 %v5756
      %v5814 = vunpack.c.l.b16 %v5757
      %v5815 = vunpack.c.h.b16 %v5757
      %v5816 = vunpack.c.l.b16 %v5758
      %v5817 = vunpack.c.h.b16 %v5758
      %v5818 = vunpack.c.l.b16 %v5759
      %v5819 = vunpack.c.h.b16 %v5759
      %v5820 = vunpack.c.l.b16 %v5760
      %v5821 = vunpack.c.h.b16 %v5760
      %v5822 = vunpack.c.l.b16 %v5761
      %v5823 = vunpack.c.h.b16 %v5761
      %v5824 = vunpack.c.l.b16 %v5762
      %v5825 = vpack.c.b16 %v5784, %v5784
      %v5826 = vpack.c.b16 %v5785, %v5785
      %v5827 = vpack.c.b16 %v5786, %v5786
      %v5828 = vpack.c.b16 %v5787, %v5787
      %v5829 = vpack.c.b16 %v5788, %v5788
      %v5830 = vpack.c.b16 %v5789, %v5789
      %v5831 = vpack.c.b16 %v5790, %v5790
      %v5832 = vpack.c.b16 %v5791, %v5791
      %v5833 = vpack.c.b16 %v5792, %v5792
      %v5834 = vpack.c.b16 %v5793, %v5793
      %v5835 = vpack.c.b16 %v5794, %v5794
      %v5836 = vpack.c.b16 %v5795, %v5795
      %v5837 = vpack.c.b16 %v5796, %v5796
      %v5838 = vpack.c.b16 %v5797, %v5797
      %v5839 = vpack.c.b16 %v5798, %v5798
      %v5840 = vpack.c.b16 %v5799, %v5799
      %v5841 = vpack.c.b16 %v5800, %v5800
      %v5842 = vpack.c.b16 %v5801, %v5801
      %v5843 = vpack.c.b16 %v5802, %v5802
      %v5844 = vpack.c.b16 %v5803, %v5803
      %v5845 = vpack.c.b16 %v5804, %v5804
      %v5846 = vpack.c.b16 %v5805, %v5805
      %v5847 = vpack.c.b16 %v5806, %v5806
      %v5848 = vpack.c.b16 %v5807, %v5807
      %v5849 = vpack.c.b16 %v5808, %v5808
      %v5850 = vpack.c.b16 %v5809, %v5809
      %v5851 = vpack.c.b16 %v5810, %v5810
      %v5852 = vpack.c.b16 %v5811, %v5811
      %v5853 = vpack.c.b16 %v5812, %v5812
      %v5854 = vpack.c.b16 %v5813, %v5813
      %v5855 = vpack.c.b16 %v5814, %v5814
      %v5856 = vpack.c.b16 %v5815, %v5815
      %v5857 = vpack.c.b16 %v5816, %v5816
      %v5858 = vpack.c.b16 %v5817, %v5817
      %v5859 = vpack.c.b16 %v5818, %v5818
      %v5860 = vpack.c.b16 %v5819, %v5819
      %v5861 = vpack.c.b16 %v5820, %v5820
      %v5862 = vpack.c.b16 %v5821, %v5821
      %v5863 = vpack.c.b16 %v5822, %v5822
      %v5864 = vpack.c.b16 %v5823, %v5823
      %v5865 = vpack.c.b16 %v5824, %v5824
      %5907 = vst [vmem:[%s258] sm:$0xf] %v5825
      %5908 = vst [vmem:[%s258 + $0x4] sm:$0xf] %v5826
      %5909 = vst [vmem:[%s258 + $0x8] sm:$0xf] %v5827
      %5910 = vst [vmem:[%s258 + $0xc] sm:$0xf] %v5828
      %5911 = vst [vmem:[%s258 + $0x10] sm:$0xf] %v5829
      %5912 = vst [vmem:[%s258 + $0x14] sm:$0xf] %v5830
      %5913 = vst [vmem:[%s258 + $0x18] sm:$0xf] %v5831
      %5914 = vst [vmem:[%s258 + $0x1c] sm:$0xf] %v5832
      %5915 = vst [vmem:[%s258 + $0x20] sm:$0xf] %v5833
      %5916 = vst [vmem:[%s258 + $0x24] sm:$0xf] %v5834
      %5917 = vst [vmem:[%s258 + $0x28] sm:$0xf] %v5835
      %5918 = vst [vmem:[%s258 + $0x2c] sm:$0xf] %v5836
      %5919 = vst [vmem:[%s258 + $0x30] sm:$0xf] %v5837
      %5920 = vst [vmem:[%s258 + $0x34] sm:$0xf] %v5838
      %5921 = vst [vmem:[%s258 + $0x38] sm:$0xf] %v5839
      %5922 = vst [vmem:[%s258 + $0x3c] sm:$0xf] %v5840
      %5923 = vst [vmem:[%s258 + $0x40] sm:$0xf] %v5841
      %5924 = vst [vmem:[%s258 + $0x44] sm:$0xf] %v5842
      %5925 = vst [vmem:[%s258 + $0x48] sm:$0xf] %v5843
      %5926 = vst [vmem:[%s258 + $0x4c] sm:$0xf] %v5844
      %5927 = vst [vmem:[%s258 + $0x50] sm:$0xf] %v5845
      %5928 = vst [vmem:[%s258 + $0x54] sm:$0xf] %v5846
      %5929 = vst [vmem:[%s258 + $0x58] sm:$0xf] %v5847
      %5930 = vst [vmem:[%s258 + $0x5c] sm:$0xf] %v5848
      %5931 = vst [vmem:[%s258 + $0x60] sm:$0xf] %v5849
      %5932 = vst [vmem:[%s258 + $0x64] sm:$0xf] %v5850
      %5933 = vst [vmem:[%s258 + $0x68] sm:$0xf] %v5851
      %5934 = vst [vmem:[%s258 + $0x6c] sm:$0xf] %v5852
      %5935 = vst [vmem:[%s258 + $0x70] sm:$0xf] %v5853
      %5936 = vst [vmem:[%s258 + $0x74] sm:$0xf] %v5854
      %5937 = vst [vmem:[%s258 + $0x78] sm:$0xf] %v5855
      %5938 = vst [vmem:[%s258 + $0x7c] sm:$0xf] %v5856
      %5939 = vst [vmem:[%s258 + $0x80] sm:$0xf] %v5857
      %5940 = vst [vmem:[%s258 + $0x84] sm:$0xf] %v5858
      %5941 = vst [vmem:[%s258 + $0x88] sm:$0xf] %v5859
      %5942 = vst [vmem:[%s258 + $0x8c] sm:$0xf] %v5860
      %5943 = vst [vmem:[%s258 + $0x90] sm:$0xf] %v5861
      %5944 = vst [vmem:[%s258 + $0x94] sm:$0xf] %v5862
      %5945 = vst [vmem:[%s258 + $0x98] sm:$0xf] %v5863
      %5946 = vst [vmem:[%s258 + $0x9c] sm:$0xf] %v5864
      %5947 = vst [vmem:[%s258 + $0xa0] sm:$0xf] %v5865
      %v5948 = vadd.f32 %v5701, %v5702
      %v5949 = vadd.f32 %v5948, %v5703
      %v5950 = vadd.f32 %v5949, %v5704
      %v5951 = vadd.f32 %v5950, %v5705
      %v5952 = vadd.f32 %v5951, %v5706
      %v5953 = vadd.f32 %v5952, %v5707
      %v5954 = vadd.f32 %v5953, %v5708
      %v5955 = vadd.f32 %v5954, %v5709
      %v5956 = vadd.f32 %v5955, %v5710
      %v5957 = vadd.f32 %v5956, %v5711
      %v5958 = vadd.f32 %v5957, %v5712
      %v5959 = vadd.f32 %v5958, %v5713
      %v5960 = vadd.f32 %v5959, %v5714
      %v5961 = vadd.f32 %v5960, %v5715
      %v5962 = vadd.f32 %v5961, %v5716
      %v5963 = vadd.f32 %v5962, %v5717
      %v5964 = vadd.f32 %v5963, %v5718
      %v5965 = vadd.f32 %v5964, %v5719
      %v5966 = vadd.f32 %v5965, %v5720
      %v5967 = vadd.f32 %v5966, %v5721
      %v5968 = vadd.f32 %v5967, %v5722
      %v5969 = vadd.f32 %v5968, %v5723
      %v5970 = vadd.f32 %v5969, %v5724
      %v5971 = vadd.f32 %v5970, %v5725
      %v5972 = vadd.f32 %v5971, %v5726
      %v5973 = vadd.f32 %v5972, %v5727
      %v5974 = vadd.f32 %v5973, %v5728
      %v5975 = vadd.f32 %v5974, %v5729
      %v5976 = vadd.f32 %v5975, %v5730
      %v5977 = vadd.f32 %v5976, %v5731
      %v5978 = vadd.f32 %v5977, %v5732
      %v5979 = vadd.f32 %v5978, %v5733
      %v5980 = vadd.f32 %v5979, %v5734
      %v5981 = vadd.f32 %v5980, %v5735
      %v5982 = vadd.f32 %v5981, %v5736
      %v5983 = vadd.f32 %v5982, %v5737
      %v5984 = vadd.f32 %v5983, %v5738
      %v5985 = vadd.f32 %v5984, %v5739
      %v5986 = vadd.f32 %v5985, %v5740
      %v5987 = vadd.f32 %v5986, %v5741
      %v5988 = vrot.slane %v5987, 4
      %v5989 = vadd.f32 %v5987, %v5988
      %v5990 = vrot.slane %v5989, 2
      %v5991 = vadd.f32 %v5989, %v5990
      %v5992 = vrot.slane %v5991, 1
      %v5993 = vadd.f32 %v5991, %v5992
      %v5994 = vmul.f32 %v5701, %v5701
      %v5995 = vmul.f32 %v5702, %v5702
      %v5996 = vmul.f32 %v5703, %v5703
      %v5997 = vmul.f32 %v5704, %v5704
      %v5998 = vmul.f32 %v5705, %v5705
      %v5999 = vmul.f32 %v5706, %v5706
      %v6000 = vmul.f32 %v5707, %v5707
      %v6001 = vmul.f32 %v5708, %v5708
      %v6002 = vmul.f32 %v5709, %v5709
      %v6003 = vmul.f32 %v5710, %v5710
      %v6004 = vmul.f32 %v5711, %v5711
      %v6005 = vmul.f32 %v5712, %v5712
      %v6006 = vmul.f32 %v5713, %v5713
      %v6007 = vmul.f32 %v5714, %v5714
      %v6008 = vmul.f32 %v5715, %v5715
      %v6009 = vmul.f32 %v5716, %v5716
      %v6010 = vmul.f32 %v5717, %v5717
      %v6011 = vmul.f32 %v5718, %v5718
      %v6012 = vmul.f32 %v5719, %v5719
      %v6013 = vmul.f32 %v5720, %v5720
      %v6014 = vmul.f32 %v5721, %v5721
      %v6015 = vmul.f32 %v5722, %v5722
      %v6016 = vmul.f32 %v5723, %v5723
      %v6017 = vmul.f32 %v5724, %v5724
      %v6018 = vmul.f32 %v5725, %v5725
      %v6019 = vmul.f32 %v5726, %v5726
      %v6020 = vmul.f32 %v5727, %v5727
      %v6021 = vmul.f32 %v5728, %v5728
      %v6022 = vmul.f32 %v5729, %v5729
      %v6023 = vmul.f32 %v5730, %v5730
      %v6024 = vmul.f32 %v5731, %v5731
      %v6025 = vmul.f32 %v5732, %v5732
      %v6026 = vmul.f32 %v5733, %v5733
      %v6027 = vmul.f32 %v5734, %v5734
      %v6028 = vmul.f32 %v5735, %v5735
      %v6029 = vmul.f32 %v5736, %v5736
      %v6030 = vmul.f32 %v5737, %v5737
      %v6031 = vmul.f32 %v5738, %v5738
      %v6032 = vmul.f32 %v5739, %v5739
      %v6033 = vmul.f32 %v5740, %v5740
      %v6034 = vmul.f32 %v5741, %v5741
      %v6035 = vadd.f32 %v5994, %v5995
      %v6036 = vadd.f32 %v6035, %v5996
      %v6037 = vadd.f32 %v6036, %v5997
      %v6038 = vadd.f32 %v6037, %v5998
      %v6039 = vadd.f32 %v6038, %v5999
      %v6040 = vadd.f32 %v6039, %v6000
      %v6041 = vadd.f32 %v6040, %v6001
      %v6042 = vadd.f32 %v6041, %v6002
      %v6043 = vadd.f32 %v6042, %v6003
      %v6044 = vadd.f32 %v6043, %v6004
      %v6045 = vadd.f32 %v6044, %v6005
      %v6046 = vadd.f32 %v6045, %v6006
      %v6047 = vadd.f32 %v6046, %v6007
      %v6048 = vadd.f32 %v6047, %v6008
      %v6049 = vadd.f32 %v6048, %v6009
      %v6050 = vadd.f32 %v6049, %v6010
      %v6051 = vadd.f32 %v6050, %v6011
      %v6052 = vadd.f32 %v6051, %v6012
      %v6053 = vadd.f32 %v6052, %v6013
      %v6054 = vadd.f32 %v6053, %v6014
      %v6055 = vadd.f32 %v6054, %v6015
      %v6056 = vadd.f32 %v6055, %v6016
      %v6057 = vadd.f32 %v6056, %v6017
      %v6058 = vadd.f32 %v6057, %v6018
      %v6059 = vadd.f32 %v6058, %v6019
      %v6060 = vadd.f32 %v6059, %v6020
      %v6061 = vadd.f32 %v6060, %v6021
      %v6062 = vadd.f32 %v6061, %v6022
      %v6063 = vadd.f32 %v6062, %v6023
      %v6064 = vadd.f32 %v6063, %v6024
      %v6065 = vadd.f32 %v6064, %v6025
      %v6066 = vadd.f32 %v6065, %v6026
      %v6067 = vadd.f32 %v6066, %v6027
      %v6068 = vadd.f32 %v6067, %v6028
      %v6069 = vadd.f32 %v6068, %v6029
      %v6070 = vadd.f32 %v6069, %v6030
      %v6071 = vadd.f32 %v6070, %v6031
      %v6072 = vadd.f32 %v6071, %v6032
      %v6073 = vadd.f32 %v6072, %v6033
      %v6074 = vadd.f32 %v6073, %v6034
      %v6075 = vrot.slane %v6074, 4
      %v6076 = vadd.f32 %v6074, %v6075
      %v6077 = vrot.slane %v6076, 2
      %v6078 = vadd.f32 %v6076, %v6077
      %v6079 = vrot.slane %v6078, 1
      %v6080 = vadd.f32 %v6078, %v6079
      %vm6081 = vcmask 1040384
      %v6082 = vsel %vm6081, %v5993, %v6080
      %6083 = vst [vmem:[%s262] sm:$0x3] %v6082
      %p6084 = scmp.lt.s32.totalorder %s18, 1
      %s6085 = scalar_select %p6084, %s18, 1
      %s6086 = smul.addr %s6085, 41
      %s6087 = smul.addr %s6086, 4
      %s6088 = scalar_lea.vmem %s5, %s6087
      %p6089 = scmp.lt.s32.totalorder %s18, 1
      %s6090 = scalar_select %p6089, %s18, 1
      %s6091 = smul.addr %s6090, 2
      %s6092 = scalar_lea.vmem %s6, %s6091
      // Predicated region
      $region45: #{basic_block_forward.3} parent=39 // pred_check
        %p6093 = pneg %p146
      $region46: #{basic_block_forward.3} parent=39 // pred_check_branch
        %6095 = sbr.rel (%p6093) target = $region48
      $region47: #{basic_block_forward.3} parent=39 // pred_region
        _
      $region48: #{basic_block_forward.3} parent=39 // pred_fallthru
        _
      // Predicated region
      $region49: #{basic_block_forward.3} parent=39 // pred_check
        %p6096 = pneg %p172
      $region50: #{basic_block_forward.3} parent=39 // pred_check_branch
        %6098 = sbr.rel (%p6096) target = $region52
      $region51: #{basic_block_forward.3} parent=39 // pred_region
        _
      $region52: #{basic_block_forward.3} parent=39 // pred_fallthru
        _
    $region40: #{basic_block_forward.3} parent=5 // pred_fallthru
      _
    %p6099 = scmp.le.s32.totalorder 2, %s13
    // Predicated region
    $region53: #{basic_block_forward.3} parent=5 // pred_check
      %p6100 = pneg %p6099
    $region54: #{basic_block_forward.3} parent=5 // pred_check_branch
      %6102 = sbr.rel (%p6100) target = $region56
    $region55: #{basic_block_forward.3} parent=5 // pred_region
      %s6103 = ssub.s32 %s13, 2
      // Predicated region
      $region57: #{basic_block_forward.3} parent=55 // pred_check
        %p6104 = pneg %p152
      $region58: #{basic_block_forward.3} parent=55 // pred_check_branch
        %6106 = sbr.rel (%p6104) target = $region60
      $region59: #{basic_block_forward.3} parent=55 // pred_region
        %p6107 = scmp.lt.s32.totalorder %s19, 1
        %s6108 = scalar_select %p6107, %s19, 1
        %s6109 = smul.addr %s6108, 41
        %s6110 = smul.addr %s6109, 4
        %s6111 = scalar_lea.vmem %s5, %s6110
      $region60: #{basic_block_forward.3} parent=55 // pred_fallthru
        _
      // Predicated region
      $region61: #{basic_block_forward.3} parent=55 // pred_check
        %p6112 = pneg %p178
      $region62: #{basic_block_forward.3} parent=55 // pred_check_branch
        %6114 = sbr.rel (%p6112) target = $region64
      $region63: #{basic_block_forward.3} parent=55 // pred_region
        %p6115 = scmp.lt.s32.totalorder %s19, 1
        %s6116 = scalar_select %p6115, %s19, 1
        %s6117 = smul.addr %s6116, 2
        %s6118 = scalar_lea.vmem %s6, %s6117
      $region64: #{basic_block_forward.3} parent=55 // pred_fallthru
        _
    $region56: #{basic_block_forward.3} parent=5 // pred_fallthru
      _
  $region6: #{basic_block_forward.3} parent=0 // loop_footer
    %s17 = sadd.s32 1, %s13
  $region7: #{basic_block_forward.3} parent=0 // loop_footer_branch
    %12 = sbr.rel target = $region3
  $region8: #{basic_block_forward.3} parent=0 // loop_exit
    _

</llo_original>
